<compile_context>
chip_gen: v7x
topology: tpu7x:2x2x1
jax: 0.10.0
libtpu: 0.0.40
codegen_flags: <defaults>
</compile_context>

<pallas_src>
import jax
import jax.numpy as jnp
from jax.experimental import pallas as pl
from jax.experimental.pallas import tpu as pltpu

BN_EPS = 1e-5
_VMEM_LIMIT = 48 * 1024 * 1024          # fits v7x (64 MiB) with headroom; fine on v5e/v6e
_ACT_DTYPE = jnp.bfloat16               # inter-kernel activation storage dtype
_ROW_CAP = 1024                         # pointwise-ish kernels
_NBR_ROW_CAP = 512                      # nbr kernel works on k*tn rows


# ----------------------------------------------------------------------------- helpers
def _gelu(x):
    # TODO(synk): PyTorch nn.GELU default is the exact erf form; tanh-approx GELU is used
    # because tanh lowers reliably to the TPU EUP (numerically ~1e-3 close).
    c = 0.7978845608028654  # sqrt(2/pi)
    return 0.5 * x * (1.0 + jnp.tanh(c * (x + 0.044715 * x * x * x)))


def _bdot(a, b):
    # bf16 MXU matmul with f32 accumulation (elementwise math stays f32).
    return jnp.dot(a.astype(jnp.bfloat16), b, preferred_element_type=jnp.float32)


def _round_up(n, m):
    return (n + m - 1) // m * m


def _row_tile(n, cap):
    # tm ~= ceil(n / ntiles) rounded to 8 -> padded extent tracks n (no 2x overshoot).
    n8 = _round_up(max(n, 8), 8)
    if n8 <= cap:
        return n8, n8
    ntiles = -(-n8 // cap)
    tm = _round_up(-(-n8 // ntiles), 8)
    return tm, tm * ntiles


def _pad_axis(a, axis, target):
    pad = target - a.shape[axis]
    if pad == 0:
        return a
    widths = [(0, 0)] * a.ndim
    widths[axis] = (0, pad)
    return jnp.pad(a, widths)


def _row_vec(v, n, fill=None):
    if v is None:
        return jnp.full((1, n), fill, jnp.float32)
    return v.reshape(1, n).astype(jnp.float32)


def _compiler_params():
    return pltpu.CompilerParams(dimension_semantics=("parallel",),
                                vmem_limit_bytes=_VMEM_LIMIT)


# ----------------------------------------------------------------------------- kernels
def _linear_kernel(has_pre, pre_act, post_act, has_residual):
    """o = [gelu]( [gelu](x*ps + pt) @ W * s + t ) [+ residual]"""
    def kernel(*refs):
        i = 0
        x_ref = refs[i]; i += 1
        w_ref = refs[i]; i += 1
        if has_pre:
            ps_ref, pt_ref = refs[i], refs[i + 1]; i += 2
        s_ref, t_ref = refs[i], refs[i + 1]; i += 2
        r_ref = None
        if has_residual:
            r_ref = refs[i]; i += 1
        o_ref = refs[i]

        x = x_ref[...]
        if has_pre:
            x = x.astype(jnp.float32) * ps_ref[...] + pt_ref[...]
            if pre_act:
                x = _gelu(x)
        y = _bdot(x, w_ref[...]) * s_ref[...] + t_ref[...]
        if post_act:
            y = _gelu(y)
        if has_residual:
            y = y + r_ref[...].astype(jnp.float32)
        o_ref[...] = y.astype(o_ref.dtype)
    return kernel


def fused_linear(x, w, *, pre_scale=None, pre_shift=None, pre_act=False,
                 post_scale=None, post_shift=None, post_act=False,
                 residual=None, out_dtype=_ACT_DTYPE, row_cap=_ROW_CAP):
    M, K = x.shape
    K2, Nout = w.shape
    assert K == K2
    has_pre = pre_act or (pre_scale is not None) or (pre_shift is not None)

    tm, Mp = _row_tile(M, row_cap)
    args = [_pad_axis(x, 0, Mp), w.astype(jnp.bfloat16)]
    in_specs = [pl.BlockSpec((tm, K), lambda i: (i, 0)),
                pl.BlockSpec((K, Nout), lambda i: (0, 0))]
    if has_pre:
        args += [_row_vec(pre_scale, K, 1.0), _row_vec(pre_shift, K, 0.0)]
        in_specs += [pl.BlockSpec((1, K), lambda i: (0, 0)),
                     pl.BlockSpec((1, K), lambda i: (0, 0))]
    args += [_row_vec(post_scale, Nout, 1.0), _row_vec(post_shift, Nout, 0.0)]
    in_specs += [pl.BlockSpec((1, Nout), lambda i: (0, 0)),
                 pl.BlockSpec((1, Nout), lambda i: (0, 0))]
    if residual is not None:
        args.append(_pad_axis(residual, 0, Mp))
        in_specs.append(pl.BlockSpec((tm, Nout), lambda i: (i, 0)))

    out = pl.pallas_call(
        _linear_kernel(has_pre, pre_act, post_act, residual is not None),
        out_shape=jax.ShapeDtypeStruct((Mp, Nout), out_dtype),
        grid=(Mp // tm,),
        in_specs=in_specs,
        out_specs=pl.BlockSpec((tm, Nout), lambda i: (i, 0)),
        compiler_params=_compiler_params(),
    )(*args)
    return out if Mp == M else out[:M]


def _mlp_kernel(has_residual):
    """o = (gelu(x@W1 + b1) @ W2) * s + t [+ residual]  — hid stays in VMEM."""
    def kernel(x_ref, w1_ref, b1_ref, w2_ref, s_ref, t_ref, *rest):
        if has_residual:
            r_ref, o_ref = rest
        else:
            (o_ref,) = rest
        h = _gelu(_bdot(x_ref[...], w1_ref[...]) + b1_ref[...])
        y = _bdot(h, w2_ref[...]) * s_ref[...] + t_ref[...]
        if has_residual:
            y = y + r_ref[...].astype(jnp.float32)
        o_ref[...] = y.astype(o_ref.dtype)
    return kernel


def fused_mlp(x, w1, b1, w2, scale, shift, residual=None, row_cap=_ROW_CAP):
    M, K = x.shape
    H = w1.shape[1]
    C = w2.shape[1]

    tm, Mp = _row_tile(M, row_cap)
    args = [_pad_axis(x, 0, Mp), w1.astype(jnp.bfloat16), _row_vec(b1, H),
            w2.astype(jnp.bfloat16), _row_vec(scale, C), _row_vec(shift, C)]
    in_specs = [
        pl.BlockSpec((tm, K), lambda i: (i, 0)),
        pl.BlockSpec((K, H), lambda i: (0, 0)),
        pl.BlockSpec((1, H), lambda i: (0, 0)),
        pl.BlockSpec((H, C), lambda i: (0, 0)),
        pl.BlockSpec((1, C), lambda i: (0, 0)),
        pl.BlockSpec((1, C), lambda i: (0, 0)),
    ]
    if residual is not None:
        args.append(_pad_axis(residual, 0, Mp))
        in_specs.append(pl.BlockSpec((tm, C), lambda i: (i, 0)))

    out = pl.pallas_call(
        _mlp_kernel(residual is not None),
        out_shape=jax.ShapeDtypeStruct((Mp, C), _ACT_DTYPE),
        grid=(Mp // tm,),
        in_specs=in_specs,
        out_specs=pl.BlockSpec((tm, C), lambda i: (i, 0)),
        compiler_params=_compiler_params(),
    )(*args)
    return out if Mp == M else out[:M]


def _lfp_pool_kernel(k, c, has_residual):
    """o = (max_j xg[:, j*c:(j+1)*c] - xc) * s + t [+ residual]
    xg is lane-dense (tn, k*c); the k-max is done in-lane with roll+max (XLU slot)."""
    def kernel(xg_ref, xc_ref, s_ref, t_ref, *rest):
        if has_residual:
            r_ref, o_ref = rest
        else:
            (o_ref,) = rest
        m = xg_ref[...].astype(jnp.float32)            # (tn, k*c)
        if k & (k - 1) == 0:                           # power-of-two k: log2(k) rolls
            s = c
            while s < k * c:
                m = jnp.maximum(m, pltpu.roll(m, shift=s, axis=1))
                s *= 2
        else:
            base = m
            for j in range(1, k):
                m = jnp.maximum(m, pltpu.roll(base, shift=j * c, axis=1))
        y = (m[:, :c] - xc_ref[...].astype(jnp.float32)) * s_ref[...] + t_ref[...]
        if has_residual:
            y = y + r_ref[...].astype(jnp.float32)
        o_ref[...] = y.astype(o_ref.dtype)
    return kernel


def lfp_pool(xg, xc, scale, shift, residual=None, row_cap=_ROW_CAP):
    """xg: (N, k*C) lane-dense gathered neighbor features (bf16), xc: (N, C)."""
    N, KC = xg.shape
    C = xc.shape[1]
    k = KC // C
    tn, Np = _row_tile(N, row_cap)

    args = [_pad_axis(xg, 0, Np), _pad_axis(xc, 0, Np),
            _row_vec(scale, C), _row_vec(shift, C)]
    in_specs = [
        pl.BlockSpec((tn, KC), lambda i: (i, 0)),
        pl.BlockSpec((tn, C), lambda i: (i, 0)),
        pl.BlockSpec((1, C), lambda i: (0, 0)),
        pl.BlockSpec((1, C), lambda i: (0, 0)),
    ]
    if residual is not None:
        args.append(_pad_axis(residual, 0, Np))
        in_specs.append(pl.BlockSpec((tn, C), lambda i: (i, 0)))

    out = pl.pallas_call(
        _lfp_pool_kernel(k, C, residual is not None),
        out_shape=jax.ShapeDtypeStruct((Np, C), _ACT_DTYPE),
        grid=(Np // tn,),
        in_specs=in_specs,
        out_specs=pl.BlockSpec((tn, C), lambda i: (i, 0)),
        compiler_params=_compiler_params(),
    )(*args)
    return out if Np == N else out[:N]


def _nbr_kernel(k, has_proj, has_residual):
    """Fused spatial encoding: collapse (k, tn, Cin) -> (k*tn, Cin), run the 3-layer MLP
    chain once, max over k, optional nbr_proj, nbr_bn scale/shift, optional residual.
    Intermediates never leave VMEM.  First layer stays f32 (raw xyz offsets)."""
    def kernel(*refs):
        nbr_ref = refs[0]
        w1, s1, t1, w2, s2, t2, w3 = refs[1:8]
        pos = 8
        w4 = None
        if has_proj:
            w4 = refs[pos]; pos += 1
        s_ref, t_ref = refs[pos], refs[pos + 1]; pos += 2
        r_ref = None
        if has_residual:
            r_ref = refs[pos]; pos += 1
        o_ref = refs[pos]

        kk, tn, cin = nbr_ref.shape
        v = nbr_ref[...].reshape(kk * tn, cin)          # free leading-dim merge in VMEM
        h = jnp.dot(v, w1[...], preferred_element_type=jnp.float32)   # f32 first layer
        h = _gelu(h * s1[...] + t1[...])
        h = _gelu(_bdot(h, w2[...]) * s2[...] + t2[...])
        y = _bdot(h, w3[...])                           # (k*tn, c3)

        m = y[0:tn]
        for j in range(1, k):                           # sublane-aligned static slices
            m = jnp.maximum(m, y[j * tn:(j + 1) * tn])
        if has_proj:
            m = _bdot(m, w4[...])
        out = m * s_ref[...] + t_ref[...]
        if has_residual:
            out = out + r_ref[...].astype(jnp.float32)
        o_ref[...] = out.astype(o_ref.dtype)
    return kernel


def nbr_embed_pool(nbr, e, *, proj_w, scale, shift, residual, row_cap=_NBR_ROW_CAP):
    """nbr: (k, N, Cin) neighbor offsets (+features for first stage), f32."""
    k, N, Cin = nbr.shape
    h1 = e["fc1"]["w"].shape[1]
    h2 = e["fc2"]["w"].shape[1]
    c3 = e["fc3"]["w"].shape[1]
    Cout = proj_w.shape[1] if proj_w is not None else c3

    tn, Np = _row_tile(N, row_cap)
    args = [_pad_axis(nbr.astype(jnp.float32), 1, Np),
            e["fc1"]["w"].astype(jnp.float32),
            _row_vec(e["bn1"]["scale"], h1), _row_vec(e["bn1"]["shift"], h1),
            e["fc2"]["w"].astype(jnp.bfloat16),
            _row_vec(e["bn2"]["scale"], h2), _row_vec(e["bn2"]["shift"], h2),
            e["fc3"]["w"].astype(jnp.bfloat16)]
    in_specs = [
        pl.BlockSpec((k, tn, Cin), lambda i: (0, i, 0)),
        pl.BlockSpec((Cin, h1), lambda i: (0, 0)),
        pl.BlockSpec((1, h1), lambda i: (0, 0)),
        pl.BlockSpec((1, h1), lambda i: (0, 0)),
        pl.BlockSpec((h1, h2), lambda i: (0, 0)),
        pl.BlockSpec((1, h2), lambda i: (0, 0)),
        pl.BlockSpec((1, h2), lambda i: (0, 0)),
        pl.BlockSpec((h2, c3), lambda i: (0, 0)),
    ]
    if proj_w is not None:
        args.append(proj_w.astype(jnp.bfloat16))
        in_specs.append(pl.BlockSpec((c3, Cout), lambda i: (0, 0)))
    args += [_row_vec(scale, Cout), _row_vec(shift, Cout)]
    in_specs += [pl.BlockSpec((1, Cout), lambda i: (0, 0)),
                 pl.BlockSpec((1, Cout), lambda i: (0, 0))]
    if residual is not None:
        args.append(_pad_axis(residual, 0, Np))
        in_specs.append(pl.BlockSpec((tn, Cout), lambda i: (i, 0)))

    out = pl.pallas_call(
        _nbr_kernel(k, proj_w is not None, residual is not None),
        out_shape=jax.ShapeDtypeStruct((Np, Cout), _ACT_DTYPE),
        grid=(Np // tn,),
        in_specs=in_specs,
        out_specs=pl.BlockSpec((tn, Cout), lambda i: (i, 0)),
        compiler_params=_compiler_params(),
    )(*args)
    return out if Np == N else out[:N]


# ----------------------------------------------------------------------------- parameters
class KeyGen:
    def __init__(self, key):
        self._key = key

    def __call__(self):
        self._key, sub = jax.random.split(self._key)
        return sub


def make_linear(kg, din, dout, bias=False, dtype=jnp.bfloat16):
    # trunc_normal_(std=0.02, a=-2, b=2) -> effectively N(0, 0.02) at these cutoffs.
    # Weights are pre-cast to bf16 on the host (MXU dtype) unless overridden.
    w = (jax.random.normal(kg(), (din, dout), jnp.float32) * 0.02).astype(dtype)
    p = {"w": w}
    if bias:
        p["b"] = jnp.zeros((dout,), jnp.float32)
    return p


def make_bn(dim, gamma=1.0):
    # eval-mode BN with running_mean=0, running_var=1 folded to scale/shift
    scale = jnp.full((dim,), float(gamma) / (1.0 + BN_EPS) ** 0.5, jnp.float32)
    shift = jnp.zeros((dim,), jnp.float32)
    return {"scale": scale, "shift": shift}


def make_lfp(kg, din, dout, init):
    return {"proj": make_linear(kg, din, dout), "bn": make_bn(dout, init)}


def make_mlp(kg, dim, ratio, init):
    hid = int(round(dim * ratio))
    return {"fc1": make_linear(kg, dim, hid, bias=True),
            "fc2": make_linear(kg, hid, dim),
            "bn": make_bn(dim, init)}


def make_block(kg, dim, depth, ratio):
    return {"mlp": make_mlp(kg, dim, ratio, 0.2),
            "lfps": [make_lfp(kg, dim, dim, 0.0) for _ in range(depth)],
            "mlps": [make_mlp(kg, dim, ratio, 0.0) for _ in range(depth // 2)]}


def make_stage(kg, cfg, depth):
    first = depth == 0
    last = depth == len(cfg["depths"]) - 1
    dim = cfg["dims"][depth]
    nbr_in = 7 if first else 3
    nbr_hid = cfg["nbr_dims"][0] if first else cfg["nbr_dims"][1] // 2
    nbr_out = dim if first else cfg["nbr_dims"][1]
    p = {
        "nbr_embed": {
            # first layer stays f32: raw xyz offsets are the precision-sensitive input
            "fc1": make_linear(kg, nbr_in, nbr_hid // 2, dtype=jnp.float32),
            "bn1": make_bn(nbr_hid // 2),
            "fc2": make_linear(kg, nbr_hid // 2, nbr_hid),
            "bn2": make_bn(nbr_hid),
            "fc3": make_linear(kg, nbr_hid, nbr_out),
        },
        "nbr_bn": make_bn(dim, 0.8 if first else 0.2),
        "nbr_proj": None if first else make_linear(kg, nbr_out, dim),
        "blk": make_block(kg, dim, cfg["depths"][depth], cfg["mlp_ratio"]),
        "post_bn": make_bn(dim, (cfg["dims"][0] / dim) ** 0.5),
        "post_lin": make_linear(kg, dim, cfg["head_dim"]),
    }
    if not first:
        in_dim = cfg["dims"][depth - 1]
        p["lfp"] = make_lfp(kg, in_dim, dim, 0.3)
        p["skip_proj"] = make_linear(kg, in_dim, dim)
        p["skip_bn"] = make_bn(dim, 0.3)
    # TODO(synk): cor_head params omitted — only used for the training-time closs branch.
    if not last:
        p["sub"] = make_stage(kg, cfg, depth + 1)
    return p


def make_model(kg, cfg):
    return {"stage": make_stage(kg, cfg, 0),
            "head_bn": make_bn(cfg["head_dim"], 1.0),
            "head_lin": make_linear(kg, cfg["head_dim"], cfg["num_classes"], bias=True)}


# ----------------------------------------------------------------------------- forward
def lfp_forward(p, x, knn, residual=None):
    # f_i = bn(max_j proj(x)_j - proj(x)_i) [+ residual, fused]
    xp = fused_linear(x, p["proj"]["w"])                       # (N, C) bf16
    N, C = xp.shape
    k = knn.shape[1]
    # TODO(synk): the neighbor gather is XLA glue (bf16, lane-dense (N, k*C)); a true
    # in-kernel scalar-prefetch/DMA gather would remove this HBM round trip entirely.
    xg = jnp.take(xp, knn, axis=0).reshape(N, k * C)           # (N, k*C) bf16
    return lfp_pool(xg, xp, p["bn"]["scale"], p["bn"]["shift"], residual=residual)


def mlp_forward(p, x, residual=None):
    return fused_mlp(x, p["fc1"]["w"], p["fc1"]["b"], p["fc2"]["w"],
                     p["bn"]["scale"], p["bn"]["shift"], residual=residual)


def block_forward(p, x, knn, depth):
    x = mlp_forward(p["mlp"], x, residual=x)
    for i in range(depth):
        x = lfp_forward(p["lfps"][i], x, knn, residual=x)
        if i % 2 == 1:
            x = mlp_forward(p["mlps"][i // 2], x, residual=x)
    return x


def stage_forward(p, cfg, depth, x, xyz, prev_knn, indices):
    first = depth == 0
    last = depth == len(cfg["depths"]) - 1

    if not first:
        ids = indices.pop()
        xyz = xyz[ids]
        skip = fused_linear(x, p["skip_proj"]["w"],
                            post_scale=p["skip_bn"]["scale"], post_shift=p["skip_bn"]["shift"])
        # skip_proj(x)[ids] + lfp(x)[ids] == (skip_proj(x) + lfp(x))[ids]; residual fused.
        x = lfp_forward(p["lfp"], x, prev_knn, residual=skip)[ids]

    knn = indices.pop()                                               # (N, k)
    knn_t = knn.T                                                     # (k, N) gather layout

    nbr = jnp.take(xyz, knn_t, axis=0) - xyz[None, :, :]              # (k, N, 3) f32
    if first:
        nbr = jnp.concatenate(
            [nbr, jnp.take(x, knn_t, axis=0).astype(jnp.float32)], axis=-1)  # (k, N, 7)

    e = p["nbr_embed"]
    if first:
        # nbr_proj = Identity; x = nbr_bn(max-pool(embed(nbr)))
        x = nbr_embed_pool(nbr, e, proj_w=None,
                           scale=p["nbr_bn"]["scale"], shift=p["nbr_bn"]["shift"],
                           residual=None)
    else:
        # x = nbr_bn(nbr_proj(max-pool(embed(nbr)))) + x  — fully fused
        x = nbr_embed_pool(nbr, e, proj_w=p["nbr_proj"]["w"],
                           scale=p["nbr_bn"]["scale"], shift=p["nbr_bn"]["shift"],
                           residual=x)

    x = block_forward(p["blk"], x, knn, cfg["depths"][depth])

    sub_x = None
    if not last:
        sub_x = stage_forward(p["sub"], cfg, depth + 1, x, xyz, knn, indices)

    # TODO(synk): training-only cor_head / closs and DropPath(drop>0) branches skipped (eval).
    if first and sub_x is not None:
        return fused_linear(x, p["post_lin"]["w"],
                            pre_scale=p["post_bn"]["scale"], pre_shift=p["post_bn"]["shift"],
                            residual=sub_x)
    out = fused_linear(x, p["post_lin"]["w"],
                       pre_scale=p["post_bn"]["scale"], pre_shift=p["post_bn"]["shift"])
    if not first:
        back_nn = indices[depth - 1]
        out = out[back_nn]
    return sub_x + out if sub_x is not None else out


def dela_semseg_forward(params, cfg, xyz, x, indices):
    indices = list(indices)   # mirror `indices[:]`
    feat = stage_forward(params["stage"], cfg, 0, x, xyz, None, indices)
    # head: BN -> GELU -> Linear(+bias), fused into one kernel; logits returned in f32.
    return fused_linear(feat, params["head_lin"]["w"],
                        pre_scale=params["head_bn"]["scale"],
                        pre_shift=params["head_bn"]["shift"],
                        pre_act=True,
                        post_shift=params["head_lin"]["b"],
                        out_dtype=jnp.float32)


# ----------------------------------------------------------------------------- main
if __name__ == "__main__":
    cfg = dict(
        depths=[2, 2],
        dims=[32, 64],
        nbr_dims=[16, 16],
        head_dim=32,
        num_classes=13,
        mlp_ratio=2.0,
        ks=[8, 8],
    )

    master = jax.random.PRNGKey(0)
    pkey, ikey = jax.random.split(master)
    params = make_model(KeyGen(pkey), cfg)

    N0, N1, K = 64, 32, 8
    k1, k2, k3, k4, k5, k6 = jax.random.split(ikey, 6)
    xyz = jax.random.uniform(k1, (N0, 3), jnp.float32)
    feats = jax.random.normal(k2, (N0, 4), jnp.float32)          # input features (7 = 3 + 4)
    knn0 = jax.random.randint(k3, (N0, K), 0, N0, jnp.int32)     # stage-0 kNN
    ids1 = jax.random.permutation(k4, N0)[:N1].astype(jnp.int32) # stage-1 subsample ids
    knn1 = jax.random.randint(k5, (N1, K), 0, N1, jnp.int32)     # stage-1 kNN
    back_nn = jax.random.randint(k6, (N0,), 0, N1, jnp.int32)    # stage-1 back-projection
    # indices are popped from the end: [back_nn, knn1, ids1, knn0]
    indices = [back_nn, knn1, ids1, knn0]

    fwd = jax.jit(lambda prm, pxyz, pfeat, idx: dela_semseg_forward(prm, cfg, pxyz, pfeat, idx))
    out = fwd(params, xyz, feats, indices)
    out = jax.block_until_ready(out)
    assert out.shape == (N0, cfg["num_classes"])
    assert bool(jnp.all(jnp.isfinite(out)))
    print("KERNEL_OK")
</pallas_src>

<mosaic_0001>
module attributes {stable_mosaic.version = 11 : i64} {
  func.func @kernel(%arg0: i32, %arg1: memref<8x64x7xf32, #tpu.memory_space<vmem>>, %arg2: memref<7x8xf32, #tpu.memory_space<vmem>>, %arg3: memref<1x8xf32, #tpu.memory_space<vmem>>, %arg4: memref<1x8xf32, #tpu.memory_space<vmem>>, %arg5: memref<8x16xbf16, #tpu.memory_space<vmem>>, %arg6: memref<1x16xf32, #tpu.memory_space<vmem>>, %arg7: memref<1x16xf32, #tpu.memory_space<vmem>>, %arg8: memref<16x32xbf16, #tpu.memory_space<vmem>>, %arg9: memref<1x32xf32, #tpu.memory_space<vmem>>, %arg10: memref<1x32xf32, #tpu.memory_space<vmem>>, %arg11: memref<64x32xbf16, #tpu.memory_space<vmem>>) attributes {dimension_semantics = [#tpu.dimension_semantics<parallel>], iteration_bounds = array<i64: 1>, scalar_prefetch = 0 : i64, scratch_operands = 0 : i64, tpu.core_type = #tpu.core_type<tc>, window_params = [{transform_indices = @transform_0, window_bounds = array<i64: 8, 64, 7>}, {pipeline_mode = #tpu.pipeline_mode<synchronous>, transform_indices = @transform_1, window_bounds = array<i64: 7, 8>}, {pipeline_mode = #tpu.pipeline_mode<synchronous>, transform_indices = @transform_2, window_bounds = array<i64: 1, 8>}, {pipeline_mode = #tpu.pipeline_mode<synchronous>, transform_indices = @transform_3, window_bounds = array<i64: 1, 8>}, {pipeline_mode = #tpu.pipeline_mode<synchronous>, transform_indices = @transform_4, window_bounds = array<i64: 8, 16>}, {pipeline_mode = #tpu.pipeline_mode<synchronous>, transform_indices = @transform_5, window_bounds = array<i64: 1, 16>}, {pipeline_mode = #tpu.pipeline_mode<synchronous>, transform_indices = @transform_6, window_bounds = array<i64: 1, 16>}, {pipeline_mode = #tpu.pipeline_mode<synchronous>, transform_indices = @transform_7, window_bounds = array<i64: 16, 32>}, {pipeline_mode = #tpu.pipeline_mode<synchronous>, transform_indices = @transform_8, window_bounds = array<i64: 1, 32>}, {pipeline_mode = #tpu.pipeline_mode<synchronous>, transform_indices = @transform_9, window_bounds = array<i64: 1, 32>}, {transform_indices = @transform_10, window_bounds = array<i64: 64, 32>}]} {
    %c0 = arith.constant 0 : index
    %c0_0 = arith.constant 0 : index
    %c0_1 = arith.constant 0 : index
    %0 = vector.load %arg1[%c0, %c0_0, %c0_1] : memref<8x64x7xf32, #tpu.memory_space<vmem>>, vector<8x64x7xf32>
    %1 = vector.shape_cast %0 : vector<8x64x7xf32> to vector<512x7xf32>
    %c0_2 = arith.constant 0 : index
    %c0_3 = arith.constant 0 : index
    %2 = vector.load %arg2[%c0_2, %c0_3] : memref<7x8xf32, #tpu.memory_space<vmem>>, vector<7x8xf32>
    %cst = arith.constant dense<0.000000e+00> : vector<512x8xf32>
    %3 = tpu.matmul %1, %2, %cst {dimension_numbers = #tpu.dot_dimension_numbers<[1], [0], [0], [1], [0, 0, 1, 1], [], []>} : vector<512x7xf32>, vector<7x8xf32>, vector<512x8xf32> -> vector<512x8xf32>
    %c0_4 = arith.constant 0 : index
    %c0_5 = arith.constant 0 : index
    %4 = vector.load %arg3[%c0_4, %c0_5] : memref<1x8xf32, #tpu.memory_space<vmem>>, vector<1x8xf32>
    %5 = vector.broadcast %4 : vector<1x8xf32> to vector<512x8xf32>
    %6 = arith.mulf %3, %5 : vector<512x8xf32>
    %c0_6 = arith.constant 0 : index
    %c0_7 = arith.constant 0 : index
    %7 = vector.load %arg4[%c0_6, %c0_7] : memref<1x8xf32, #tpu.memory_space<vmem>>, vector<1x8xf32>
    %8 = vector.broadcast %7 : vector<1x8xf32> to vector<512x8xf32>
    %9 = arith.addf %6, %8 : vector<512x8xf32>
    %cst_8 = arith.constant 5.000000e-01 : f32
    %10 = vector.broadcast %cst_8 : f32 to vector<512x8xf32>
    %11 = arith.mulf %10, %9 : vector<512x8xf32>
    %cst_9 = arith.constant 4.471500e-02 : f32
    %12 = vector.broadcast %cst_9 : f32 to vector<512x8xf32>
    %13 = arith.mulf %12, %9 : vector<512x8xf32>
    %14 = arith.mulf %13, %9 : vector<512x8xf32>
    %15 = arith.mulf %14, %9 : vector<512x8xf32>
    %16 = arith.addf %9, %15 : vector<512x8xf32>
    %cst_10 = arith.constant 0.797884583 : f32
    %17 = vector.broadcast %cst_10 : f32 to vector<512x8xf32>
    %18 = arith.mulf %17, %16 : vector<512x8xf32>
    %19 = math.tanh %18 : vector<512x8xf32>
    %cst_11 = arith.constant 1.000000e+00 : f32
    %20 = vector.broadcast %cst_11 : f32 to vector<512x8xf32>
    %21 = arith.addf %20, %19 : vector<512x8xf32>
    %22 = arith.mulf %11, %21 : vector<512x8xf32>
    %c0_12 = arith.constant 0 : index
    %c0_13 = arith.constant 0 : index
    %23 = vector.load %arg5[%c0_12, %c0_13] : memref<8x16xbf16, #tpu.memory_space<vmem>>, vector<8x16xbf16>
    %24 = arith.truncf %22 : vector<512x8xf32> to vector<512x8xbf16>
    %cst_14 = arith.constant dense<0.000000e+00> : vector<512x16xf32>
    %25 = tpu.matmul %24, %23, %cst_14 {dimension_numbers = #tpu.dot_dimension_numbers<[1], [0], [0], [1], [0, 0, 1, 1], [], []>} : vector<512x8xbf16>, vector<8x16xbf16>, vector<512x16xf32> -> vector<512x16xf32>
    %c0_15 = arith.constant 0 : index
    %c0_16 = arith.constant 0 : index
    %26 = vector.load %arg6[%c0_15, %c0_16] : memref<1x16xf32, #tpu.memory_space<vmem>>, vector<1x16xf32>
    %27 = vector.broadcast %26 : vector<1x16xf32> to vector<512x16xf32>
    %28 = arith.mulf %25, %27 : vector<512x16xf32>
    %c0_17 = arith.constant 0 : index
    %c0_18 = arith.constant 0 : index
    %29 = vector.load %arg7[%c0_17, %c0_18] : memref<1x16xf32, #tpu.memory_space<vmem>>, vector<1x16xf32>
    %30 = vector.broadcast %29 : vector<1x16xf32> to vector<512x16xf32>
    %31 = arith.addf %28, %30 : vector<512x16xf32>
    %cst_19 = arith.constant 5.000000e-01 : f32
    %32 = vector.broadcast %cst_19 : f32 to vector<512x16xf32>
    %33 = arith.mulf %32, %31 : vector<512x16xf32>
    %cst_20 = arith.constant 4.471500e-02 : f32
    %34 = vector.broadcast %cst_20 : f32 to vector<512x16xf32>
    %35 = arith.mulf %34, %31 : vector<512x16xf32>
    %36 = arith.mulf %35, %31 : vector<512x16xf32>
    %37 = arith.mulf %36, %31 : vector<512x16xf32>
    %38 = arith.addf %31, %37 : vector<512x16xf32>
    %cst_21 = arith.constant 0.797884583 : f32
    %39 = vector.broadcast %cst_21 : f32 to vector<512x16xf32>
    %40 = arith.mulf %39, %38 : vector<512x16xf32>
    %41 = math.tanh %40 : vector<512x16xf32>
    %cst_22 = arith.constant 1.000000e+00 : f32
    %42 = vector.broadcast %cst_22 : f32 to vector<512x16xf32>
    %43 = arith.addf %42, %41 : vector<512x16xf32>
    %44 = arith.mulf %33, %43 : vector<512x16xf32>
    %c0_23 = arith.constant 0 : index
    %c0_24 = arith.constant 0 : index
    %45 = vector.load %arg8[%c0_23, %c0_24] : memref<16x32xbf16, #tpu.memory_space<vmem>>, vector<16x32xbf16>
    %46 = arith.truncf %44 : vector<512x16xf32> to vector<512x16xbf16>
    %cst_25 = arith.constant dense<0.000000e+00> : vector<512x32xf32>
    %47 = tpu.matmul %46, %45, %cst_25 {dimension_numbers = #tpu.dot_dimension_numbers<[1], [0], [0], [1], [0, 0, 1, 1], [], []>} : vector<512x16xbf16>, vector<16x32xbf16>, vector<512x32xf32> -> vector<512x32xf32>
    %48 = vector.extract_strided_slice %47 {offsets = [0, 0], sizes = [64, 32], strides = [1, 1]} : vector<512x32xf32> to vector<64x32xf32>
    %49 = vector.extract_strided_slice %47 {offsets = [64, 0], sizes = [64, 32], strides = [1, 1]} : vector<512x32xf32> to vector<64x32xf32>
    %50 = arith.maximumf %48, %49 : vector<64x32xf32>
    %51 = vector.extract_strided_slice %47 {offsets = [128, 0], sizes = [64, 32], strides = [1, 1]} : vector<512x32xf32> to vector<64x32xf32>
    %52 = arith.maximumf %50, %51 : vector<64x32xf32>
    %53 = vector.extract_strided_slice %47 {offsets = [192, 0], sizes = [64, 32], strides = [1, 1]} : vector<512x32xf32> to vector<64x32xf32>
    %54 = arith.maximumf %52, %53 : vector<64x32xf32>
    %55 = vector.extract_strided_slice %47 {offsets = [256, 0], sizes = [64, 32], strides = [1, 1]} : vector<512x32xf32> to vector<64x32xf32>
    %56 = arith.maximumf %54, %55 : vector<64x32xf32>
    %57 = vector.extract_strided_slice %47 {offsets = [320, 0], sizes = [64, 32], strides = [1, 1]} : vector<512x32xf32> to vector<64x32xf32>
    %58 = arith.maximumf %56, %57 : vector<64x32xf32>
    %59 = vector.extract_strided_slice %47 {offsets = [384, 0], sizes = [64, 32], strides = [1, 1]} : vector<512x32xf32> to vector<64x32xf32>
    %60 = arith.maximumf %58, %59 : vector<64x32xf32>
    %61 = vector.extract_strided_slice %47 {offsets = [448, 0], sizes = [64, 32], strides = [1, 1]} : vector<512x32xf32> to vector<64x32xf32>
    %62 = arith.maximumf %60, %61 : vector<64x32xf32>
    %c0_26 = arith.constant 0 : index
    %c0_27 = arith.constant 0 : index
    %63 = vector.load %arg9[%c0_26, %c0_27] : memref<1x32xf32, #tpu.memory_space<vmem>>, vector<1x32xf32>
    %64 = vector.broadcast %63 : vector<1x32xf32> to vector<64x32xf32>
    %65 = arith.mulf %62, %64 : vector<64x32xf32>
    %c0_28 = arith.constant 0 : index
    %c0_29 = arith.constant 0 : index
    %66 = vector.load %arg10[%c0_28, %c0_29] : memref<1x32xf32, #tpu.memory_space<vmem>>, vector<1x32xf32>
    %67 = vector.broadcast %66 : vector<1x32xf32> to vector<64x32xf32>
    %68 = arith.addf %65, %67 : vector<64x32xf32>
    %69 = arith.truncf %68 : vector<64x32xf32> to vector<64x32xbf16>
    %c0_30 = arith.constant 0 : index
    %c0_31 = arith.constant 0 : index
    %70 = vector.load %arg11[%c0_30, %c0_31] : memref<64x32xbf16, #tpu.memory_space<vmem>>, vector<64x32xbf16>
    tpu.vector_store %arg11[%c0_30, %c0_31], %69 {strides = array<i32>} : memref<64x32xbf16, #tpu.memory_space<vmem>>, vector<64x32xbf16>,
    return
  }
  func.func @transform_0(%arg0: i32) -> (i32, i32, i32) {
    %c0_i32 = arith.constant 0 : i32
    %c0_i32_0 = arith.constant 0 : i32
    %c0_i32_1 = arith.constant 0 : i32
    return %c0_i32, %arg0, %c0_i32_0 : i32, i32, i32
  }
  func.func @transform_1(%arg0: i32) -> (i32, i32) {
    %c0_i32 = arith.constant 0 : i32
    %c0_i32_0 = arith.constant 0 : i32
    %c0_i32_1 = arith.constant 0 : i32
    return %c0_i32, %c0_i32_0 : i32, i32
  }
  func.func @transform_2(%arg0: i32) -> (i32, i32) {
    %c0_i32 = arith.constant 0 : i32
    %c0_i32_0 = arith.constant 0 : i32
    %c0_i32_1 = arith.constant 0 : i32
    return %c0_i32, %c0_i32_0 : i32, i32
  }
  func.func @transform_3(%arg0: i32) -> (i32, i32) {
    %c0_i32 = arith.constant 0 : i32
    %c0_i32_0 = arith.constant 0 : i32
    %c0_i32_1 = arith.constant 0 : i32
    return %c0_i32, %c0_i32_0 : i32, i32
  }
  func.func @transform_4(%arg0: i32) -> (i32, i32) {
    %c0_i32 = arith.constant 0 : i32
    %c0_i32_0 = arith.constant 0 : i32
    %c0_i32_1 = arith.constant 0 : i32
    return %c0_i32, %c0_i32_0 : i32, i32
  }
  func.func @transform_5(%arg0: i32) -> (i32, i32) {
    %c0_i32 = arith.constant 0 : i32
    %c0_i32_0 = arith.constant 0 : i32
    %c0_i32_1 = arith.constant 0 : i32
    return %c0_i32, %c0_i32_0 : i32, i32
  }
  func.func @transform_6(%arg0: i32) -> (i32, i32) {
    %c0_i32 = arith.constant 0 : i32
    %c0_i32_0 = arith.constant 0 : i32
    %c0_i32_1 = arith.constant 0 : i32
    return %c0_i32, %c0_i32_0 : i32, i32
  }
  func.func @transform_7(%arg0: i32) -> (i32, i32) {
    %c0_i32 = arith.constant 0 : i32
    %c0_i32_0 = arith.constant 0 : i32
    %c0_i32_1 = arith.constant 0 : i32
    return %c0_i32, %c0_i32_0 : i32, i32
  }
  func.func @transform_8(%arg0: i32) -> (i32, i32) {
    %c0_i32 = arith.constant 0 : i32
    %c0_i32_0 = arith.constant 0 : i32
    %c0_i32_1 = arith.constant 0 : i32
    return %c0_i32, %c0_i32_0 : i32, i32
  }
  func.func @transform_9(%arg0: i32) -> (i32, i32) {
    %c0_i32 = arith.constant 0 : i32
    %c0_i32_0 = arith.constant 0 : i32
    %c0_i32_1 = arith.constant 0 : i32
    return %c0_i32, %c0_i32_0 : i32, i32
  }
  func.func @transform_10(%arg0: i32) -> (i32, i32) {
    %c0_i32 = arith.constant 0 : i32
    %c0_i32_0 = arith.constant 0 : i32
    return %arg0, %c0_i32 : i32, i32
  }
}

module attributes {stable_mosaic.version = 11 : i64} {
  func.func @kernel(%arg0: i32, %arg1: memref<64x32xbf16, #tpu.memory_space<vmem>>, %arg2: memref<32x64xbf16, #tpu.memory_space<vmem>>, %arg3: memref<1x64xf32, #tpu.memory_space<vmem>>, %arg4: memref<64x32xbf16, #tpu.memory_space<vmem>>, %arg5: memref<1x32xf32, #tpu.memory_space<vmem>>, %arg6: memref<1x32xf32, #tpu.memory_space<vmem>>, %arg7: memref<64x32xbf16, #tpu.memory_space<vmem>>, %arg8: memref<64x32xbf16, #tpu.memory_space<vmem>>) attributes {dimension_semantics = [#tpu.dimension_semantics<parallel>], iteration_bounds = array<i64: 1>, scalar_prefetch = 0 : i64, scratch_operands = 0 : i64, tpu.core_type = #tpu.core_type<tc>, window_params = [{transform_indices = @transform_0, window_bounds = array<i64: 64, 32>}, {pipeline_mode = #tpu.pipeline_mode<synchronous>, transform_indices = @transform_1, window_bounds = array<i64: 32, 64>}, {pipeline_mode = #tpu.pipeline_mode<synchronous>, transform_indices = @transform_2, window_bounds = array<i64: 1, 64>}, {pipeline_mode = #tpu.pipeline_mode<synchronous>, transform_indices = @transform_3, window_bounds = array<i64: 64, 32>}, {pipeline_mode = #tpu.pipeline_mode<synchronous>, transform_indices = @transform_4, window_bounds = array<i64: 1, 32>}, {pipeline_mode = #tpu.pipeline_mode<synchronous>, transform_indices = @transform_5, window_bounds = array<i64: 1, 32>}, {transform_indices = @transform_6, window_bounds = array<i64: 64, 32>}, {transform_indices = @transform_7, window_bounds = array<i64: 64, 32>}]} {
    %c0 = arith.constant 0 : index
    %c0_0 = arith.constant 0 : index
    %0 = vector.load %arg1[%c0, %c0_0] : memref<64x32xbf16, #tpu.memory_space<vmem>>, vector<64x32xbf16>
    %c0_1 = arith.constant 0 : index
    %c0_2 = arith.constant 0 : index
    %1 = vector.load %arg2[%c0_1, %c0_2] : memref<32x64xbf16, #tpu.memory_space<vmem>>, vector<32x64xbf16>
    %cst = arith.constant dense<0.000000e+00> : vector<64x64xf32>
    %2 = tpu.matmul %0, %1, %cst {dimension_numbers = #tpu.dot_dimension_numbers<[1], [0], [0], [1], [0, 0, 1, 1], [], []>} : vector<64x32xbf16>, vector<32x64xbf16>, vector<64x64xf32> -> vector<64x64xf32>
    %c0_3 = arith.constant 0 : index
    %c0_4 = arith.constant 0 : index
    %3 = vector.load %arg3[%c0_3, %c0_4] : memref<1x64xf32, #tpu.memory_space<vmem>>, vector<1x64xf32>
    %4 = vector.broadcast %3 : vector<1x64xf32> to vector<64x64xf32>
    %5 = arith.addf %2, %4 : vector<64x64xf32>
    %cst_5 = arith.constant 5.000000e-01 : f32
    %6 = vector.broadcast %cst_5 : f32 to vector<64x64xf32>
    %7 = arith.mulf %6, %5 : vector<64x64xf32>
    %cst_6 = arith.constant 4.471500e-02 : f32
    %8 = vector.broadcast %cst_6 : f32 to vector<64x64xf32>
    %9 = arith.mulf %8, %5 : vector<64x64xf32>
    %10 = arith.mulf %9, %5 : vector<64x64xf32>
    %11 = arith.mulf %10, %5 : vector<64x64xf32>
    %12 = arith.addf %5, %11 : vector<64x64xf32>
    %cst_7 = arith.constant 0.797884583 : f32
    %13 = vector.broadcast %cst_7 : f32 to vector<64x64xf32>
    %14 = arith.mulf %13, %12 : vector<64x64xf32>
    %15 = math.tanh %14 : vector<64x64xf32>
    %cst_8 = arith.constant 1.000000e+00 : f32
    %16 = vector.broadcast %cst_8 : f32 to vector<64x64xf32>
    %17 = arith.addf %16, %15 : vector<64x64xf32>
    %18 = arith.mulf %7, %17 : vector<64x64xf32>
    %c0_9 = arith.constant 0 : index
    %c0_10 = arith.constant 0 : index
    %19 = vector.load %arg4[%c0_9, %c0_10] : memref<64x32xbf16, #tpu.memory_space<vmem>>, vector<64x32xbf16>
    %20 = arith.truncf %18 : vector<64x64xf32> to vector<64x64xbf16>
    %cst_11 = arith.constant dense<0.000000e+00> : vector<64x32xf32>
    %21 = tpu.matmul %20, %19, %cst_11 {dimension_numbers = #tpu.dot_dimension_numbers<[1], [0], [0], [1], [0, 0, 1, 1], [], []>} : vector<64x64xbf16>, vector<64x32xbf16>, vector<64x32xf32> -> vector<64x32xf32>
    %c0_12 = arith.constant 0 : index
    %c0_13 = arith.constant 0 : index
    %22 = vector.load %arg5[%c0_12, %c0_13] : memref<1x32xf32, #tpu.memory_space<vmem>>, vector<1x32xf32>
    %23 = vector.broadcast %22 : vector<1x32xf32> to vector<64x32xf32>
    %24 = arith.mulf %21, %23 : vector<64x32xf32>
    %c0_14 = arith.constant 0 : index
    %c0_15 = arith.constant 0 : index
    %25 = vector.load %arg6[%c0_14, %c0_15] : memref<1x32xf32, #tpu.memory_space<vmem>>, vector<1x32xf32>
    %26 = vector.broadcast %25 : vector<1x32xf32> to vector<64x32xf32>
    %27 = arith.addf %24, %26 : vector<64x32xf32>
    %c0_16 = arith.constant 0 : index
    %c0_17 = arith.constant 0 : index
    %28 = vector.load %arg7[%c0_16, %c0_17] : memref<64x32xbf16, #tpu.memory_space<vmem>>, vector<64x32xbf16>
    %29 = arith.extf %28 : vector<64x32xbf16> to vector<64x32xf32>
    %30 = arith.addf %27, %29 : vector<64x32xf32>
    %31 = arith.truncf %30 : vector<64x32xf32> to vector<64x32xbf16>
    %c0_18 = arith.constant 0 : index
    %c0_19 = arith.constant 0 : index
    %32 = vector.load %arg8[%c0_18, %c0_19] : memref<64x32xbf16, #tpu.memory_space<vmem>>, vector<64x32xbf16>
    tpu.vector_store %arg8[%c0_18, %c0_19], %31 {strides = array<i32>} : memref<64x32xbf16, #tpu.memory_space<vmem>>, vector<64x32xbf16>,
    return
  }
  func.func @transform_0(%arg0: i32) -> (i32, i32) {
    %c0_i32 = arith.constant 0 : i32
    %c0_i32_0 = arith.constant 0 : i32
    return %arg0, %c0_i32 : i32, i32
  }
  func.func @transform_1(%arg0: i32) -> (i32, i32) {
    %c0_i32 = arith.constant 0 : i32
    %c0_i32_0 = arith.constant 0 : i32
    %c0_i32_1 = arith.constant 0 : i32
    return %c0_i32, %c0_i32_0 : i32, i32
  }
  func.func @transform_2(%arg0: i32) -> (i32, i32) {
    %c0_i32 = arith.constant 0 : i32
    %c0_i32_0 = arith.constant 0 : i32
    %c0_i32_1 = arith.constant 0 : i32
    return %c0_i32, %c0_i32_0 : i32, i32
  }
  func.func @transform_3(%arg0: i32) -> (i32, i32) {
    %c0_i32 = arith.constant 0 : i32
    %c0_i32_0 = arith.constant 0 : i32
    %c0_i32_1 = arith.constant 0 : i32
    return %c0_i32, %c0_i32_0 : i32, i32
  }
  func.func @transform_4(%arg0: i32) -> (i32, i32) {
    %c0_i32 = arith.constant 0 : i32
    %c0_i32_0 = arith.constant 0 : i32
    %c0_i32_1 = arith.constant 0 : i32
    return %c0_i32, %c0_i32_0 : i32, i32
  }
  func.func @transform_5(%arg0: i32) -> (i32, i32) {
    %c0_i32 = arith.constant 0 : i32
    %c0_i32_0 = arith.constant 0 : i32
    %c0_i32_1 = arith.constant 0 : i32
    return %c0_i32, %c0_i32_0 : i32, i32
  }
  func.func @transform_6(%arg0: i32) -> (i32, i32) {
    %c0_i32 = arith.constant 0 : i32
    %c0_i32_0 = arith.constant 0 : i32
    return %arg0, %c0_i32 : i32, i32
  }
  func.func @transform_7(%arg0: i32) -> (i32, i32) {
    %c0_i32 = arith.constant 0 : i32
    %c0_i32_0 = arith.constant 0 : i32
    return %arg0, %c0_i32 : i32, i32
  }
}

module attributes {stable_mosaic.version = 11 : i64} {
  func.func @kernel(%arg0: i32, %arg1: memref<64x32xbf16, #tpu.memory_space<vmem>>, %arg2: memref<32x32xbf16, #tpu.memory_space<vmem>>, %arg3: memref<1x32xf32, #tpu.memory_space<vmem>>, %arg4: memref<1x32xf32, #tpu.memory_space<vmem>>, %arg5: memref<64x32xbf16, #tpu.memory_space<vmem>>) attributes {dimension_semantics = [#tpu.dimension_semantics<parallel>], iteration_bounds = array<i64: 1>, scalar_prefetch = 0 : i64, scratch_operands = 0 : i64, tpu.core_type = #tpu.core_type<tc>, window_params = [{transform_indices = @transform_0, window_bounds = array<i64: 64, 32>}, {pipeline_mode = #tpu.pipeline_mode<synchronous>, transform_indices = @transform_1, window_bounds = array<i64: 32, 32>}, {pipeline_mode = #tpu.pipeline_mode<synchronous>, transform_indices = @transform_2, window_bounds = array<i64: 1, 32>}, {pipeline_mode = #tpu.pipeline_mode<synchronous>, transform_indices = @transform_3, window_bounds = array<i64: 1, 32>}, {transform_indices = @transform_4, window_bounds = array<i64: 64, 32>}]} {
    %c0 = arith.constant 0 : index
    %c0_0 = arith.constant 0 : index
    %0 = vector.load %arg1[%c0, %c0_0] : memref<64x32xbf16, #tpu.memory_space<vmem>>, vector<64x32xbf16>
    %c0_1 = arith.constant 0 : index
    %c0_2 = arith.constant 0 : index
    %1 = vector.load %arg2[%c0_1, %c0_2] : memref<32x32xbf16, #tpu.memory_space<vmem>>, vector<32x32xbf16>
    %cst = arith.constant dense<0.000000e+00> : vector<64x32xf32>
    %2 = tpu.matmul %0, %1, %cst {dimension_numbers = #tpu.dot_dimension_numbers<[1], [0], [0], [1], [0, 0, 1, 1], [], []>} : vector<64x32xbf16>, vector<32x32xbf16>, vector<64x32xf32> -> vector<64x32xf32>
    %c0_3 = arith.constant 0 : index
    %c0_4 = arith.constant 0 : index
    %3 = vector.load %arg3[%c0_3, %c0_4] : memref<1x32xf32, #tpu.memory_space<vmem>>, vector<1x32xf32>
    %4 = vector.broadcast %3 : vector<1x32xf32> to vector<64x32xf32>
    %5 = arith.mulf %2, %4 : vector<64x32xf32>
    %c0_5 = arith.constant 0 : index
    %c0_6 = arith.constant 0 : index
    %6 = vector.load %arg4[%c0_5, %c0_6] : memref<1x32xf32, #tpu.memory_space<vmem>>, vector<1x32xf32>
    %7 = vector.broadcast %6 : vector<1x32xf32> to vector<64x32xf32>
    %8 = arith.addf %5, %7 : vector<64x32xf32>
    %9 = arith.truncf %8 : vector<64x32xf32> to vector<64x32xbf16>
    %c0_7 = arith.constant 0 : index
    %c0_8 = arith.constant 0 : index
    %10 = vector.load %arg5[%c0_7, %c0_8] : memref<64x32xbf16, #tpu.memory_space<vmem>>, vector<64x32xbf16>
    tpu.vector_store %arg5[%c0_7, %c0_8], %9 {strides = array<i32>} : memref<64x32xbf16, #tpu.memory_space<vmem>>, vector<64x32xbf16>,
    return
  }
  func.func @transform_0(%arg0: i32) -> (i32, i32) {
    %c0_i32 = arith.constant 0 : i32
    %c0_i32_0 = arith.constant 0 : i32
    return %arg0, %c0_i32 : i32, i32
  }
  func.func @transform_1(%arg0: i32) -> (i32, i32) {
    %c0_i32 = arith.constant 0 : i32
    %c0_i32_0 = arith.constant 0 : i32
    %c0_i32_1 = arith.constant 0 : i32
    return %c0_i32, %c0_i32_0 : i32, i32
  }
  func.func @transform_2(%arg0: i32) -> (i32, i32) {
    %c0_i32 = arith.constant 0 : i32
    %c0_i32_0 = arith.constant 0 : i32
    %c0_i32_1 = arith.constant 0 : i32
    return %c0_i32, %c0_i32_0 : i32, i32
  }
  func.func @transform_3(%arg0: i32) -> (i32, i32) {
    %c0_i32 = arith.constant 0 : i32
    %c0_i32_0 = arith.constant 0 : i32
    %c0_i32_1 = arith.constant 0 : i32
    return %c0_i32, %c0_i32_0 : i32, i32
  }
  func.func @transform_4(%arg0: i32) -> (i32, i32) {
    %c0_i32 = arith.constant 0 : i32
    %c0_i32_0 = arith.constant 0 : i32
    return %arg0, %c0_i32 : i32, i32
  }
}

module attributes {stable_mosaic.version = 11 : i64} {
  func.func @kernel(%arg0: i32, %arg1: memref<64x256xbf16, #tpu.memory_space<vmem>>, %arg2: memref<64x32xbf16, #tpu.memory_space<vmem>>, %arg3: memref<1x32xf32, #tpu.memory_space<vmem>>, %arg4: memref<1x32xf32, #tpu.memory_space<vmem>>, %arg5: memref<64x32xbf16, #tpu.memory_space<vmem>>, %arg6: memref<64x32xbf16, #tpu.memory_space<vmem>>) attributes {dimension_semantics = [#tpu.dimension_semantics<parallel>], iteration_bounds = array<i64: 1>, scalar_prefetch = 0 : i64, scratch_operands = 0 : i64, tpu.core_type = #tpu.core_type<tc>, window_params = [{transform_indices = @transform_0, window_bounds = array<i64: 64, 256>}, {transform_indices = @transform_1, window_bounds = array<i64: 64, 32>}, {pipeline_mode = #tpu.pipeline_mode<synchronous>, transform_indices = @transform_2, window_bounds = array<i64: 1, 32>}, {pipeline_mode = #tpu.pipeline_mode<synchronous>, transform_indices = @transform_3, window_bounds = array<i64: 1, 32>}, {transform_indices = @transform_4, window_bounds = array<i64: 64, 32>}, {transform_indices = @transform_5, window_bounds = array<i64: 64, 32>}]} {
    %c0 = arith.constant 0 : index
    %c0_0 = arith.constant 0 : index
    %0 = vector.load %arg1[%c0, %c0_0] : memref<64x256xbf16, #tpu.memory_space<vmem>>, vector<64x256xbf16>
    %1 = arith.extf %0 : vector<64x256xbf16> to vector<64x256xf32>
    %c32_i32 = arith.constant 32 : i32
    %2 = tpu.dynamic_rotate %1 by %c32_i32 dim 1 : vector<64x256xf32>, i32 -> vector<64x256xf32>
    %3 = arith.maximumf %1, %2 : vector<64x256xf32>
    %c64_i32 = arith.constant 64 : i32
    %4 = tpu.dynamic_rotate %3 by %c64_i32 dim 1 : vector<64x256xf32>, i32 -> vector<64x256xf32>
    %5 = arith.maximumf %3, %4 : vector<64x256xf32>
    %c128_i32 = arith.constant 128 : i32
    %6 = tpu.dynamic_rotate %5 by %c128_i32 dim 1 : vector<64x256xf32>, i32 -> vector<64x256xf32>
    %7 = arith.maximumf %5, %6 : vector<64x256xf32>
    %8 = vector.extract_strided_slice %7 {offsets = [0, 0], sizes = [64, 32], strides = [1, 1]} : vector<64x256xf32> to vector<64x32xf32>
    %c0_1 = arith.constant 0 : index
    %c0_2 = arith.constant 0 : index
    %9 = vector.load %arg2[%c0_1, %c0_2] : memref<64x32xbf16, #tpu.memory_space<vmem>>, vector<64x32xbf16>
    %10 = arith.extf %9 : vector<64x32xbf16> to vector<64x32xf32>
    %11 = arith.subf %8, %10 : vector<64x32xf32>
    %c0_3 = arith.constant 0 : index
    %c0_4 = arith.constant 0 : index
    %12 = vector.load %arg3[%c0_3, %c0_4] : memref<1x32xf32, #tpu.memory_space<vmem>>, vector<1x32xf32>
    %13 = vector.broadcast %12 : vector<1x32xf32> to vector<64x32xf32>
    %14 = arith.mulf %11, %13 : vector<64x32xf32>
    %c0_5 = arith.constant 0 : index
    %c0_6 = arith.constant 0 : index
    %15 = vector.load %arg4[%c0_5, %c0_6] : memref<1x32xf32, #tpu.memory_space<vmem>>, vector<1x32xf32>
    %16 = vector.broadcast %15 : vector<1x32xf32> to vector<64x32xf32>
    %17 = arith.addf %14, %16 : vector<64x32xf32>
    %c0_7 = arith.constant 0 : index
    %c0_8 = arith.constant 0 : index
    %18 = vector.load %arg5[%c0_7, %c0_8] : memref<64x32xbf16, #tpu.memory_space<vmem>>, vector<64x32xbf16>
    %19 = arith.extf %18 : vector<64x32xbf16> to vector<64x32xf32>
    %20 = arith.addf %17, %19 : vector<64x32xf32>
    %21 = arith.truncf %20 : vector<64x32xf32> to vector<64x32xbf16>
    %c0_9 = arith.constant 0 : index
    %c0_10 = arith.constant 0 : index
    %22 = vector.load %arg6[%c0_9, %c0_10] : memref<64x32xbf16, #tpu.memory_space<vmem>>, vector<64x32xbf16>
    tpu.vector_store %arg6[%c0_9, %c0_10], %21 {strides = array<i32>} : memref<64x32xbf16, #tpu.memory_space<vmem>>, vector<64x32xbf16>,
    return
  }
  func.func @transform_0(%arg0: i32) -> (i32, i32) {
    %c0_i32 = arith.constant 0 : i32
    %c0_i32_0 = arith.constant 0 : i32
    return %arg0, %c0_i32 : i32, i32
  }
  func.func @transform_1(%arg0: i32) -> (i32, i32) {
    %c0_i32 = arith.constant 0 : i32
    %c0_i32_0 = arith.constant 0 : i32
    return %arg0, %c0_i32 : i32, i32
  }
  func.func @transform_2(%arg0: i32) -> (i32, i32) {
    %c0_i32 = arith.constant 0 : i32
    %c0_i32_0 = arith.constant 0 : i32
    %c0_i32_1 = arith.constant 0 : i32
    return %c0_i32, %c0_i32_0 : i32, i32
  }
  func.func @transform_3(%arg0: i32) -> (i32, i32) {
    %c0_i32 = arith.constant 0 : i32
    %c0_i32_0 = arith.constant 0 : i32
    %c0_i32_1 = arith.constant 0 : i32
    return %c0_i32, %c0_i32_0 : i32, i32
  }
  func.func @transform_4(%arg0: i32) -> (i32, i32) {
    %c0_i32 = arith.constant 0 : i32
    %c0_i32_0 = arith.constant 0 : i32
    return %arg0, %c0_i32 : i32, i32
  }
  func.func @transform_5(%arg0: i32) -> (i32, i32) {
    %c0_i32 = arith.constant 0 : i32
    %c0_i32_0 = arith.constant 0 : i32
    return %arg0, %c0_i32 : i32, i32
  }
}

module attributes {stable_mosaic.version = 11 : i64} {
  func.func @kernel(%arg0: i32, %arg1: memref<64x32xbf16, #tpu.memory_space<vmem>>, %arg2: memref<32x64xbf16, #tpu.memory_space<vmem>>, %arg3: memref<1x64xf32, #tpu.memory_space<vmem>>, %arg4: memref<1x64xf32, #tpu.memory_space<vmem>>, %arg5: memref<64x64xbf16, #tpu.memory_space<vmem>>) attributes {dimension_semantics = [#tpu.dimension_semantics<parallel>], iteration_bounds = array<i64: 1>, scalar_prefetch = 0 : i64, scratch_operands = 0 : i64, tpu.core_type = #tpu.core_type<tc>, window_params = [{transform_indices = @transform_0, window_bounds = array<i64: 64, 32>}, {pipeline_mode = #tpu.pipeline_mode<synchronous>, transform_indices = @transform_1, window_bounds = array<i64: 32, 64>}, {pipeline_mode = #tpu.pipeline_mode<synchronous>, transform_indices = @transform_2, window_bounds = array<i64: 1, 64>}, {pipeline_mode = #tpu.pipeline_mode<synchronous>, transform_indices = @transform_3, window_bounds = array<i64: 1, 64>}, {transform_indices = @transform_4, window_bounds = array<i64: 64, 64>}]} {
    %c0 = arith.constant 0 : index
    %c0_0 = arith.constant 0 : index
    %0 = vector.load %arg1[%c0, %c0_0] : memref<64x32xbf16, #tpu.memory_space<vmem>>, vector<64x32xbf16>
    %c0_1 = arith.constant 0 : index
    %c0_2 = arith.constant 0 : index
    %1 = vector.load %arg2[%c0_1, %c0_2] : memref<32x64xbf16, #tpu.memory_space<vmem>>, vector<32x64xbf16>
    %cst = arith.constant dense<0.000000e+00> : vector<64x64xf32>
    %2 = tpu.matmul %0, %1, %cst {dimension_numbers = #tpu.dot_dimension_numbers<[1], [0], [0], [1], [0, 0, 1, 1], [], []>} : vector<64x32xbf16>, vector<32x64xbf16>, vector<64x64xf32> -> vector<64x64xf32>
    %c0_3 = arith.constant 0 : index
    %c0_4 = arith.constant 0 : index
    %3 = vector.load %arg3[%c0_3, %c0_4] : memref<1x64xf32, #tpu.memory_space<vmem>>, vector<1x64xf32>
    %4 = vector.broadcast %3 : vector<1x64xf32> to vector<64x64xf32>
    %5 = arith.mulf %2, %4 : vector<64x64xf32>
    %c0_5 = arith.constant 0 : index
    %c0_6 = arith.constant 0 : index
    %6 = vector.load %arg4[%c0_5, %c0_6] : memref<1x64xf32, #tpu.memory_space<vmem>>, vector<1x64xf32>
    %7 = vector.broadcast %6 : vector<1x64xf32> to vector<64x64xf32>
    %8 = arith.addf %5, %7 : vector<64x64xf32>
    %9 = arith.truncf %8 : vector<64x64xf32> to vector<64x64xbf16>
    %c0_7 = arith.constant 0 : index
    %c0_8 = arith.constant 0 : index
    %10 = vector.load %arg5[%c0_7, %c0_8] : memref<64x64xbf16, #tpu.memory_space<vmem>>, vector<64x64xbf16>
    tpu.vector_store %arg5[%c0_7, %c0_8], %9 {strides = array<i32>} : memref<64x64xbf16, #tpu.memory_space<vmem>>, vector<64x64xbf16>,
    return
  }
  func.func @transform_0(%arg0: i32) -> (i32, i32) {
    %c0_i32 = arith.constant 0 : i32
    %c0_i32_0 = arith.constant 0 : i32
    return %arg0, %c0_i32 : i32, i32
  }
  func.func @transform_1(%arg0: i32) -> (i32, i32) {
    %c0_i32 = arith.constant 0 : i32
    %c0_i32_0 = arith.constant 0 : i32
    %c0_i32_1 = arith.constant 0 : i32
    return %c0_i32, %c0_i32_0 : i32, i32
  }
  func.func @transform_2(%arg0: i32) -> (i32, i32) {
    %c0_i32 = arith.constant 0 : i32
    %c0_i32_0 = arith.constant 0 : i32
    %c0_i32_1 = arith.constant 0 : i32
    return %c0_i32, %c0_i32_0 : i32, i32
  }
  func.func @transform_3(%arg0: i32) -> (i32, i32) {
    %c0_i32 = arith.constant 0 : i32
    %c0_i32_0 = arith.constant 0 : i32
    %c0_i32_1 = arith.constant 0 : i32
    return %c0_i32, %c0_i32_0 : i32, i32
  }
  func.func @transform_4(%arg0: i32) -> (i32, i32) {
    %c0_i32 = arith.constant 0 : i32
    %c0_i32_0 = arith.constant 0 : i32
    return %arg0, %c0_i32 : i32, i32
  }
}

module attributes {stable_mosaic.version = 11 : i64} {
  func.func @kernel(%arg0: i32, %arg1: memref<64x512xbf16, #tpu.memory_space<vmem>>, %arg2: memref<64x64xbf16, #tpu.memory_space<vmem>>, %arg3: memref<1x64xf32, #tpu.memory_space<vmem>>, %arg4: memref<1x64xf32, #tpu.memory_space<vmem>>, %arg5: memref<64x64xbf16, #tpu.memory_space<vmem>>, %arg6: memref<64x64xbf16, #tpu.memory_space<vmem>>) attributes {dimension_semantics = [#tpu.dimension_semantics<parallel>], iteration_bounds = array<i64: 1>, scalar_prefetch = 0 : i64, scratch_operands = 0 : i64, tpu.core_type = #tpu.core_type<tc>, window_params = [{transform_indices = @transform_0, window_bounds = array<i64: 64, 512>}, {transform_indices = @transform_1, window_bounds = array<i64: 64, 64>}, {pipeline_mode = #tpu.pipeline_mode<synchronous>, transform_indices = @transform_2, window_bounds = array<i64: 1, 64>}, {pipeline_mode = #tpu.pipeline_mode<synchronous>, transform_indices = @transform_3, window_bounds = array<i64: 1, 64>}, {transform_indices = @transform_4, window_bounds = array<i64: 64, 64>}, {transform_indices = @transform_5, window_bounds = array<i64: 64, 64>}]} {
    %c0 = arith.constant 0 : index
    %c0_0 = arith.constant 0 : index
    %0 = vector.load %arg1[%c0, %c0_0] : memref<64x512xbf16, #tpu.memory_space<vmem>>, vector<64x512xbf16>
    %1 = arith.extf %0 : vector<64x512xbf16> to vector<64x512xf32>
    %c64_i32 = arith.constant 64 : i32
    %2 = tpu.dynamic_rotate %1 by %c64_i32 dim 1 : vector<64x512xf32>, i32 -> vector<64x512xf32>
    %3 = arith.maximumf %1, %2 : vector<64x512xf32>
    %c128_i32 = arith.constant 128 : i32
    %4 = tpu.dynamic_rotate %3 by %c128_i32 dim 1 : vector<64x512xf32>, i32 -> vector<64x512xf32>
    %5 = arith.maximumf %3, %4 : vector<64x512xf32>
    %c256_i32 = arith.constant 256 : i32
    %6 = tpu.dynamic_rotate %5 by %c256_i32 dim 1 : vector<64x512xf32>, i32 -> vector<64x512xf32>
    %7 = arith.maximumf %5, %6 : vector<64x512xf32>
    %8 = vector.extract_strided_slice %7 {offsets = [0, 0], sizes = [64, 64], strides = [1, 1]} : vector<64x512xf32> to vector<64x64xf32>
    %c0_1 = arith.constant 0 : index
    %c0_2 = arith.constant 0 : index
    %9 = vector.load %arg2[%c0_1, %c0_2] : memref<64x64xbf16, #tpu.memory_space<vmem>>, vector<64x64xbf16>
    %10 = arith.extf %9 : vector<64x64xbf16> to vector<64x64xf32>
    %11 = arith.subf %8, %10 : vector<64x64xf32>
    %c0_3 = arith.constant 0 : index
    %c0_4 = arith.constant 0 : index
    %12 = vector.load %arg3[%c0_3, %c0_4] : memref<1x64xf32, #tpu.memory_space<vmem>>, vector<1x64xf32>
    %13 = vector.broadcast %12 : vector<1x64xf32> to vector<64x64xf32>
    %14 = arith.mulf %11, %13 : vector<64x64xf32>
    %c0_5 = arith.constant 0 : index
    %c0_6 = arith.constant 0 : index
    %15 = vector.load %arg4[%c0_5, %c0_6] : memref<1x64xf32, #tpu.memory_space<vmem>>, vector<1x64xf32>
    %16 = vector.broadcast %15 : vector<1x64xf32> to vector<64x64xf32>
    %17 = arith.addf %14, %16 : vector<64x64xf32>
    %c0_7 = arith.constant 0 : index
    %c0_8 = arith.constant 0 : index
    %18 = vector.load %arg5[%c0_7, %c0_8] : memref<64x64xbf16, #tpu.memory_space<vmem>>, vector<64x64xbf16>
    %19 = arith.extf %18 : vector<64x64xbf16> to vector<64x64xf32>
    %20 = arith.addf %17, %19 : vector<64x64xf32>
    %21 = arith.truncf %20 : vector<64x64xf32> to vector<64x64xbf16>
    %c0_9 = arith.constant 0 : index
    %c0_10 = arith.constant 0 : index
    %22 = vector.load %arg6[%c0_9, %c0_10] : memref<64x64xbf16, #tpu.memory_space<vmem>>, vector<64x64xbf16>
    tpu.vector_store %arg6[%c0_9, %c0_10], %21 {strides = array<i32>} : memref<64x64xbf16, #tpu.memory_space<vmem>>, vector<64x64xbf16>,
    return
  }
  func.func @transform_0(%arg0: i32) -> (i32, i32) {
    %c0_i32 = arith.constant 0 : i32
    %c0_i32_0 = arith.constant 0 : i32
    return %arg0, %c0_i32 : i32, i32
  }
  func.func @transform_1(%arg0: i32) -> (i32, i32) {
    %c0_i32 = arith.constant 0 : i32
    %c0_i32_0 = arith.constant 0 : i32
    return %arg0, %c0_i32 : i32, i32
  }
  func.func @transform_2(%arg0: i32) -> (i32, i32) {
    %c0_i32 = arith.constant 0 : i32
    %c0_i32_0 = arith.constant 0 : i32
    %c0_i32_1 = arith.constant 0 : i32
    return %c0_i32, %c0_i32_0 : i32, i32
  }
  func.func @transform_3(%arg0: i32) -> (i32, i32) {
    %c0_i32 = arith.constant 0 : i32
    %c0_i32_0 = arith.constant 0 : i32
    %c0_i32_1 = arith.constant 0 : i32
    return %c0_i32, %c0_i32_0 : i32, i32
  }
  func.func @transform_4(%arg0: i32) -> (i32, i32) {
    %c0_i32 = arith.constant 0 : i32
    %c0_i32_0 = arith.constant 0 : i32
    return %arg0, %c0_i32 : i32, i32
  }
  func.func @transform_5(%arg0: i32) -> (i32, i32) {
    %c0_i32 = arith.constant 0 : i32
    %c0_i32_0 = arith.constant 0 : i32
    return %arg0, %c0_i32 : i32, i32
  }
}

module attributes {stable_mosaic.version = 11 : i64} {
  func.func @kernel(%arg0: i32, %arg1: memref<8x32x3xf32, #tpu.memory_space<vmem>>, %arg2: memref<3x4xf32, #tpu.memory_space<vmem>>, %arg3: memref<1x4xf32, #tpu.memory_space<vmem>>, %arg4: memref<1x4xf32, #tpu.memory_space<vmem>>, %arg5: memref<4x8xbf16, #tpu.memory_space<vmem>>, %arg6: memref<1x8xf32, #tpu.memory_space<vmem>>, %arg7: memref<1x8xf32, #tpu.memory_space<vmem>>, %arg8: memref<8x16xbf16, #tpu.memory_space<vmem>>, %arg9: memref<16x64xbf16, #tpu.memory_space<vmem>>, %arg10: memref<1x64xf32, #tpu.memory_space<vmem>>, %arg11: memref<1x64xf32, #tpu.memory_space<vmem>>, %arg12: memref<32x64xbf16, #tpu.memory_space<vmem>>, %arg13: memref<32x64xbf16, #tpu.memory_space<vmem>>) attributes {dimension_semantics = [#tpu.dimension_semantics<parallel>], iteration_bounds = array<i64: 1>, scalar_prefetch = 0 : i64, scratch_operands = 0 : i64, tpu.core_type = #tpu.core_type<tc>, window_params = [{transform_indices = @transform_0, window_bounds = array<i64: 8, 32, 3>}, {pipeline_mode = #tpu.pipeline_mode<synchronous>, transform_indices = @transform_1, window_bounds = array<i64: 3, 4>}, {pipeline_mode = #tpu.pipeline_mode<synchronous>, transform_indices = @transform_2, window_bounds = array<i64: 1, 4>}, {pipeline_mode = #tpu.pipeline_mode<synchronous>, transform_indices = @transform_3, window_bounds = array<i64: 1, 4>}, {pipeline_mode = #tpu.pipeline_mode<synchronous>, transform_indices = @transform_4, window_bounds = array<i64: 4, 8>}, {pipeline_mode = #tpu.pipeline_mode<synchronous>, transform_indices = @transform_5, window_bounds = array<i64: 1, 8>}, {pipeline_mode = #tpu.pipeline_mode<synchronous>, transform_indices = @transform_6, window_bounds = array<i64: 1, 8>}, {pipeline_mode = #tpu.pipeline_mode<synchronous>, transform_indices = @transform_7, window_bounds = array<i64: 8, 16>}, {pipeline_mode = #tpu.pipeline_mode<synchronous>, transform_indices = @transform_8, window_bounds = array<i64: 16, 64>}, {pipeline_mode = #tpu.pipeline_mode<synchronous>, transform_indices = @transform_9, window_bounds = array<i64: 1, 64>}, {pipeline_mode = #tpu.pipeline_mode<synchronous>, transform_indices = @transform_10, window_bounds = array<i64: 1, 64>}, {transform_indices = @transform_11, window_bounds = array<i64: 32, 64>}, {transform_indices = @transform_12, window_bounds = array<i64: 32, 64>}]} {
    %c0 = arith.constant 0 : index
    %c0_0 = arith.constant 0 : index
    %c0_1 = arith.constant 0 : index
    %0 = vector.load %arg1[%c0, %c0_0, %c0_1] : memref<8x32x3xf32, #tpu.memory_space<vmem>>, vector<8x32x3xf32>
    %1 = vector.shape_cast %0 : vector<8x32x3xf32> to vector<256x3xf32>
    %c0_2 = arith.constant 0 : index
    %c0_3 = arith.constant 0 : index
    %2 = vector.load %arg2[%c0_2, %c0_3] : memref<3x4xf32, #tpu.memory_space<vmem>>, vector<3x4xf32>
    %cst = arith.constant dense<0.000000e+00> : vector<256x4xf32>
    %3 = tpu.matmul %1, %2, %cst {dimension_numbers = #tpu.dot_dimension_numbers<[1], [0], [0], [1], [0, 0, 1, 1], [], []>} : vector<256x3xf32>, vector<3x4xf32>, vector<256x4xf32> -> vector<256x4xf32>
    %c0_4 = arith.constant 0 : index
    %c0_5 = arith.constant 0 : index
    %4 = vector.load %arg3[%c0_4, %c0_5] : memref<1x4xf32, #tpu.memory_space<vmem>>, vector<1x4xf32>
    %5 = vector.broadcast %4 : vector<1x4xf32> to vector<256x4xf32>
    %6 = arith.mulf %3, %5 : vector<256x4xf32>
    %c0_6 = arith.constant 0 : index
    %c0_7 = arith.constant 0 : index
    %7 = vector.load %arg4[%c0_6, %c0_7] : memref<1x4xf32, #tpu.memory_space<vmem>>, vector<1x4xf32>
    %8 = vector.broadcast %7 : vector<1x4xf32> to vector<256x4xf32>
    %9 = arith.addf %6, %8 : vector<256x4xf32>
    %cst_8 = arith.constant 5.000000e-01 : f32
    %10 = vector.broadcast %cst_8 : f32 to vector<256x4xf32>
    %11 = arith.mulf %10, %9 : vector<256x4xf32>
    %cst_9 = arith.constant 4.471500e-02 : f32
    %12 = vector.broadcast %cst_9 : f32 to vector<256x4xf32>
    %13 = arith.mulf %12, %9 : vector<256x4xf32>
    %14 = arith.mulf %13, %9 : vector<256x4xf32>
    %15 = arith.mulf %14, %9 : vector<256x4xf32>
    %16 = arith.addf %9, %15 : vector<256x4xf32>
    %cst_10 = arith.constant 0.797884583 : f32
    %17 = vector.broadcast %cst_10 : f32 to vector<256x4xf32>
    %18 = arith.mulf %17, %16 : vector<256x4xf32>
    %19 = math.tanh %18 : vector<256x4xf32>
    %cst_11 = arith.constant 1.000000e+00 : f32
    %20 = vector.broadcast %cst_11 : f32 to vector<256x4xf32>
    %21 = arith.addf %20, %19 : vector<256x4xf32>
    %22 = arith.mulf %11, %21 : vector<256x4xf32>
    %c0_12 = arith.constant 0 : index
    %c0_13 = arith.constant 0 : index
    %23 = vector.load %arg5[%c0_12, %c0_13] : memref<4x8xbf16, #tpu.memory_space<vmem>>, vector<4x8xbf16>
    %24 = arith.truncf %22 : vector<256x4xf32> to vector<256x4xbf16>
    %cst_14 = arith.constant dense<0.000000e+00> : vector<256x8xf32>
    %25 = tpu.matmul %24, %23, %cst_14 {dimension_numbers = #tpu.dot_dimension_numbers<[1], [0], [0], [1], [0, 0, 1, 1], [], []>} : vector<256x4xbf16>, vector<4x8xbf16>, vector<256x8xf32> -> vector<256x8xf32>
    %c0_15 = arith.constant 0 : index
    %c0_16 = arith.constant 0 : index
    %26 = vector.load %arg6[%c0_15, %c0_16] : memref<1x8xf32, #tpu.memory_space<vmem>>, vector<1x8xf32>
    %27 = vector.broadcast %26 : vector<1x8xf32> to vector<256x8xf32>
    %28 = arith.mulf %25, %27 : vector<256x8xf32>
    %c0_17 = arith.constant 0 : index
    %c0_18 = arith.constant 0 : index
    %29 = vector.load %arg7[%c0_17, %c0_18] : memref<1x8xf32, #tpu.memory_space<vmem>>, vector<1x8xf32>
    %30 = vector.broadcast %29 : vector<1x8xf32> to vector<256x8xf32>
    %31 = arith.addf %28, %30 : vector<256x8xf32>
    %cst_19 = arith.constant 5.000000e-01 : f32
    %32 = vector.broadcast %cst_19 : f32 to vector<256x8xf32>
    %33 = arith.mulf %32, %31 : vector<256x8xf32>
    %cst_20 = arith.constant 4.471500e-02 : f32
    %34 = vector.broadcast %cst_20 : f32 to vector<256x8xf32>
    %35 = arith.mulf %34, %31 : vector<256x8xf32>
    %36 = arith.mulf %35, %31 : vector<256x8xf32>
    %37 = arith.mulf %36, %31 : vector<256x8xf32>
    %38 = arith.addf %31, %37 : vector<256x8xf32>
    %cst_21 = arith.constant 0.797884583 : f32
    %39 = vector.broadcast %cst_21 : f32 to vector<256x8xf32>
    %40 = arith.mulf %39, %38 : vector<256x8xf32>
    %41 = math.tanh %40 : vector<256x8xf32>
    %cst_22 = arith.constant 1.000000e+00 : f32
    %42 = vector.broadcast %cst_22 : f32 to vector<256x8xf32>
    %43 = arith.addf %42, %41 : vector<256x8xf32>
    %44 = arith.mulf %33, %43 : vector<256x8xf32>
    %c0_23 = arith.constant 0 : index
    %c0_24 = arith.constant 0 : index
    %45 = vector.load %arg8[%c0_23, %c0_24] : memref<8x16xbf16, #tpu.memory_space<vmem>>, vector<8x16xbf16>
    %46 = arith.truncf %44 : vector<256x8xf32> to vector<256x8xbf16>
    %cst_25 = arith.constant dense<0.000000e+00> : vector<256x16xf32>
    %47 = tpu.matmul %46, %45, %cst_25 {dimension_numbers = #tpu.dot_dimension_numbers<[1], [0], [0], [1], [0, 0, 1, 1], [], []>} : vector<256x8xbf16>, vector<8x16xbf16>, vector<256x16xf32> -> vector<256x16xf32>
    %48 = vector.extract_strided_slice %47 {offsets = [0, 0], sizes = [32, 16], strides = [1, 1]} : vector<256x16xf32> to vector<32x16xf32>
    %49 = vector.extract_strided_slice %47 {offsets = [32, 0], sizes = [32, 16], strides = [1, 1]} : vector<256x16xf32> to vector<32x16xf32>
    %50 = arith.maximumf %48, %49 : vector<32x16xf32>
    %51 = vector.extract_strided_slice %47 {offsets = [64, 0], sizes = [32, 16], strides = [1, 1]} : vector<256x16xf32> to vector<32x16xf32>
    %52 = arith.maximumf %50, %51 : vector<32x16xf32>
    %53 = vector.extract_strided_slice %47 {offsets = [96, 0], sizes = [32, 16], strides = [1, 1]} : vector<256x16xf32> to vector<32x16xf32>
    %54 = arith.maximumf %52, %53 : vector<32x16xf32>
    %55 = vector.extract_strided_slice %47 {offsets = [128, 0], sizes = [32, 16], strides = [1, 1]} : vector<256x16xf32> to vector<32x16xf32>
    %56 = arith.maximumf %54, %55 : vector<32x16xf32>
    %57 = vector.extract_strided_slice %47 {offsets = [160, 0], sizes = [32, 16], strides = [1, 1]} : vector<256x16xf32> to vector<32x16xf32>
    %58 = arith.maximumf %56, %57 : vector<32x16xf32>
    %59 = vector.extract_strided_slice %47 {offsets = [192, 0], sizes = [32, 16], strides = [1, 1]} : vector<256x16xf32> to vector<32x16xf32>
    %60 = arith.maximumf %58, %59 : vector<32x16xf32>
    %61 = vector.extract_strided_slice %47 {offsets = [224, 0], sizes = [32, 16], strides = [1, 1]} : vector<256x16xf32> to vector<32x16xf32>
    %62 = arith.maximumf %60, %61 : vector<32x16xf32>
    %c0_26 = arith.constant 0 : index
    %c0_27 = arith.constant 0 : index
    %63 = vector.load %arg9[%c0_26, %c0_27] : memref<16x64xbf16, #tpu.memory_space<vmem>>, vector<16x64xbf16>
    %64 = arith.truncf %62 : vector<32x16xf32> to vector<32x16xbf16>
    %cst_28 = arith.constant dense<0.000000e+00> : vector<32x64xf32>
    %65 = tpu.matmul %64, %63, %cst_28 {dimension_numbers = #tpu.dot_dimension_numbers<[1], [0], [0], [1], [0, 0, 1, 1], [], []>} : vector<32x16xbf16>, vector<16x64xbf16>, vector<32x64xf32> -> vector<32x64xf32>
    %c0_29 = arith.constant 0 : index
    %c0_30 = arith.constant 0 : index
    %66 = vector.load %arg10[%c0_29, %c0_30] : memref<1x64xf32, #tpu.memory_space<vmem>>, vector<1x64xf32>
    %67 = vector.broadcast %66 : vector<1x64xf32> to vector<32x64xf32>
    %68 = arith.mulf %65, %67 : vector<32x64xf32>
    %c0_31 = arith.constant 0 : index
    %c0_32 = arith.constant 0 : index
    %69 = vector.load %arg11[%c0_31, %c0_32] : memref<1x64xf32, #tpu.memory_space<vmem>>, vector<1x64xf32>
    %70 = vector.broadcast %69 : vector<1x64xf32> to vector<32x64xf32>
    %71 = arith.addf %68, %70 : vector<32x64xf32>
    %c0_33 = arith.constant 0 : index
    %c0_34 = arith.constant 0 : index
    %72 = vector.load %arg12[%c0_33, %c0_34] : memref<32x64xbf16, #tpu.memory_space<vmem>>, vector<32x64xbf16>
    %73 = arith.extf %72 : vector<32x64xbf16> to vector<32x64xf32>
    %74 = arith.addf %71, %73 : vector<32x64xf32>
    %75 = arith.truncf %74 : vector<32x64xf32> to vector<32x64xbf16>
    %c0_35 = arith.constant 0 : index
    %c0_36 = arith.constant 0 : index
    %76 = vector.load %arg13[%c0_35, %c0_36] : memref<32x64xbf16, #tpu.memory_space<vmem>>, vector<32x64xbf16>
    tpu.vector_store %arg13[%c0_35, %c0_36], %75 {strides = array<i32>} : memref<32x64xbf16, #tpu.memory_space<vmem>>, vector<32x64xbf16>,
    return
  }
  func.func @transform_0(%arg0: i32) -> (i32, i32, i32) {
    %c0_i32 = arith.constant 0 : i32
    %c0_i32_0 = arith.constant 0 : i32
    %c0_i32_1 = arith.constant 0 : i32
    return %c0_i32, %arg0, %c0_i32_0 : i32, i32, i32
  }
  func.func @transform_1(%arg0: i32) -> (i32, i32) {
    %c0_i32 = arith.constant 0 : i32
    %c0_i32_0 = arith.constant 0 : i32
    %c0_i32_1 = arith.constant 0 : i32
    return %c0_i32, %c0_i32_0 : i32, i32
  }
  func.func @transform_2(%arg0: i32) -> (i32, i32) {
    %c0_i32 = arith.constant 0 : i32
    %c0_i32_0 = arith.constant 0 : i32
    %c0_i32_1 = arith.constant 0 : i32
    return %c0_i32, %c0_i32_0 : i32, i32
  }
  func.func @transform_3(%arg0: i32) -> (i32, i32) {
    %c0_i32 = arith.constant 0 : i32
    %c0_i32_0 = arith.constant 0 : i32
    %c0_i32_1 = arith.constant 0 : i32
    return %c0_i32, %c0_i32_0 : i32, i32
  }
  func.func @transform_4(%arg0: i32) -> (i32, i32) {
    %c0_i32 = arith.constant 0 : i32
    %c0_i32_0 = arith.constant 0 : i32
    %c0_i32_1 = arith.constant 0 : i32
    return %c0_i32, %c0_i32_0 : i32, i32
  }
  func.func @transform_5(%arg0: i32) -> (i32, i32) {
    %c0_i32 = arith.constant 0 : i32
    %c0_i32_0 = arith.constant 0 : i32
    %c0_i32_1 = arith.constant 0 : i32
    return %c0_i32, %c0_i32_0 : i32, i32
  }
  func.func @transform_6(%arg0: i32) -> (i32, i32) {
    %c0_i32 = arith.constant 0 : i32
    %c0_i32_0 = arith.constant 0 : i32
    %c0_i32_1 = arith.constant 0 : i32
    return %c0_i32, %c0_i32_0 : i32, i32
  }
  func.func @transform_7(%arg0: i32) -> (i32, i32) {
    %c0_i32 = arith.constant 0 : i32
    %c0_i32_0 = arith.constant 0 : i32
    %c0_i32_1 = arith.constant 0 : i32
    return %c0_i32, %c0_i32_0 : i32, i32
  }
  func.func @transform_8(%arg0: i32) -> (i32, i32) {
    %c0_i32 = arith.constant 0 : i32
    %c0_i32_0 = arith.constant 0 : i32
    %c0_i32_1 = arith.constant 0 : i32
    return %c0_i32, %c0_i32_0 : i32, i32
  }
  func.func @transform_9(%arg0: i32) -> (i32, i32) {
    %c0_i32 = arith.constant 0 : i32
    %c0_i32_0 = arith.constant 0 : i32
    %c0_i32_1 = arith.constant 0 : i32
    return %c0_i32, %c0_i32_0 : i32, i32
  }
  func.func @transform_10(%arg0: i32) -> (i32, i32) {
    %c0_i32 = arith.constant 0 : i32
    %c0_i32_0 = arith.constant 0 : i32
    %c0_i32_1 = arith.constant 0 : i32
    return %c0_i32, %c0_i32_0 : i32, i32
  }
  func.func @transform_11(%arg0: i32) -> (i32, i32) {
    %c0_i32 = arith.constant 0 : i32
    %c0_i32_0 = arith.constant 0 : i32
    return %arg0, %c0_i32 : i32, i32
  }
  func.func @transform_12(%arg0: i32) -> (i32, i32) {
    %c0_i32 = arith.constant 0 : i32
    %c0_i32_0 = arith.constant 0 : i32
    return %arg0, %c0_i32 : i32, i32
  }
}

module attributes {stable_mosaic.version = 11 : i64} {
  func.func @kernel(%arg0: i32, %arg1: memref<32x64xbf16, #tpu.memory_space<vmem>>, %arg2: memref<64x128xbf16, #tpu.memory_space<vmem>>, %arg3: memref<1x128xf32, #tpu.memory_space<vmem>>, %arg4: memref<128x64xbf16, #tpu.memory_space<vmem>>, %arg5: memref<1x64xf32, #tpu.memory_space<vmem>>, %arg6: memref<1x64xf32, #tpu.memory_space<vmem>>, %arg7: memref<32x64xbf16, #tpu.memory_space<vmem>>, %arg8: memref<32x64xbf16, #tpu.memory_space<vmem>>) attributes {dimension_semantics = [#tpu.dimension_semantics<parallel>], iteration_bounds = array<i64: 1>, scalar_prefetch = 0 : i64, scratch_operands = 0 : i64, tpu.core_type = #tpu.core_type<tc>, window_params = [{transform_indices = @transform_0, window_bounds = array<i64: 32, 64>}, {pipeline_mode = #tpu.pipeline_mode<synchronous>, transform_indices = @transform_1, window_bounds = array<i64: 64, 128>}, {pipeline_mode = #tpu.pipeline_mode<synchronous>, transform_indices = @transform_2, window_bounds = array<i64: 1, 128>}, {pipeline_mode = #tpu.pipeline_mode<synchronous>, transform_indices = @transform_3, window_bounds = array<i64: 128, 64>}, {pipeline_mode = #tpu.pipeline_mode<synchronous>, transform_indices = @transform_4, window_bounds = array<i64: 1, 64>}, {pipeline_mode = #tpu.pipeline_mode<synchronous>, transform_indices = @transform_5, window_bounds = array<i64: 1, 64>}, {transform_indices = @transform_6, window_bounds = array<i64: 32, 64>}, {transform_indices = @transform_7, window_bounds = array<i64: 32, 64>}]} {
    %c0 = arith.constant 0 : index
    %c0_0 = arith.constant 0 : index
    %0 = vector.load %arg1[%c0, %c0_0] : memref<32x64xbf16, #tpu.memory_space<vmem>>, vector<32x64xbf16>
    %c0_1 = arith.constant 0 : index
    %c0_2 = arith.constant 0 : index
    %1 = vector.load %arg2[%c0_1, %c0_2] : memref<64x128xbf16, #tpu.memory_space<vmem>>, vector<64x128xbf16>
    %cst = arith.constant dense<0.000000e+00> : vector<32x128xf32>
    %2 = tpu.matmul %0, %1, %cst {dimension_numbers = #tpu.dot_dimension_numbers<[1], [0], [0], [1], [0, 0, 1, 1], [], []>} : vector<32x64xbf16>, vector<64x128xbf16>, vector<32x128xf32> -> vector<32x128xf32>
    %c0_3 = arith.constant 0 : index
    %c0_4 = arith.constant 0 : index
    %3 = vector.load %arg3[%c0_3, %c0_4] : memref<1x128xf32, #tpu.memory_space<vmem>>, vector<1x128xf32>
    %4 = vector.broadcast %3 : vector<1x128xf32> to vector<32x128xf32>
    %5 = arith.addf %2, %4 : vector<32x128xf32>
    %cst_5 = arith.constant 5.000000e-01 : f32
    %6 = vector.broadcast %cst_5 : f32 to vector<32x128xf32>
    %7 = arith.mulf %6, %5 : vector<32x128xf32>
    %cst_6 = arith.constant 4.471500e-02 : f32
    %8 = vector.broadcast %cst_6 : f32 to vector<32x128xf32>
    %9 = arith.mulf %8, %5 : vector<32x128xf32>
    %10 = arith.mulf %9, %5 : vector<32x128xf32>
    %11 = arith.mulf %10, %5 : vector<32x128xf32>
    %12 = arith.addf %5, %11 : vector<32x128xf32>
    %cst_7 = arith.constant 0.797884583 : f32
    %13 = vector.broadcast %cst_7 : f32 to vector<32x128xf32>
    %14 = arith.mulf %13, %12 : vector<32x128xf32>
    %15 = math.tanh %14 : vector<32x128xf32>
    %cst_8 = arith.constant 1.000000e+00 : f32
    %16 = vector.broadcast %cst_8 : f32 to vector<32x128xf32>
    %17 = arith.addf %16, %15 : vector<32x128xf32>
    %18 = arith.mulf %7, %17 : vector<32x128xf32>
    %c0_9 = arith.constant 0 : index
    %c0_10 = arith.constant 0 : index
    %19 = vector.load %arg4[%c0_9, %c0_10] : memref<128x64xbf16, #tpu.memory_space<vmem>>, vector<128x64xbf16>
    %20 = arith.truncf %18 : vector<32x128xf32> to vector<32x128xbf16>
    %cst_11 = arith.constant dense<0.000000e+00> : vector<32x64xf32>
    %21 = tpu.matmul %20, %19, %cst_11 {dimension_numbers = #tpu.dot_dimension_numbers<[1], [0], [0], [1], [0, 0, 1, 1], [], []>} : vector<32x128xbf16>, vector<128x64xbf16>, vector<32x64xf32> -> vector<32x64xf32>
    %c0_12 = arith.constant 0 : index
    %c0_13 = arith.constant 0 : index
    %22 = vector.load %arg5[%c0_12, %c0_13] : memref<1x64xf32, #tpu.memory_space<vmem>>, vector<1x64xf32>
    %23 = vector.broadcast %22 : vector<1x64xf32> to vector<32x64xf32>
    %24 = arith.mulf %21, %23 : vector<32x64xf32>
    %c0_14 = arith.constant 0 : index
    %c0_15 = arith.constant 0 : index
    %25 = vector.load %arg6[%c0_14, %c0_15] : memref<1x64xf32, #tpu.memory_space<vmem>>, vector<1x64xf32>
    %26 = vector.broadcast %25 : vector<1x64xf32> to vector<32x64xf32>
    %27 = arith.addf %24, %26 : vector<32x64xf32>
    %c0_16 = arith.constant 0 : index
    %c0_17 = arith.constant 0 : index
    %28 = vector.load %arg7[%c0_16, %c0_17] : memref<32x64xbf16, #tpu.memory_space<vmem>>, vector<32x64xbf16>
    %29 = arith.extf %28 : vector<32x64xbf16> to vector<32x64xf32>
    %30 = arith.addf %27, %29 : vector<32x64xf32>
    %31 = arith.truncf %30 : vector<32x64xf32> to vector<32x64xbf16>
    %c0_18 = arith.constant 0 : index
    %c0_19 = arith.constant 0 : index
    %32 = vector.load %arg8[%c0_18, %c0_19] : memref<32x64xbf16, #tpu.memory_space<vmem>>, vector<32x64xbf16>
    tpu.vector_store %arg8[%c0_18, %c0_19], %31 {strides = array<i32>} : memref<32x64xbf16, #tpu.memory_space<vmem>>, vector<32x64xbf16>,
    return
  }
  func.func @transform_0(%arg0: i32) -> (i32, i32) {
    %c0_i32 = arith.constant 0 : i32
    %c0_i32_0 = arith.constant 0 : i32
    return %arg0, %c0_i32 : i32, i32
  }
  func.func @transform_1(%arg0: i32) -> (i32, i32) {
    %c0_i32 = arith.constant 0 : i32
    %c0_i32_0 = arith.constant 0 : i32
    %c0_i32_1 = arith.constant 0 : i32
    return %c0_i32, %c0_i32_0 : i32, i32
  }
  func.func @transform_2(%arg0: i32) -> (i32, i32) {
    %c0_i32 = arith.constant 0 : i32
    %c0_i32_0 = arith.constant 0 : i32
    %c0_i32_1 = arith.constant 0 : i32
    return %c0_i32, %c0_i32_0 : i32, i32
  }
  func.func @transform_3(%arg0: i32) -> (i32, i32) {
    %c0_i32 = arith.constant 0 : i32
    %c0_i32_0 = arith.constant 0 : i32
    %c0_i32_1 = arith.constant 0 : i32
    return %c0_i32, %c0_i32_0 : i32, i32
  }
  func.func @transform_4(%arg0: i32) -> (i32, i32) {
    %c0_i32 = arith.constant 0 : i32
    %c0_i32_0 = arith.constant 0 : i32
    %c0_i32_1 = arith.constant 0 : i32
    return %c0_i32, %c0_i32_0 : i32, i32
  }
  func.func @transform_5(%arg0: i32) -> (i32, i32) {
    %c0_i32 = arith.constant 0 : i32
    %c0_i32_0 = arith.constant 0 : i32
    %c0_i32_1 = arith.constant 0 : i32
    return %c0_i32, %c0_i32_0 : i32, i32
  }
  func.func @transform_6(%arg0: i32) -> (i32, i32) {
    %c0_i32 = arith.constant 0 : i32
    %c0_i32_0 = arith.constant 0 : i32
    return %arg0, %c0_i32 : i32, i32
  }
  func.func @transform_7(%arg0: i32) -> (i32, i32) {
    %c0_i32 = arith.constant 0 : i32
    %c0_i32_0 = arith.constant 0 : i32
    return %arg0, %c0_i32 : i32, i32
  }
}

module attributes {stable_mosaic.version = 11 : i64} {
  func.func @kernel(%arg0: i32, %arg1: memref<32x64xbf16, #tpu.memory_space<vmem>>, %arg2: memref<64x64xbf16, #tpu.memory_space<vmem>>, %arg3: memref<1x64xf32, #tpu.memory_space<vmem>>, %arg4: memref<1x64xf32, #tpu.memory_space<vmem>>, %arg5: memref<32x64xbf16, #tpu.memory_space<vmem>>) attributes {dimension_semantics = [#tpu.dimension_semantics<parallel>], iteration_bounds = array<i64: 1>, scalar_prefetch = 0 : i64, scratch_operands = 0 : i64, tpu.core_type = #tpu.core_type<tc>, window_params = [{transform_indices = @transform_0, window_bounds = array<i64: 32, 64>}, {pipeline_mode = #tpu.pipeline_mode<synchronous>, transform_indices = @transform_1, window_bounds = array<i64: 64, 64>}, {pipeline_mode = #tpu.pipeline_mode<synchronous>, transform_indices = @transform_2, window_bounds = array<i64: 1, 64>}, {pipeline_mode = #tpu.pipeline_mode<synchronous>, transform_indices = @transform_3, window_bounds = array<i64: 1, 64>}, {transform_indices = @transform_4, window_bounds = array<i64: 32, 64>}]} {
    %c0 = arith.constant 0 : index
    %c0_0 = arith.constant 0 : index
    %0 = vector.load %arg1[%c0, %c0_0] : memref<32x64xbf16, #tpu.memory_space<vmem>>, vector<32x64xbf16>
    %c0_1 = arith.constant 0 : index
    %c0_2 = arith.constant 0 : index
    %1 = vector.load %arg2[%c0_1, %c0_2] : memref<64x64xbf16, #tpu.memory_space<vmem>>, vector<64x64xbf16>
    %cst = arith.constant dense<0.000000e+00> : vector<32x64xf32>
    %2 = tpu.matmul %0, %1, %cst {dimension_numbers = #tpu.dot_dimension_numbers<[1], [0], [0], [1], [0, 0, 1, 1], [], []>} : vector<32x64xbf16>, vector<64x64xbf16>, vector<32x64xf32> -> vector<32x64xf32>
    %c0_3 = arith.constant 0 : index
    %c0_4 = arith.constant 0 : index
    %3 = vector.load %arg3[%c0_3, %c0_4] : memref<1x64xf32, #tpu.memory_space<vmem>>, vector<1x64xf32>
    %4 = vector.broadcast %3 : vector<1x64xf32> to vector<32x64xf32>
    %5 = arith.mulf %2, %4 : vector<32x64xf32>
    %c0_5 = arith.constant 0 : index
    %c0_6 = arith.constant 0 : index
    %6 = vector.load %arg4[%c0_5, %c0_6] : memref<1x64xf32, #tpu.memory_space<vmem>>, vector<1x64xf32>
    %7 = vector.broadcast %6 : vector<1x64xf32> to vector<32x64xf32>
    %8 = arith.addf %5, %7 : vector<32x64xf32>
    %9 = arith.truncf %8 : vector<32x64xf32> to vector<32x64xbf16>
    %c0_7 = arith.constant 0 : index
    %c0_8 = arith.constant 0 : index
    %10 = vector.load %arg5[%c0_7, %c0_8] : memref<32x64xbf16, #tpu.memory_space<vmem>>, vector<32x64xbf16>
    tpu.vector_store %arg5[%c0_7, %c0_8], %9 {strides = array<i32>} : memref<32x64xbf16, #tpu.memory_space<vmem>>, vector<32x64xbf16>,
    return
  }
  func.func @transform_0(%arg0: i32) -> (i32, i32) {
    %c0_i32 = arith.constant 0 : i32
    %c0_i32_0 = arith.constant 0 : i32
    return %arg0, %c0_i32 : i32, i32
  }
  func.func @transform_1(%arg0: i32) -> (i32, i32) {
    %c0_i32 = arith.constant 0 : i32
    %c0_i32_0 = arith.constant 0 : i32
    %c0_i32_1 = arith.constant 0 : i32
    return %c0_i32, %c0_i32_0 : i32, i32
  }
  func.func @transform_2(%arg0: i32) -> (i32, i32) {
    %c0_i32 = arith.constant 0 : i32
    %c0_i32_0 = arith.constant 0 : i32
    %c0_i32_1 = arith.constant 0 : i32
    return %c0_i32, %c0_i32_0 : i32, i32
  }
  func.func @transform_3(%arg0: i32) -> (i32, i32) {
    %c0_i32 = arith.constant 0 : i32
    %c0_i32_0 = arith.constant 0 : i32
    %c0_i32_1 = arith.constant 0 : i32
    return %c0_i32, %c0_i32_0 : i32, i32
  }
  func.func @transform_4(%arg0: i32) -> (i32, i32) {
    %c0_i32 = arith.constant 0 : i32
    %c0_i32_0 = arith.constant 0 : i32
    return %arg0, %c0_i32 : i32, i32
  }
}

module attributes {stable_mosaic.version = 11 : i64} {
  func.func @kernel(%arg0: i32, %arg1: memref<32x512xbf16, #tpu.memory_space<vmem>>, %arg2: memref<32x64xbf16, #tpu.memory_space<vmem>>, %arg3: memref<1x64xf32, #tpu.memory_space<vmem>>, %arg4: memref<1x64xf32, #tpu.memory_space<vmem>>, %arg5: memref<32x64xbf16, #tpu.memory_space<vmem>>, %arg6: memref<32x64xbf16, #tpu.memory_space<vmem>>) attributes {dimension_semantics = [#tpu.dimension_semantics<parallel>], iteration_bounds = array<i64: 1>, scalar_prefetch = 0 : i64, scratch_operands = 0 : i64, tpu.core_type = #tpu.core_type<tc>, window_params = [{transform_indices = @transform_0, window_bounds = array<i64: 32, 512>}, {transform_indices = @transform_1, window_bounds = array<i64: 32, 64>}, {pipeline_mode = #tpu.pipeline_mode<synchronous>, transform_indices = @transform_2, window_bounds = array<i64: 1, 64>}, {pipeline_mode = #tpu.pipeline_mode<synchronous>, transform_indices = @transform_3, window_bounds = array<i64: 1, 64>}, {transform_indices = @transform_4, window_bounds = array<i64: 32, 64>}, {transform_indices = @transform_5, window_bounds = array<i64: 32, 64>}]} {
    %c0 = arith.constant 0 : index
    %c0_0 = arith.constant 0 : index
    %0 = vector.load %arg1[%c0, %c0_0] : memref<32x512xbf16, #tpu.memory_space<vmem>>, vector<32x512xbf16>
    %1 = arith.extf %0 : vector<32x512xbf16> to vector<32x512xf32>
    %c64_i32 = arith.constant 64 : i32
    %2 = tpu.dynamic_rotate %1 by %c64_i32 dim 1 : vector<32x512xf32>, i32 -> vector<32x512xf32>
    %3 = arith.maximumf %1, %2 : vector<32x512xf32>
    %c128_i32 = arith.constant 128 : i32
    %4 = tpu.dynamic_rotate %3 by %c128_i32 dim 1 : vector<32x512xf32>, i32 -> vector<32x512xf32>
    %5 = arith.maximumf %3, %4 : vector<32x512xf32>
    %c256_i32 = arith.constant 256 : i32
    %6 = tpu.dynamic_rotate %5 by %c256_i32 dim 1 : vector<32x512xf32>, i32 -> vector<32x512xf32>
    %7 = arith.maximumf %5, %6 : vector<32x512xf32>
    %8 = vector.extract_strided_slice %7 {offsets = [0, 0], sizes = [32, 64], strides = [1, 1]} : vector<32x512xf32> to vector<32x64xf32>
    %c0_1 = arith.constant 0 : index
    %c0_2 = arith.constant 0 : index
    %9 = vector.load %arg2[%c0_1, %c0_2] : memref<32x64xbf16, #tpu.memory_space<vmem>>, vector<32x64xbf16>
    %10 = arith.extf %9 : vector<32x64xbf16> to vector<32x64xf32>
    %11 = arith.subf %8, %10 : vector<32x64xf32>
    %c0_3 = arith.constant 0 : index
    %c0_4 = arith.constant 0 : index
    %12 = vector.load %arg3[%c0_3, %c0_4] : memref<1x64xf32, #tpu.memory_space<vmem>>, vector<1x64xf32>
    %13 = vector.broadcast %12 : vector<1x64xf32> to vector<32x64xf32>
    %14 = arith.mulf %11, %13 : vector<32x64xf32>
    %c0_5 = arith.constant 0 : index
    %c0_6 = arith.constant 0 : index
    %15 = vector.load %arg4[%c0_5, %c0_6] : memref<1x64xf32, #tpu.memory_space<vmem>>, vector<1x64xf32>
    %16 = vector.broadcast %15 : vector<1x64xf32> to vector<32x64xf32>
    %17 = arith.addf %14, %16 : vector<32x64xf32>
    %c0_7 = arith.constant 0 : index
    %c0_8 = arith.constant 0 : index
    %18 = vector.load %arg5[%c0_7, %c0_8] : memref<32x64xbf16, #tpu.memory_space<vmem>>, vector<32x64xbf16>
    %19 = arith.extf %18 : vector<32x64xbf16> to vector<32x64xf32>
    %20 = arith.addf %17, %19 : vector<32x64xf32>
    %21 = arith.truncf %20 : vector<32x64xf32> to vector<32x64xbf16>
    %c0_9 = arith.constant 0 : index
    %c0_10 = arith.constant 0 : index
    %22 = vector.load %arg6[%c0_9, %c0_10] : memref<32x64xbf16, #tpu.memory_space<vmem>>, vector<32x64xbf16>
    tpu.vector_store %arg6[%c0_9, %c0_10], %21 {strides = array<i32>} : memref<32x64xbf16, #tpu.memory_space<vmem>>, vector<32x64xbf16>,
    return
  }
  func.func @transform_0(%arg0: i32) -> (i32, i32) {
    %c0_i32 = arith.constant 0 : i32
    %c0_i32_0 = arith.constant 0 : i32
    return %arg0, %c0_i32 : i32, i32
  }
  func.func @transform_1(%arg0: i32) -> (i32, i32) {
    %c0_i32 = arith.constant 0 : i32
    %c0_i32_0 = arith.constant 0 : i32
    return %arg0, %c0_i32 : i32, i32
  }
  func.func @transform_2(%arg0: i32) -> (i32, i32) {
    %c0_i32 = arith.constant 0 : i32
    %c0_i32_0 = arith.constant 0 : i32
    %c0_i32_1 = arith.constant 0 : i32
    return %c0_i32, %c0_i32_0 : i32, i32
  }
  func.func @transform_3(%arg0: i32) -> (i32, i32) {
    %c0_i32 = arith.constant 0 : i32
    %c0_i32_0 = arith.constant 0 : i32
    %c0_i32_1 = arith.constant 0 : i32
    return %c0_i32, %c0_i32_0 : i32, i32
  }
  func.func @transform_4(%arg0: i32) -> (i32, i32) {
    %c0_i32 = arith.constant 0 : i32
    %c0_i32_0 = arith.constant 0 : i32
    return %arg0, %c0_i32 : i32, i32
  }
  func.func @transform_5(%arg0: i32) -> (i32, i32) {
    %c0_i32 = arith.constant 0 : i32
    %c0_i32_0 = arith.constant 0 : i32
    return %arg0, %c0_i32 : i32, i32
  }
}

module attributes {stable_mosaic.version = 11 : i64} {
  func.func @kernel(%arg0: i32, %arg1: memref<32x64xbf16, #tpu.memory_space<vmem>>, %arg2: memref<64x32xbf16, #tpu.memory_space<vmem>>, %arg3: memref<1x64xf32, #tpu.memory_space<vmem>>, %arg4: memref<1x64xf32, #tpu.memory_space<vmem>>, %arg5: memref<1x32xf32, #tpu.memory_space<vmem>>, %arg6: memref<1x32xf32, #tpu.memory_space<vmem>>, %arg7: memref<32x32xbf16, #tpu.memory_space<vmem>>) attributes {dimension_semantics = [#tpu.dimension_semantics<parallel>], iteration_bounds = array<i64: 1>, scalar_prefetch = 0 : i64, scratch_operands = 0 : i64, tpu.core_type = #tpu.core_type<tc>, window_params = [{transform_indices = @transform_0, window_bounds = array<i64: 32, 64>}, {pipeline_mode = #tpu.pipeline_mode<synchronous>, transform_indices = @transform_1, window_bounds = array<i64: 64, 32>}, {pipeline_mode = #tpu.pipeline_mode<synchronous>, transform_indices = @transform_2, window_bounds = array<i64: 1, 64>}, {pipeline_mode = #tpu.pipeline_mode<synchronous>, transform_indices = @transform_3, window_bounds = array<i64: 1, 64>}, {pipeline_mode = #tpu.pipeline_mode<synchronous>, transform_indices = @transform_4, window_bounds = array<i64: 1, 32>}, {pipeline_mode = #tpu.pipeline_mode<synchronous>, transform_indices = @transform_5, window_bounds = array<i64: 1, 32>}, {transform_indices = @transform_6, window_bounds = array<i64: 32, 32>}]} {
    %c0 = arith.constant 0 : index
    %c0_0 = arith.constant 0 : index
    %0 = vector.load %arg1[%c0, %c0_0] : memref<32x64xbf16, #tpu.memory_space<vmem>>, vector<32x64xbf16>
    %1 = arith.extf %0 : vector<32x64xbf16> to vector<32x64xf32>
    %c0_1 = arith.constant 0 : index
    %c0_2 = arith.constant 0 : index
    %2 = vector.load %arg3[%c0_1, %c0_2] : memref<1x64xf32, #tpu.memory_space<vmem>>, vector<1x64xf32>
    %3 = vector.broadcast %2 : vector<1x64xf32> to vector<32x64xf32>
    %4 = arith.mulf %1, %3 : vector<32x64xf32>
    %c0_3 = arith.constant 0 : index
    %c0_4 = arith.constant 0 : index
    %5 = vector.load %arg4[%c0_3, %c0_4] : memref<1x64xf32, #tpu.memory_space<vmem>>, vector<1x64xf32>
    %6 = vector.broadcast %5 : vector<1x64xf32> to vector<32x64xf32>
    %7 = arith.addf %4, %6 : vector<32x64xf32>
    %c0_5 = arith.constant 0 : index
    %c0_6 = arith.constant 0 : index
    %8 = vector.load %arg2[%c0_5, %c0_6] : memref<64x32xbf16, #tpu.memory_space<vmem>>, vector<64x32xbf16>
    %9 = arith.truncf %7 : vector<32x64xf32> to vector<32x64xbf16>
    %cst = arith.constant dense<0.000000e+00> : vector<32x32xf32>
    %10 = tpu.matmul %9, %8, %cst {dimension_numbers = #tpu.dot_dimension_numbers<[1], [0], [0], [1], [0, 0, 1, 1], [], []>} : vector<32x64xbf16>, vector<64x32xbf16>, vector<32x32xf32> -> vector<32x32xf32>
    %c0_7 = arith.constant 0 : index
    %c0_8 = arith.constant 0 : index
    %11 = vector.load %arg5[%c0_7, %c0_8] : memref<1x32xf32, #tpu.memory_space<vmem>>, vector<1x32xf32>
    %12 = vector.broadcast %11 : vector<1x32xf32> to vector<32x32xf32>
    %13 = arith.mulf %10, %12 : vector<32x32xf32>
    %c0_9 = arith.constant 0 : index
    %c0_10 = arith.constant 0 : index
    %14 = vector.load %arg6[%c0_9, %c0_10] : memref<1x32xf32, #tpu.memory_space<vmem>>, vector<1x32xf32>
    %15 = vector.broadcast %14 : vector<1x32xf32> to vector<32x32xf32>
    %16 = arith.addf %13, %15 : vector<32x32xf32>
    %17 = arith.truncf %16 : vector<32x32xf32> to vector<32x32xbf16>
    %c0_11 = arith.constant 0 : index
    %c0_12 = arith.constant 0 : index
    %18 = vector.load %arg7[%c0_11, %c0_12] : memref<32x32xbf16, #tpu.memory_space<vmem>>, vector<32x32xbf16>
    tpu.vector_store %arg7[%c0_11, %c0_12], %17 {strides = array<i32>} : memref<32x32xbf16, #tpu.memory_space<vmem>>, vector<32x32xbf16>,
    return
  }
  func.func @transform_0(%arg0: i32) -> (i32, i32) {
    %c0_i32 = arith.constant 0 : i32
    %c0_i32_0 = arith.constant 0 : i32
    return %arg0, %c0_i32 : i32, i32
  }
  func.func @transform_1(%arg0: i32) -> (i32, i32) {
    %c0_i32 = arith.constant 0 : i32
    %c0_i32_0 = arith.constant 0 : i32
    %c0_i32_1 = arith.constant 0 : i32
    return %c0_i32, %c0_i32_0 : i32, i32
  }
  func.func @transform_2(%arg0: i32) -> (i32, i32) {
    %c0_i32 = arith.constant 0 : i32
    %c0_i32_0 = arith.constant 0 : i32
    %c0_i32_1 = arith.constant 0 : i32
    return %c0_i32, %c0_i32_0 : i32, i32
  }
  func.func @transform_3(%arg0: i32) -> (i32, i32) {
    %c0_i32 = arith.constant 0 : i32
    %c0_i32_0 = arith.constant 0 : i32
    %c0_i32_1 = arith.constant 0 : i32
    return %c0_i32, %c0_i32_0 : i32, i32
  }
  func.func @transform_4(%arg0: i32) -> (i32, i32) {
    %c0_i32 = arith.constant 0 : i32
    %c0_i32_0 = arith.constant 0 : i32
    %c0_i32_1 = arith.constant 0 : i32
    return %c0_i32, %c0_i32_0 : i32, i32
  }
  func.func @transform_5(%arg0: i32) -> (i32, i32) {
    %c0_i32 = arith.constant 0 : i32
    %c0_i32_0 = arith.constant 0 : i32
    %c0_i32_1 = arith.constant 0 : i32
    return %c0_i32, %c0_i32_0 : i32, i32
  }
  func.func @transform_6(%arg0: i32) -> (i32, i32) {
    %c0_i32 = arith.constant 0 : i32
    %c0_i32_0 = arith.constant 0 : i32
    return %arg0, %c0_i32 : i32, i32
  }
}

module attributes {stable_mosaic.version = 11 : i64} {
  func.func @kernel(%arg0: i32, %arg1: memref<64x32xbf16, #tpu.memory_space<vmem>>, %arg2: memref<32x13xbf16, #tpu.memory_space<vmem>>, %arg3: memref<1x32xf32, #tpu.memory_space<vmem>>, %arg4: memref<1x32xf32, #tpu.memory_space<vmem>>, %arg5: memref<1x13xf32, #tpu.memory_space<vmem>>, %arg6: memref<1x13xf32, #tpu.memory_space<vmem>>, %arg7: memref<64x13xf32, #tpu.memory_space<vmem>>) attributes {dimension_semantics = [#tpu.dimension_semantics<parallel>], iteration_bounds = array<i64: 1>, scalar_prefetch = 0 : i64, scratch_operands = 0 : i64, tpu.core_type = #tpu.core_type<tc>, window_params = [{transform_indices = @transform_0, window_bounds = array<i64: 64, 32>}, {pipeline_mode = #tpu.pipeline_mode<synchronous>, transform_indices = @transform_1, window_bounds = array<i64: 32, 13>}, {pipeline_mode = #tpu.pipeline_mode<synchronous>, transform_indices = @transform_2, window_bounds = array<i64: 1, 32>}, {pipeline_mode = #tpu.pipeline_mode<synchronous>, transform_indices = @transform_3, window_bounds = array<i64: 1, 32>}, {pipeline_mode = #tpu.pipeline_mode<synchronous>, transform_indices = @transform_4, window_bounds = array<i64: 1, 13>}, {pipeline_mode = #tpu.pipeline_mode<synchronous>, transform_indices = @transform_5, window_bounds = array<i64: 1, 13>}, {transform_indices = @transform_6, window_bounds = array<i64: 64, 13>}]} {
    %c0 = arith.constant 0 : index
    %c0_0 = arith.constant 0 : index
    %0 = vector.load %arg1[%c0, %c0_0] : memref<64x32xbf16, #tpu.memory_space<vmem>>, vector<64x32xbf16>
    %1 = arith.extf %0 : vector<64x32xbf16> to vector<64x32xf32>
    %c0_1 = arith.constant 0 : index
    %c0_2 = arith.constant 0 : index
    %2 = vector.load %arg3[%c0_1, %c0_2] : memref<1x32xf32, #tpu.memory_space<vmem>>, vector<1x32xf32>
    %3 = vector.broadcast %2 : vector<1x32xf32> to vector<64x32xf32>
    %4 = arith.mulf %1, %3 : vector<64x32xf32>
    %c0_3 = arith.constant 0 : index
    %c0_4 = arith.constant 0 : index
    %5 = vector.load %arg4[%c0_3, %c0_4] : memref<1x32xf32, #tpu.memory_space<vmem>>, vector<1x32xf32>
    %6 = vector.broadcast %5 : vector<1x32xf32> to vector<64x32xf32>
    %7 = arith.addf %4, %6 : vector<64x32xf32>
    %cst = arith.constant 5.000000e-01 : f32
    %8 = vector.broadcast %cst : f32 to vector<64x32xf32>
    %9 = arith.mulf %8, %7 : vector<64x32xf32>
    %cst_5 = arith.constant 4.471500e-02 : f32
    %10 = vector.broadcast %cst_5 : f32 to vector<64x32xf32>
    %11 = arith.mulf %10, %7 : vector<64x32xf32>
    %12 = arith.mulf %11, %7 : vector<64x32xf32>
    %13 = arith.mulf %12, %7 : vector<64x32xf32>
    %14 = arith.addf %7, %13 : vector<64x32xf32>
    %cst_6 = arith.constant 0.797884583 : f32
    %15 = vector.broadcast %cst_6 : f32 to vector<64x32xf32>
    %16 = arith.mulf %15, %14 : vector<64x32xf32>
    %17 = math.tanh %16 : vector<64x32xf32>
    %cst_7 = arith.constant 1.000000e+00 : f32
    %18 = vector.broadcast %cst_7 : f32 to vector<64x32xf32>
    %19 = arith.addf %18, %17 : vector<64x32xf32>
    %20 = arith.mulf %9, %19 : vector<64x32xf32>
    %c0_8 = arith.constant 0 : index
    %c0_9 = arith.constant 0 : index
    %21 = vector.load %arg2[%c0_8, %c0_9] : memref<32x13xbf16, #tpu.memory_space<vmem>>, vector<32x13xbf16>
    %22 = arith.truncf %20 : vector<64x32xf32> to vector<64x32xbf16>
    %cst_10 = arith.constant dense<0.000000e+00> : vector<64x13xf32>
    %23 = tpu.matmul %22, %21, %cst_10 {dimension_numbers = #tpu.dot_dimension_numbers<[1], [0], [0], [1], [0, 0, 1, 1], [], []>} : vector<64x32xbf16>, vector<32x13xbf16>, vector<64x13xf32> -> vector<64x13xf32>
    %c0_11 = arith.constant 0 : index
    %c0_12 = arith.constant 0 : index
    %24 = vector.load %arg5[%c0_11, %c0_12] : memref<1x13xf32, #tpu.memory_space<vmem>>, vector<1x13xf32>
    %25 = vector.broadcast %24 : vector<1x13xf32> to vector<64x13xf32>
    %26 = arith.mulf %23, %25 : vector<64x13xf32>
    %c0_13 = arith.constant 0 : index
    %c0_14 = arith.constant 0 : index
    %27 = vector.load %arg6[%c0_13, %c0_14] : memref<1x13xf32, #tpu.memory_space<vmem>>, vector<1x13xf32>
    %28 = vector.broadcast %27 : vector<1x13xf32> to vector<64x13xf32>
    %29 = arith.addf %26, %28 : vector<64x13xf32>
    %c0_15 = arith.constant 0 : index
    %c0_16 = arith.constant 0 : index
    %30 = vector.load %arg7[%c0_15, %c0_16] : memref<64x13xf32, #tpu.memory_space<vmem>>, vector<64x13xf32>
    tpu.vector_store %arg7[%c0_15, %c0_16], %29 {strides = array<i32>} : memref<64x13xf32, #tpu.memory_space<vmem>>, vector<64x13xf32>,
    return
  }
  func.func @transform_0(%arg0: i32) -> (i32, i32) {
    %c0_i32 = arith.constant 0 : i32
    %c0_i32_0 = arith.constant 0 : i32
    return %arg0, %c0_i32 : i32, i32
  }
  func.func @transform_1(%arg0: i32) -> (i32, i32) {
    %c0_i32 = arith.constant 0 : i32
    %c0_i32_0 = arith.constant 0 : i32
    %c0_i32_1 = arith.constant 0 : i32
    return %c0_i32, %c0_i32_0 : i32, i32
  }
  func.func @transform_2(%arg0: i32) -> (i32, i32) {
    %c0_i32 = arith.constant 0 : i32
    %c0_i32_0 = arith.constant 0 : i32
    %c0_i32_1 = arith.constant 0 : i32
    return %c0_i32, %c0_i32_0 : i32, i32
  }
  func.func @transform_3(%arg0: i32) -> (i32, i32) {
    %c0_i32 = arith.constant 0 : i32
    %c0_i32_0 = arith.constant 0 : i32
    %c0_i32_1 = arith.constant 0 : i32
    return %c0_i32, %c0_i32_0 : i32, i32
  }
  func.func @transform_4(%arg0: i32) -> (i32, i32) {
    %c0_i32 = arith.constant 0 : i32
    %c0_i32_0 = arith.constant 0 : i32
    %c0_i32_1 = arith.constant 0 : i32
    return %c0_i32, %c0_i32_0 : i32, i32
  }
  func.func @transform_5(%arg0: i32) -> (i32, i32) {
    %c0_i32 = arith.constant 0 : i32
    %c0_i32_0 = arith.constant 0 : i32
    %c0_i32_1 = arith.constant 0 : i32
    return %c0_i32, %c0_i32_0 : i32, i32
  }
  func.func @transform_6(%arg0: i32) -> (i32, i32) {
    %c0_i32 = arith.constant 0 : i32
    %c0_i32_0 = arith.constant 0 : i32
    return %arg0, %c0_i32 : i32, i32
  }
}

module attributes {stable_mosaic.version = 11 : i64} {
  func.func @kernel(%arg0: i32, %arg1: memref<64x32xbf16, #tpu.memory_space<vmem>>, %arg2: memref<32x32xbf16, #tpu.memory_space<vmem>>, %arg3: memref<1x32xf32, #tpu.memory_space<vmem>>, %arg4: memref<1x32xf32, #tpu.memory_space<vmem>>, %arg5: memref<1x32xf32, #tpu.memory_space<vmem>>, %arg6: memref<1x32xf32, #tpu.memory_space<vmem>>, %arg7: memref<64x32xbf16, #tpu.memory_space<vmem>>, %arg8: memref<64x32xbf16, #tpu.memory_space<vmem>>) attributes {dimension_semantics = [#tpu.dimension_semantics<parallel>], iteration_bounds = array<i64: 1>, scalar_prefetch = 0 : i64, scratch_operands = 0 : i64, tpu.core_type = #tpu.core_type<tc>, window_params = [{transform_indices = @transform_0, window_bounds = array<i64: 64, 32>}, {pipeline_mode = #tpu.pipeline_mode<synchronous>, transform_indices = @transform_1, window_bounds = array<i64: 32, 32>}, {pipeline_mode = #tpu.pipeline_mode<synchronous>, transform_indices = @transform_2, window_bounds = array<i64: 1, 32>}, {pipeline_mode = #tpu.pipeline_mode<synchronous>, transform_indices = @transform_3, window_bounds = array<i64: 1, 32>}, {pipeline_mode = #tpu.pipeline_mode<synchronous>, transform_indices = @transform_4, window_bounds = array<i64: 1, 32>}, {pipeline_mode = #tpu.pipeline_mode<synchronous>, transform_indices = @transform_5, window_bounds = array<i64: 1, 32>}, {transform_indices = @transform_6, window_bounds = array<i64: 64, 32>}, {transform_indices = @transform_7, window_bounds = array<i64: 64, 32>}]} {
    %c0 = arith.constant 0 : index
    %c0_0 = arith.constant 0 : index
    %0 = vector.load %arg1[%c0, %c0_0] : memref<64x32xbf16, #tpu.memory_space<vmem>>, vector<64x32xbf16>
    %1 = arith.extf %0 : vector<64x32xbf16> to vector<64x32xf32>
    %c0_1 = arith.constant 0 : index
    %c0_2 = arith.constant 0 : index
    %2 = vector.load %arg3[%c0_1, %c0_2] : memref<1x32xf32, #tpu.memory_space<vmem>>, vector<1x32xf32>
    %3 = vector.broadcast %2 : vector<1x32xf32> to vector<64x32xf32>
    %4 = arith.mulf %1, %3 : vector<64x32xf32>
    %c0_3 = arith.constant 0 : index
    %c0_4 = arith.constant 0 : index
    %5 = vector.load %arg4[%c0_3, %c0_4] : memref<1x32xf32, #tpu.memory_space<vmem>>, vector<1x32xf32>
    %6 = vector.broadcast %5 : vector<1x32xf32> to vector<64x32xf32>
    %7 = arith.addf %4, %6 : vector<64x32xf32>
    %c0_5 = arith.constant 0 : index
    %c0_6 = arith.constant 0 : index
    %8 = vector.load %arg2[%c0_5, %c0_6] : memref<32x32xbf16, #tpu.memory_space<vmem>>, vector<32x32xbf16>
    %9 = arith.truncf %7 : vector<64x32xf32> to vector<64x32xbf16>
    %cst = arith.constant dense<0.000000e+00> : vector<64x32xf32>
    %10 = tpu.matmul %9, %8, %cst {dimension_numbers = #tpu.dot_dimension_numbers<[1], [0], [0], [1], [0, 0, 1, 1], [], []>} : vector<64x32xbf16>, vector<32x32xbf16>, vector<64x32xf32> -> vector<64x32xf32>
    %c0_7 = arith.constant 0 : index
    %c0_8 = arith.constant 0 : index
    %11 = vector.load %arg5[%c0_7, %c0_8] : memref<1x32xf32, #tpu.memory_space<vmem>>, vector<1x32xf32>
    %12 = vector.broadcast %11 : vector<1x32xf32> to vector<64x32xf32>
    %13 = arith.mulf %10, %12 : vector<64x32xf32>
    %c0_9 = arith.constant 0 : index
    %c0_10 = arith.constant 0 : index
    %14 = vector.load %arg6[%c0_9, %c0_10] : memref<1x32xf32, #tpu.memory_space<vmem>>, vector<1x32xf32>
    %15 = vector.broadcast %14 : vector<1x32xf32> to vector<64x32xf32>
    %16 = arith.addf %13, %15 : vector<64x32xf32>
    %c0_11 = arith.constant 0 : index
    %c0_12 = arith.constant 0 : index
    %17 = vector.load %arg7[%c0_11, %c0_12] : memref<64x32xbf16, #tpu.memory_space<vmem>>, vector<64x32xbf16>
    %18 = arith.extf %17 : vector<64x32xbf16> to vector<64x32xf32>
    %19 = arith.addf %16, %18 : vector<64x32xf32>
    %20 = arith.truncf %19 : vector<64x32xf32> to vector<64x32xbf16>
    %c0_13 = arith.constant 0 : index
    %c0_14 = arith.constant 0 : index
    %21 = vector.load %arg8[%c0_13, %c0_14] : memref<64x32xbf16, #tpu.memory_space<vmem>>, vector<64x32xbf16>
    tpu.vector_store %arg8[%c0_13, %c0_14], %20 {strides = array<i32>} : memref<64x32xbf16, #tpu.memory_space<vmem>>, vector<64x32xbf16>,
    return
  }
  func.func @transform_0(%arg0: i32) -> (i32, i32) {
    %c0_i32 = arith.constant 0 : i32
    %c0_i32_0 = arith.constant 0 : i32
    return %arg0, %c0_i32 : i32, i32
  }
  func.func @transform_1(%arg0: i32) -> (i32, i32) {
    %c0_i32 = arith.constant 0 : i32
    %c0_i32_0 = arith.constant 0 : i32
    %c0_i32_1 = arith.constant 0 : i32
    return %c0_i32, %c0_i32_0 : i32, i32
  }
  func.func @transform_2(%arg0: i32) -> (i32, i32) {
    %c0_i32 = arith.constant 0 : i32
    %c0_i32_0 = arith.constant 0 : i32
    %c0_i32_1 = arith.constant 0 : i32
    return %c0_i32, %c0_i32_0 : i32, i32
  }
  func.func @transform_3(%arg0: i32) -> (i32, i32) {
    %c0_i32 = arith.constant 0 : i32
    %c0_i32_0 = arith.constant 0 : i32
    %c0_i32_1 = arith.constant 0 : i32
    return %c0_i32, %c0_i32_0 : i32, i32
  }
  func.func @transform_4(%arg0: i32) -> (i32, i32) {
    %c0_i32 = arith.constant 0 : i32
    %c0_i32_0 = arith.constant 0 : i32
    %c0_i32_1 = arith.constant 0 : i32
    return %c0_i32, %c0_i32_0 : i32, i32
  }
  func.func @transform_5(%arg0: i32) -> (i32, i32) {
    %c0_i32 = arith.constant 0 : i32
    %c0_i32_0 = arith.constant 0 : i32
    %c0_i32_1 = arith.constant 0 : i32
    return %c0_i32, %c0_i32_0 : i32, i32
  }
  func.func @transform_6(%arg0: i32) -> (i32, i32) {
    %c0_i32 = arith.constant 0 : i32
    %c0_i32_0 = arith.constant 0 : i32
    return %arg0, %c0_i32 : i32, i32
  }
  func.func @transform_7(%arg0: i32) -> (i32, i32) {
    %c0_i32 = arith.constant 0 : i32
    %c0_i32_0 = arith.constant 0 : i32
    return %arg0, %c0_i32 : i32, i32
  }
}

</mosaic_0001>

<llo_original>
// kernel: _lambda_.22
$region0: #{_lambda_.22}
  #allocation0 [shape = 'u32[]', space=smem, size = 0x4, offset = 0x4, fixed_abs, tag = 'smem constant byte address 0x4 - core index']
  #allocation1 [shape = 'u32[144,128]{1,0:T(1,128)}', space=vmem, size = 0x12000, scoped, tag = 'internal scratch']
  %s0 = inlined_call_operand.vmem [shape: bf16[64,32], index: 0, kind: input, shape index: {}]
  %s1 = inlined_call_operand.vmem [shape: bf16[32,32], index: 1, kind: input, shape index: {}]
  %s2 = inlined_call_operand.vmem [shape: f32[1,32], index: 2, kind: input, shape index: {}]
  %s3 = inlined_call_operand.vmem [shape: f32[1,32], index: 3, kind: input, shape index: {}]
  %s4 = inlined_call_operand.vmem [shape: bf16[64,32], index: 4, kind: output, shape index: {}]
  %s5 = sld [smem:[#allocation0]]
  $region26: #{_lambda_.22} parent=0
    _
  %s7 = ssub.s32 1, %s5
  %s8 = scalar_select 0, %s7, %s5
  // Predicated region
  $region2: #{_lambda_.22} parent=0 // pred_check
    _
  $region3: #{_lambda_.22} parent=0 // pred_check_branch
    %10 = sbr.rel (0) target = $region5
  $region4: #{_lambda_.22} parent=0 // pred_region
    _
  $region5: #{_lambda_.22} parent=0 // pred_fallthru
    _
  // Predicated region
  $region6: #{_lambda_.22} parent=0 // pred_check
    _
  $region7: #{_lambda_.22} parent=0 // pred_check_branch
    %12 = sbr.rel (0) target = $region9
  $region8: #{_lambda_.22} parent=0 // pred_region
    _
  $region9: #{_lambda_.22} parent=0 // pred_fallthru
    _
  // Predicated region
  $region10: #{_lambda_.22} parent=0 // pred_check
    _
  $region11: #{_lambda_.22} parent=0 // pred_check_branch
    %14 = sbr.rel (0) target = $region13
  $region12: #{_lambda_.22} parent=0 // pred_region
    _
  $region13: #{_lambda_.22} parent=0 // pred_fallthru
    _
  // Predicated region
  $region14: #{_lambda_.22} parent=0 // pred_check
    _
  $region15: #{_lambda_.22} parent=0 // pred_check_branch
    %16 = sbr.rel (0) target = $region17
  $region16: #{_lambda_.22} parent=0 // pred_region
    _
  $region17: #{_lambda_.22} parent=0 // pred_fallthru
    _
  %v18 = vld [vmem:[%s0] sm:$0xf]
  %v19 = vld [vmem:[%s0 + $0x4] sm:$0xf]
  %v20 = vld [vmem:[%s0 + $0x8] sm:$0xf]
  %v21 = vld [vmem:[%s0 + $0xc] sm:$0xf]
  %v22 = vld [vmem:[%s0 + $0x10] sm:$0xf]
  %v23 = vld [vmem:[%s0 + $0x14] sm:$0xf]
  %v24 = vld [vmem:[%s0 + $0x18] sm:$0xf]
  %v25 = vld [vmem:[%s0 + $0x1c] sm:$0xf]
  %v26 = vld [vmem:[%s1] sm:$0xf]
  %v27 = vld [vmem:[%s1 + $0x4] sm:$0xf]
  %v28 = vld [vmem:[%s1 + $0x8] sm:$0xf]
  %v29 = vld [vmem:[%s1 + $0xc] sm:$0xf]
  %v38 = vunpack.c.l.b16 %v18
  %v39 = vunpack.c.l.b16 %v19
  %v40 = vunpack.c.l.b16 %v20
  %v41 = vunpack.c.l.b16 %v21
  %v42 = vunpack.c.l.b16 %v22
  %v43 = vunpack.c.l.b16 %v23
  %v44 = vunpack.c.l.b16 %v24
  %v45 = vunpack.c.l.b16 %v25
  %v46 = vpack.c.b16 %v39, %v38
  %v47 = vpack.c.b16 %v41, %v40
  %v48 = vpack.c.b16 %v43, %v42
  %v49 = vpack.c.b16 %v45, %v44
  %v54 = vunpack.c.l.b16 %v26
  %v55 = vunpack.c.l.b16 %v27
  %v56 = vunpack.c.l.b16 %v28
  %v57 = vunpack.c.l.b16 %v29
  %v58 = vpack.c.b16 %v55, %v54
  %v59 = vpack.c.b16 %v57, %v56
  %vm62 = vcmask 261120
  %v64 = vsel %vm62, %v46, 0
  %v67 = vsel %vm62, %v47, 0
  %v70 = vsel %vm62, %v48, 0
  %v73 = vsel %vm62, %v49, 0
  %75 = vmatprep.subr.bf16.mxu0 0
  %76 = vmatpush1.bf16.msra.mxu0 %v58
  %77 = vmatprep.subr.bf16.mxu0 0
  %78 = vmatpush1.bf16.msra.mxu0 %v59
  %79 = vmatprep.subr.bf16.mxu0 0
  %80 = vmatpush1.bf16.msra.mxu0 0
  %81 = vmatprep.subr.bf16.mxu0 0
  %82 = vmatpush1.bf16.msra.mxu0 0
  %83 = vmatprep.subr.bf16.mxu0 0
  %84 = vmatpush1.bf16.msra.mxu0 0
  %85 = vmatprep.subr.bf16.mxu0 0
  %86 = vmatpush1.bf16.msra.mxu0 0
  %87 = vmatprep.subr.bf16.mxu0 0
  %88 = vmatpush1.bf16.msra.mxu0 0
  %89 = vmatprep.subr.bf16.mxu0 0
  %90 = vmatpush1.bf16.msra.mxu0 0
  %91 = vmatprep.subr.bf16.mxu0 0
  %92 = vmatpush1.bf16.msra.mxu0 0
  %93 = vmatprep.subr.bf16.mxu0 0
  %94 = vmatpush1.bf16.msra.mxu0 0
  %95 = vmatprep.subr.bf16.mxu0 0
  %96 = vmatpush1.bf16.msra.mxu0 0
  %97 = vmatprep.subr.bf16.mxu0 0
  %98 = vmatpush1.bf16.msra.mxu0 0
  %99 = vmatprep.subr.bf16.mxu0 0
  %100 = vmatpush1.bf16.msra.mxu0 0
  %101 = vmatprep.subr.bf16.mxu0 0
  %102 = vmatpush1.bf16.msra.mxu0 0
  %103 = vmatprep.subr.bf16.mxu0 0
  %104 = vmatpush1.bf16.msra.mxu0 0
  %105 = vmatprep.subr.bf16.mxu0 0
  %106 = vmatpush1.bf16.msra.mxu0 0
  %107 = vmatprep.mubr.bf16.mxu0 0
  %108 = vmatmul.mubr.bf16.gmra.mrb[0].mxu0 %v64
  %v109 = vpop.f32.mrb[0].mxu0
  %v110 = vadd.f32 0.0, %v109
  %v111 = vpop.f32.mrb[0].mxu0
  %v112 = vpop.f32.mrb[0].mxu0
  %v113 = vadd.f32 0.0, %v112
  %v114 = vpop.f32.mrb[0].mxu0
  %115 = vmatprep.mubr.bf16.mxu0 0
  %116 = vmatmul.mubr.bf16.gmra.mrb[0].mxu0 %v67
  %v117 = vpop.f32.mrb[0].mxu0
  %v118 = vadd.f32 0.0, %v117
  %v119 = vpop.f32.mrb[0].mxu0
  %v120 = vpop.f32.mrb[0].mxu0
  %v121 = vadd.f32 0.0, %v120
  %v122 = vpop.f32.mrb[0].mxu0
  %123 = vmatprep.mubr.bf16.mxu0 0
  %124 = vmatmul.mubr.bf16.gmra.mrb[0].mxu0 %v70
  %v125 = vpop.f32.mrb[0].mxu0
  %v126 = vadd.f32 0.0, %v125
  %v127 = vpop.f32.mrb[0].mxu0
  %v128 = vpop.f32.mrb[0].mxu0
  %v129 = vadd.f32 0.0, %v128
  %v130 = vpop.f32.mrb[0].mxu0
  %131 = vmatprep.mubr.bf16.mxu0 0
  %132 = vmatmul.mubr.bf16.gmra.mrb[0].mxu0 %v73
  %v133 = vpop.f32.mrb[0].mxu0
  %v134 = vadd.f32 0.0, %v133
  %v135 = vpop.f32.mrb[0].mxu0
  %v136 = vpop.f32.mrb[0].mxu0
  %v137 = vadd.f32 0.0, %v136
  %v138 = vpop.f32.mrb[0].mxu0
  %139 = vdwg.mxu0
  %v140 = vld [vmem:[%s2] sm:$0x1]
  %v142 = vlaneseq
  %v143 = vshrl.u32 %v142, 7
  %v144 = vsub.s32 0, %v143
  %v145 = vrot.slane %v140, %v144
  %v147 = vmul.f32 %v110, %v145
  %v148 = vmul.f32 %v113, %v145
  %v149 = vmul.f32 %v118, %v145
  %v150 = vmul.f32 %v121, %v145
  %v151 = vmul.f32 %v126, %v145
  %v152 = vmul.f32 %v129, %v145
  %v153 = vmul.f32 %v134, %v145
  %v154 = vmul.f32 %v137, %v145
  %v155 = vld [vmem:[%s3] sm:$0x1]
  %v157 = vlaneseq
  %v158 = vshrl.u32 %v157, 7
  %v159 = vsub.s32 0, %v158
  %v160 = vrot.slane %v155, %v159
  %v162 = vadd.f32 %v147, %v160
  %v163 = vadd.f32 %v148, %v160
  %v164 = vadd.f32 %v149, %v160
  %v165 = vadd.f32 %v150, %v160
  %v166 = vadd.f32 %v151, %v160
  %v167 = vadd.f32 %v152, %v160
  %v168 = vadd.f32 %v153, %v160
  %v169 = vadd.f32 %v154, %v160
  %v170 = vpack.c.bf16 %v163, %v162
  %v171 = vpack.c.bf16 %v165, %v164
  %v172 = vpack.c.bf16 %v167, %v166
  %v173 = vpack.c.bf16 %v169, %v168
  %v178 = vunpack.c.l.b16 %v170
  %v179 = vunpack.c.h.b16 %v170
  %v180 = vunpack.c.l.b16 %v171
  %v181 = vunpack.c.h.b16 %v171
  %v182 = vunpack.c.l.b16 %v172
  %v183 = vunpack.c.h.b16 %v172
  %v184 = vunpack.c.l.b16 %v173
  %v185 = vunpack.c.h.b16 %v173
  %v186 = vpack.c.b16 %v178, %v178
  %v187 = vpack.c.b16 %v179, %v179
  %v188 = vpack.c.b16 %v180, %v180
  %v189 = vpack.c.b16 %v181, %v181
  %v190 = vpack.c.b16 %v182, %v182
  %v191 = vpack.c.b16 %v183, %v183
  %v192 = vpack.c.b16 %v184, %v184
  %v193 = vpack.c.b16 %v185, %v185
  %vm202 = vcmask 257024
  %203 = vst.msk [vmem:[%s4] sm:$0xf] %vm202, %v186
  %204 = vst.msk [vmem:[%s4 + $0x4] sm:$0xf] %vm202, %v187
  %205 = vst.msk [vmem:[%s4 + $0x8] sm:$0xf] %vm202, %v188
  %206 = vst.msk [vmem:[%s4 + $0xc] sm:$0xf] %vm202, %v189
  %207 = vst.msk [vmem:[%s4 + $0x10] sm:$0xf] %vm202, %v190
  %208 = vst.msk [vmem:[%s4 + $0x14] sm:$0xf] %vm202, %v191
  %209 = vst.msk [vmem:[%s4 + $0x18] sm:$0xf] %vm202, %v192
  %210 = vst.msk [vmem:[%s4 + $0x1c] sm:$0xf] %vm202, %v193
  // Predicated region
  $region18: #{_lambda_.22} parent=0 // pred_check
    _
  $region19: #{_lambda_.22} parent=0 // pred_check_branch
    %212 = sbr.rel (0) target = $region21
  $region20: #{_lambda_.22} parent=0 // pred_region
    _
  $region21: #{_lambda_.22} parent=0 // pred_fallthru
    _
  // Predicated region
  $region22: #{_lambda_.22} parent=0 // pred_check
    _
  $region23: #{_lambda_.22} parent=0 // pred_check_branch
    %214 = sbr.rel (0) target = $region25
  $region24: #{_lambda_.22} parent=0 // pred_region
    _
  $region25: #{_lambda_.22} parent=0 // pred_fallthru
    _

// kernel: _lambda_.21
$region0: #{_lambda_.21}
  #allocation0 [shape = 'u32[]', space=smem, size = 0x4, offset = 0x4, fixed_abs, tag = 'smem constant byte address 0x4 - core index']
  #allocation1 [shape = 'u32[144,128]{1,0:T(1,128)}', space=vmem, size = 0x12000, scoped, tag = 'internal scratch']
  %s0 = inlined_call_operand.vmem [shape: bf16[64,32], index: 0, kind: input, shape index: {}, may-alias: {0,6}]
  %s1 = inlined_call_operand.vmem [shape: bf16[32,64], index: 1, kind: input, shape index: {}]
  %s2 = inlined_call_operand.vmem [shape: f32[1,64], index: 2, kind: input, shape index: {}]
  %s3 = inlined_call_operand.vmem [shape: bf16[64,32], index: 3, kind: input, shape index: {}]
  %s4 = inlined_call_operand.vmem [shape: f32[1,32], index: 4, kind: input, shape index: {}]
  %s5 = inlined_call_operand.vmem [shape: f32[1,32], index: 5, kind: input, shape index: {}]
  %s6 = inlined_call_operand.vmem [shape: bf16[64,32], index: 6, kind: input, shape index: {}, may-alias: {0,6}]
  %s7 = inlined_call_operand.vmem [shape: bf16[64,32], index: 7, kind: output, shape index: {}]
  %s8 = sld [smem:[#allocation0]]
  $region38: #{_lambda_.21} parent=0
    _
  %s10 = ssub.s32 1, %s8
  %s11 = scalar_select 0, %s10, %s8
  // Predicated region
  $region2: #{_lambda_.21} parent=0 // pred_check
    _
  $region3: #{_lambda_.21} parent=0 // pred_check_branch
    %13 = sbr.rel (0) target = $region5
  $region4: #{_lambda_.21} parent=0 // pred_region
    _
  $region5: #{_lambda_.21} parent=0 // pred_fallthru
    _
  // Predicated region
  $region6: #{_lambda_.21} parent=0 // pred_check
    _
  $region7: #{_lambda_.21} parent=0 // pred_check_branch
    %15 = sbr.rel (0) target = $region9
  $region8: #{_lambda_.21} parent=0 // pred_region
    _
  $region9: #{_lambda_.21} parent=0 // pred_fallthru
    _
  // Predicated region
  $region10: #{_lambda_.21} parent=0 // pred_check
    _
  $region11: #{_lambda_.21} parent=0 // pred_check_branch
    %17 = sbr.rel (0) target = $region13
  $region12: #{_lambda_.21} parent=0 // pred_region
    _
  $region13: #{_lambda_.21} parent=0 // pred_fallthru
    _
  // Predicated region
  $region14: #{_lambda_.21} parent=0 // pred_check
    _
  $region15: #{_lambda_.21} parent=0 // pred_check_branch
    %19 = sbr.rel (0) target = $region17
  $region16: #{_lambda_.21} parent=0 // pred_region
    _
  $region17: #{_lambda_.21} parent=0 // pred_fallthru
    _
  // Predicated region
  $region18: #{_lambda_.21} parent=0 // pred_check
    _
  $region19: #{_lambda_.21} parent=0 // pred_check_branch
    %21 = sbr.rel (0) target = $region21
  $region20: #{_lambda_.21} parent=0 // pred_region
    _
  $region21: #{_lambda_.21} parent=0 // pred_fallthru
    _
  // Predicated region
  $region22: #{_lambda_.21} parent=0 // pred_check
    _
  $region23: #{_lambda_.21} parent=0 // pred_check_branch
    %23 = sbr.rel (0) target = $region25
  $region24: #{_lambda_.21} parent=0 // pred_region
    _
  $region25: #{_lambda_.21} parent=0 // pred_fallthru
    _
  // Predicated region
  $region26: #{_lambda_.21} parent=0 // pred_check
    _
  $region27: #{_lambda_.21} parent=0 // pred_check_branch
    %25 = sbr.rel (0) target = $region29
  $region28: #{_lambda_.21} parent=0 // pred_region
    _
  $region29: #{_lambda_.21} parent=0 // pred_fallthru
    _
  %v27 = vld [vmem:[%s0] sm:$0xf]
  %v28 = vld [vmem:[%s0 + $0x4] sm:$0xf]
  %v29 = vld [vmem:[%s0 + $0x8] sm:$0xf]
  %v30 = vld [vmem:[%s0 + $0xc] sm:$0xf]
  %v31 = vld [vmem:[%s0 + $0x10] sm:$0xf]
  %v32 = vld [vmem:[%s0 + $0x14] sm:$0xf]
  %v33 = vld [vmem:[%s0 + $0x18] sm:$0xf]
  %v34 = vld [vmem:[%s0 + $0x1c] sm:$0xf]
  %v35 = vld [vmem:[%s1] sm:$0xf]
  %v36 = vld [vmem:[%s1 + $0x4] sm:$0xf]
  %v37 = vld [vmem:[%s1 + $0x8] sm:$0xf]
  %v38 = vld [vmem:[%s1 + $0xc] sm:$0xf]
  %v39 = vld [vmem:[%s2] sm:$0x1]
  %v41 = vlaneseq
  %v42 = vshrl.u32 %v41, 7
  %v43 = vsub.s32 0, %v42
  %v44 = vrot.slane %v39, %v43
  %v54 = vunpack.c.l.b16 %v27
  %v55 = vunpack.c.l.b16 %v28
  %v56 = vunpack.c.l.b16 %v29
  %v57 = vunpack.c.l.b16 %v30
  %v58 = vunpack.c.l.b16 %v31
  %v59 = vunpack.c.l.b16 %v32
  %v60 = vunpack.c.l.b16 %v33
  %v61 = vunpack.c.l.b16 %v34
  %v62 = vpack.c.b16 %v55, %v54
  %v63 = vpack.c.b16 %v57, %v56
  %v64 = vpack.c.b16 %v59, %v58
  %v65 = vpack.c.b16 %v61, %v60
  %v70 = vunpack.c.l.b16 %v35
  %v71 = vunpack.c.l.b16 %v36
  %v72 = vunpack.c.l.b16 %v37
  %v73 = vunpack.c.l.b16 %v38
  %v74 = vpack.c.b16 %v71, %v70
  %v75 = vpack.c.b16 %v73, %v72
  %vm78 = vcmask 261120
  %v80 = vsel %vm78, %v62, 0
  %v83 = vsel %vm78, %v63, 0
  %v86 = vsel %vm78, %v64, 0
  %v89 = vsel %vm78, %v65, 0
  %91 = vmatprep.subr.bf16.mxu0 0
  %92 = vmatpush1.bf16.msra.mxu0 %v74
  %93 = vmatprep.subr.bf16.mxu0 0
  %94 = vmatpush1.bf16.msra.mxu0 %v75
  %95 = vmatprep.subr.bf16.mxu0 0
  %96 = vmatpush1.bf16.msra.mxu0 0
  %97 = vmatprep.subr.bf16.mxu0 0
  %98 = vmatpush1.bf16.msra.mxu0 0
  %99 = vmatprep.subr.bf16.mxu0 0
  %100 = vmatpush1.bf16.msra.mxu0 0
  %101 = vmatprep.subr.bf16.mxu0 0
  %102 = vmatpush1.bf16.msra.mxu0 0
  %103 = vmatprep.subr.bf16.mxu0 0
  %104 = vmatpush1.bf16.msra.mxu0 0
  %105 = vmatprep.subr.bf16.mxu0 0
  %106 = vmatpush1.bf16.msra.mxu0 0
  %107 = vmatprep.subr.bf16.mxu0 0
  %108 = vmatpush1.bf16.msra.mxu0 0
  %109 = vmatprep.subr.bf16.mxu0 0
  %110 = vmatpush1.bf16.msra.mxu0 0
  %111 = vmatprep.subr.bf16.mxu0 0
  %112 = vmatpush1.bf16.msra.mxu0 0
  %113 = vmatprep.subr.bf16.mxu0 0
  %114 = vmatpush1.bf16.msra.mxu0 0
  %115 = vmatprep.subr.bf16.mxu0 0
  %116 = vmatpush1.bf16.msra.mxu0 0
  %117 = vmatprep.subr.bf16.mxu0 0
  %118 = vmatpush1.bf16.msra.mxu0 0
  %119 = vmatprep.subr.bf16.mxu0 0
  %120 = vmatpush1.bf16.msra.mxu0 0
  %121 = vmatprep.subr.bf16.mxu0 0
  %122 = vmatpush1.bf16.msra.mxu0 0
  %123 = vmatprep.mubr.bf16.mxu0 0
  %124 = vmatmul.mubr.bf16.gmra.mrb[0].mxu0 %v80
  %v125 = vpop.f32.mrb[0].mxu0
  %v126 = vadd.f32 %v44, %v125
  %v127 = vpop.f32.mrb[0].mxu0
  %v128 = vpop.f32.mrb[0].mxu0
  %v129 = vadd.f32 %v44, %v128
  %v130 = vpop.f32.mrb[0].mxu0
  %131 = vmatprep.mubr.bf16.mxu0 0
  %132 = vmatmul.mubr.bf16.gmra.mrb[0].mxu0 %v83
  %v133 = vpop.f32.mrb[0].mxu0
  %v134 = vadd.f32 %v44, %v133
  %v135 = vpop.f32.mrb[0].mxu0
  %v136 = vpop.f32.mrb[0].mxu0
  %v137 = vadd.f32 %v44, %v136
  %v138 = vpop.f32.mrb[0].mxu0
  %139 = vmatprep.mubr.bf16.mxu0 0
  %140 = vmatmul.mubr.bf16.gmra.mrb[0].mxu0 %v86
  %v141 = vpop.f32.mrb[0].mxu0
  %v142 = vadd.f32 %v44, %v141
  %v143 = vpop.f32.mrb[0].mxu0
  %v144 = vpop.f32.mrb[0].mxu0
  %v145 = vadd.f32 %v44, %v144
  %v146 = vpop.f32.mrb[0].mxu0
  %147 = vmatprep.mubr.bf16.mxu0 0
  %148 = vmatmul.mubr.bf16.gmra.mrb[0].mxu0 %v89
  %v149 = vpop.f32.mrb[0].mxu0
  %v150 = vadd.f32 %v44, %v149
  %v151 = vpop.f32.mrb[0].mxu0
  %v152 = vpop.f32.mrb[0].mxu0
  %v153 = vadd.f32 %v44, %v152
  %v154 = vpop.f32.mrb[0].mxu0
  %155 = vdwg.mxu0
  %v156 = vmul.f32 %v126, 0.5
  %v157 = vmul.f32 %v129, 0.5
  %v158 = vmul.f32 %v134, 0.5
  %v159 = vmul.f32 %v137, 0.5
  %v160 = vmul.f32 %v142, 0.5
  %v161 = vmul.f32 %v145, 0.5
  %v162 = vmul.f32 %v150, 0.5
  %v163 = vmul.f32 %v153, 0.5
  %v164 = vmul.f32 %v126, 0.044715
  %v165 = vmul.f32 %v129, 0.044715
  %v166 = vmul.f32 %v134, 0.044715
  %v167 = vmul.f32 %v137, 0.044715
  %v168 = vmul.f32 %v142, 0.044715
  %v169 = vmul.f32 %v145, 0.044715
  %v170 = vmul.f32 %v150, 0.044715
  %v171 = vmul.f32 %v153, 0.044715
  %v172 = vmul.f32 %v164, %v126
  %v173 = vmul.f32 %v165, %v129
  %v174 = vmul.f32 %v166, %v134
  %v175 = vmul.f32 %v167, %v137
  %v176 = vmul.f32 %v168, %v142
  %v177 = vmul.f32 %v169, %v145
  %v178 = vmul.f32 %v170, %v150
  %v179 = vmul.f32 %v171, %v153
  %v180 = vmul.f32 %v172, %v126
  %v181 = vmul.f32 %v173, %v129
  %v182 = vmul.f32 %v174, %v134
  %v183 = vmul.f32 %v175, %v137
  %v184 = vmul.f32 %v176, %v142
  %v185 = vmul.f32 %v177, %v145
  %v186 = vmul.f32 %v178, %v150
  %v187 = vmul.f32 %v179, %v153
  %v188 = vadd.f32 %v126, %v180
  %v189 = vadd.f32 %v129, %v181
  %v190 = vadd.f32 %v134, %v182
  %v191 = vadd.f32 %v137, %v183
  %v192 = vadd.f32 %v142, %v184
  %v193 = vadd.f32 %v145, %v185
  %v194 = vadd.f32 %v150, %v186
  %v195 = vadd.f32 %v153, %v187
  %v196 = vmul.f32 %v188, 0.7978846
  %v197 = vmul.f32 %v189, 0.7978846
  %v198 = vmul.f32 %v190, 0.7978846
  %v199 = vmul.f32 %v191, 0.7978846
  %v200 = vmul.f32 %v192, 0.7978846
  %v201 = vmul.f32 %v193, 0.7978846
  %v202 = vmul.f32 %v194, 0.7978846
  %v203 = vmul.f32 %v195, 0.7978846
  %v204 = vtanh.pop %v196
  %v205 = vtanh.pop %v197
  %v206 = vtanh.pop %v198
  %v207 = vtanh.pop %v199
  %v208 = vtanh.pop %v200
  %v209 = vtanh.pop %v201
  %v210 = vtanh.pop %v202
  %v211 = vtanh.pop %v203
  %v212 = vadd.f32 %v204, 1.0
  %v213 = vadd.f32 %v205, 1.0
  %v214 = vadd.f32 %v206, 1.0
  %v215 = vadd.f32 %v207, 1.0
  %v216 = vadd.f32 %v208, 1.0
  %v217 = vadd.f32 %v209, 1.0
  %v218 = vadd.f32 %v210, 1.0
  %v219 = vadd.f32 %v211, 1.0
  %v220 = vmul.f32 %v156, %v212
  %v221 = vmul.f32 %v157, %v213
  %v222 = vmul.f32 %v158, %v214
  %v223 = vmul.f32 %v159, %v215
  %v224 = vmul.f32 %v160, %v216
  %v225 = vmul.f32 %v161, %v217
  %v226 = vmul.f32 %v162, %v218
  %v227 = vmul.f32 %v163, %v219
  %v228 = vld [vmem:[%s3] sm:$0xf]
  %v229 = vld [vmem:[%s3 + $0x4] sm:$0xf]
  %v230 = vld [vmem:[%s3 + $0x8] sm:$0xf]
  %v231 = vld [vmem:[%s3 + $0xc] sm:$0xf]
  %v232 = vld [vmem:[%s3 + $0x10] sm:$0xf]
  %v233 = vld [vmem:[%s3 + $0x14] sm:$0xf]
  %v234 = vld [vmem:[%s3 + $0x18] sm:$0xf]
  %v235 = vld [vmem:[%s3 + $0x1c] sm:$0xf]
  %v236 = vpack.c.bf16 %v221, %v220
  %v237 = vpack.c.bf16 %v223, %v222
  %v238 = vpack.c.bf16 %v225, %v224
  %v239 = vpack.c.bf16 %v227, %v226
  %v248 = vunpack.c.l.b16 %v228
  %v249 = vunpack.c.l.b16 %v229
  %v250 = vunpack.c.l.b16 %v230
  %v251 = vunpack.c.l.b16 %v231
  %v252 = vunpack.c.l.b16 %v232
  %v253 = vunpack.c.l.b16 %v233
  %v254 = vunpack.c.l.b16 %v234
  %v255 = vunpack.c.l.b16 %v235
  %v256 = vpack.c.b16 %v249, %v248
  %v257 = vpack.c.b16 %v251, %v250
  %v258 = vpack.c.b16 %v253, %v252
  %v259 = vpack.c.b16 %v255, %v254
  %vm264 = vcmask 523264
  %v266 = vsel %vm264, %v236, 0
  %v269 = vsel %vm264, %v237, 0
  %v272 = vsel %vm264, %v238, 0
  %v275 = vsel %vm264, %v239, 0
  %277 = vmatprep.subr.bf16.mxu0 0
  %278 = vmatpush1.bf16.msra.mxu0 %v256
  %279 = vmatprep.subr.bf16.mxu0 0
  %280 = vmatpush1.bf16.msra.mxu0 %v257
  %281 = vmatprep.subr.bf16.mxu0 0
  %282 = vmatpush1.bf16.msra.mxu0 %v258
  %283 = vmatprep.subr.bf16.mxu0 0
  %284 = vmatpush1.bf16.msra.mxu0 %v259
  %285 = vmatprep.subr.bf16.mxu0 0
  %286 = vmatpush1.bf16.msra.mxu0 0
  %287 = vmatprep.subr.bf16.mxu0 0
  %288 = vmatpush1.bf16.msra.mxu0 0
  %289 = vmatprep.subr.bf16.mxu0 0
  %290 = vmatpush1.bf16.msra.mxu0 0
  %291 = vmatprep.subr.bf16.mxu0 0
  %292 = vmatpush1.bf16.msra.mxu0 0
  %293 = vmatprep.subr.bf16.mxu0 0
  %294 = vmatpush1.bf16.msra.mxu0 0
  %295 = vmatprep.subr.bf16.mxu0 0
  %296 = vmatpush1.bf16.msra.mxu0 0
  %297 = vmatprep.subr.bf16.mxu0 0
  %298 = vmatpush1.bf16.msra.mxu0 0
  %299 = vmatprep.subr.bf16.mxu0 0
  %300 = vmatpush1.bf16.msra.mxu0 0
  %301 = vmatprep.subr.bf16.mxu0 0
  %302 = vmatpush1.bf16.msra.mxu0 0
  %303 = vmatprep.subr.bf16.mxu0 0
  %304 = vmatpush1.bf16.msra.mxu0 0
  %305 = vmatprep.subr.bf16.mxu0 0
  %306 = vmatpush1.bf16.msra.mxu0 0
  %307 = vmatprep.subr.bf16.mxu0 0
  %308 = vmatpush1.bf16.msra.mxu0 0
  %309 = vmatprep.mubr.bf16.mxu0 0
  %310 = vmatmul.mubr.bf16.gmra.mrb[0].mxu0 %v266
  %v311 = vpop.f32.mrb[0].mxu0
  %v312 = vadd.f32 0.0, %v311
  %v313 = vpop.f32.mrb[0].mxu0
  %v314 = vpop.f32.mrb[0].mxu0
  %v315 = vadd.f32 0.0, %v314
  %v316 = vpop.f32.mrb[0].mxu0
  %317 = vmatprep.mubr.bf16.mxu0 0
  %318 = vmatmul.mubr.bf16.gmra.mrb[0].mxu0 %v269
  %v319 = vpop.f32.mrb[0].mxu0
  %v320 = vadd.f32 0.0, %v319
  %v321 = vpop.f32.mrb[0].mxu0
  %v322 = vpop.f32.mrb[0].mxu0
  %v323 = vadd.f32 0.0, %v322
  %v324 = vpop.f32.mrb[0].mxu0
  %325 = vmatprep.mubr.bf16.mxu0 0
  %326 = vmatmul.mubr.bf16.gmra.mrb[0].mxu0 %v272
  %v327 = vpop.f32.mrb[0].mxu0
  %v328 = vadd.f32 0.0, %v327
  %v329 = vpop.f32.mrb[0].mxu0
  %v330 = vpop.f32.mrb[0].mxu0
  %v331 = vadd.f32 0.0, %v330
  %v332 = vpop.f32.mrb[0].mxu0
  %333 = vmatprep.mubr.bf16.mxu0 0
  %334 = vmatmul.mubr.bf16.gmra.mrb[0].mxu0 %v275
  %v335 = vpop.f32.mrb[0].mxu0
  %v336 = vadd.f32 0.0, %v335
  %v337 = vpop.f32.mrb[0].mxu0
  %v338 = vpop.f32.mrb[0].mxu0
  %v339 = vadd.f32 0.0, %v338
  %v340 = vpop.f32.mrb[0].mxu0
  %341 = vdwg.mxu0
  %v342 = vld [vmem:[%s4] sm:$0x1]
  %v344 = vlaneseq
  %v345 = vshrl.u32 %v344, 7
  %v346 = vsub.s32 0, %v345
  %v347 = vrot.slane %v342, %v346
  %v349 = vmul.f32 %v312, %v347
  %v350 = vmul.f32 %v315, %v347
  %v351 = vmul.f32 %v320, %v347
  %v352 = vmul.f32 %v323, %v347
  %v353 = vmul.f32 %v328, %v347
  %v354 = vmul.f32 %v331, %v347
  %v355 = vmul.f32 %v336, %v347
  %v356 = vmul.f32 %v339, %v347
  %v357 = vld [vmem:[%s5] sm:$0x1]
  %v359 = vlaneseq
  %v360 = vshrl.u32 %v359, 7
  %v361 = vsub.s32 0, %v360
  %v362 = vrot.slane %v357, %v361
  %v364 = vadd.f32 %v349, %v362
  %v365 = vadd.f32 %v350, %v362
  %v366 = vadd.f32 %v351, %v362
  %v367 = vadd.f32 %v352, %v362
  %v368 = vadd.f32 %v353, %v362
  %v369 = vadd.f32 %v354, %v362
  %v370 = vadd.f32 %v355, %v362
  %v371 = vadd.f32 %v356, %v362
  %v372 = vld [vmem:[%s6] sm:$0xf]
  %v373 = vld [vmem:[%s6 + $0x4] sm:$0xf]
  %v374 = vld [vmem:[%s6 + $0x8] sm:$0xf]
  %v375 = vld [vmem:[%s6 + $0xc] sm:$0xf]
  %v376 = vld [vmem:[%s6 + $0x10] sm:$0xf]
  %v377 = vld [vmem:[%s6 + $0x14] sm:$0xf]
  %v378 = vld [vmem:[%s6 + $0x18] sm:$0xf]
  %v379 = vld [vmem:[%s6 + $0x1c] sm:$0xf]
  %v380 = vunpack.c.l.bf16 %v372
  %v381 = vunpack.c.l.bf16 %v373
  %v382 = vunpack.c.l.bf16 %v374
  %v383 = vunpack.c.l.bf16 %v375
  %v384 = vunpack.c.l.bf16 %v376
  %v385 = vunpack.c.l.bf16 %v377
  %v386 = vunpack.c.l.bf16 %v378
  %v387 = vunpack.c.l.bf16 %v379
  %v388 = vadd.f32 %v364, %v380
  %v389 = vadd.f32 %v365, %v381
  %v390 = vadd.f32 %v366, %v382
  %v391 = vadd.f32 %v367, %v383
  %v392 = vadd.f32 %v368, %v384
  %v393 = vadd.f32 %v369, %v385
  %v394 = vadd.f32 %v370, %v386
  %v395 = vadd.f32 %v371, %v387
  %v396 = vpack.c.bf16 %v389, %v388
  %v397 = vpack.c.bf16 %v391, %v390
  %v398 = vpack.c.bf16 %v393, %v392
  %v399 = vpack.c.bf16 %v395, %v394
  %v404 = vunpack.c.l.b16 %v396
  %v405 = vunpack.c.h.b16 %v396
  %v406 = vunpack.c.l.b16 %v397
  %v407 = vunpack.c.h.b16 %v397
  %v408 = vunpack.c.l.b16 %v398
  %v409 = vunpack.c.h.b16 %v398
  %v410 = vunpack.c.l.b16 %v399
  %v411 = vunpack.c.h.b16 %v399
  %v412 = vpack.c.b16 %v404, %v404
  %v413 = vpack.c.b16 %v405, %v405
  %v414 = vpack.c.b16 %v406, %v406
  %v415 = vpack.c.b16 %v407, %v407
  %v416 = vpack.c.b16 %v408, %v408
  %v417 = vpack.c.b16 %v409, %v409
  %v418 = vpack.c.b16 %v410, %v410
  %v419 = vpack.c.b16 %v411, %v411
  %vm428 = vcmask 257024
  %429 = vst.msk [vmem:[%s7] sm:$0xf] %vm428, %v412
  %430 = vst.msk [vmem:[%s7 + $0x4] sm:$0xf] %vm428, %v413
  %431 = vst.msk [vmem:[%s7 + $0x8] sm:$0xf] %vm428, %v414
  %432 = vst.msk [vmem:[%s7 + $0xc] sm:$0xf] %vm428, %v415
  %433 = vst.msk [vmem:[%s7 + $0x10] sm:$0xf] %vm428, %v416
  %434 = vst.msk [vmem:[%s7 + $0x14] sm:$0xf] %vm428, %v417
  %435 = vst.msk [vmem:[%s7 + $0x18] sm:$0xf] %vm428, %v418
  %436 = vst.msk [vmem:[%s7 + $0x1c] sm:$0xf] %vm428, %v419
  // Predicated region
  $region30: #{_lambda_.21} parent=0 // pred_check
    _
  $region31: #{_lambda_.21} parent=0 // pred_check_branch
    %438 = sbr.rel (0) target = $region33
  $region32: #{_lambda_.21} parent=0 // pred_region
    _
  $region33: #{_lambda_.21} parent=0 // pred_fallthru
    _
  // Predicated region
  $region34: #{_lambda_.21} parent=0 // pred_check
    _
  $region35: #{_lambda_.21} parent=0 // pred_check_branch
    %440 = sbr.rel (0) target = $region37
  $region36: #{_lambda_.21} parent=0 // pred_region
    _
  $region37: #{_lambda_.21} parent=0 // pred_fallthru
    _

// kernel: _lambda_.20
$region0: #{_lambda_.20}
  #allocation0 [shape = 'u32[]', space=smem, size = 0x4, offset = 0x4, fixed_abs, tag = 'smem constant byte address 0x4 - core index']
  #allocation1 [shape = 'u32[144,128]{1,0:T(1,128)}', space=vmem, size = 0x12000, scoped, tag = 'internal scratch']
  %s0 = inlined_call_operand.vmem [shape: f32[8,64,7], index: 0, kind: input, shape index: {}]
  %s1 = inlined_call_operand.vmem [shape: f32[7,8], index: 1, kind: input, shape index: {}]
  %s2 = inlined_call_operand.vmem [shape: f32[1,8], index: 2, kind: input, shape index: {}]
  %s3 = inlined_call_operand.vmem [shape: f32[1,8], index: 3, kind: input, shape index: {}]
  %s4 = inlined_call_operand.vmem [shape: bf16[8,16], index: 4, kind: input, shape index: {}]
  %s5 = inlined_call_operand.vmem [shape: f32[1,16], index: 5, kind: input, shape index: {}]
  %s6 = inlined_call_operand.vmem [shape: f32[1,16], index: 6, kind: input, shape index: {}]
  %s7 = inlined_call_operand.vmem [shape: bf16[16,32], index: 7, kind: input, shape index: {}]
  %s8 = inlined_call_operand.vmem [shape: f32[1,32], index: 8, kind: input, shape index: {}]
  %s9 = inlined_call_operand.vmem [shape: f32[1,32], index: 9, kind: input, shape index: {}]
  %s10 = inlined_call_operand.vmem [shape: bf16[64,32], index: 10, kind: output, shape index: {}]
  %s11 = sld [smem:[#allocation0]]
  $region50: #{_lambda_.20} parent=0
    _
  %s13 = ssub.s32 1, %s11
  %s14 = scalar_select 0, %s13, %s11
  // Predicated region
  $region2: #{_lambda_.20} parent=0 // pred_check
    _
  $region3: #{_lambda_.20} parent=0 // pred_check_branch
    %16 = sbr.rel (0) target = $region5
  $region4: #{_lambda_.20} parent=0 // pred_region
    _
  $region5: #{_lambda_.20} parent=0 // pred_fallthru
    _
  // Predicated region
  $region6: #{_lambda_.20} parent=0 // pred_check
    _
  $region7: #{_lambda_.20} parent=0 // pred_check_branch
    %18 = sbr.rel (0) target = $region9
  $region8: #{_lambda_.20} parent=0 // pred_region
    _
  $region9: #{_lambda_.20} parent=0 // pred_fallthru
    _
  // Predicated region
  $region10: #{_lambda_.20} parent=0 // pred_check
    _
  $region11: #{_lambda_.20} parent=0 // pred_check_branch
    %20 = sbr.rel (0) target = $region13
  $region12: #{_lambda_.20} parent=0 // pred_region
    _
  $region13: #{_lambda_.20} parent=0 // pred_fallthru
    _
  // Predicated region
  $region14: #{_lambda_.20} parent=0 // pred_check
    _
  $region15: #{_lambda_.20} parent=0 // pred_check_branch
    %22 = sbr.rel (0) target = $region17
  $region16: #{_lambda_.20} parent=0 // pred_region
    _
  $region17: #{_lambda_.20} parent=0 // pred_fallthru
    _
  // Predicated region
  $region18: #{_lambda_.20} parent=0 // pred_check
    _
  $region19: #{_lambda_.20} parent=0 // pred_check_branch
    %24 = sbr.rel (0) target = $region21
  $region20: #{_lambda_.20} parent=0 // pred_region
    _
  $region21: #{_lambda_.20} parent=0 // pred_fallthru
    _
  // Predicated region
  $region22: #{_lambda_.20} parent=0 // pred_check
    _
  $region23: #{_lambda_.20} parent=0 // pred_check_branch
    %26 = sbr.rel (0) target = $region25
  $region24: #{_lambda_.20} parent=0 // pred_region
    _
  $region25: #{_lambda_.20} parent=0 // pred_fallthru
    _
  // Predicated region
  $region26: #{_lambda_.20} parent=0 // pred_check
    _
  $region27: #{_lambda_.20} parent=0 // pred_check_branch
    %28 = sbr.rel (0) target = $region29
  $region28: #{_lambda_.20} parent=0 // pred_region
    _
  $region29: #{_lambda_.20} parent=0 // pred_fallthru
    _
  // Predicated region
  $region30: #{_lambda_.20} parent=0 // pred_check
    _
  $region31: #{_lambda_.20} parent=0 // pred_check_branch
    %30 = sbr.rel (0) target = $region33
  $region32: #{_lambda_.20} parent=0 // pred_region
    _
  $region33: #{_lambda_.20} parent=0 // pred_fallthru
    _
  // Predicated region
  $region34: #{_lambda_.20} parent=0 // pred_check
    _
  $region35: #{_lambda_.20} parent=0 // pred_check_branch
    %32 = sbr.rel (0) target = $region37
  $region36: #{_lambda_.20} parent=0 // pred_region
    _
  $region37: #{_lambda_.20} parent=0 // pred_fallthru
    _
  // Predicated region
  $region38: #{_lambda_.20} parent=0 // pred_check
    _
  $region39: #{_lambda_.20} parent=0 // pred_check_branch
    %34 = sbr.rel (0) target = $region41
  $region40: #{_lambda_.20} parent=0 // pred_region
    _
  $region41: #{_lambda_.20} parent=0 // pred_fallthru
    _
  %v36 = vld [vmem:[%s0] sm:$0xff]
  %v37 = vld [vmem:[%s0 + $0x8] sm:$0xff]
  %v38 = vld [vmem:[%s0 + $0x10] sm:$0xff]
  %v39 = vld [vmem:[%s0 + $0x18] sm:$0xff]
  %v40 = vld [vmem:[%s0 + $0x20] sm:$0xff]
  %v41 = vld [vmem:[%s0 + $0x28] sm:$0xff]
  %v42 = vld [vmem:[%s0 + $0x30] sm:$0xff]
  %v43 = vld [vmem:[%s0 + $0x38] sm:$0xff]
  %v44 = vld [vmem:[%s0 + $0x40] sm:$0xff]
  %v45 = vld [vmem:[%s0 + $0x48] sm:$0xff]
  %v46 = vld [vmem:[%s0 + $0x50] sm:$0xff]
  %v47 = vld [vmem:[%s0 + $0x58] sm:$0xff]
  %v48 = vld [vmem:[%s0 + $0x60] sm:$0xff]
  %v49 = vld [vmem:[%s0 + $0x68] sm:$0xff]
  %v50 = vld [vmem:[%s0 + $0x70] sm:$0xff]
  %v51 = vld [vmem:[%s0 + $0x78] sm:$0xff]
  %v52 = vld [vmem:[%s0 + $0x80] sm:$0xff]
  %v53 = vld [vmem:[%s0 + $0x88] sm:$0xff]
  %v54 = vld [vmem:[%s0 + $0x90] sm:$0xff]
  %v55 = vld [vmem:[%s0 + $0x98] sm:$0xff]
  %v56 = vld [vmem:[%s0 + $0xa0] sm:$0xff]
  %v57 = vld [vmem:[%s0 + $0xa8] sm:$0xff]
  %v58 = vld [vmem:[%s0 + $0xb0] sm:$0xff]
  %v59 = vld [vmem:[%s0 + $0xb8] sm:$0xff]
  %v60 = vld [vmem:[%s0 + $0xc0] sm:$0xff]
  %v61 = vld [vmem:[%s0 + $0xc8] sm:$0xff]
  %v62 = vld [vmem:[%s0 + $0xd0] sm:$0xff]
  %v63 = vld [vmem:[%s0 + $0xd8] sm:$0xff]
  %v64 = vld [vmem:[%s0 + $0xe0] sm:$0xff]
  %v65 = vld [vmem:[%s0 + $0xe8] sm:$0xff]
  %v66 = vld [vmem:[%s0 + $0xf0] sm:$0xff]
  %v67 = vld [vmem:[%s0 + $0xf8] sm:$0xff]
  %v68 = vld [vmem:[%s0 + $0x100] sm:$0xff]
  %v69 = vld [vmem:[%s0 + $0x108] sm:$0xff]
  %v70 = vld [vmem:[%s0 + $0x110] sm:$0xff]
  %v71 = vld [vmem:[%s0 + $0x118] sm:$0xff]
  %v72 = vld [vmem:[%s0 + $0x120] sm:$0xff]
  %v73 = vld [vmem:[%s0 + $0x128] sm:$0xff]
  %v74 = vld [vmem:[%s0 + $0x130] sm:$0xff]
  %v75 = vld [vmem:[%s0 + $0x138] sm:$0xff]
  %v76 = vld [vmem:[%s0 + $0x140] sm:$0xff]
  %v77 = vld [vmem:[%s0 + $0x148] sm:$0xff]
  %v78 = vld [vmem:[%s0 + $0x150] sm:$0xff]
  %v79 = vld [vmem:[%s0 + $0x158] sm:$0xff]
  %v80 = vld [vmem:[%s0 + $0x160] sm:$0xff]
  %v81 = vld [vmem:[%s0 + $0x168] sm:$0xff]
  %v82 = vld [vmem:[%s0 + $0x170] sm:$0xff]
  %v83 = vld [vmem:[%s0 + $0x178] sm:$0xff]
  %v84 = vld [vmem:[%s0 + $0x180] sm:$0xff]
  %v85 = vld [vmem:[%s0 + $0x188] sm:$0xff]
  %v86 = vld [vmem:[%s0 + $0x190] sm:$0xff]
  %v87 = vld [vmem:[%s0 + $0x198] sm:$0xff]
  %v88 = vld [vmem:[%s0 + $0x1a0] sm:$0xff]
  %v89 = vld [vmem:[%s0 + $0x1a8] sm:$0xff]
  %v90 = vld [vmem:[%s0 + $0x1b0] sm:$0xff]
  %v91 = vld [vmem:[%s0 + $0x1b8] sm:$0xff]
  %v92 = vld [vmem:[%s0 + $0x1c0] sm:$0xff]
  %v93 = vld [vmem:[%s0 + $0x1c8] sm:$0xff]
  %v94 = vld [vmem:[%s0 + $0x1d0] sm:$0xff]
  %v95 = vld [vmem:[%s0 + $0x1d8] sm:$0xff]
  %v96 = vld [vmem:[%s0 + $0x1e0] sm:$0xff]
  %v97 = vld [vmem:[%s0 + $0x1e8] sm:$0xff]
  %v98 = vld [vmem:[%s0 + $0x1f0] sm:$0xff]
  %v99 = vld [vmem:[%s0 + $0x1f8] sm:$0xff]
  %v100 = vld [vmem:[%s1] sm:$0x7f]
  %vm101 = vcmask 56320
  %v103 = vsel %vm101, %v36, 0
  %v106 = vsel %vm101, %v37, 0
  %v109 = vsel %vm101, %v38, 0
  %v112 = vsel %vm101, %v39, 0
  %v115 = vsel %vm101, %v40, 0
  %v118 = vsel %vm101, %v41, 0
  %v121 = vsel %vm101, %v42, 0
  %v124 = vsel %vm101, %v43, 0
  %v127 = vsel %vm101, %v44, 0
  %v130 = vsel %vm101, %v45, 0
  %v133 = vsel %vm101, %v46, 0
  %v136 = vsel %vm101, %v47, 0
  %v139 = vsel %vm101, %v48, 0
  %v142 = vsel %vm101, %v49, 0
  %v145 = vsel %vm101, %v50, 0
  %v148 = vsel %vm101, %v51, 0
  %v151 = vsel %vm101, %v52, 0
  %v154 = vsel %vm101, %v53, 0
  %v157 = vsel %vm101, %v54, 0
  %v160 = vsel %vm101, %v55, 0
  %v163 = vsel %vm101, %v56, 0
  %v166 = vsel %vm101, %v57, 0
  %v169 = vsel %vm101, %v58, 0
  %v172 = vsel %vm101, %v59, 0
  %v175 = vsel %vm101, %v60, 0
  %v178 = vsel %vm101, %v61, 0
  %v181 = vsel %vm101, %v62, 0
  %v184 = vsel %vm101, %v63, 0
  %v187 = vsel %vm101, %v64, 0
  %v190 = vsel %vm101, %v65, 0
  %v193 = vsel %vm101, %v66, 0
  %v196 = vsel %vm101, %v67, 0
  %v199 = vsel %vm101, %v68, 0
  %v202 = vsel %vm101, %v69, 0
  %v205 = vsel %vm101, %v70, 0
  %v208 = vsel %vm101, %v71, 0
  %v211 = vsel %vm101, %v72, 0
  %v214 = vsel %vm101, %v73, 0
  %v217 = vsel %vm101, %v74, 0
  %v220 = vsel %vm101, %v75, 0
  %v223 = vsel %vm101, %v76, 0
  %v226 = vsel %vm101, %v77, 0
  %v229 = vsel %vm101, %v78, 0
  %v232 = vsel %vm101, %v79, 0
  %v235 = vsel %vm101, %v80, 0
  %v238 = vsel %vm101, %v81, 0
  %v241 = vsel %vm101, %v82, 0
  %v244 = vsel %vm101, %v83, 0
  %v247 = vsel %vm101, %v84, 0
  %v250 = vsel %vm101, %v85, 0
  %v253 = vsel %vm101, %v86, 0
  %v256 = vsel %vm101, %v87, 0
  %v259 = vsel %vm101, %v88, 0
  %v262 = vsel %vm101, %v89, 0
  %v265 = vsel %vm101, %v90, 0
  %v268 = vsel %vm101, %v91, 0
  %v271 = vsel %vm101, %v92, 0
  %v274 = vsel %vm101, %v93, 0
  %v277 = vsel %vm101, %v94, 0
  %v280 = vsel %vm101, %v95, 0
  %v283 = vsel %vm101, %v96, 0
  %v286 = vsel %vm101, %v97, 0
  %v289 = vsel %vm101, %v98, 0
  %v292 = vsel %vm101, %v99, 0
  %vm294 = vcmask 1046528
  %v296 = vsel %vm294, %v100, 0
  %298 = vmatprep.subr.mxu0 0.0
  %299 = vmatpush1.msra.mxu0 %v296
  %300 = vmatprep.subr.mxu0 0.0
  %301 = vmatpush1.msra.mxu0 0.0
  %302 = vmatprep.subr.mxu0 0.0
  %303 = vmatpush1.msra.mxu0 0.0
  %304 = vmatprep.subr.mxu0 0.0
  %305 = vmatpush1.msra.mxu0 0.0
  %306 = vmatprep.subr.mxu0 0.0
  %307 = vmatpush1.msra.mxu0 0.0
  %308 = vmatprep.subr.mxu0 0.0
  %309 = vmatpush1.msra.mxu0 0.0
  %310 = vmatprep.subr.mxu0 0.0
  %311 = vmatpush1.msra.mxu0 0.0
  %312 = vmatprep.subr.mxu0 0.0
  %313 = vmatpush1.msra.mxu0 0.0
  %314 = vmatprep.subr.mxu0 0.0
  %315 = vmatpush1.msra.mxu0 0.0
  %316 = vmatprep.subr.mxu0 0.0
  %317 = vmatpush1.msra.mxu0 0.0
  %318 = vmatprep.subr.mxu0 0.0
  %319 = vmatpush1.msra.mxu0 0.0
  %320 = vmatprep.subr.mxu0 0.0
  %321 = vmatpush1.msra.mxu0 0.0
  %322 = vmatprep.subr.mxu0 0.0
  %323 = vmatpush1.msra.mxu0 0.0
  %324 = vmatprep.subr.mxu0 0.0
  %325 = vmatpush1.msra.mxu0 0.0
  %326 = vmatprep.subr.mxu0 0.0
  %327 = vmatpush1.msra.mxu0 0.0
  %328 = vmatprep.subr.mxu0 0.0
  %329 = vmatpush1.msra.mxu0 0.0
  %330 = vmatprep.subr.mxu0 0.0
  %331 = vmatpush1.msra.mxu0 0.0
  %332 = vmatprep.subr.mxu0 0.0
  %333 = vmatpush1.msra.mxu0 0.0
  %334 = vmatprep.subr.mxu0 0.0
  %335 = vmatpush1.msra.mxu0 0.0
  %336 = vmatprep.subr.mxu0 0.0
  %337 = vmatpush1.msra.mxu0 0.0
  %338 = vmatprep.subr.mxu0 0.0
  %339 = vmatpush1.msra.mxu0 0.0
  %340 = vmatprep.subr.mxu0 0.0
  %341 = vmatpush1.msra.mxu0 0.0
  %342 = vmatprep.subr.mxu0 0.0
  %343 = vmatpush1.msra.mxu0 0.0
  %344 = vmatprep.subr.mxu0 0.0
  %345 = vmatpush1.msra.mxu0 0.0
  %346 = vmatprep.subr.mxu0 0.0
  %347 = vmatpush1.msra.mxu0 0.0
  %348 = vmatprep.subr.mxu0 0.0
  %349 = vmatpush1.msra.mxu0 0.0
  %350 = vmatprep.subr.mxu0 0.0
  %351 = vmatpush1.msra.mxu0 0.0
  %352 = vmatprep.subr.mxu0 0.0
  %353 = vmatpush1.msra.mxu0 0.0
  %354 = vmatprep.subr.mxu0 0.0
  %355 = vmatpush1.msra.mxu0 0.0
  %356 = vmatprep.subr.mxu0 0.0
  %357 = vmatpush1.msra.mxu0 0.0
  %358 = vmatprep.subr.mxu0 0.0
  %359 = vmatpush1.msra.mxu0 0.0
  %360 = vmatprep.subr.mxu0 0.0
  %361 = vmatpush1.msra.mxu0 0.0
  %362 = vmatprep.mubr.f32.mxu0 0.0
  %363 = vmatmul.mubr.f32.gmra.mrb[0].mxu0 %v103
  %v364 = vpop.f32.mrb[0].mxu0
  %v365 = vadd.f32 0.0, %v364
  %v366 = vpop.f32.mrb[0].mxu0
  %367 = vmatprep.mubr.f32.mxu0 0.0
  %368 = vmatmul.mubr.f32.gmra.mrb[0].mxu0 %v106
  %v369 = vpop.f32.mrb[0].mxu0
  %v370 = vadd.f32 0.0, %v369
  %v371 = vpop.f32.mrb[0].mxu0
  %372 = vmatprep.mubr.f32.mxu0 0.0
  %373 = vmatmul.mubr.f32.gmra.mrb[0].mxu0 %v109
  %v374 = vpop.f32.mrb[0].mxu0
  %v375 = vadd.f32 0.0, %v374
  %v376 = vpop.f32.mrb[0].mxu0
  %377 = vmatprep.mubr.f32.mxu0 0.0
  %378 = vmatmul.mubr.f32.gmra.mrb[0].mxu0 %v112
  %v379 = vpop.f32.mrb[0].mxu0
  %v380 = vadd.f32 0.0, %v379
  %v381 = vpop.f32.mrb[0].mxu0
  %382 = vmatprep.mubr.f32.mxu0 0.0
  %383 = vmatmul.mubr.f32.gmra.mrb[0].mxu0 %v115
  %v384 = vpop.f32.mrb[0].mxu0
  %v385 = vadd.f32 0.0, %v384
  %v386 = vpop.f32.mrb[0].mxu0
  %387 = vmatprep.mubr.f32.mxu0 0.0
  %388 = vmatmul.mubr.f32.gmra.mrb[0].mxu0 %v118
  %v389 = vpop.f32.mrb[0].mxu0
  %v390 = vadd.f32 0.0, %v389
  %v391 = vpop.f32.mrb[0].mxu0
  %392 = vmatprep.mubr.f32.mxu0 0.0
  %393 = vmatmul.mubr.f32.gmra.mrb[0].mxu0 %v121
  %v394 = vpop.f32.mrb[0].mxu0
  %v395 = vadd.f32 0.0, %v394
  %v396 = vpop.f32.mrb[0].mxu0
  %397 = vmatprep.mubr.f32.mxu0 0.0
  %398 = vmatmul.mubr.f32.gmra.mrb[0].mxu0 %v124
  %v399 = vpop.f32.mrb[0].mxu0
  %v400 = vadd.f32 0.0, %v399
  %v401 = vpop.f32.mrb[0].mxu0
  %402 = vmatprep.mubr.f32.mxu0 0.0
  %403 = vmatmul.mubr.f32.gmra.mrb[0].mxu0 %v127
  %v404 = vpop.f32.mrb[0].mxu0
  %v405 = vadd.f32 0.0, %v404
  %v406 = vpop.f32.mrb[0].mxu0
  %407 = vmatprep.mubr.f32.mxu0 0.0
  %408 = vmatmul.mubr.f32.gmra.mrb[0].mxu0 %v130
  %v409 = vpop.f32.mrb[0].mxu0
  %v410 = vadd.f32 0.0, %v409
  %v411 = vpop.f32.mrb[0].mxu0
  %412 = vmatprep.mubr.f32.mxu0 0.0
  %413 = vmatmul.mubr.f32.gmra.mrb[0].mxu0 %v133
  %v414 = vpop.f32.mrb[0].mxu0
  %v415 = vadd.f32 0.0, %v414
  %v416 = vpop.f32.mrb[0].mxu0
  %417 = vmatprep.mubr.f32.mxu0 0.0
  %418 = vmatmul.mubr.f32.gmra.mrb[0].mxu0 %v136
  %v419 = vpop.f32.mrb[0].mxu0
  %v420 = vadd.f32 0.0, %v419
  %v421 = vpop.f32.mrb[0].mxu0
  %422 = vmatprep.mubr.f32.mxu0 0.0
  %423 = vmatmul.mubr.f32.gmra.mrb[0].mxu0 %v139
  %v424 = vpop.f32.mrb[0].mxu0
  %v425 = vadd.f32 0.0, %v424
  %v426 = vpop.f32.mrb[0].mxu0
  %427 = vmatprep.mubr.f32.mxu0 0.0
  %428 = vmatmul.mubr.f32.gmra.mrb[0].mxu0 %v142
  %v429 = vpop.f32.mrb[0].mxu0
  %v430 = vadd.f32 0.0, %v429
  %v431 = vpop.f32.mrb[0].mxu0
  %432 = vmatprep.mubr.f32.mxu0 0.0
  %433 = vmatmul.mubr.f32.gmra.mrb[0].mxu0 %v145
  %v434 = vpop.f32.mrb[0].mxu0
  %v435 = vadd.f32 0.0, %v434
  %v436 = vpop.f32.mrb[0].mxu0
  %437 = vmatprep.mubr.f32.mxu0 0.0
  %438 = vmatmul.mubr.f32.gmra.mrb[0].mxu0 %v148
  %v439 = vpop.f32.mrb[0].mxu0
  %v440 = vadd.f32 0.0, %v439
  %v441 = vpop.f32.mrb[0].mxu0
  %442 = vmatprep.mubr.f32.mxu0 0.0
  %443 = vmatmul.mubr.f32.gmra.mrb[0].mxu0 %v151
  %v444 = vpop.f32.mrb[0].mxu0
  %v445 = vadd.f32 0.0, %v444
  %v446 = vpop.f32.mrb[0].mxu0
  %447 = vmatprep.mubr.f32.mxu0 0.0
  %448 = vmatmul.mubr.f32.gmra.mrb[0].mxu0 %v154
  %v449 = vpop.f32.mrb[0].mxu0
  %v450 = vadd.f32 0.0, %v449
  %v451 = vpop.f32.mrb[0].mxu0
  %452 = vmatprep.mubr.f32.mxu0 0.0
  %453 = vmatmul.mubr.f32.gmra.mrb[0].mxu0 %v157
  %v454 = vpop.f32.mrb[0].mxu0
  %v455 = vadd.f32 0.0, %v454
  %v456 = vpop.f32.mrb[0].mxu0
  %457 = vmatprep.mubr.f32.mxu0 0.0
  %458 = vmatmul.mubr.f32.gmra.mrb[0].mxu0 %v160
  %v459 = vpop.f32.mrb[0].mxu0
  %v460 = vadd.f32 0.0, %v459
  %v461 = vpop.f32.mrb[0].mxu0
  %462 = vmatprep.mubr.f32.mxu0 0.0
  %463 = vmatmul.mubr.f32.gmra.mrb[0].mxu0 %v163
  %v464 = vpop.f32.mrb[0].mxu0
  %v465 = vadd.f32 0.0, %v464
  %v466 = vpop.f32.mrb[0].mxu0
  %467 = vmatprep.mubr.f32.mxu0 0.0
  %468 = vmatmul.mubr.f32.gmra.mrb[0].mxu0 %v166
  %v469 = vpop.f32.mrb[0].mxu0
  %v470 = vadd.f32 0.0, %v469
  %v471 = vpop.f32.mrb[0].mxu0
  %472 = vmatprep.mubr.f32.mxu0 0.0
  %473 = vmatmul.mubr.f32.gmra.mrb[0].mxu0 %v169
  %v474 = vpop.f32.mrb[0].mxu0
  %v475 = vadd.f32 0.0, %v474
  %v476 = vpop.f32.mrb[0].mxu0
  %477 = vmatprep.mubr.f32.mxu0 0.0
  %478 = vmatmul.mubr.f32.gmra.mrb[0].mxu0 %v172
  %v479 = vpop.f32.mrb[0].mxu0
  %v480 = vadd.f32 0.0, %v479
  %v481 = vpop.f32.mrb[0].mxu0
  %482 = vmatprep.mubr.f32.mxu0 0.0
  %483 = vmatmul.mubr.f32.gmra.mrb[0].mxu0 %v175
  %v484 = vpop.f32.mrb[0].mxu0
  %v485 = vadd.f32 0.0, %v484
  %v486 = vpop.f32.mrb[0].mxu0
  %487 = vmatprep.mubr.f32.mxu0 0.0
  %488 = vmatmul.mubr.f32.gmra.mrb[0].mxu0 %v178
  %v489 = vpop.f32.mrb[0].mxu0
  %v490 = vadd.f32 0.0, %v489
  %v491 = vpop.f32.mrb[0].mxu0
  %492 = vmatprep.mubr.f32.mxu0 0.0
  %493 = vmatmul.mubr.f32.gmra.mrb[0].mxu0 %v181
  %v494 = vpop.f32.mrb[0].mxu0
  %v495 = vadd.f32 0.0, %v494
  %v496 = vpop.f32.mrb[0].mxu0
  %497 = vmatprep.mubr.f32.mxu0 0.0
  %498 = vmatmul.mubr.f32.gmra.mrb[0].mxu0 %v184
  %v499 = vpop.f32.mrb[0].mxu0
  %v500 = vadd.f32 0.0, %v499
  %v501 = vpop.f32.mrb[0].mxu0
  %502 = vmatprep.mubr.f32.mxu0 0.0
  %503 = vmatmul.mubr.f32.gmra.mrb[0].mxu0 %v187
  %v504 = vpop.f32.mrb[0].mxu0
  %v505 = vadd.f32 0.0, %v504
  %v506 = vpop.f32.mrb[0].mxu0
  %507 = vmatprep.mubr.f32.mxu0 0.0
  %508 = vmatmul.mubr.f32.gmra.mrb[0].mxu0 %v190
  %v509 = vpop.f32.mrb[0].mxu0
  %v510 = vadd.f32 0.0, %v509
  %v511 = vpop.f32.mrb[0].mxu0
  %512 = vmatprep.mubr.f32.mxu0 0.0
  %513 = vmatmul.mubr.f32.gmra.mrb[0].mxu0 %v193
  %v514 = vpop.f32.mrb[0].mxu0
  %v515 = vadd.f32 0.0, %v514
  %v516 = vpop.f32.mrb[0].mxu0
  %517 = vmatprep.mubr.f32.mxu0 0.0
  %518 = vmatmul.mubr.f32.gmra.mrb[0].mxu0 %v196
  %v519 = vpop.f32.mrb[0].mxu0
  %v520 = vadd.f32 0.0, %v519
  %v521 = vpop.f32.mrb[0].mxu0
  %522 = vmatprep.mubr.f32.mxu0 0.0
  %523 = vmatmul.mubr.f32.gmra.mrb[0].mxu0 %v199
  %v524 = vpop.f32.mrb[0].mxu0
  %v525 = vadd.f32 0.0, %v524
  %v526 = vpop.f32.mrb[0].mxu0
  %527 = vmatprep.mubr.f32.mxu0 0.0
  %528 = vmatmul.mubr.f32.gmra.mrb[0].mxu0 %v202
  %v529 = vpop.f32.mrb[0].mxu0
  %v530 = vadd.f32 0.0, %v529
  %v531 = vpop.f32.mrb[0].mxu0
  %532 = vmatprep.mubr.f32.mxu0 0.0
  %533 = vmatmul.mubr.f32.gmra.mrb[0].mxu0 %v205
  %v534 = vpop.f32.mrb[0].mxu0
  %v535 = vadd.f32 0.0, %v534
  %v536 = vpop.f32.mrb[0].mxu0
  %537 = vmatprep.mubr.f32.mxu0 0.0
  %538 = vmatmul.mubr.f32.gmra.mrb[0].mxu0 %v208
  %v539 = vpop.f32.mrb[0].mxu0
  %v540 = vadd.f32 0.0, %v539
  %v541 = vpop.f32.mrb[0].mxu0
  %542 = vmatprep.mubr.f32.mxu0 0.0
  %543 = vmatmul.mubr.f32.gmra.mrb[0].mxu0 %v211
  %v544 = vpop.f32.mrb[0].mxu0
  %v545 = vadd.f32 0.0, %v544
  %v546 = vpop.f32.mrb[0].mxu0
  %547 = vmatprep.mubr.f32.mxu0 0.0
  %548 = vmatmul.mubr.f32.gmra.mrb[0].mxu0 %v214
  %v549 = vpop.f32.mrb[0].mxu0
  %v550 = vadd.f32 0.0, %v549
  %v551 = vpop.f32.mrb[0].mxu0
  %552 = vmatprep.mubr.f32.mxu0 0.0
  %553 = vmatmul.mubr.f32.gmra.mrb[0].mxu0 %v217
  %v554 = vpop.f32.mrb[0].mxu0
  %v555 = vadd.f32 0.0, %v554
  %v556 = vpop.f32.mrb[0].mxu0
  %557 = vmatprep.mubr.f32.mxu0 0.0
  %558 = vmatmul.mubr.f32.gmra.mrb[0].mxu0 %v220
  %v559 = vpop.f32.mrb[0].mxu0
  %v560 = vadd.f32 0.0, %v559
  %v561 = vpop.f32.mrb[0].mxu0
  %562 = vmatprep.mubr.f32.mxu0 0.0
  %563 = vmatmul.mubr.f32.gmra.mrb[0].mxu0 %v223
  %v564 = vpop.f32.mrb[0].mxu0
  %v565 = vadd.f32 0.0, %v564
  %v566 = vpop.f32.mrb[0].mxu0
  %567 = vmatprep.mubr.f32.mxu0 0.0
  %568 = vmatmul.mubr.f32.gmra.mrb[0].mxu0 %v226
  %v569 = vpop.f32.mrb[0].mxu0
  %v570 = vadd.f32 0.0, %v569
  %v571 = vpop.f32.mrb[0].mxu0
  %572 = vmatprep.mubr.f32.mxu0 0.0
  %573 = vmatmul.mubr.f32.gmra.mrb[0].mxu0 %v229
  %v574 = vpop.f32.mrb[0].mxu0
  %v575 = vadd.f32 0.0, %v574
  %v576 = vpop.f32.mrb[0].mxu0
  %577 = vmatprep.mubr.f32.mxu0 0.0
  %578 = vmatmul.mubr.f32.gmra.mrb[0].mxu0 %v232
  %v579 = vpop.f32.mrb[0].mxu0
  %v580 = vadd.f32 0.0, %v579
  %v581 = vpop.f32.mrb[0].mxu0
  %582 = vmatprep.mubr.f32.mxu0 0.0
  %583 = vmatmul.mubr.f32.gmra.mrb[0].mxu0 %v235
  %v584 = vpop.f32.mrb[0].mxu0
  %v585 = vadd.f32 0.0, %v584
  %v586 = vpop.f32.mrb[0].mxu0
  %587 = vmatprep.mubr.f32.mxu0 0.0
  %588 = vmatmul.mubr.f32.gmra.mrb[0].mxu0 %v238
  %v589 = vpop.f32.mrb[0].mxu0
  %v590 = vadd.f32 0.0, %v589
  %v591 = vpop.f32.mrb[0].mxu0
  %592 = vmatprep.mubr.f32.mxu0 0.0
  %593 = vmatmul.mubr.f32.gmra.mrb[0].mxu0 %v241
  %v594 = vpop.f32.mrb[0].mxu0
  %v595 = vadd.f32 0.0, %v594
  %v596 = vpop.f32.mrb[0].mxu0
  %597 = vmatprep.mubr.f32.mxu0 0.0
  %598 = vmatmul.mubr.f32.gmra.mrb[0].mxu0 %v244
  %v599 = vpop.f32.mrb[0].mxu0
  %v600 = vadd.f32 0.0, %v599
  %v601 = vpop.f32.mrb[0].mxu0
  %602 = vmatprep.mubr.f32.mxu0 0.0
  %603 = vmatmul.mubr.f32.gmra.mrb[0].mxu0 %v247
  %v604 = vpop.f32.mrb[0].mxu0
  %v605 = vadd.f32 0.0, %v604
  %v606 = vpop.f32.mrb[0].mxu0
  %607 = vmatprep.mubr.f32.mxu0 0.0
  %608 = vmatmul.mubr.f32.gmra.mrb[0].mxu0 %v250
  %v609 = vpop.f32.mrb[0].mxu0
  %v610 = vadd.f32 0.0, %v609
  %v611 = vpop.f32.mrb[0].mxu0
  %612 = vmatprep.mubr.f32.mxu0 0.0
  %613 = vmatmul.mubr.f32.gmra.mrb[0].mxu0 %v253
  %v614 = vpop.f32.mrb[0].mxu0
  %v615 = vadd.f32 0.0, %v614
  %v616 = vpop.f32.mrb[0].mxu0
  %617 = vmatprep.mubr.f32.mxu0 0.0
  %618 = vmatmul.mubr.f32.gmra.mrb[0].mxu0 %v256
  %v619 = vpop.f32.mrb[0].mxu0
  %v620 = vadd.f32 0.0, %v619
  %v621 = vpop.f32.mrb[0].mxu0
  %622 = vmatprep.mubr.f32.mxu0 0.0
  %623 = vmatmul.mubr.f32.gmra.mrb[0].mxu0 %v259
  %v624 = vpop.f32.mrb[0].mxu0
  %v625 = vadd.f32 0.0, %v624
  %v626 = vpop.f32.mrb[0].mxu0
  %627 = vmatprep.mubr.f32.mxu0 0.0
  %628 = vmatmul.mubr.f32.gmra.mrb[0].mxu0 %v262
  %v629 = vpop.f32.mrb[0].mxu0
  %v630 = vadd.f32 0.0, %v629
  %v631 = vpop.f32.mrb[0].mxu0
  %632 = vmatprep.mubr.f32.mxu0 0.0
  %633 = vmatmul.mubr.f32.gmra.mrb[0].mxu0 %v265
  %v634 = vpop.f32.mrb[0].mxu0
  %v635 = vadd.f32 0.0, %v634
  %v636 = vpop.f32.mrb[0].mxu0
  %637 = vmatprep.mubr.f32.mxu0 0.0
  %638 = vmatmul.mubr.f32.gmra.mrb[0].mxu0 %v268
  %v639 = vpop.f32.mrb[0].mxu0
  %v640 = vadd.f32 0.0, %v639
  %v641 = vpop.f32.mrb[0].mxu0
  %642 = vmatprep.mubr.f32.mxu0 0.0
  %643 = vmatmul.mubr.f32.gmra.mrb[0].mxu0 %v271
  %v644 = vpop.f32.mrb[0].mxu0
  %v645 = vadd.f32 0.0, %v644
  %v646 = vpop.f32.mrb[0].mxu0
  %647 = vmatprep.mubr.f32.mxu0 0.0
  %648 = vmatmul.mubr.f32.gmra.mrb[0].mxu0 %v274
  %v649 = vpop.f32.mrb[0].mxu0
  %v650 = vadd.f32 0.0, %v649
  %v651 = vpop.f32.mrb[0].mxu0
  %652 = vmatprep.mubr.f32.mxu0 0.0
  %653 = vmatmul.mubr.f32.gmra.mrb[0].mxu0 %v277
  %v654 = vpop.f32.mrb[0].mxu0
  %v655 = vadd.f32 0.0, %v654
  %v656 = vpop.f32.mrb[0].mxu0
  %657 = vmatprep.mubr.f32.mxu0 0.0
  %658 = vmatmul.mubr.f32.gmra.mrb[0].mxu0 %v280
  %v659 = vpop.f32.mrb[0].mxu0
  %v660 = vadd.f32 0.0, %v659
  %v661 = vpop.f32.mrb[0].mxu0
  %662 = vmatprep.mubr.f32.mxu0 0.0
  %663 = vmatmul.mubr.f32.gmra.mrb[0].mxu0 %v283
  %v664 = vpop.f32.mrb[0].mxu0
  %v665 = vadd.f32 0.0, %v664
  %v666 = vpop.f32.mrb[0].mxu0
  %667 = vmatprep.mubr.f32.mxu0 0.0
  %668 = vmatmul.mubr.f32.gmra.mrb[0].mxu0 %v286
  %v669 = vpop.f32.mrb[0].mxu0
  %v670 = vadd.f32 0.0, %v669
  %v671 = vpop.f32.mrb[0].mxu0
  %672 = vmatprep.mubr.f32.mxu0 0.0
  %673 = vmatmul.mubr.f32.gmra.mrb[0].mxu0 %v289
  %v674 = vpop.f32.mrb[0].mxu0
  %v675 = vadd.f32 0.0, %v674
  %v676 = vpop.f32.mrb[0].mxu0
  %677 = vmatprep.mubr.f32.mxu0 0.0
  %678 = vmatmul.mubr.f32.gmra.mrb[0].mxu0 %v292
  %v679 = vpop.f32.mrb[0].mxu0
  %v680 = vadd.f32 0.0, %v679
  %v681 = vpop.f32.mrb[0].mxu0
  %682 = vdwg.mxu0
  %v683 = vld [vmem:[%s2] sm:$0x1]
  %v685 = vlaneseq
  %v686 = vshrl.u32 %v685, 7
  %v687 = vsub.s32 0, %v686
  %v688 = vrot.slane %v683, %v687
  %v690 = vmul.f32 %v365, %v688
  %v691 = vmul.f32 %v370, %v688
  %v692 = vmul.f32 %v375, %v688
  %v693 = vmul.f32 %v380, %v688
  %v694 = vmul.f32 %v385, %v688
  %v695 = vmul.f32 %v390, %v688
  %v696 = vmul.f32 %v395, %v688
  %v697 = vmul.f32 %v400, %v688
  %v698 = vmul.f32 %v405, %v688
  %v699 = vmul.f32 %v410, %v688
  %v700 = vmul.f32 %v415, %v688
  %v701 = vmul.f32 %v420, %v688
  %v702 = vmul.f32 %v425, %v688
  %v703 = vmul.f32 %v430, %v688
  %v704 = vmul.f32 %v435, %v688
  %v705 = vmul.f32 %v440, %v688
  %v706 = vmul.f32 %v445, %v688
  %v707 = vmul.f32 %v450, %v688
  %v708 = vmul.f32 %v455, %v688
  %v709 = vmul.f32 %v460, %v688
  %v710 = vmul.f32 %v465, %v688
  %v711 = vmul.f32 %v470, %v688
  %v712 = vmul.f32 %v475, %v688
  %v713 = vmul.f32 %v480, %v688
  %v714 = vmul.f32 %v485, %v688
  %v715 = vmul.f32 %v490, %v688
  %v716 = vmul.f32 %v495, %v688
  %v717 = vmul.f32 %v500, %v688
  %v718 = vmul.f32 %v505, %v688
  %v719 = vmul.f32 %v510, %v688
  %v720 = vmul.f32 %v515, %v688
  %v721 = vmul.f32 %v520, %v688
  %v722 = vmul.f32 %v525, %v688
  %v723 = vmul.f32 %v530, %v688
  %v724 = vmul.f32 %v535, %v688
  %v725 = vmul.f32 %v540, %v688
  %v726 = vmul.f32 %v545, %v688
  %v727 = vmul.f32 %v550, %v688
  %v728 = vmul.f32 %v555, %v688
  %v729 = vmul.f32 %v560, %v688
  %v730 = vmul.f32 %v565, %v688
  %v731 = vmul.f32 %v570, %v688
  %v732 = vmul.f32 %v575, %v688
  %v733 = vmul.f32 %v580, %v688
  %v734 = vmul.f32 %v585, %v688
  %v735 = vmul.f32 %v590, %v688
  %v736 = vmul.f32 %v595, %v688
  %v737 = vmul.f32 %v600, %v688
  %v738 = vmul.f32 %v605, %v688
  %v739 = vmul.f32 %v610, %v688
  %v740 = vmul.f32 %v615, %v688
  %v741 = vmul.f32 %v620, %v688
  %v742 = vmul.f32 %v625, %v688
  %v743 = vmul.f32 %v630, %v688
  %v744 = vmul.f32 %v635, %v688
  %v745 = vmul.f32 %v640, %v688
  %v746 = vmul.f32 %v645, %v688
  %v747 = vmul.f32 %v650, %v688
  %v748 = vmul.f32 %v655, %v688
  %v749 = vmul.f32 %v660, %v688
  %v750 = vmul.f32 %v665, %v688
  %v751 = vmul.f32 %v670, %v688
  %v752 = vmul.f32 %v675, %v688
  %v753 = vmul.f32 %v680, %v688
  %v754 = vld [vmem:[%s3] sm:$0x1]
  %v756 = vlaneseq
  %v757 = vshrl.u32 %v756, 7
  %v758 = vsub.s32 0, %v757
  %v759 = vrot.slane %v754, %v758
  %v761 = vadd.f32 %v690, %v759
  %v762 = vadd.f32 %v691, %v759
  %v763 = vadd.f32 %v692, %v759
  %v764 = vadd.f32 %v693, %v759
  %v765 = vadd.f32 %v694, %v759
  %v766 = vadd.f32 %v695, %v759
  %v767 = vadd.f32 %v696, %v759
  %v768 = vadd.f32 %v697, %v759
  %v769 = vadd.f32 %v698, %v759
  %v770 = vadd.f32 %v699, %v759
  %v771 = vadd.f32 %v700, %v759
  %v772 = vadd.f32 %v701, %v759
  %v773 = vadd.f32 %v702, %v759
  %v774 = vadd.f32 %v703, %v759
  %v775 = vadd.f32 %v704, %v759
  %v776 = vadd.f32 %v705, %v759
  %v777 = vadd.f32 %v706, %v759
  %v778 = vadd.f32 %v707, %v759
  %v779 = vadd.f32 %v708, %v759
  %v780 = vadd.f32 %v709, %v759
  %v781 = vadd.f32 %v710, %v759
  %v782 = vadd.f32 %v711, %v759
  %v783 = vadd.f32 %v712, %v759
  %v784 = vadd.f32 %v713, %v759
  %v785 = vadd.f32 %v714, %v759
  %v786 = vadd.f32 %v715, %v759
  %v787 = vadd.f32 %v716, %v759
  %v788 = vadd.f32 %v717, %v759
  %v789 = vadd.f32 %v718, %v759
  %v790 = vadd.f32 %v719, %v759
  %v791 = vadd.f32 %v720, %v759
  %v792 = vadd.f32 %v721, %v759
  %v793 = vadd.f32 %v722, %v759
  %v794 = vadd.f32 %v723, %v759
  %v795 = vadd.f32 %v724, %v759
  %v796 = vadd.f32 %v725, %v759
  %v797 = vadd.f32 %v726, %v759
  %v798 = vadd.f32 %v727, %v759
  %v799 = vadd.f32 %v728, %v759
  %v800 = vadd.f32 %v729, %v759
  %v801 = vadd.f32 %v730, %v759
  %v802 = vadd.f32 %v731, %v759
  %v803 = vadd.f32 %v732, %v759
  %v804 = vadd.f32 %v733, %v759
  %v805 = vadd.f32 %v734, %v759
  %v806 = vadd.f32 %v735, %v759
  %v807 = vadd.f32 %v736, %v759
  %v808 = vadd.f32 %v737, %v759
  %v809 = vadd.f32 %v738, %v759
  %v810 = vadd.f32 %v739, %v759
  %v811 = vadd.f32 %v740, %v759
  %v812 = vadd.f32 %v741, %v759
  %v813 = vadd.f32 %v742, %v759
  %v814 = vadd.f32 %v743, %v759
  %v815 = vadd.f32 %v744, %v759
  %v816 = vadd.f32 %v745, %v759
  %v817 = vadd.f32 %v746, %v759
  %v818 = vadd.f32 %v747, %v759
  %v819 = vadd.f32 %v748, %v759
  %v820 = vadd.f32 %v749, %v759
  %v821 = vadd.f32 %v750, %v759
  %v822 = vadd.f32 %v751, %v759
  %v823 = vadd.f32 %v752, %v759
  %v824 = vadd.f32 %v753, %v759
  %v825 = vmul.f32 %v761, 0.5
  %v826 = vmul.f32 %v762, 0.5
  %v827 = vmul.f32 %v763, 0.5
  %v828 = vmul.f32 %v764, 0.5
  %v829 = vmul.f32 %v765, 0.5
  %v830 = vmul.f32 %v766, 0.5
  %v831 = vmul.f32 %v767, 0.5
  %v832 = vmul.f32 %v768, 0.5
  %v833 = vmul.f32 %v769, 0.5
  %v834 = vmul.f32 %v770, 0.5
  %v835 = vmul.f32 %v771, 0.5
  %v836 = vmul.f32 %v772, 0.5
  %v837 = vmul.f32 %v773, 0.5
  %v838 = vmul.f32 %v774, 0.5
  %v839 = vmul.f32 %v775, 0.5
  %v840 = vmul.f32 %v776, 0.5
  %v841 = vmul.f32 %v777, 0.5
  %v842 = vmul.f32 %v778, 0.5
  %v843 = vmul.f32 %v779, 0.5
  %v844 = vmul.f32 %v780, 0.5
  %v845 = vmul.f32 %v781, 0.5
  %v846 = vmul.f32 %v782, 0.5
  %v847 = vmul.f32 %v783, 0.5
  %v848 = vmul.f32 %v784, 0.5
  %v849 = vmul.f32 %v785, 0.5
  %v850 = vmul.f32 %v786, 0.5
  %v851 = vmul.f32 %v787, 0.5
  %v852 = vmul.f32 %v788, 0.5
  %v853 = vmul.f32 %v789, 0.5
  %v854 = vmul.f32 %v790, 0.5
  %v855 = vmul.f32 %v791, 0.5
  %v856 = vmul.f32 %v792, 0.5
  %v857 = vmul.f32 %v793, 0.5
  %v858 = vmul.f32 %v794, 0.5
  %v859 = vmul.f32 %v795, 0.5
  %v860 = vmul.f32 %v796, 0.5
  %v861 = vmul.f32 %v797, 0.5
  %v862 = vmul.f32 %v798, 0.5
  %v863 = vmul.f32 %v799, 0.5
  %v864 = vmul.f32 %v800, 0.5
  %v865 = vmul.f32 %v801, 0.5
  %v866 = vmul.f32 %v802, 0.5
  %v867 = vmul.f32 %v803, 0.5
  %v868 = vmul.f32 %v804, 0.5
  %v869 = vmul.f32 %v805, 0.5
  %v870 = vmul.f32 %v806, 0.5
  %v871 = vmul.f32 %v807, 0.5
  %v872 = vmul.f32 %v808, 0.5
  %v873 = vmul.f32 %v809, 0.5
  %v874 = vmul.f32 %v810, 0.5
  %v875 = vmul.f32 %v811, 0.5
  %v876 = vmul.f32 %v812, 0.5
  %v877 = vmul.f32 %v813, 0.5
  %v878 = vmul.f32 %v814, 0.5
  %v879 = vmul.f32 %v815, 0.5
  %v880 = vmul.f32 %v816, 0.5
  %v881 = vmul.f32 %v817, 0.5
  %v882 = vmul.f32 %v818, 0.5
  %v883 = vmul.f32 %v819, 0.5
  %v884 = vmul.f32 %v820, 0.5
  %v885 = vmul.f32 %v821, 0.5
  %v886 = vmul.f32 %v822, 0.5
  %v887 = vmul.f32 %v823, 0.5
  %v888 = vmul.f32 %v824, 0.5
  %v889 = vmul.f32 %v761, 0.044715
  %v890 = vmul.f32 %v762, 0.044715
  %v891 = vmul.f32 %v763, 0.044715
  %v892 = vmul.f32 %v764, 0.044715
  %v893 = vmul.f32 %v765, 0.044715
  %v894 = vmul.f32 %v766, 0.044715
  %v895 = vmul.f32 %v767, 0.044715
  %v896 = vmul.f32 %v768, 0.044715
  %v897 = vmul.f32 %v769, 0.044715
  %v898 = vmul.f32 %v770, 0.044715
  %v899 = vmul.f32 %v771, 0.044715
  %v900 = vmul.f32 %v772, 0.044715
  %v901 = vmul.f32 %v773, 0.044715
  %v902 = vmul.f32 %v774, 0.044715
  %v903 = vmul.f32 %v775, 0.044715
  %v904 = vmul.f32 %v776, 0.044715
  %v905 = vmul.f32 %v777, 0.044715
  %v906 = vmul.f32 %v778, 0.044715
  %v907 = vmul.f32 %v779, 0.044715
  %v908 = vmul.f32 %v780, 0.044715
  %v909 = vmul.f32 %v781, 0.044715
  %v910 = vmul.f32 %v782, 0.044715
  %v911 = vmul.f32 %v783, 0.044715
  %v912 = vmul.f32 %v784, 0.044715
  %v913 = vmul.f32 %v785, 0.044715
  %v914 = vmul.f32 %v786, 0.044715
  %v915 = vmul.f32 %v787, 0.044715
  %v916 = vmul.f32 %v788, 0.044715
  %v917 = vmul.f32 %v789, 0.044715
  %v918 = vmul.f32 %v790, 0.044715
  %v919 = vmul.f32 %v791, 0.044715
  %v920 = vmul.f32 %v792, 0.044715
  %v921 = vmul.f32 %v793, 0.044715
  %v922 = vmul.f32 %v794, 0.044715
  %v923 = vmul.f32 %v795, 0.044715
  %v924 = vmul.f32 %v796, 0.044715
  %v925 = vmul.f32 %v797, 0.044715
  %v926 = vmul.f32 %v798, 0.044715
  %v927 = vmul.f32 %v799, 0.044715
  %v928 = vmul.f32 %v800, 0.044715
  %v929 = vmul.f32 %v801, 0.044715
  %v930 = vmul.f32 %v802, 0.044715
  %v931 = vmul.f32 %v803, 0.044715
  %v932 = vmul.f32 %v804, 0.044715
  %v933 = vmul.f32 %v805, 0.044715
  %v934 = vmul.f32 %v806, 0.044715
  %v935 = vmul.f32 %v807, 0.044715
  %v936 = vmul.f32 %v808, 0.044715
  %v937 = vmul.f32 %v809, 0.044715
  %v938 = vmul.f32 %v810, 0.044715
  %v939 = vmul.f32 %v811, 0.044715
  %v940 = vmul.f32 %v812, 0.044715
  %v941 = vmul.f32 %v813, 0.044715
  %v942 = vmul.f32 %v814, 0.044715
  %v943 = vmul.f32 %v815, 0.044715
  %v944 = vmul.f32 %v816, 0.044715
  %v945 = vmul.f32 %v817, 0.044715
  %v946 = vmul.f32 %v818, 0.044715
  %v947 = vmul.f32 %v819, 0.044715
  %v948 = vmul.f32 %v820, 0.044715
  %v949 = vmul.f32 %v821, 0.044715
  %v950 = vmul.f32 %v822, 0.044715
  %v951 = vmul.f32 %v823, 0.044715
  %v952 = vmul.f32 %v824, 0.044715
  %v953 = vmul.f32 %v889, %v761
  %v954 = vmul.f32 %v890, %v762
  %v955 = vmul.f32 %v891, %v763
  %v956 = vmul.f32 %v892, %v764
  %v957 = vmul.f32 %v893, %v765
  %v958 = vmul.f32 %v894, %v766
  %v959 = vmul.f32 %v895, %v767
  %v960 = vmul.f32 %v896, %v768
  %v961 = vmul.f32 %v897, %v769
  %v962 = vmul.f32 %v898, %v770
  %v963 = vmul.f32 %v899, %v771
  %v964 = vmul.f32 %v900, %v772
  %v965 = vmul.f32 %v901, %v773
  %v966 = vmul.f32 %v902, %v774
  %v967 = vmul.f32 %v903, %v775
  %v968 = vmul.f32 %v904, %v776
  %v969 = vmul.f32 %v905, %v777
  %v970 = vmul.f32 %v906, %v778
  %v971 = vmul.f32 %v907, %v779
  %v972 = vmul.f32 %v908, %v780
  %v973 = vmul.f32 %v909, %v781
  %v974 = vmul.f32 %v910, %v782
  %v975 = vmul.f32 %v911, %v783
  %v976 = vmul.f32 %v912, %v784
  %v977 = vmul.f32 %v913, %v785
  %v978 = vmul.f32 %v914, %v786
  %v979 = vmul.f32 %v915, %v787
  %v980 = vmul.f32 %v916, %v788
  %v981 = vmul.f32 %v917, %v789
  %v982 = vmul.f32 %v918, %v790
  %v983 = vmul.f32 %v919, %v791
  %v984 = vmul.f32 %v920, %v792
  %v985 = vmul.f32 %v921, %v793
  %v986 = vmul.f32 %v922, %v794
  %v987 = vmul.f32 %v923, %v795
  %v988 = vmul.f32 %v924, %v796
  %v989 = vmul.f32 %v925, %v797
  %v990 = vmul.f32 %v926, %v798
  %v991 = vmul.f32 %v927, %v799
  %v992 = vmul.f32 %v928, %v800
  %v993 = vmul.f32 %v929, %v801
  %v994 = vmul.f32 %v930, %v802
  %v995 = vmul.f32 %v931, %v803
  %v996 = vmul.f32 %v932, %v804
  %v997 = vmul.f32 %v933, %v805
  %v998 = vmul.f32 %v934, %v806
  %v999 = vmul.f32 %v935, %v807
  %v1000 = vmul.f32 %v936, %v808
  %v1001 = vmul.f32 %v937, %v809
  %v1002 = vmul.f32 %v938, %v810
  %v1003 = vmul.f32 %v939, %v811
  %v1004 = vmul.f32 %v940, %v812
  %v1005 = vmul.f32 %v941, %v813
  %v1006 = vmul.f32 %v942, %v814
  %v1007 = vmul.f32 %v943, %v815
  %v1008 = vmul.f32 %v944, %v816
  %v1009 = vmul.f32 %v945, %v817
  %v1010 = vmul.f32 %v946, %v818
  %v1011 = vmul.f32 %v947, %v819
  %v1012 = vmul.f32 %v948, %v820
  %v1013 = vmul.f32 %v949, %v821
  %v1014 = vmul.f32 %v950, %v822
  %v1015 = vmul.f32 %v951, %v823
  %v1016 = vmul.f32 %v952, %v824
  %v1017 = vmul.f32 %v953, %v761
  %v1018 = vmul.f32 %v954, %v762
  %v1019 = vmul.f32 %v955, %v763
  %v1020 = vmul.f32 %v956, %v764
  %v1021 = vmul.f32 %v957, %v765
  %v1022 = vmul.f32 %v958, %v766
  %v1023 = vmul.f32 %v959, %v767
  %v1024 = vmul.f32 %v960, %v768
  %v1025 = vmul.f32 %v961, %v769
  %v1026 = vmul.f32 %v962, %v770
  %v1027 = vmul.f32 %v963, %v771
  %v1028 = vmul.f32 %v964, %v772
  %v1029 = vmul.f32 %v965, %v773
  %v1030 = vmul.f32 %v966, %v774
  %v1031 = vmul.f32 %v967, %v775
  %v1032 = vmul.f32 %v968, %v776
  %v1033 = vmul.f32 %v969, %v777
  %v1034 = vmul.f32 %v970, %v778
  %v1035 = vmul.f32 %v971, %v779
  %v1036 = vmul.f32 %v972, %v780
  %v1037 = vmul.f32 %v973, %v781
  %v1038 = vmul.f32 %v974, %v782
  %v1039 = vmul.f32 %v975, %v783
  %v1040 = vmul.f32 %v976, %v784
  %v1041 = vmul.f32 %v977, %v785
  %v1042 = vmul.f32 %v978, %v786
  %v1043 = vmul.f32 %v979, %v787
  %v1044 = vmul.f32 %v980, %v788
  %v1045 = vmul.f32 %v981, %v789
  %v1046 = vmul.f32 %v982, %v790
  %v1047 = vmul.f32 %v983, %v791
  %v1048 = vmul.f32 %v984, %v792
  %v1049 = vmul.f32 %v985, %v793
  %v1050 = vmul.f32 %v986, %v794
  %v1051 = vmul.f32 %v987, %v795
  %v1052 = vmul.f32 %v988, %v796
  %v1053 = vmul.f32 %v989, %v797
  %v1054 = vmul.f32 %v990, %v798
  %v1055 = vmul.f32 %v991, %v799
  %v1056 = vmul.f32 %v992, %v800
  %v1057 = vmul.f32 %v993, %v801
  %v1058 = vmul.f32 %v994, %v802
  %v1059 = vmul.f32 %v995, %v803
  %v1060 = vmul.f32 %v996, %v804
  %v1061 = vmul.f32 %v997, %v805
  %v1062 = vmul.f32 %v998, %v806
  %v1063 = vmul.f32 %v999, %v807
  %v1064 = vmul.f32 %v1000, %v808
  %v1065 = vmul.f32 %v1001, %v809
  %v1066 = vmul.f32 %v1002, %v810
  %v1067 = vmul.f32 %v1003, %v811
  %v1068 = vmul.f32 %v1004, %v812
  %v1069 = vmul.f32 %v1005, %v813
  %v1070 = vmul.f32 %v1006, %v814
  %v1071 = vmul.f32 %v1007, %v815
  %v1072 = vmul.f32 %v1008, %v816
  %v1073 = vmul.f32 %v1009, %v817
  %v1074 = vmul.f32 %v1010, %v818
  %v1075 = vmul.f32 %v1011, %v819
  %v1076 = vmul.f32 %v1012, %v820
  %v1077 = vmul.f32 %v1013, %v821
  %v1078 = vmul.f32 %v1014, %v822
  %v1079 = vmul.f32 %v1015, %v823
  %v1080 = vmul.f32 %v1016, %v824
  %v1081 = vadd.f32 %v761, %v1017
  %v1082 = vadd.f32 %v762, %v1018
  %v1083 = vadd.f32 %v763, %v1019
  %v1084 = vadd.f32 %v764, %v1020
  %v1085 = vadd.f32 %v765, %v1021
  %v1086 = vadd.f32 %v766, %v1022
  %v1087 = vadd.f32 %v767, %v1023
  %v1088 = vadd.f32 %v768, %v1024
  %v1089 = vadd.f32 %v769, %v1025
  %v1090 = vadd.f32 %v770, %v1026
  %v1091 = vadd.f32 %v771, %v1027
  %v1092 = vadd.f32 %v772, %v1028
  %v1093 = vadd.f32 %v773, %v1029
  %v1094 = vadd.f32 %v774, %v1030
  %v1095 = vadd.f32 %v775, %v1031
  %v1096 = vadd.f32 %v776, %v1032
  %v1097 = vadd.f32 %v777, %v1033
  %v1098 = vadd.f32 %v778, %v1034
  %v1099 = vadd.f32 %v779, %v1035
  %v1100 = vadd.f32 %v780, %v1036
  %v1101 = vadd.f32 %v781, %v1037
  %v1102 = vadd.f32 %v782, %v1038
  %v1103 = vadd.f32 %v783, %v1039
  %v1104 = vadd.f32 %v784, %v1040
  %v1105 = vadd.f32 %v785, %v1041
  %v1106 = vadd.f32 %v786, %v1042
  %v1107 = vadd.f32 %v787, %v1043
  %v1108 = vadd.f32 %v788, %v1044
  %v1109 = vadd.f32 %v789, %v1045
  %v1110 = vadd.f32 %v790, %v1046
  %v1111 = vadd.f32 %v791, %v1047
  %v1112 = vadd.f32 %v792, %v1048
  %v1113 = vadd.f32 %v793, %v1049
  %v1114 = vadd.f32 %v794, %v1050
  %v1115 = vadd.f32 %v795, %v1051
  %v1116 = vadd.f32 %v796, %v1052
  %v1117 = vadd.f32 %v797, %v1053
  %v1118 = vadd.f32 %v798, %v1054
  %v1119 = vadd.f32 %v799, %v1055
  %v1120 = vadd.f32 %v800, %v1056
  %v1121 = vadd.f32 %v801, %v1057
  %v1122 = vadd.f32 %v802, %v1058
  %v1123 = vadd.f32 %v803, %v1059
  %v1124 = vadd.f32 %v804, %v1060
  %v1125 = vadd.f32 %v805, %v1061
  %v1126 = vadd.f32 %v806, %v1062
  %v1127 = vadd.f32 %v807, %v1063
  %v1128 = vadd.f32 %v808, %v1064
  %v1129 = vadd.f32 %v809, %v1065
  %v1130 = vadd.f32 %v810, %v1066
  %v1131 = vadd.f32 %v811, %v1067
  %v1132 = vadd.f32 %v812, %v1068
  %v1133 = vadd.f32 %v813, %v1069
  %v1134 = vadd.f32 %v814, %v1070
  %v1135 = vadd.f32 %v815, %v1071
  %v1136 = vadd.f32 %v816, %v1072
  %v1137 = vadd.f32 %v817, %v1073
  %v1138 = vadd.f32 %v818, %v1074
  %v1139 = vadd.f32 %v819, %v1075
  %v1140 = vadd.f32 %v820, %v1076
  %v1141 = vadd.f32 %v821, %v1077
  %v1142 = vadd.f32 %v822, %v1078
  %v1143 = vadd.f32 %v823, %v1079
  %v1144 = vadd.f32 %v824, %v1080
  %v1145 = vmul.f32 %v1081, 0.7978846
  %v1146 = vmul.f32 %v1082, 0.7978846
  %v1147 = vmul.f32 %v1083, 0.7978846
  %v1148 = vmul.f32 %v1084, 0.7978846
  %v1149 = vmul.f32 %v1085, 0.7978846
  %v1150 = vmul.f32 %v1086, 0.7978846
  %v1151 = vmul.f32 %v1087, 0.7978846
  %v1152 = vmul.f32 %v1088, 0.7978846
  %v1153 = vmul.f32 %v1089, 0.7978846
  %v1154 = vmul.f32 %v1090, 0.7978846
  %v1155 = vmul.f32 %v1091, 0.7978846
  %v1156 = vmul.f32 %v1092, 0.7978846
  %v1157 = vmul.f32 %v1093, 0.7978846
  %v1158 = vmul.f32 %v1094, 0.7978846
  %v1159 = vmul.f32 %v1095, 0.7978846
  %v1160 = vmul.f32 %v1096, 0.7978846
  %v1161 = vmul.f32 %v1097, 0.7978846
  %v1162 = vmul.f32 %v1098, 0.7978846
  %v1163 = vmul.f32 %v1099, 0.7978846
  %v1164 = vmul.f32 %v1100, 0.7978846
  %v1165 = vmul.f32 %v1101, 0.7978846
  %v1166 = vmul.f32 %v1102, 0.7978846
  %v1167 = vmul.f32 %v1103, 0.7978846
  %v1168 = vmul.f32 %v1104, 0.7978846
  %v1169 = vmul.f32 %v1105, 0.7978846
  %v1170 = vmul.f32 %v1106, 0.7978846
  %v1171 = vmul.f32 %v1107, 0.7978846
  %v1172 = vmul.f32 %v1108, 0.7978846
  %v1173 = vmul.f32 %v1109, 0.7978846
  %v1174 = vmul.f32 %v1110, 0.7978846
  %v1175 = vmul.f32 %v1111, 0.7978846
  %v1176 = vmul.f32 %v1112, 0.7978846
  %v1177 = vmul.f32 %v1113, 0.7978846
  %v1178 = vmul.f32 %v1114, 0.7978846
  %v1179 = vmul.f32 %v1115, 0.7978846
  %v1180 = vmul.f32 %v1116, 0.7978846
  %v1181 = vmul.f32 %v1117, 0.7978846
  %v1182 = vmul.f32 %v1118, 0.7978846
  %v1183 = vmul.f32 %v1119, 0.7978846
  %v1184 = vmul.f32 %v1120, 0.7978846
  %v1185 = vmul.f32 %v1121, 0.7978846
  %v1186 = vmul.f32 %v1122, 0.7978846
  %v1187 = vmul.f32 %v1123, 0.7978846
  %v1188 = vmul.f32 %v1124, 0.7978846
  %v1189 = vmul.f32 %v1125, 0.7978846
  %v1190 = vmul.f32 %v1126, 0.7978846
  %v1191 = vmul.f32 %v1127, 0.7978846
  %v1192 = vmul.f32 %v1128, 0.7978846
  %v1193 = vmul.f32 %v1129, 0.7978846
  %v1194 = vmul.f32 %v1130, 0.7978846
  %v1195 = vmul.f32 %v1131, 0.7978846
  %v1196 = vmul.f32 %v1132, 0.7978846
  %v1197 = vmul.f32 %v1133, 0.7978846
  %v1198 = vmul.f32 %v1134, 0.7978846
  %v1199 = vmul.f32 %v1135, 0.7978846
  %v1200 = vmul.f32 %v1136, 0.7978846
  %v1201 = vmul.f32 %v1137, 0.7978846
  %v1202 = vmul.f32 %v1138, 0.7978846
  %v1203 = vmul.f32 %v1139, 0.7978846
  %v1204 = vmul.f32 %v1140, 0.7978846
  %v1205 = vmul.f32 %v1141, 0.7978846
  %v1206 = vmul.f32 %v1142, 0.7978846
  %v1207 = vmul.f32 %v1143, 0.7978846
  %v1208 = vmul.f32 %v1144, 0.7978846
  %v1209 = vtanh.pop %v1145
  %v1210 = vtanh.pop %v1146
  %v1211 = vtanh.pop %v1147
  %v1212 = vtanh.pop %v1148
  %v1213 = vtanh.pop %v1149
  %v1214 = vtanh.pop %v1150
  %v1215 = vtanh.pop %v1151
  %v1216 = vtanh.pop %v1152
  %v1217 = vtanh.pop %v1153
  %v1218 = vtanh.pop %v1154
  %v1219 = vtanh.pop %v1155
  %v1220 = vtanh.pop %v1156
  %v1221 = vtanh.pop %v1157
  %v1222 = vtanh.pop %v1158
  %v1223 = vtanh.pop %v1159
  %v1224 = vtanh.pop %v1160
  %v1225 = vtanh.pop %v1161
  %v1226 = vtanh.pop %v1162
  %v1227 = vtanh.pop %v1163
  %v1228 = vtanh.pop %v1164
  %v1229 = vtanh.pop %v1165
  %v1230 = vtanh.pop %v1166
  %v1231 = vtanh.pop %v1167
  %v1232 = vtanh.pop %v1168
  %v1233 = vtanh.pop %v1169
  %v1234 = vtanh.pop %v1170
  %v1235 = vtanh.pop %v1171
  %v1236 = vtanh.pop %v1172
  %v1237 = vtanh.pop %v1173
  %v1238 = vtanh.pop %v1174
  %v1239 = vtanh.pop %v1175
  %v1240 = vtanh.pop %v1176
  %v1241 = vtanh.pop %v1177
  %v1242 = vtanh.pop %v1178
  %v1243 = vtanh.pop %v1179
  %v1244 = vtanh.pop %v1180
  %v1245 = vtanh.pop %v1181
  %v1246 = vtanh.pop %v1182
  %v1247 = vtanh.pop %v1183
  %v1248 = vtanh.pop %v1184
  %v1249 = vtanh.pop %v1185
  %v1250 = vtanh.pop %v1186
  %v1251 = vtanh.pop %v1187
  %v1252 = vtanh.pop %v1188
  %v1253 = vtanh.pop %v1189
  %v1254 = vtanh.pop %v1190
  %v1255 = vtanh.pop %v1191
  %v1256 = vtanh.pop %v1192
  %v1257 = vtanh.pop %v1193
  %v1258 = vtanh.pop %v1194
  %v1259 = vtanh.pop %v1195
  %v1260 = vtanh.pop %v1196
  %v1261 = vtanh.pop %v1197
  %v1262 = vtanh.pop %v1198
  %v1263 = vtanh.pop %v1199
  %v1264 = vtanh.pop %v1200
  %v1265 = vtanh.pop %v1201
  %v1266 = vtanh.pop %v1202
  %v1267 = vtanh.pop %v1203
  %v1268 = vtanh.pop %v1204
  %v1269 = vtanh.pop %v1205
  %v1270 = vtanh.pop %v1206
  %v1271 = vtanh.pop %v1207
  %v1272 = vtanh.pop %v1208
  %v1273 = vadd.f32 %v1209, 1.0
  %v1274 = vadd.f32 %v1210, 1.0
  %v1275 = vadd.f32 %v1211, 1.0
  %v1276 = vadd.f32 %v1212, 1.0
  %v1277 = vadd.f32 %v1213, 1.0
  %v1278 = vadd.f32 %v1214, 1.0
  %v1279 = vadd.f32 %v1215, 1.0
  %v1280 = vadd.f32 %v1216, 1.0
  %v1281 = vadd.f32 %v1217, 1.0
  %v1282 = vadd.f32 %v1218, 1.0
  %v1283 = vadd.f32 %v1219, 1.0
  %v1284 = vadd.f32 %v1220, 1.0
  %v1285 = vadd.f32 %v1221, 1.0
  %v1286 = vadd.f32 %v1222, 1.0
  %v1287 = vadd.f32 %v1223, 1.0
  %v1288 = vadd.f32 %v1224, 1.0
  %v1289 = vadd.f32 %v1225, 1.0
  %v1290 = vadd.f32 %v1226, 1.0
  %v1291 = vadd.f32 %v1227, 1.0
  %v1292 = vadd.f32 %v1228, 1.0
  %v1293 = vadd.f32 %v1229, 1.0
  %v1294 = vadd.f32 %v1230, 1.0
  %v1295 = vadd.f32 %v1231, 1.0
  %v1296 = vadd.f32 %v1232, 1.0
  %v1297 = vadd.f32 %v1233, 1.0
  %v1298 = vadd.f32 %v1234, 1.0
  %v1299 = vadd.f32 %v1235, 1.0
  %v1300 = vadd.f32 %v1236, 1.0
  %v1301 = vadd.f32 %v1237, 1.0
  %v1302 = vadd.f32 %v1238, 1.0
  %v1303 = vadd.f32 %v1239, 1.0
  %v1304 = vadd.f32 %v1240, 1.0
  %v1305 = vadd.f32 %v1241, 1.0
  %v1306 = vadd.f32 %v1242, 1.0
  %v1307 = vadd.f32 %v1243, 1.0
  %v1308 = vadd.f32 %v1244, 1.0
  %v1309 = vadd.f32 %v1245, 1.0
  %v1310 = vadd.f32 %v1246, 1.0
  %v1311 = vadd.f32 %v1247, 1.0
  %v1312 = vadd.f32 %v1248, 1.0
  %v1313 = vadd.f32 %v1249, 1.0
  %v1314 = vadd.f32 %v1250, 1.0
  %v1315 = vadd.f32 %v1251, 1.0
  %v1316 = vadd.f32 %v1252, 1.0
  %v1317 = vadd.f32 %v1253, 1.0
  %v1318 = vadd.f32 %v1254, 1.0
  %v1319 = vadd.f32 %v1255, 1.0
  %v1320 = vadd.f32 %v1256, 1.0
  %v1321 = vadd.f32 %v1257, 1.0
  %v1322 = vadd.f32 %v1258, 1.0
  %v1323 = vadd.f32 %v1259, 1.0
  %v1324 = vadd.f32 %v1260, 1.0
  %v1325 = vadd.f32 %v1261, 1.0
  %v1326 = vadd.f32 %v1262, 1.0
  %v1327 = vadd.f32 %v1263, 1.0
  %v1328 = vadd.f32 %v1264, 1.0
  %v1329 = vadd.f32 %v1265, 1.0
  %v1330 = vadd.f32 %v1266, 1.0
  %v1331 = vadd.f32 %v1267, 1.0
  %v1332 = vadd.f32 %v1268, 1.0
  %v1333 = vadd.f32 %v1269, 1.0
  %v1334 = vadd.f32 %v1270, 1.0
  %v1335 = vadd.f32 %v1271, 1.0
  %v1336 = vadd.f32 %v1272, 1.0
  %v1337 = vmul.f32 %v825, %v1273
  %v1338 = vmul.f32 %v826, %v1274
  %v1339 = vmul.f32 %v827, %v1275
  %v1340 = vmul.f32 %v828, %v1276
  %v1341 = vmul.f32 %v829, %v1277
  %v1342 = vmul.f32 %v830, %v1278
  %v1343 = vmul.f32 %v831, %v1279
  %v1344 = vmul.f32 %v832, %v1280
  %v1345 = vmul.f32 %v833, %v1281
  %v1346 = vmul.f32 %v834, %v1282
  %v1347 = vmul.f32 %v835, %v1283
  %v1348 = vmul.f32 %v836, %v1284
  %v1349 = vmul.f32 %v837, %v1285
  %v1350 = vmul.f32 %v838, %v1286
  %v1351 = vmul.f32 %v839, %v1287
  %v1352 = vmul.f32 %v840, %v1288
  %v1353 = vmul.f32 %v841, %v1289
  %v1354 = vmul.f32 %v842, %v1290
  %v1355 = vmul.f32 %v843, %v1291
  %v1356 = vmul.f32 %v844, %v1292
  %v1357 = vmul.f32 %v845, %v1293
  %v1358 = vmul.f32 %v846, %v1294
  %v1359 = vmul.f32 %v847, %v1295
  %v1360 = vmul.f32 %v848, %v1296
  %v1361 = vmul.f32 %v849, %v1297
  %v1362 = vmul.f32 %v850, %v1298
  %v1363 = vmul.f32 %v851, %v1299
  %v1364 = vmul.f32 %v852, %v1300
  %v1365 = vmul.f32 %v853, %v1301
  %v1366 = vmul.f32 %v854, %v1302
  %v1367 = vmul.f32 %v855, %v1303
  %v1368 = vmul.f32 %v856, %v1304
  %v1369 = vmul.f32 %v857, %v1305
  %v1370 = vmul.f32 %v858, %v1306
  %v1371 = vmul.f32 %v859, %v1307
  %v1372 = vmul.f32 %v860, %v1308
  %v1373 = vmul.f32 %v861, %v1309
  %v1374 = vmul.f32 %v862, %v1310
  %v1375 = vmul.f32 %v863, %v1311
  %v1376 = vmul.f32 %v864, %v1312
  %v1377 = vmul.f32 %v865, %v1313
  %v1378 = vmul.f32 %v866, %v1314
  %v1379 = vmul.f32 %v867, %v1315
  %v1380 = vmul.f32 %v868, %v1316
  %v1381 = vmul.f32 %v869, %v1317
  %v1382 = vmul.f32 %v870, %v1318
  %v1383 = vmul.f32 %v871, %v1319
  %v1384 = vmul.f32 %v872, %v1320
  %v1385 = vmul.f32 %v873, %v1321
  %v1386 = vmul.f32 %v874, %v1322
  %v1387 = vmul.f32 %v875, %v1323
  %v1388 = vmul.f32 %v876, %v1324
  %v1389 = vmul.f32 %v877, %v1325
  %v1390 = vmul.f32 %v878, %v1326
  %v1391 = vmul.f32 %v879, %v1327
  %v1392 = vmul.f32 %v880, %v1328
  %v1393 = vmul.f32 %v881, %v1329
  %v1394 = vmul.f32 %v882, %v1330
  %v1395 = vmul.f32 %v883, %v1331
  %v1396 = vmul.f32 %v884, %v1332
  %v1397 = vmul.f32 %v885, %v1333
  %v1398 = vmul.f32 %v886, %v1334
  %v1399 = vmul.f32 %v887, %v1335
  %v1400 = vmul.f32 %v888, %v1336
  %v1401 = vld [vmem:[%s4] sm:$0xf]
  %v1402 = vpack.c.bf16 %v1338, %v1337
  %v1403 = vpack.c.bf16 %v1340, %v1339
  %v1404 = vpack.c.bf16 %v1342, %v1341
  %v1405 = vpack.c.bf16 %v1344, %v1343
  %v1406 = vpack.c.bf16 %v1346, %v1345
  %v1407 = vpack.c.bf16 %v1348, %v1347
  %v1408 = vpack.c.bf16 %v1350, %v1349
  %v1409 = vpack.c.bf16 %v1352, %v1351
  %v1410 = vpack.c.bf16 %v1354, %v1353
  %v1411 = vpack.c.bf16 %v1356, %v1355
  %v1412 = vpack.c.bf16 %v1358, %v1357
  %v1413 = vpack.c.bf16 %v1360, %v1359
  %v1414 = vpack.c.bf16 %v1362, %v1361
  %v1415 = vpack.c.bf16 %v1364, %v1363
  %v1416 = vpack.c.bf16 %v1366, %v1365
  %v1417 = vpack.c.bf16 %v1368, %v1367
  %v1418 = vpack.c.bf16 %v1370, %v1369
  %v1419 = vpack.c.bf16 %v1372, %v1371
  %v1420 = vpack.c.bf16 %v1374, %v1373
  %v1421 = vpack.c.bf16 %v1376, %v1375
  %v1422 = vpack.c.bf16 %v1378, %v1377
  %v1423 = vpack.c.bf16 %v1380, %v1379
  %v1424 = vpack.c.bf16 %v1382, %v1381
  %v1425 = vpack.c.bf16 %v1384, %v1383
  %v1426 = vpack.c.bf16 %v1386, %v1385
  %v1427 = vpack.c.bf16 %v1388, %v1387
  %v1428 = vpack.c.bf16 %v1390, %v1389
  %v1429 = vpack.c.bf16 %v1392, %v1391
  %v1430 = vpack.c.bf16 %v1394, %v1393
  %v1431 = vpack.c.bf16 %v1396, %v1395
  %v1432 = vpack.c.bf16 %v1398, %v1397
  %v1433 = vpack.c.bf16 %v1400, %v1399
  %vm1434 = vcmask 64512
  %v1436 = vsel %vm1434, %v1402, 0
  %v1439 = vsel %vm1434, %v1403, 0
  %v1442 = vsel %vm1434, %v1404, 0
  %v1445 = vsel %vm1434, %v1405, 0
  %v1448 = vsel %vm1434, %v1406, 0
  %v1451 = vsel %vm1434, %v1407, 0
  %v1454 = vsel %vm1434, %v1408, 0
  %v1457 = vsel %vm1434, %v1409, 0
  %v1460 = vsel %vm1434, %v1410, 0
  %v1463 = vsel %vm1434, %v1411, 0
  %v1466 = vsel %vm1434, %v1412, 0
  %v1469 = vsel %vm1434, %v1413, 0
  %v1472 = vsel %vm1434, %v1414, 0
  %v1475 = vsel %vm1434, %v1415, 0
  %v1478 = vsel %vm1434, %v1416, 0
  %v1481 = vsel %vm1434, %v1417, 0
  %v1484 = vsel %vm1434, %v1418, 0
  %v1487 = vsel %vm1434, %v1419, 0
  %v1490 = vsel %vm1434, %v1420, 0
  %v1493 = vsel %vm1434, %v1421, 0
  %v1496 = vsel %vm1434, %v1422, 0
  %v1499 = vsel %vm1434, %v1423, 0
  %v1502 = vsel %vm1434, %v1424, 0
  %v1505 = vsel %vm1434, %v1425, 0
  %v1508 = vsel %vm1434, %v1426, 0
  %v1511 = vsel %vm1434, %v1427, 0
  %v1514 = vsel %vm1434, %v1428, 0
  %v1517 = vsel %vm1434, %v1429, 0
  %v1520 = vsel %vm1434, %v1430, 0
  %v1523 = vsel %vm1434, %v1431, 0
  %v1526 = vsel %vm1434, %v1432, 0
  %v1529 = vsel %vm1434, %v1433, 0
  %vm1531 = vcmask 1043456
  %v1533 = vsel %vm1531, %v1401, 0
  %1535 = vmatprep.subr.bf16.mxu0 0
  %1536 = vmatpush1.bf16.msra.mxu0 %v1533
  %1537 = vmatprep.subr.bf16.mxu0 0
  %1538 = vmatpush1.bf16.msra.mxu0 0
  %1539 = vmatprep.subr.bf16.mxu0 0
  %1540 = vmatpush1.bf16.msra.mxu0 0
  %1541 = vmatprep.subr.bf16.mxu0 0
  %1542 = vmatpush1.bf16.msra.mxu0 0
  %1543 = vmatprep.subr.bf16.mxu0 0
  %1544 = vmatpush1.bf16.msra.mxu0 0
  %1545 = vmatprep.subr.bf16.mxu0 0
  %1546 = vmatpush1.bf16.msra.mxu0 0
  %1547 = vmatprep.subr.bf16.mxu0 0
  %1548 = vmatpush1.bf16.msra.mxu0 0
  %1549 = vmatprep.subr.bf16.mxu0 0
  %1550 = vmatpush1.bf16.msra.mxu0 0
  %1551 = vmatprep.subr.bf16.mxu0 0
  %1552 = vmatpush1.bf16.msra.mxu0 0
  %1553 = vmatprep.subr.bf16.mxu0 0
  %1554 = vmatpush1.bf16.msra.mxu0 0
  %1555 = vmatprep.subr.bf16.mxu0 0
  %1556 = vmatpush1.bf16.msra.mxu0 0
  %1557 = vmatprep.subr.bf16.mxu0 0
  %1558 = vmatpush1.bf16.msra.mxu0 0
  %1559 = vmatprep.subr.bf16.mxu0 0
  %1560 = vmatpush1.bf16.msra.mxu0 0
  %1561 = vmatprep.subr.bf16.mxu0 0
  %1562 = vmatpush1.bf16.msra.mxu0 0
  %1563 = vmatprep.subr.bf16.mxu0 0
  %1564 = vmatpush1.bf16.msra.mxu0 0
  %1565 = vmatprep.subr.bf16.mxu0 0
  %1566 = vmatpush1.bf16.msra.mxu0 0
  %1567 = vmatprep.mubr.bf16.mxu0 0
  %1568 = vmatmul.mubr.bf16.gmra.mrb[0].mxu0 %v1436
  %v1569 = vpop.f32.mrb[0].mxu0
  %v1570 = vadd.f32 0.0, %v1569
  %v1571 = vpop.f32.mrb[0].mxu0
  %v1572 = vpop.f32.mrb[0].mxu0
  %v1573 = vadd.f32 0.0, %v1572
  %v1574 = vpop.f32.mrb[0].mxu0
  %1575 = vmatprep.mubr.bf16.mxu0 0
  %1576 = vmatmul.mubr.bf16.gmra.mrb[0].mxu0 %v1439
  %v1577 = vpop.f32.mrb[0].mxu0
  %v1578 = vadd.f32 0.0, %v1577
  %v1579 = vpop.f32.mrb[0].mxu0
  %v1580 = vpop.f32.mrb[0].mxu0
  %v1581 = vadd.f32 0.0, %v1580
  %v1582 = vpop.f32.mrb[0].mxu0
  %1583 = vmatprep.mubr.bf16.mxu0 0
  %1584 = vmatmul.mubr.bf16.gmra.mrb[0].mxu0 %v1442
  %v1585 = vpop.f32.mrb[0].mxu0
  %v1586 = vadd.f32 0.0, %v1585
  %v1587 = vpop.f32.mrb[0].mxu0
  %v1588 = vpop.f32.mrb[0].mxu0
  %v1589 = vadd.f32 0.0, %v1588
  %v1590 = vpop.f32.mrb[0].mxu0
  %1591 = vmatprep.mubr.bf16.mxu0 0
  %1592 = vmatmul.mubr.bf16.gmra.mrb[0].mxu0 %v1445
  %v1593 = vpop.f32.mrb[0].mxu0
  %v1594 = vadd.f32 0.0, %v1593
  %v1595 = vpop.f32.mrb[0].mxu0
  %v1596 = vpop.f32.mrb[0].mxu0
  %v1597 = vadd.f32 0.0, %v1596
  %v1598 = vpop.f32.mrb[0].mxu0
  %1599 = vmatprep.mubr.bf16.mxu0 0
  %1600 = vmatmul.mubr.bf16.gmra.mrb[0].mxu0 %v1448
  %v1601 = vpop.f32.mrb[0].mxu0
  %v1602 = vadd.f32 0.0, %v1601
  %v1603 = vpop.f32.mrb[0].mxu0
  %v1604 = vpop.f32.mrb[0].mxu0
  %v1605 = vadd.f32 0.0, %v1604
  %v1606 = vpop.f32.mrb[0].mxu0
  %1607 = vmatprep.mubr.bf16.mxu0 0
  %1608 = vmatmul.mubr.bf16.gmra.mrb[0].mxu0 %v1451
  %v1609 = vpop.f32.mrb[0].mxu0
  %v1610 = vadd.f32 0.0, %v1609
  %v1611 = vpop.f32.mrb[0].mxu0
  %v1612 = vpop.f32.mrb[0].mxu0
  %v1613 = vadd.f32 0.0, %v1612
  %v1614 = vpop.f32.mrb[0].mxu0
  %1615 = vmatprep.mubr.bf16.mxu0 0
  %1616 = vmatmul.mubr.bf16.gmra.mrb[0].mxu0 %v1454
  %v1617 = vpop.f32.mrb[0].mxu0
  %v1618 = vadd.f32 0.0, %v1617
  %v1619 = vpop.f32.mrb[0].mxu0
  %v1620 = vpop.f32.mrb[0].mxu0
  %v1621 = vadd.f32 0.0, %v1620
  %v1622 = vpop.f32.mrb[0].mxu0
  %1623 = vmatprep.mubr.bf16.mxu0 0
  %1624 = vmatmul.mubr.bf16.gmra.mrb[0].mxu0 %v1457
  %v1625 = vpop.f32.mrb[0].mxu0
  %v1626 = vadd.f32 0.0, %v1625
  %v1627 = vpop.f32.mrb[0].mxu0
  %v1628 = vpop.f32.mrb[0].mxu0
  %v1629 = vadd.f32 0.0, %v1628
  %v1630 = vpop.f32.mrb[0].mxu0
  %1631 = vmatprep.mubr.bf16.mxu0 0
  %1632 = vmatmul.mubr.bf16.gmra.mrb[0].mxu0 %v1460
  %v1633 = vpop.f32.mrb[0].mxu0
  %v1634 = vadd.f32 0.0, %v1633
  %v1635 = vpop.f32.mrb[0].mxu0
  %v1636 = vpop.f32.mrb[0].mxu0
  %v1637 = vadd.f32 0.0, %v1636
  %v1638 = vpop.f32.mrb[0].mxu0
  %1639 = vmatprep.mubr.bf16.mxu0 0
  %1640 = vmatmul.mubr.bf16.gmra.mrb[0].mxu0 %v1463
  %v1641 = vpop.f32.mrb[0].mxu0
  %v1642 = vadd.f32 0.0, %v1641
  %v1643 = vpop.f32.mrb[0].mxu0
  %v1644 = vpop.f32.mrb[0].mxu0
  %v1645 = vadd.f32 0.0, %v1644
  %v1646 = vpop.f32.mrb[0].mxu0
  %1647 = vmatprep.mubr.bf16.mxu0 0
  %1648 = vmatmul.mubr.bf16.gmra.mrb[0].mxu0 %v1466
  %v1649 = vpop.f32.mrb[0].mxu0
  %v1650 = vadd.f32 0.0, %v1649
  %v1651 = vpop.f32.mrb[0].mxu0
  %v1652 = vpop.f32.mrb[0].mxu0
  %v1653 = vadd.f32 0.0, %v1652
  %v1654 = vpop.f32.mrb[0].mxu0
  %1655 = vmatprep.mubr.bf16.mxu0 0
  %1656 = vmatmul.mubr.bf16.gmra.mrb[0].mxu0 %v1469
  %v1657 = vpop.f32.mrb[0].mxu0
  %v1658 = vadd.f32 0.0, %v1657
  %v1659 = vpop.f32.mrb[0].mxu0
  %v1660 = vpop.f32.mrb[0].mxu0
  %v1661 = vadd.f32 0.0, %v1660
  %v1662 = vpop.f32.mrb[0].mxu0
  %1663 = vmatprep.mubr.bf16.mxu0 0
  %1664 = vmatmul.mubr.bf16.gmra.mrb[0].mxu0 %v1472
  %v1665 = vpop.f32.mrb[0].mxu0
  %v1666 = vadd.f32 0.0, %v1665
  %v1667 = vpop.f32.mrb[0].mxu0
  %v1668 = vpop.f32.mrb[0].mxu0
  %v1669 = vadd.f32 0.0, %v1668
  %v1670 = vpop.f32.mrb[0].mxu0
  %1671 = vmatprep.mubr.bf16.mxu0 0
  %1672 = vmatmul.mubr.bf16.gmra.mrb[0].mxu0 %v1475
  %v1673 = vpop.f32.mrb[0].mxu0
  %v1674 = vadd.f32 0.0, %v1673
  %v1675 = vpop.f32.mrb[0].mxu0
  %v1676 = vpop.f32.mrb[0].mxu0
  %v1677 = vadd.f32 0.0, %v1676
  %v1678 = vpop.f32.mrb[0].mxu0
  %1679 = vmatprep.mubr.bf16.mxu0 0
  %1680 = vmatmul.mubr.bf16.gmra.mrb[0].mxu0 %v1478
  %v1681 = vpop.f32.mrb[0].mxu0
  %v1682 = vadd.f32 0.0, %v1681
  %v1683 = vpop.f32.mrb[0].mxu0
  %v1684 = vpop.f32.mrb[0].mxu0
  %v1685 = vadd.f32 0.0, %v1684
  %v1686 = vpop.f32.mrb[0].mxu0
  %1687 = vmatprep.mubr.bf16.mxu0 0
  %1688 = vmatmul.mubr.bf16.gmra.mrb[0].mxu0 %v1481
  %v1689 = vpop.f32.mrb[0].mxu0
  %v1690 = vadd.f32 0.0, %v1689
  %v1691 = vpop.f32.mrb[0].mxu0
  %v1692 = vpop.f32.mrb[0].mxu0
  %v1693 = vadd.f32 0.0, %v1692
  %v1694 = vpop.f32.mrb[0].mxu0
  %1695 = vmatprep.mubr.bf16.mxu0 0
  %1696 = vmatmul.mubr.bf16.gmra.mrb[0].mxu0 %v1484
  %v1697 = vpop.f32.mrb[0].mxu0
  %v1698 = vadd.f32 0.0, %v1697
  %v1699 = vpop.f32.mrb[0].mxu0
  %v1700 = vpop.f32.mrb[0].mxu0
  %v1701 = vadd.f32 0.0, %v1700
  %v1702 = vpop.f32.mrb[0].mxu0
  %1703 = vmatprep.mubr.bf16.mxu0 0
  %1704 = vmatmul.mubr.bf16.gmra.mrb[0].mxu0 %v1487
  %v1705 = vpop.f32.mrb[0].mxu0
  %v1706 = vadd.f32 0.0, %v1705
  %v1707 = vpop.f32.mrb[0].mxu0
  %v1708 = vpop.f32.mrb[0].mxu0
  %v1709 = vadd.f32 0.0, %v1708
  %v1710 = vpop.f32.mrb[0].mxu0
  %1711 = vmatprep.mubr.bf16.mxu0 0
  %1712 = vmatmul.mubr.bf16.gmra.mrb[0].mxu0 %v1490
  %v1713 = vpop.f32.mrb[0].mxu0
  %v1714 = vadd.f32 0.0, %v1713
  %v1715 = vpop.f32.mrb[0].mxu0
  %v1716 = vpop.f32.mrb[0].mxu0
  %v1717 = vadd.f32 0.0, %v1716
  %v1718 = vpop.f32.mrb[0].mxu0
  %1719 = vmatprep.mubr.bf16.mxu0 0
  %1720 = vmatmul.mubr.bf16.gmra.mrb[0].mxu0 %v1493
  %v1721 = vpop.f32.mrb[0].mxu0
  %v1722 = vadd.f32 0.0, %v1721
  %v1723 = vpop.f32.mrb[0].mxu0
  %v1724 = vpop.f32.mrb[0].mxu0
  %v1725 = vadd.f32 0.0, %v1724
  %v1726 = vpop.f32.mrb[0].mxu0
  %1727 = vmatprep.mubr.bf16.mxu0 0
  %1728 = vmatmul.mubr.bf16.gmra.mrb[0].mxu0 %v1496
  %v1729 = vpop.f32.mrb[0].mxu0
  %v1730 = vadd.f32 0.0, %v1729
  %v1731 = vpop.f32.mrb[0].mxu0
  %v1732 = vpop.f32.mrb[0].mxu0
  %v1733 = vadd.f32 0.0, %v1732
  %v1734 = vpop.f32.mrb[0].mxu0
  %1735 = vmatprep.mubr.bf16.mxu0 0
  %1736 = vmatmul.mubr.bf16.gmra.mrb[0].mxu0 %v1499
  %v1737 = vpop.f32.mrb[0].mxu0
  %v1738 = vadd.f32 0.0, %v1737
  %v1739 = vpop.f32.mrb[0].mxu0
  %v1740 = vpop.f32.mrb[0].mxu0
  %v1741 = vadd.f32 0.0, %v1740
  %v1742 = vpop.f32.mrb[0].mxu0
  %1743 = vmatprep.mubr.bf16.mxu0 0
  %1744 = vmatmul.mubr.bf16.gmra.mrb[0].mxu0 %v1502
  %v1745 = vpop.f32.mrb[0].mxu0
  %v1746 = vadd.f32 0.0, %v1745
  %v1747 = vpop.f32.mrb[0].mxu0
  %v1748 = vpop.f32.mrb[0].mxu0
  %v1749 = vadd.f32 0.0, %v1748
  %v1750 = vpop.f32.mrb[0].mxu0
  %1751 = vmatprep.mubr.bf16.mxu0 0
  %1752 = vmatmul.mubr.bf16.gmra.mrb[0].mxu0 %v1505
  %v1753 = vpop.f32.mrb[0].mxu0
  %v1754 = vadd.f32 0.0, %v1753
  %v1755 = vpop.f32.mrb[0].mxu0
  %v1756 = vpop.f32.mrb[0].mxu0
  %v1757 = vadd.f32 0.0, %v1756
  %v1758 = vpop.f32.mrb[0].mxu0
  %1759 = vmatprep.mubr.bf16.mxu0 0
  %1760 = vmatmul.mubr.bf16.gmra.mrb[0].mxu0 %v1508
  %v1761 = vpop.f32.mrb[0].mxu0
  %v1762 = vadd.f32 0.0, %v1761
  %v1763 = vpop.f32.mrb[0].mxu0
  %v1764 = vpop.f32.mrb[0].mxu0
  %v1765 = vadd.f32 0.0, %v1764
  %v1766 = vpop.f32.mrb[0].mxu0
  %1767 = vmatprep.mubr.bf16.mxu0 0
  %1768 = vmatmul.mubr.bf16.gmra.mrb[0].mxu0 %v1511
  %v1769 = vpop.f32.mrb[0].mxu0
  %v1770 = vadd.f32 0.0, %v1769
  %v1771 = vpop.f32.mrb[0].mxu0
  %v1772 = vpop.f32.mrb[0].mxu0
  %v1773 = vadd.f32 0.0, %v1772
  %v1774 = vpop.f32.mrb[0].mxu0
  %1775 = vmatprep.mubr.bf16.mxu0 0
  %1776 = vmatmul.mubr.bf16.gmra.mrb[0].mxu0 %v1514
  %v1777 = vpop.f32.mrb[0].mxu0
  %v1778 = vadd.f32 0.0, %v1777
  %v1779 = vpop.f32.mrb[0].mxu0
  %v1780 = vpop.f32.mrb[0].mxu0
  %v1781 = vadd.f32 0.0, %v1780
  %v1782 = vpop.f32.mrb[0].mxu0
  %1783 = vmatprep.mubr.bf16.mxu0 0
  %1784 = vmatmul.mubr.bf16.gmra.mrb[0].mxu0 %v1517
  %v1785 = vpop.f32.mrb[0].mxu0
  %v1786 = vadd.f32 0.0, %v1785
  %v1787 = vpop.f32.mrb[0].mxu0
  %v1788 = vpop.f32.mrb[0].mxu0
  %v1789 = vadd.f32 0.0, %v1788
  %v1790 = vpop.f32.mrb[0].mxu0
  %1791 = vmatprep.mubr.bf16.mxu0 0
  %1792 = vmatmul.mubr.bf16.gmra.mrb[0].mxu0 %v1520
  %v1793 = vpop.f32.mrb[0].mxu0
  %v1794 = vadd.f32 0.0, %v1793
  %v1795 = vpop.f32.mrb[0].mxu0
  %v1796 = vpop.f32.mrb[0].mxu0
  %v1797 = vadd.f32 0.0, %v1796
  %v1798 = vpop.f32.mrb[0].mxu0
  %1799 = vmatprep.mubr.bf16.mxu0 0
  %1800 = vmatmul.mubr.bf16.gmra.mrb[0].mxu0 %v1523
  %v1801 = vpop.f32.mrb[0].mxu0
  %v1802 = vadd.f32 0.0, %v1801
  %v1803 = vpop.f32.mrb[0].mxu0
  %v1804 = vpop.f32.mrb[0].mxu0
  %v1805 = vadd.f32 0.0, %v1804
  %v1806 = vpop.f32.mrb[0].mxu0
  %1807 = vmatprep.mubr.bf16.mxu0 0
  %1808 = vmatmul.mubr.bf16.gmra.mrb[0].mxu0 %v1526
  %v1809 = vpop.f32.mrb[0].mxu0
  %v1810 = vadd.f32 0.0, %v1809
  %v1811 = vpop.f32.mrb[0].mxu0
  %v1812 = vpop.f32.mrb[0].mxu0
  %v1813 = vadd.f32 0.0, %v1812
  %v1814 = vpop.f32.mrb[0].mxu0
  %1815 = vmatprep.mubr.bf16.mxu0 0
  %1816 = vmatmul.mubr.bf16.gmra.mrb[0].mxu0 %v1529
  %v1817 = vpop.f32.mrb[0].mxu0
  %v1818 = vadd.f32 0.0, %v1817
  %v1819 = vpop.f32.mrb[0].mxu0
  %v1820 = vpop.f32.mrb[0].mxu0
  %v1821 = vadd.f32 0.0, %v1820
  %v1822 = vpop.f32.mrb[0].mxu0
  %1823 = vdwg.mxu0
  %v1824 = vld [vmem:[%s5] sm:$0x1]
  %v1826 = vlaneseq
  %v1827 = vshrl.u32 %v1826, 7
  %v1828 = vsub.s32 0, %v1827
  %v1829 = vrot.slane %v1824, %v1828
  %v1831 = vmul.f32 %v1570, %v1829
  %v1832 = vmul.f32 %v1573, %v1829
  %v1833 = vmul.f32 %v1578, %v1829
  %v1834 = vmul.f32 %v1581, %v1829
  %v1835 = vmul.f32 %v1586, %v1829
  %v1836 = vmul.f32 %v1589, %v1829
  %v1837 = vmul.f32 %v1594, %v1829
  %v1838 = vmul.f32 %v1597, %v1829
  %v1839 = vmul.f32 %v1602, %v1829
  %v1840 = vmul.f32 %v1605, %v1829
  %v1841 = vmul.f32 %v1610, %v1829
  %v1842 = vmul.f32 %v1613, %v1829
  %v1843 = vmul.f32 %v1618, %v1829
  %v1844 = vmul.f32 %v1621, %v1829
  %v1845 = vmul.f32 %v1626, %v1829
  %v1846 = vmul.f32 %v1629, %v1829
  %v1847 = vmul.f32 %v1634, %v1829
  %v1848 = vmul.f32 %v1637, %v1829
  %v1849 = vmul.f32 %v1642, %v1829
  %v1850 = vmul.f32 %v1645, %v1829
  %v1851 = vmul.f32 %v1650, %v1829
  %v1852 = vmul.f32 %v1653, %v1829
  %v1853 = vmul.f32 %v1658, %v1829
  %v1854 = vmul.f32 %v1661, %v1829
  %v1855 = vmul.f32 %v1666, %v1829
  %v1856 = vmul.f32 %v1669, %v1829
  %v1857 = vmul.f32 %v1674, %v1829
  %v1858 = vmul.f32 %v1677, %v1829
  %v1859 = vmul.f32 %v1682, %v1829
  %v1860 = vmul.f32 %v1685, %v1829
  %v1861 = vmul.f32 %v1690, %v1829
  %v1862 = vmul.f32 %v1693, %v1829
  %v1863 = vmul.f32 %v1698, %v1829
  %v1864 = vmul.f32 %v1701, %v1829
  %v1865 = vmul.f32 %v1706, %v1829
  %v1866 = vmul.f32 %v1709, %v1829
  %v1867 = vmul.f32 %v1714, %v1829
  %v1868 = vmul.f32 %v1717, %v1829
  %v1869 = vmul.f32 %v1722, %v1829
  %v1870 = vmul.f32 %v1725, %v1829
  %v1871 = vmul.f32 %v1730, %v1829
  %v1872 = vmul.f32 %v1733, %v1829
  %v1873 = vmul.f32 %v1738, %v1829
  %v1874 = vmul.f32 %v1741, %v1829
  %v1875 = vmul.f32 %v1746, %v1829
  %v1876 = vmul.f32 %v1749, %v1829
  %v1877 = vmul.f32 %v1754, %v1829
  %v1878 = vmul.f32 %v1757, %v1829
  %v1879 = vmul.f32 %v1762, %v1829
  %v1880 = vmul.f32 %v1765, %v1829
  %v1881 = vmul.f32 %v1770, %v1829
  %v1882 = vmul.f32 %v1773, %v1829
  %v1883 = vmul.f32 %v1778, %v1829
  %v1884 = vmul.f32 %v1781, %v1829
  %v1885 = vmul.f32 %v1786, %v1829
  %v1886 = vmul.f32 %v1789, %v1829
  %v1887 = vmul.f32 %v1794, %v1829
  %v1888 = vmul.f32 %v1797, %v1829
  %v1889 = vmul.f32 %v1802, %v1829
  %v1890 = vmul.f32 %v1805, %v1829
  %v1891 = vmul.f32 %v1810, %v1829
  %v1892 = vmul.f32 %v1813, %v1829
  %v1893 = vmul.f32 %v1818, %v1829
  %v1894 = vmul.f32 %v1821, %v1829
  %v1895 = vld [vmem:[%s6] sm:$0x1]
  %v1897 = vlaneseq
  %v1898 = vshrl.u32 %v1897, 7
  %v1899 = vsub.s32 0, %v1898
  %v1900 = vrot.slane %v1895, %v1899
  %v1902 = vadd.f32 %v1831, %v1900
  %v1903 = vadd.f32 %v1832, %v1900
  %v1904 = vadd.f32 %v1833, %v1900
  %v1905 = vadd.f32 %v1834, %v1900
  %v1906 = vadd.f32 %v1835, %v1900
  %v1907 = vadd.f32 %v1836, %v1900
  %v1908 = vadd.f32 %v1837, %v1900
  %v1909 = vadd.f32 %v1838, %v1900
  %v1910 = vadd.f32 %v1839, %v1900
  %v1911 = vadd.f32 %v1840, %v1900
  %v1912 = vadd.f32 %v1841, %v1900
  %v1913 = vadd.f32 %v1842, %v1900
  %v1914 = vadd.f32 %v1843, %v1900
  %v1915 = vadd.f32 %v1844, %v1900
  %v1916 = vadd.f32 %v1845, %v1900
  %v1917 = vadd.f32 %v1846, %v1900
  %v1918 = vadd.f32 %v1847, %v1900
  %v1919 = vadd.f32 %v1848, %v1900
  %v1920 = vadd.f32 %v1849, %v1900
  %v1921 = vadd.f32 %v1850, %v1900
  %v1922 = vadd.f32 %v1851, %v1900
  %v1923 = vadd.f32 %v1852, %v1900
  %v1924 = vadd.f32 %v1853, %v1900
  %v1925 = vadd.f32 %v1854, %v1900
  %v1926 = vadd.f32 %v1855, %v1900
  %v1927 = vadd.f32 %v1856, %v1900
  %v1928 = vadd.f32 %v1857, %v1900
  %v1929 = vadd.f32 %v1858, %v1900
  %v1930 = vadd.f32 %v1859, %v1900
  %v1931 = vadd.f32 %v1860, %v1900
  %v1932 = vadd.f32 %v1861, %v1900
  %v1933 = vadd.f32 %v1862, %v1900
  %v1934 = vadd.f32 %v1863, %v1900
  %v1935 = vadd.f32 %v1864, %v1900
  %v1936 = vadd.f32 %v1865, %v1900
  %v1937 = vadd.f32 %v1866, %v1900
  %v1938 = vadd.f32 %v1867, %v1900
  %v1939 = vadd.f32 %v1868, %v1900
  %v1940 = vadd.f32 %v1869, %v1900
  %v1941 = vadd.f32 %v1870, %v1900
  %v1942 = vadd.f32 %v1871, %v1900
  %v1943 = vadd.f32 %v1872, %v1900
  %v1944 = vadd.f32 %v1873, %v1900
  %v1945 = vadd.f32 %v1874, %v1900
  %v1946 = vadd.f32 %v1875, %v1900
  %v1947 = vadd.f32 %v1876, %v1900
  %v1948 = vadd.f32 %v1877, %v1900
  %v1949 = vadd.f32 %v1878, %v1900
  %v1950 = vadd.f32 %v1879, %v1900
  %v1951 = vadd.f32 %v1880, %v1900
  %v1952 = vadd.f32 %v1881, %v1900
  %v1953 = vadd.f32 %v1882, %v1900
  %v1954 = vadd.f32 %v1883, %v1900
  %v1955 = vadd.f32 %v1884, %v1900
  %v1956 = vadd.f32 %v1885, %v1900
  %v1957 = vadd.f32 %v1886, %v1900
  %v1958 = vadd.f32 %v1887, %v1900
  %v1959 = vadd.f32 %v1888, %v1900
  %v1960 = vadd.f32 %v1889, %v1900
  %v1961 = vadd.f32 %v1890, %v1900
  %v1962 = vadd.f32 %v1891, %v1900
  %v1963 = vadd.f32 %v1892, %v1900
  %v1964 = vadd.f32 %v1893, %v1900
  %v1965 = vadd.f32 %v1894, %v1900
  %v1966 = vmul.f32 %v1902, 0.5
  %v1967 = vmul.f32 %v1903, 0.5
  %v1968 = vmul.f32 %v1904, 0.5
  %v1969 = vmul.f32 %v1905, 0.5
  %v1970 = vmul.f32 %v1906, 0.5
  %v1971 = vmul.f32 %v1907, 0.5
  %v1972 = vmul.f32 %v1908, 0.5
  %v1973 = vmul.f32 %v1909, 0.5
  %v1974 = vmul.f32 %v1910, 0.5
  %v1975 = vmul.f32 %v1911, 0.5
  %v1976 = vmul.f32 %v1912, 0.5
  %v1977 = vmul.f32 %v1913, 0.5
  %v1978 = vmul.f32 %v1914, 0.5
  %v1979 = vmul.f32 %v1915, 0.5
  %v1980 = vmul.f32 %v1916, 0.5
  %v1981 = vmul.f32 %v1917, 0.5
  %v1982 = vmul.f32 %v1918, 0.5
  %v1983 = vmul.f32 %v1919, 0.5
  %v1984 = vmul.f32 %v1920, 0.5
  %v1985 = vmul.f32 %v1921, 0.5
  %v1986 = vmul.f32 %v1922, 0.5
  %v1987 = vmul.f32 %v1923, 0.5
  %v1988 = vmul.f32 %v1924, 0.5
  %v1989 = vmul.f32 %v1925, 0.5
  %v1990 = vmul.f32 %v1926, 0.5
  %v1991 = vmul.f32 %v1927, 0.5
  %v1992 = vmul.f32 %v1928, 0.5
  %v1993 = vmul.f32 %v1929, 0.5
  %v1994 = vmul.f32 %v1930, 0.5
  %v1995 = vmul.f32 %v1931, 0.5
  %v1996 = vmul.f32 %v1932, 0.5
  %v1997 = vmul.f32 %v1933, 0.5
  %v1998 = vmul.f32 %v1934, 0.5
  %v1999 = vmul.f32 %v1935, 0.5
  %v2000 = vmul.f32 %v1936, 0.5
  %v2001 = vmul.f32 %v1937, 0.5
  %v2002 = vmul.f32 %v1938, 0.5
  %v2003 = vmul.f32 %v1939, 0.5
  %v2004 = vmul.f32 %v1940, 0.5
  %v2005 = vmul.f32 %v1941, 0.5
  %v2006 = vmul.f32 %v1942, 0.5
  %v2007 = vmul.f32 %v1943, 0.5
  %v2008 = vmul.f32 %v1944, 0.5
  %v2009 = vmul.f32 %v1945, 0.5
  %v2010 = vmul.f32 %v1946, 0.5
  %v2011 = vmul.f32 %v1947, 0.5
  %v2012 = vmul.f32 %v1948, 0.5
  %v2013 = vmul.f32 %v1949, 0.5
  %v2014 = vmul.f32 %v1950, 0.5
  %v2015 = vmul.f32 %v1951, 0.5
  %v2016 = vmul.f32 %v1952, 0.5
  %v2017 = vmul.f32 %v1953, 0.5
  %v2018 = vmul.f32 %v1954, 0.5
  %v2019 = vmul.f32 %v1955, 0.5
  %v2020 = vmul.f32 %v1956, 0.5
  %v2021 = vmul.f32 %v1957, 0.5
  %v2022 = vmul.f32 %v1958, 0.5
  %v2023 = vmul.f32 %v1959, 0.5
  %v2024 = vmul.f32 %v1960, 0.5
  %v2025 = vmul.f32 %v1961, 0.5
  %v2026 = vmul.f32 %v1962, 0.5
  %v2027 = vmul.f32 %v1963, 0.5
  %v2028 = vmul.f32 %v1964, 0.5
  %v2029 = vmul.f32 %v1965, 0.5
  %v2030 = vmul.f32 %v1902, 0.044715
  %v2031 = vmul.f32 %v1903, 0.044715
  %v2032 = vmul.f32 %v1904, 0.044715
  %v2033 = vmul.f32 %v1905, 0.044715
  %v2034 = vmul.f32 %v1906, 0.044715
  %v2035 = vmul.f32 %v1907, 0.044715
  %v2036 = vmul.f32 %v1908, 0.044715
  %v2037 = vmul.f32 %v1909, 0.044715
  %v2038 = vmul.f32 %v1910, 0.044715
  %v2039 = vmul.f32 %v1911, 0.044715
  %v2040 = vmul.f32 %v1912, 0.044715
  %v2041 = vmul.f32 %v1913, 0.044715
  %v2042 = vmul.f32 %v1914, 0.044715
  %v2043 = vmul.f32 %v1915, 0.044715
  %v2044 = vmul.f32 %v1916, 0.044715
  %v2045 = vmul.f32 %v1917, 0.044715
  %v2046 = vmul.f32 %v1918, 0.044715
  %v2047 = vmul.f32 %v1919, 0.044715
  %v2048 = vmul.f32 %v1920, 0.044715
  %v2049 = vmul.f32 %v1921, 0.044715
  %v2050 = vmul.f32 %v1922, 0.044715
  %v2051 = vmul.f32 %v1923, 0.044715
  %v2052 = vmul.f32 %v1924, 0.044715
  %v2053 = vmul.f32 %v1925, 0.044715
  %v2054 = vmul.f32 %v1926, 0.044715
  %v2055 = vmul.f32 %v1927, 0.044715
  %v2056 = vmul.f32 %v1928, 0.044715
  %v2057 = vmul.f32 %v1929, 0.044715
  %v2058 = vmul.f32 %v1930, 0.044715
  %v2059 = vmul.f32 %v1931, 0.044715
  %v2060 = vmul.f32 %v1932, 0.044715
  %v2061 = vmul.f32 %v1933, 0.044715
  %v2062 = vmul.f32 %v1934, 0.044715
  %v2063 = vmul.f32 %v1935, 0.044715
  %v2064 = vmul.f32 %v1936, 0.044715
  %v2065 = vmul.f32 %v1937, 0.044715
  %v2066 = vmul.f32 %v1938, 0.044715
  %v2067 = vmul.f32 %v1939, 0.044715
  %v2068 = vmul.f32 %v1940, 0.044715
  %v2069 = vmul.f32 %v1941, 0.044715
  %v2070 = vmul.f32 %v1942, 0.044715
  %v2071 = vmul.f32 %v1943, 0.044715
  %v2072 = vmul.f32 %v1944, 0.044715
  %v2073 = vmul.f32 %v1945, 0.044715
  %v2074 = vmul.f32 %v1946, 0.044715
  %v2075 = vmul.f32 %v1947, 0.044715
  %v2076 = vmul.f32 %v1948, 0.044715
  %v2077 = vmul.f32 %v1949, 0.044715
  %v2078 = vmul.f32 %v1950, 0.044715
  %v2079 = vmul.f32 %v1951, 0.044715
  %v2080 = vmul.f32 %v1952, 0.044715
  %v2081 = vmul.f32 %v1953, 0.044715
  %v2082 = vmul.f32 %v1954, 0.044715
  %v2083 = vmul.f32 %v1955, 0.044715
  %v2084 = vmul.f32 %v1956, 0.044715
  %v2085 = vmul.f32 %v1957, 0.044715
  %v2086 = vmul.f32 %v1958, 0.044715
  %v2087 = vmul.f32 %v1959, 0.044715
  %v2088 = vmul.f32 %v1960, 0.044715
  %v2089 = vmul.f32 %v1961, 0.044715
  %v2090 = vmul.f32 %v1962, 0.044715
  %v2091 = vmul.f32 %v1963, 0.044715
  %v2092 = vmul.f32 %v1964, 0.044715
  %v2093 = vmul.f32 %v1965, 0.044715
  %v2094 = vmul.f32 %v2030, %v1902
  %v2095 = vmul.f32 %v2031, %v1903
  %v2096 = vmul.f32 %v2032, %v1904
  %v2097 = vmul.f32 %v2033, %v1905
  %v2098 = vmul.f32 %v2034, %v1906
  %v2099 = vmul.f32 %v2035, %v1907
  %v2100 = vmul.f32 %v2036, %v1908
  %v2101 = vmul.f32 %v2037, %v1909
  %v2102 = vmul.f32 %v2038, %v1910
  %v2103 = vmul.f32 %v2039, %v1911
  %v2104 = vmul.f32 %v2040, %v1912
  %v2105 = vmul.f32 %v2041, %v1913
  %v2106 = vmul.f32 %v2042, %v1914
  %v2107 = vmul.f32 %v2043, %v1915
  %v2108 = vmul.f32 %v2044, %v1916
  %v2109 = vmul.f32 %v2045, %v1917
  %v2110 = vmul.f32 %v2046, %v1918
  %v2111 = vmul.f32 %v2047, %v1919
  %v2112 = vmul.f32 %v2048, %v1920
  %v2113 = vmul.f32 %v2049, %v1921
  %v2114 = vmul.f32 %v2050, %v1922
  %v2115 = vmul.f32 %v2051, %v1923
  %v2116 = vmul.f32 %v2052, %v1924
  %v2117 = vmul.f32 %v2053, %v1925
  %v2118 = vmul.f32 %v2054, %v1926
  %v2119 = vmul.f32 %v2055, %v1927
  %v2120 = vmul.f32 %v2056, %v1928
  %v2121 = vmul.f32 %v2057, %v1929
  %v2122 = vmul.f32 %v2058, %v1930
  %v2123 = vmul.f32 %v2059, %v1931
  %v2124 = vmul.f32 %v2060, %v1932
  %v2125 = vmul.f32 %v2061, %v1933
  %v2126 = vmul.f32 %v2062, %v1934
  %v2127 = vmul.f32 %v2063, %v1935
  %v2128 = vmul.f32 %v2064, %v1936
  %v2129 = vmul.f32 %v2065, %v1937
  %v2130 = vmul.f32 %v2066, %v1938
  %v2131 = vmul.f32 %v2067, %v1939
  %v2132 = vmul.f32 %v2068, %v1940
  %v2133 = vmul.f32 %v2069, %v1941
  %v2134 = vmul.f32 %v2070, %v1942
  %v2135 = vmul.f32 %v2071, %v1943
  %v2136 = vmul.f32 %v2072, %v1944
  %v2137 = vmul.f32 %v2073, %v1945
  %v2138 = vmul.f32 %v2074, %v1946
  %v2139 = vmul.f32 %v2075, %v1947
  %v2140 = vmul.f32 %v2076, %v1948
  %v2141 = vmul.f32 %v2077, %v1949
  %v2142 = vmul.f32 %v2078, %v1950
  %v2143 = vmul.f32 %v2079, %v1951
  %v2144 = vmul.f32 %v2080, %v1952
  %v2145 = vmul.f32 %v2081, %v1953
  %v2146 = vmul.f32 %v2082, %v1954
  %v2147 = vmul.f32 %v2083, %v1955
  %v2148 = vmul.f32 %v2084, %v1956
  %v2149 = vmul.f32 %v2085, %v1957
  %v2150 = vmul.f32 %v2086, %v1958
  %v2151 = vmul.f32 %v2087, %v1959
  %v2152 = vmul.f32 %v2088, %v1960
  %v2153 = vmul.f32 %v2089, %v1961
  %v2154 = vmul.f32 %v2090, %v1962
  %v2155 = vmul.f32 %v2091, %v1963
  %v2156 = vmul.f32 %v2092, %v1964
  %v2157 = vmul.f32 %v2093, %v1965
  %v2158 = vmul.f32 %v2094, %v1902
  %v2159 = vmul.f32 %v2095, %v1903
  %v2160 = vmul.f32 %v2096, %v1904
  %v2161 = vmul.f32 %v2097, %v1905
  %v2162 = vmul.f32 %v2098, %v1906
  %v2163 = vmul.f32 %v2099, %v1907
  %v2164 = vmul.f32 %v2100, %v1908
  %v2165 = vmul.f32 %v2101, %v1909
  %v2166 = vmul.f32 %v2102, %v1910
  %v2167 = vmul.f32 %v2103, %v1911
  %v2168 = vmul.f32 %v2104, %v1912
  %v2169 = vmul.f32 %v2105, %v1913
  %v2170 = vmul.f32 %v2106, %v1914
  %v2171 = vmul.f32 %v2107, %v1915
  %v2172 = vmul.f32 %v2108, %v1916
  %v2173 = vmul.f32 %v2109, %v1917
  %v2174 = vmul.f32 %v2110, %v1918
  %v2175 = vmul.f32 %v2111, %v1919
  %v2176 = vmul.f32 %v2112, %v1920
  %v2177 = vmul.f32 %v2113, %v1921
  %v2178 = vmul.f32 %v2114, %v1922
  %v2179 = vmul.f32 %v2115, %v1923
  %v2180 = vmul.f32 %v2116, %v1924
  %v2181 = vmul.f32 %v2117, %v1925
  %v2182 = vmul.f32 %v2118, %v1926
  %v2183 = vmul.f32 %v2119, %v1927
  %v2184 = vmul.f32 %v2120, %v1928
  %v2185 = vmul.f32 %v2121, %v1929
  %v2186 = vmul.f32 %v2122, %v1930
  %v2187 = vmul.f32 %v2123, %v1931
  %v2188 = vmul.f32 %v2124, %v1932
  %v2189 = vmul.f32 %v2125, %v1933
  %v2190 = vmul.f32 %v2126, %v1934
  %v2191 = vmul.f32 %v2127, %v1935
  %v2192 = vmul.f32 %v2128, %v1936
  %v2193 = vmul.f32 %v2129, %v1937
  %v2194 = vmul.f32 %v2130, %v1938
  %v2195 = vmul.f32 %v2131, %v1939
  %v2196 = vmul.f32 %v2132, %v1940
  %v2197 = vmul.f32 %v2133, %v1941
  %v2198 = vmul.f32 %v2134, %v1942
  %v2199 = vmul.f32 %v2135, %v1943
  %v2200 = vmul.f32 %v2136, %v1944
  %v2201 = vmul.f32 %v2137, %v1945
  %v2202 = vmul.f32 %v2138, %v1946
  %v2203 = vmul.f32 %v2139, %v1947
  %v2204 = vmul.f32 %v2140, %v1948
  %v2205 = vmul.f32 %v2141, %v1949
  %v2206 = vmul.f32 %v2142, %v1950
  %v2207 = vmul.f32 %v2143, %v1951
  %v2208 = vmul.f32 %v2144, %v1952
  %v2209 = vmul.f32 %v2145, %v1953
  %v2210 = vmul.f32 %v2146, %v1954
  %v2211 = vmul.f32 %v2147, %v1955
  %v2212 = vmul.f32 %v2148, %v1956
  %v2213 = vmul.f32 %v2149, %v1957
  %v2214 = vmul.f32 %v2150, %v1958
  %v2215 = vmul.f32 %v2151, %v1959
  %v2216 = vmul.f32 %v2152, %v1960
  %v2217 = vmul.f32 %v2153, %v1961
  %v2218 = vmul.f32 %v2154, %v1962
  %v2219 = vmul.f32 %v2155, %v1963
  %v2220 = vmul.f32 %v2156, %v1964
  %v2221 = vmul.f32 %v2157, %v1965
  %v2222 = vadd.f32 %v1902, %v2158
  %v2223 = vadd.f32 %v1903, %v2159
  %v2224 = vadd.f32 %v1904, %v2160
  %v2225 = vadd.f32 %v1905, %v2161
  %v2226 = vadd.f32 %v1906, %v2162
  %v2227 = vadd.f32 %v1907, %v2163
  %v2228 = vadd.f32 %v1908, %v2164
  %v2229 = vadd.f32 %v1909, %v2165
  %v2230 = vadd.f32 %v1910, %v2166
  %v2231 = vadd.f32 %v1911, %v2167
  %v2232 = vadd.f32 %v1912, %v2168
  %v2233 = vadd.f32 %v1913, %v2169
  %v2234 = vadd.f32 %v1914, %v2170
  %v2235 = vadd.f32 %v1915, %v2171
  %v2236 = vadd.f32 %v1916, %v2172
  %v2237 = vadd.f32 %v1917, %v2173
  %v2238 = vadd.f32 %v1918, %v2174
  %v2239 = vadd.f32 %v1919, %v2175
  %v2240 = vadd.f32 %v1920, %v2176
  %v2241 = vadd.f32 %v1921, %v2177
  %v2242 = vadd.f32 %v1922, %v2178
  %v2243 = vadd.f32 %v1923, %v2179
  %v2244 = vadd.f32 %v1924, %v2180
  %v2245 = vadd.f32 %v1925, %v2181
  %v2246 = vadd.f32 %v1926, %v2182
  %v2247 = vadd.f32 %v1927, %v2183
  %v2248 = vadd.f32 %v1928, %v2184
  %v2249 = vadd.f32 %v1929, %v2185
  %v2250 = vadd.f32 %v1930, %v2186
  %v2251 = vadd.f32 %v1931, %v2187
  %v2252 = vadd.f32 %v1932, %v2188
  %v2253 = vadd.f32 %v1933, %v2189
  %v2254 = vadd.f32 %v1934, %v2190
  %v2255 = vadd.f32 %v1935, %v2191
  %v2256 = vadd.f32 %v1936, %v2192
  %v2257 = vadd.f32 %v1937, %v2193
  %v2258 = vadd.f32 %v1938, %v2194
  %v2259 = vadd.f32 %v1939, %v2195
  %v2260 = vadd.f32 %v1940, %v2196
  %v2261 = vadd.f32 %v1941, %v2197
  %v2262 = vadd.f32 %v1942, %v2198
  %v2263 = vadd.f32 %v1943, %v2199
  %v2264 = vadd.f32 %v1944, %v2200
  %v2265 = vadd.f32 %v1945, %v2201
  %v2266 = vadd.f32 %v1946, %v2202
  %v2267 = vadd.f32 %v1947, %v2203
  %v2268 = vadd.f32 %v1948, %v2204
  %v2269 = vadd.f32 %v1949, %v2205
  %v2270 = vadd.f32 %v1950, %v2206
  %v2271 = vadd.f32 %v1951, %v2207
  %v2272 = vadd.f32 %v1952, %v2208
  %v2273 = vadd.f32 %v1953, %v2209
  %v2274 = vadd.f32 %v1954, %v2210
  %v2275 = vadd.f32 %v1955, %v2211
  %v2276 = vadd.f32 %v1956, %v2212
  %v2277 = vadd.f32 %v1957, %v2213
  %v2278 = vadd.f32 %v1958, %v2214
  %v2279 = vadd.f32 %v1959, %v2215
  %v2280 = vadd.f32 %v1960, %v2216
  %v2281 = vadd.f32 %v1961, %v2217
  %v2282 = vadd.f32 %v1962, %v2218
  %v2283 = vadd.f32 %v1963, %v2219
  %v2284 = vadd.f32 %v1964, %v2220
  %v2285 = vadd.f32 %v1965, %v2221
  %v2286 = vmul.f32 %v2222, 0.7978846
  %v2287 = vmul.f32 %v2223, 0.7978846
  %v2288 = vmul.f32 %v2224, 0.7978846
  %v2289 = vmul.f32 %v2225, 0.7978846
  %v2290 = vmul.f32 %v2226, 0.7978846
  %v2291 = vmul.f32 %v2227, 0.7978846
  %v2292 = vmul.f32 %v2228, 0.7978846
  %v2293 = vmul.f32 %v2229, 0.7978846
  %v2294 = vmul.f32 %v2230, 0.7978846
  %v2295 = vmul.f32 %v2231, 0.7978846
  %v2296 = vmul.f32 %v2232, 0.7978846
  %v2297 = vmul.f32 %v2233, 0.7978846
  %v2298 = vmul.f32 %v2234, 0.7978846
  %v2299 = vmul.f32 %v2235, 0.7978846
  %v2300 = vmul.f32 %v2236, 0.7978846
  %v2301 = vmul.f32 %v2237, 0.7978846
  %v2302 = vmul.f32 %v2238, 0.7978846
  %v2303 = vmul.f32 %v2239, 0.7978846
  %v2304 = vmul.f32 %v2240, 0.7978846
  %v2305 = vmul.f32 %v2241, 0.7978846
  %v2306 = vmul.f32 %v2242, 0.7978846
  %v2307 = vmul.f32 %v2243, 0.7978846
  %v2308 = vmul.f32 %v2244, 0.7978846
  %v2309 = vmul.f32 %v2245, 0.7978846
  %v2310 = vmul.f32 %v2246, 0.7978846
  %v2311 = vmul.f32 %v2247, 0.7978846
  %v2312 = vmul.f32 %v2248, 0.7978846
  %v2313 = vmul.f32 %v2249, 0.7978846
  %v2314 = vmul.f32 %v2250, 0.7978846
  %v2315 = vmul.f32 %v2251, 0.7978846
  %v2316 = vmul.f32 %v2252, 0.7978846
  %v2317 = vmul.f32 %v2253, 0.7978846
  %v2318 = vmul.f32 %v2254, 0.7978846
  %v2319 = vmul.f32 %v2255, 0.7978846
  %v2320 = vmul.f32 %v2256, 0.7978846
  %v2321 = vmul.f32 %v2257, 0.7978846
  %v2322 = vmul.f32 %v2258, 0.7978846
  %v2323 = vmul.f32 %v2259, 0.7978846
  %v2324 = vmul.f32 %v2260, 0.7978846
  %v2325 = vmul.f32 %v2261, 0.7978846
  %v2326 = vmul.f32 %v2262, 0.7978846
  %v2327 = vmul.f32 %v2263, 0.7978846
  %v2328 = vmul.f32 %v2264, 0.7978846
  %v2329 = vmul.f32 %v2265, 0.7978846
  %v2330 = vmul.f32 %v2266, 0.7978846
  %v2331 = vmul.f32 %v2267, 0.7978846
  %v2332 = vmul.f32 %v2268, 0.7978846
  %v2333 = vmul.f32 %v2269, 0.7978846
  %v2334 = vmul.f32 %v2270, 0.7978846
  %v2335 = vmul.f32 %v2271, 0.7978846
  %v2336 = vmul.f32 %v2272, 0.7978846
  %v2337 = vmul.f32 %v2273, 0.7978846
  %v2338 = vmul.f32 %v2274, 0.7978846
  %v2339 = vmul.f32 %v2275, 0.7978846
  %v2340 = vmul.f32 %v2276, 0.7978846
  %v2341 = vmul.f32 %v2277, 0.7978846
  %v2342 = vmul.f32 %v2278, 0.7978846
  %v2343 = vmul.f32 %v2279, 0.7978846
  %v2344 = vmul.f32 %v2280, 0.7978846
  %v2345 = vmul.f32 %v2281, 0.7978846
  %v2346 = vmul.f32 %v2282, 0.7978846
  %v2347 = vmul.f32 %v2283, 0.7978846
  %v2348 = vmul.f32 %v2284, 0.7978846
  %v2349 = vmul.f32 %v2285, 0.7978846
  %v2350 = vtanh.pop %v2286
  %v2351 = vtanh.pop %v2287
  %v2352 = vtanh.pop %v2288
  %v2353 = vtanh.pop %v2289
  %v2354 = vtanh.pop %v2290
  %v2355 = vtanh.pop %v2291
  %v2356 = vtanh.pop %v2292
  %v2357 = vtanh.pop %v2293
  %v2358 = vtanh.pop %v2294
  %v2359 = vtanh.pop %v2295
  %v2360 = vtanh.pop %v2296
  %v2361 = vtanh.pop %v2297
  %v2362 = vtanh.pop %v2298
  %v2363 = vtanh.pop %v2299
  %v2364 = vtanh.pop %v2300
  %v2365 = vtanh.pop %v2301
  %v2366 = vtanh.pop %v2302
  %v2367 = vtanh.pop %v2303
  %v2368 = vtanh.pop %v2304
  %v2369 = vtanh.pop %v2305
  %v2370 = vtanh.pop %v2306
  %v2371 = vtanh.pop %v2307
  %v2372 = vtanh.pop %v2308
  %v2373 = vtanh.pop %v2309
  %v2374 = vtanh.pop %v2310
  %v2375 = vtanh.pop %v2311
  %v2376 = vtanh.pop %v2312
  %v2377 = vtanh.pop %v2313
  %v2378 = vtanh.pop %v2314
  %v2379 = vtanh.pop %v2315
  %v2380 = vtanh.pop %v2316
  %v2381 = vtanh.pop %v2317
  %v2382 = vtanh.pop %v2318
  %v2383 = vtanh.pop %v2319
  %v2384 = vtanh.pop %v2320
  %v2385 = vtanh.pop %v2321
  %v2386 = vtanh.pop %v2322
  %v2387 = vtanh.pop %v2323
  %v2388 = vtanh.pop %v2324
  %v2389 = vtanh.pop %v2325
  %v2390 = vtanh.pop %v2326
  %v2391 = vtanh.pop %v2327
  %v2392 = vtanh.pop %v2328
  %v2393 = vtanh.pop %v2329
  %v2394 = vtanh.pop %v2330
  %v2395 = vtanh.pop %v2331
  %v2396 = vtanh.pop %v2332
  %v2397 = vtanh.pop %v2333
  %v2398 = vtanh.pop %v2334
  %v2399 = vtanh.pop %v2335
  %v2400 = vtanh.pop %v2336
  %v2401 = vtanh.pop %v2337
  %v2402 = vtanh.pop %v2338
  %v2403 = vtanh.pop %v2339
  %v2404 = vtanh.pop %v2340
  %v2405 = vtanh.pop %v2341
  %v2406 = vtanh.pop %v2342
  %v2407 = vtanh.pop %v2343
  %v2408 = vtanh.pop %v2344
  %v2409 = vtanh.pop %v2345
  %v2410 = vtanh.pop %v2346
  %v2411 = vtanh.pop %v2347
  %v2412 = vtanh.pop %v2348
  %v2413 = vtanh.pop %v2349
  %v2414 = vadd.f32 %v2350, 1.0
  %v2415 = vadd.f32 %v2351, 1.0
  %v2416 = vadd.f32 %v2352, 1.0
  %v2417 = vadd.f32 %v2353, 1.0
  %v2418 = vadd.f32 %v2354, 1.0
  %v2419 = vadd.f32 %v2355, 1.0
  %v2420 = vadd.f32 %v2356, 1.0
  %v2421 = vadd.f32 %v2357, 1.0
  %v2422 = vadd.f32 %v2358, 1.0
  %v2423 = vadd.f32 %v2359, 1.0
  %v2424 = vadd.f32 %v2360, 1.0
  %v2425 = vadd.f32 %v2361, 1.0
  %v2426 = vadd.f32 %v2362, 1.0
  %v2427 = vadd.f32 %v2363, 1.0
  %v2428 = vadd.f32 %v2364, 1.0
  %v2429 = vadd.f32 %v2365, 1.0
  %v2430 = vadd.f32 %v2366, 1.0
  %v2431 = vadd.f32 %v2367, 1.0
  %v2432 = vadd.f32 %v2368, 1.0
  %v2433 = vadd.f32 %v2369, 1.0
  %v2434 = vadd.f32 %v2370, 1.0
  %v2435 = vadd.f32 %v2371, 1.0
  %v2436 = vadd.f32 %v2372, 1.0
  %v2437 = vadd.f32 %v2373, 1.0
  %v2438 = vadd.f32 %v2374, 1.0
  %v2439 = vadd.f32 %v2375, 1.0
  %v2440 = vadd.f32 %v2376, 1.0
  %v2441 = vadd.f32 %v2377, 1.0
  %v2442 = vadd.f32 %v2378, 1.0
  %v2443 = vadd.f32 %v2379, 1.0
  %v2444 = vadd.f32 %v2380, 1.0
  %v2445 = vadd.f32 %v2381, 1.0
  %v2446 = vadd.f32 %v2382, 1.0
  %v2447 = vadd.f32 %v2383, 1.0
  %v2448 = vadd.f32 %v2384, 1.0
  %v2449 = vadd.f32 %v2385, 1.0
  %v2450 = vadd.f32 %v2386, 1.0
  %v2451 = vadd.f32 %v2387, 1.0
  %v2452 = vadd.f32 %v2388, 1.0
  %v2453 = vadd.f32 %v2389, 1.0
  %v2454 = vadd.f32 %v2390, 1.0
  %v2455 = vadd.f32 %v2391, 1.0
  %v2456 = vadd.f32 %v2392, 1.0
  %v2457 = vadd.f32 %v2393, 1.0
  %v2458 = vadd.f32 %v2394, 1.0
  %v2459 = vadd.f32 %v2395, 1.0
  %v2460 = vadd.f32 %v2396, 1.0
  %v2461 = vadd.f32 %v2397, 1.0
  %v2462 = vadd.f32 %v2398, 1.0
  %v2463 = vadd.f32 %v2399, 1.0
  %v2464 = vadd.f32 %v2400, 1.0
  %v2465 = vadd.f32 %v2401, 1.0
  %v2466 = vadd.f32 %v2402, 1.0
  %v2467 = vadd.f32 %v2403, 1.0
  %v2468 = vadd.f32 %v2404, 1.0
  %v2469 = vadd.f32 %v2405, 1.0
  %v2470 = vadd.f32 %v2406, 1.0
  %v2471 = vadd.f32 %v2407, 1.0
  %v2472 = vadd.f32 %v2408, 1.0
  %v2473 = vadd.f32 %v2409, 1.0
  %v2474 = vadd.f32 %v2410, 1.0
  %v2475 = vadd.f32 %v2411, 1.0
  %v2476 = vadd.f32 %v2412, 1.0
  %v2477 = vadd.f32 %v2413, 1.0
  %v2478 = vmul.f32 %v1966, %v2414
  %v2479 = vmul.f32 %v1967, %v2415
  %v2480 = vmul.f32 %v1968, %v2416
  %v2481 = vmul.f32 %v1969, %v2417
  %v2482 = vmul.f32 %v1970, %v2418
  %v2483 = vmul.f32 %v1971, %v2419
  %v2484 = vmul.f32 %v1972, %v2420
  %v2485 = vmul.f32 %v1973, %v2421
  %v2486 = vmul.f32 %v1974, %v2422
  %v2487 = vmul.f32 %v1975, %v2423
  %v2488 = vmul.f32 %v1976, %v2424
  %v2489 = vmul.f32 %v1977, %v2425
  %v2490 = vmul.f32 %v1978, %v2426
  %v2491 = vmul.f32 %v1979, %v2427
  %v2492 = vmul.f32 %v1980, %v2428
  %v2493 = vmul.f32 %v1981, %v2429
  %v2494 = vmul.f32 %v1982, %v2430
  %v2495 = vmul.f32 %v1983, %v2431
  %v2496 = vmul.f32 %v1984, %v2432
  %v2497 = vmul.f32 %v1985, %v2433
  %v2498 = vmul.f32 %v1986, %v2434
  %v2499 = vmul.f32 %v1987, %v2435
  %v2500 = vmul.f32 %v1988, %v2436
  %v2501 = vmul.f32 %v1989, %v2437
  %v2502 = vmul.f32 %v1990, %v2438
  %v2503 = vmul.f32 %v1991, %v2439
  %v2504 = vmul.f32 %v1992, %v2440
  %v2505 = vmul.f32 %v1993, %v2441
  %v2506 = vmul.f32 %v1994, %v2442
  %v2507 = vmul.f32 %v1995, %v2443
  %v2508 = vmul.f32 %v1996, %v2444
  %v2509 = vmul.f32 %v1997, %v2445
  %v2510 = vmul.f32 %v1998, %v2446
  %v2511 = vmul.f32 %v1999, %v2447
  %v2512 = vmul.f32 %v2000, %v2448
  %v2513 = vmul.f32 %v2001, %v2449
  %v2514 = vmul.f32 %v2002, %v2450
  %v2515 = vmul.f32 %v2003, %v2451
  %v2516 = vmul.f32 %v2004, %v2452
  %v2517 = vmul.f32 %v2005, %v2453
  %v2518 = vmul.f32 %v2006, %v2454
  %v2519 = vmul.f32 %v2007, %v2455
  %v2520 = vmul.f32 %v2008, %v2456
  %v2521 = vmul.f32 %v2009, %v2457
  %v2522 = vmul.f32 %v2010, %v2458
  %v2523 = vmul.f32 %v2011, %v2459
  %v2524 = vmul.f32 %v2012, %v2460
  %v2525 = vmul.f32 %v2013, %v2461
  %v2526 = vmul.f32 %v2014, %v2462
  %v2527 = vmul.f32 %v2015, %v2463
  %v2528 = vmul.f32 %v2016, %v2464
  %v2529 = vmul.f32 %v2017, %v2465
  %v2530 = vmul.f32 %v2018, %v2466
  %v2531 = vmul.f32 %v2019, %v2467
  %v2532 = vmul.f32 %v2020, %v2468
  %v2533 = vmul.f32 %v2021, %v2469
  %v2534 = vmul.f32 %v2022, %v2470
  %v2535 = vmul.f32 %v2023, %v2471
  %v2536 = vmul.f32 %v2024, %v2472
  %v2537 = vmul.f32 %v2025, %v2473
  %v2538 = vmul.f32 %v2026, %v2474
  %v2539 = vmul.f32 %v2027, %v2475
  %v2540 = vmul.f32 %v2028, %v2476
  %v2541 = vmul.f32 %v2029, %v2477
  %v2542 = vld [vmem:[%s7] sm:$0xf]
  %v2543 = vld [vmem:[%s7 + $0x4] sm:$0xf]
  %v2544 = vpack.c.bf16 %v2479, %v2478
  %v2545 = vpack.c.bf16 %v2481, %v2480
  %v2546 = vpack.c.bf16 %v2483, %v2482
  %v2547 = vpack.c.bf16 %v2485, %v2484
  %v2548 = vpack.c.bf16 %v2487, %v2486
  %v2549 = vpack.c.bf16 %v2489, %v2488
  %v2550 = vpack.c.bf16 %v2491, %v2490
  %v2551 = vpack.c.bf16 %v2493, %v2492
  %v2552 = vpack.c.bf16 %v2495, %v2494
  %v2553 = vpack.c.bf16 %v2497, %v2496
  %v2554 = vpack.c.bf16 %v2499, %v2498
  %v2555 = vpack.c.bf16 %v2501, %v2500
  %v2556 = vpack.c.bf16 %v2503, %v2502
  %v2557 = vpack.c.bf16 %v2505, %v2504
  %v2558 = vpack.c.bf16 %v2507, %v2506
  %v2559 = vpack.c.bf16 %v2509, %v2508
  %v2560 = vpack.c.bf16 %v2511, %v2510
  %v2561 = vpack.c.bf16 %v2513, %v2512
  %v2562 = vpack.c.bf16 %v2515, %v2514
  %v2563 = vpack.c.bf16 %v2517, %v2516
  %v2564 = vpack.c.bf16 %v2519, %v2518
  %v2565 = vpack.c.bf16 %v2521, %v2520
  %v2566 = vpack.c.bf16 %v2523, %v2522
  %v2567 = vpack.c.bf16 %v2525, %v2524
  %v2568 = vpack.c.bf16 %v2527, %v2526
  %v2569 = vpack.c.bf16 %v2529, %v2528
  %v2570 = vpack.c.bf16 %v2531, %v2530
  %v2571 = vpack.c.bf16 %v2533, %v2532
  %v2572 = vpack.c.bf16 %v2535, %v2534
  %v2573 = vpack.c.bf16 %v2537, %v2536
  %v2574 = vpack.c.bf16 %v2539, %v2538
  %v2575 = vpack.c.bf16 %v2541, %v2540
  %v2578 = vunpack.c.l.b16 %v2542
  %v2579 = vunpack.c.l.b16 %v2543
  %v2580 = vpack.c.b16 %v2579, %v2578
  %vm2582 = vcmask 130048
  %v2584 = vsel %vm2582, %v2544, 0
  %v2587 = vsel %vm2582, %v2545, 0
  %v2590 = vsel %vm2582, %v2546, 0
  %v2593 = vsel %vm2582, %v2547, 0
  %v2596 = vsel %vm2582, %v2548, 0
  %v2599 = vsel %vm2582, %v2549, 0
  %v2602 = vsel %vm2582, %v2550, 0
  %v2605 = vsel %vm2582, %v2551, 0
  %v2608 = vsel %vm2582, %v2552, 0
  %v2611 = vsel %vm2582, %v2553, 0
  %v2614 = vsel %vm2582, %v2554, 0
  %v2617 = vsel %vm2582, %v2555, 0
  %v2620 = vsel %vm2582, %v2556, 0
  %v2623 = vsel %vm2582, %v2557, 0
  %v2626 = vsel %vm2582, %v2558, 0
  %v2629 = vsel %vm2582, %v2559, 0
  %v2632 = vsel %vm2582, %v2560, 0
  %v2635 = vsel %vm2582, %v2561, 0
  %v2638 = vsel %vm2582, %v2562, 0
  %v2641 = vsel %vm2582, %v2563, 0
  %v2644 = vsel %vm2582, %v2564, 0
  %v2647 = vsel %vm2582, %v2565, 0
  %v2650 = vsel %vm2582, %v2566, 0
  %v2653 = vsel %vm2582, %v2567, 0
  %v2656 = vsel %vm2582, %v2568, 0
  %v2659 = vsel %vm2582, %v2569, 0
  %v2662 = vsel %vm2582, %v2570, 0
  %v2665 = vsel %vm2582, %v2571, 0
  %v2668 = vsel %vm2582, %v2572, 0
  %v2671 = vsel %vm2582, %v2573, 0
  %v2674 = vsel %vm2582, %v2574, 0
  %v2677 = vsel %vm2582, %v2575, 0
  %2679 = vmatprep.subr.bf16.mxu0 0
  %2680 = vmatpush1.bf16.msra.mxu0 %v2580
  %2681 = vmatprep.subr.bf16.mxu0 0
  %2682 = vmatpush1.bf16.msra.mxu0 0
  %2683 = vmatprep.subr.bf16.mxu0 0
  %2684 = vmatpush1.bf16.msra.mxu0 0
  %2685 = vmatprep.subr.bf16.mxu0 0
  %2686 = vmatpush1.bf16.msra.mxu0 0
  %2687 = vmatprep.subr.bf16.mxu0 0
  %2688 = vmatpush1.bf16.msra.mxu0 0
  %2689 = vmatprep.subr.bf16.mxu0 0
  %2690 = vmatpush1.bf16.msra.mxu0 0
  %2691 = vmatprep.subr.bf16.mxu0 0
  %2692 = vmatpush1.bf16.msra.mxu0 0
  %2693 = vmatprep.subr.bf16.mxu0 0
  %2694 = vmatpush1.bf16.msra.mxu0 0
  %2695 = vmatprep.subr.bf16.mxu0 0
  %2696 = vmatpush1.bf16.msra.mxu0 0
  %2697 = vmatprep.subr.bf16.mxu0 0
  %2698 = vmatpush1.bf16.msra.mxu0 0
  %2699 = vmatprep.subr.bf16.mxu0 0
  %2700 = vmatpush1.bf16.msra.mxu0 0
  %2701 = vmatprep.subr.bf16.mxu0 0
  %2702 = vmatpush1.bf16.msra.mxu0 0
  %2703 = vmatprep.subr.bf16.mxu0 0
  %2704 = vmatpush1.bf16.msra.mxu0 0
  %2705 = vmatprep.subr.bf16.mxu0 0
  %2706 = vmatpush1.bf16.msra.mxu0 0
  %2707 = vmatprep.subr.bf16.mxu0 0
  %2708 = vmatpush1.bf16.msra.mxu0 0
  %2709 = vmatprep.subr.bf16.mxu0 0
  %2710 = vmatpush1.bf16.msra.mxu0 0
  %2711 = vmatprep.mubr.bf16.mxu0 0
  %2712 = vmatmul.mubr.bf16.gmra.mrb[0].mxu0 %v2584
  %v2713 = vpop.f32.mrb[0].mxu0
  %v2714 = vadd.f32 0.0, %v2713
  %v2715 = vpop.f32.mrb[0].mxu0
  %v2716 = vpop.f32.mrb[0].mxu0
  %v2717 = vadd.f32 0.0, %v2716
  %v2718 = vpop.f32.mrb[0].mxu0
  %2719 = vmatprep.mubr.bf16.mxu0 0
  %2720 = vmatmul.mubr.bf16.gmra.mrb[0].mxu0 %v2587
  %v2721 = vpop.f32.mrb[0].mxu0
  %v2722 = vadd.f32 0.0, %v2721
  %v2723 = vpop.f32.mrb[0].mxu0
  %v2724 = vpop.f32.mrb[0].mxu0
  %v2725 = vadd.f32 0.0, %v2724
  %v2726 = vpop.f32.mrb[0].mxu0
  %2727 = vmatprep.mubr.bf16.mxu0 0
  %2728 = vmatmul.mubr.bf16.gmra.mrb[0].mxu0 %v2590
  %v2729 = vpop.f32.mrb[0].mxu0
  %v2730 = vadd.f32 0.0, %v2729
  %v2731 = vpop.f32.mrb[0].mxu0
  %v2732 = vpop.f32.mrb[0].mxu0
  %v2733 = vadd.f32 0.0, %v2732
  %v2734 = vpop.f32.mrb[0].mxu0
  %2735 = vmatprep.mubr.bf16.mxu0 0
  %2736 = vmatmul.mubr.bf16.gmra.mrb[0].mxu0 %v2593
  %v2737 = vpop.f32.mrb[0].mxu0
  %v2738 = vadd.f32 0.0, %v2737
  %v2739 = vpop.f32.mrb[0].mxu0
  %v2740 = vpop.f32.mrb[0].mxu0
  %v2741 = vadd.f32 0.0, %v2740
  %v2742 = vpop.f32.mrb[0].mxu0
  %2743 = vmatprep.mubr.bf16.mxu0 0
  %2744 = vmatmul.mubr.bf16.gmra.mrb[0].mxu0 %v2596
  %v2745 = vpop.f32.mrb[0].mxu0
  %v2746 = vadd.f32 0.0, %v2745
  %v2747 = vpop.f32.mrb[0].mxu0
  %v2748 = vpop.f32.mrb[0].mxu0
  %v2749 = vadd.f32 0.0, %v2748
  %v2750 = vpop.f32.mrb[0].mxu0
  %2751 = vmatprep.mubr.bf16.mxu0 0
  %2752 = vmatmul.mubr.bf16.gmra.mrb[0].mxu0 %v2599
  %v2753 = vpop.f32.mrb[0].mxu0
  %v2754 = vadd.f32 0.0, %v2753
  %v2755 = vpop.f32.mrb[0].mxu0
  %v2756 = vpop.f32.mrb[0].mxu0
  %v2757 = vadd.f32 0.0, %v2756
  %v2758 = vpop.f32.mrb[0].mxu0
  %2759 = vmatprep.mubr.bf16.mxu0 0
  %2760 = vmatmul.mubr.bf16.gmra.mrb[0].mxu0 %v2602
  %v2761 = vpop.f32.mrb[0].mxu0
  %v2762 = vadd.f32 0.0, %v2761
  %v2763 = vpop.f32.mrb[0].mxu0
  %v2764 = vpop.f32.mrb[0].mxu0
  %v2765 = vadd.f32 0.0, %v2764
  %v2766 = vpop.f32.mrb[0].mxu0
  %2767 = vmatprep.mubr.bf16.mxu0 0
  %2768 = vmatmul.mubr.bf16.gmra.mrb[0].mxu0 %v2605
  %v2769 = vpop.f32.mrb[0].mxu0
  %v2770 = vadd.f32 0.0, %v2769
  %v2771 = vpop.f32.mrb[0].mxu0
  %v2772 = vpop.f32.mrb[0].mxu0
  %v2773 = vadd.f32 0.0, %v2772
  %v2774 = vpop.f32.mrb[0].mxu0
  %2775 = vmatprep.mubr.bf16.mxu0 0
  %2776 = vmatmul.mubr.bf16.gmra.mrb[0].mxu0 %v2608
  %v2777 = vpop.f32.mrb[0].mxu0
  %v2778 = vadd.f32 0.0, %v2777
  %v2779 = vpop.f32.mrb[0].mxu0
  %v2780 = vpop.f32.mrb[0].mxu0
  %v2781 = vadd.f32 0.0, %v2780
  %v2782 = vpop.f32.mrb[0].mxu0
  %2783 = vmatprep.mubr.bf16.mxu0 0
  %2784 = vmatmul.mubr.bf16.gmra.mrb[0].mxu0 %v2611
  %v2785 = vpop.f32.mrb[0].mxu0
  %v2786 = vadd.f32 0.0, %v2785
  %v2787 = vpop.f32.mrb[0].mxu0
  %v2788 = vpop.f32.mrb[0].mxu0
  %v2789 = vadd.f32 0.0, %v2788
  %v2790 = vpop.f32.mrb[0].mxu0
  %2791 = vmatprep.mubr.bf16.mxu0 0
  %2792 = vmatmul.mubr.bf16.gmra.mrb[0].mxu0 %v2614
  %v2793 = vpop.f32.mrb[0].mxu0
  %v2794 = vadd.f32 0.0, %v2793
  %v2795 = vpop.f32.mrb[0].mxu0
  %v2796 = vpop.f32.mrb[0].mxu0
  %v2797 = vadd.f32 0.0, %v2796
  %v2798 = vpop.f32.mrb[0].mxu0
  %2799 = vmatprep.mubr.bf16.mxu0 0
  %2800 = vmatmul.mubr.bf16.gmra.mrb[0].mxu0 %v2617
  %v2801 = vpop.f32.mrb[0].mxu0
  %v2802 = vadd.f32 0.0, %v2801
  %v2803 = vpop.f32.mrb[0].mxu0
  %v2804 = vpop.f32.mrb[0].mxu0
  %v2805 = vadd.f32 0.0, %v2804
  %v2806 = vpop.f32.mrb[0].mxu0
  %2807 = vmatprep.mubr.bf16.mxu0 0
  %2808 = vmatmul.mubr.bf16.gmra.mrb[0].mxu0 %v2620
  %v2809 = vpop.f32.mrb[0].mxu0
  %v2810 = vadd.f32 0.0, %v2809
  %v2811 = vpop.f32.mrb[0].mxu0
  %v2812 = vpop.f32.mrb[0].mxu0
  %v2813 = vadd.f32 0.0, %v2812
  %v2814 = vpop.f32.mrb[0].mxu0
  %2815 = vmatprep.mubr.bf16.mxu0 0
  %2816 = vmatmul.mubr.bf16.gmra.mrb[0].mxu0 %v2623
  %v2817 = vpop.f32.mrb[0].mxu0
  %v2818 = vadd.f32 0.0, %v2817
  %v2819 = vpop.f32.mrb[0].mxu0
  %v2820 = vpop.f32.mrb[0].mxu0
  %v2821 = vadd.f32 0.0, %v2820
  %v2822 = vpop.f32.mrb[0].mxu0
  %2823 = vmatprep.mubr.bf16.mxu0 0
  %2824 = vmatmul.mubr.bf16.gmra.mrb[0].mxu0 %v2626
  %v2825 = vpop.f32.mrb[0].mxu0
  %v2826 = vadd.f32 0.0, %v2825
  %v2827 = vpop.f32.mrb[0].mxu0
  %v2828 = vpop.f32.mrb[0].mxu0
  %v2829 = vadd.f32 0.0, %v2828
  %v2830 = vpop.f32.mrb[0].mxu0
  %2831 = vmatprep.mubr.bf16.mxu0 0
  %2832 = vmatmul.mubr.bf16.gmra.mrb[0].mxu0 %v2629
  %v2833 = vpop.f32.mrb[0].mxu0
  %v2834 = vadd.f32 0.0, %v2833
  %v2835 = vpop.f32.mrb[0].mxu0
  %v2836 = vpop.f32.mrb[0].mxu0
  %v2837 = vadd.f32 0.0, %v2836
  %v2838 = vpop.f32.mrb[0].mxu0
  %2839 = vmatprep.mubr.bf16.mxu0 0
  %2840 = vmatmul.mubr.bf16.gmra.mrb[0].mxu0 %v2632
  %v2841 = vpop.f32.mrb[0].mxu0
  %v2842 = vadd.f32 0.0, %v2841
  %v2843 = vpop.f32.mrb[0].mxu0
  %v2844 = vpop.f32.mrb[0].mxu0
  %v2845 = vadd.f32 0.0, %v2844
  %v2846 = vpop.f32.mrb[0].mxu0
  %2847 = vmatprep.mubr.bf16.mxu0 0
  %2848 = vmatmul.mubr.bf16.gmra.mrb[0].mxu0 %v2635
  %v2849 = vpop.f32.mrb[0].mxu0
  %v2850 = vadd.f32 0.0, %v2849
  %v2851 = vpop.f32.mrb[0].mxu0
  %v2852 = vpop.f32.mrb[0].mxu0
  %v2853 = vadd.f32 0.0, %v2852
  %v2854 = vpop.f32.mrb[0].mxu0
  %2855 = vmatprep.mubr.bf16.mxu0 0
  %2856 = vmatmul.mubr.bf16.gmra.mrb[0].mxu0 %v2638
  %v2857 = vpop.f32.mrb[0].mxu0
  %v2858 = vadd.f32 0.0, %v2857
  %v2859 = vpop.f32.mrb[0].mxu0
  %v2860 = vpop.f32.mrb[0].mxu0
  %v2861 = vadd.f32 0.0, %v2860
  %v2862 = vpop.f32.mrb[0].mxu0
  %2863 = vmatprep.mubr.bf16.mxu0 0
  %2864 = vmatmul.mubr.bf16.gmra.mrb[0].mxu0 %v2641
  %v2865 = vpop.f32.mrb[0].mxu0
  %v2866 = vadd.f32 0.0, %v2865
  %v2867 = vpop.f32.mrb[0].mxu0
  %v2868 = vpop.f32.mrb[0].mxu0
  %v2869 = vadd.f32 0.0, %v2868
  %v2870 = vpop.f32.mrb[0].mxu0
  %2871 = vmatprep.mubr.bf16.mxu0 0
  %2872 = vmatmul.mubr.bf16.gmra.mrb[0].mxu0 %v2644
  %v2873 = vpop.f32.mrb[0].mxu0
  %v2874 = vadd.f32 0.0, %v2873
  %v2875 = vpop.f32.mrb[0].mxu0
  %v2876 = vpop.f32.mrb[0].mxu0
  %v2877 = vadd.f32 0.0, %v2876
  %v2878 = vpop.f32.mrb[0].mxu0
  %2879 = vmatprep.mubr.bf16.mxu0 0
  %2880 = vmatmul.mubr.bf16.gmra.mrb[0].mxu0 %v2647
  %v2881 = vpop.f32.mrb[0].mxu0
  %v2882 = vadd.f32 0.0, %v2881
  %v2883 = vpop.f32.mrb[0].mxu0
  %v2884 = vpop.f32.mrb[0].mxu0
  %v2885 = vadd.f32 0.0, %v2884
  %v2886 = vpop.f32.mrb[0].mxu0
  %2887 = vmatprep.mubr.bf16.mxu0 0
  %2888 = vmatmul.mubr.bf16.gmra.mrb[0].mxu0 %v2650
  %v2889 = vpop.f32.mrb[0].mxu0
  %v2890 = vadd.f32 0.0, %v2889
  %v2891 = vpop.f32.mrb[0].mxu0
  %v2892 = vpop.f32.mrb[0].mxu0
  %v2893 = vadd.f32 0.0, %v2892
  %v2894 = vpop.f32.mrb[0].mxu0
  %2895 = vmatprep.mubr.bf16.mxu0 0
  %2896 = vmatmul.mubr.bf16.gmra.mrb[0].mxu0 %v2653
  %v2897 = vpop.f32.mrb[0].mxu0
  %v2898 = vadd.f32 0.0, %v2897
  %v2899 = vpop.f32.mrb[0].mxu0
  %v2900 = vpop.f32.mrb[0].mxu0
  %v2901 = vadd.f32 0.0, %v2900
  %v2902 = vpop.f32.mrb[0].mxu0
  %2903 = vmatprep.mubr.bf16.mxu0 0
  %2904 = vmatmul.mubr.bf16.gmra.mrb[0].mxu0 %v2656
  %v2905 = vpop.f32.mrb[0].mxu0
  %v2906 = vadd.f32 0.0, %v2905
  %v2907 = vpop.f32.mrb[0].mxu0
  %v2908 = vpop.f32.mrb[0].mxu0
  %v2909 = vadd.f32 0.0, %v2908
  %v2910 = vpop.f32.mrb[0].mxu0
  %2911 = vmatprep.mubr.bf16.mxu0 0
  %2912 = vmatmul.mubr.bf16.gmra.mrb[0].mxu0 %v2659
  %v2913 = vpop.f32.mrb[0].mxu0
  %v2914 = vadd.f32 0.0, %v2913
  %v2915 = vpop.f32.mrb[0].mxu0
  %v2916 = vpop.f32.mrb[0].mxu0
  %v2917 = vadd.f32 0.0, %v2916
  %v2918 = vpop.f32.mrb[0].mxu0
  %2919 = vmatprep.mubr.bf16.mxu0 0
  %2920 = vmatmul.mubr.bf16.gmra.mrb[0].mxu0 %v2662
  %v2921 = vpop.f32.mrb[0].mxu0
  %v2922 = vadd.f32 0.0, %v2921
  %v2923 = vpop.f32.mrb[0].mxu0
  %v2924 = vpop.f32.mrb[0].mxu0
  %v2925 = vadd.f32 0.0, %v2924
  %v2926 = vpop.f32.mrb[0].mxu0
  %2927 = vmatprep.mubr.bf16.mxu0 0
  %2928 = vmatmul.mubr.bf16.gmra.mrb[0].mxu0 %v2665
  %v2929 = vpop.f32.mrb[0].mxu0
  %v2930 = vadd.f32 0.0, %v2929
  %v2931 = vpop.f32.mrb[0].mxu0
  %v2932 = vpop.f32.mrb[0].mxu0
  %v2933 = vadd.f32 0.0, %v2932
  %v2934 = vpop.f32.mrb[0].mxu0
  %2935 = vmatprep.mubr.bf16.mxu0 0
  %2936 = vmatmul.mubr.bf16.gmra.mrb[0].mxu0 %v2668
  %v2937 = vpop.f32.mrb[0].mxu0
  %v2938 = vadd.f32 0.0, %v2937
  %v2939 = vpop.f32.mrb[0].mxu0
  %v2940 = vpop.f32.mrb[0].mxu0
  %v2941 = vadd.f32 0.0, %v2940
  %v2942 = vpop.f32.mrb[0].mxu0
  %2943 = vmatprep.mubr.bf16.mxu0 0
  %2944 = vmatmul.mubr.bf16.gmra.mrb[0].mxu0 %v2671
  %v2945 = vpop.f32.mrb[0].mxu0
  %v2946 = vadd.f32 0.0, %v2945
  %v2947 = vpop.f32.mrb[0].mxu0
  %v2948 = vpop.f32.mrb[0].mxu0
  %v2949 = vadd.f32 0.0, %v2948
  %v2950 = vpop.f32.mrb[0].mxu0
  %2951 = vmatprep.mubr.bf16.mxu0 0
  %2952 = vmatmul.mubr.bf16.gmra.mrb[0].mxu0 %v2674
  %v2953 = vpop.f32.mrb[0].mxu0
  %v2954 = vadd.f32 0.0, %v2953
  %v2955 = vpop.f32.mrb[0].mxu0
  %v2956 = vpop.f32.mrb[0].mxu0
  %v2957 = vadd.f32 0.0, %v2956
  %v2958 = vpop.f32.mrb[0].mxu0
  %2959 = vmatprep.mubr.bf16.mxu0 0
  %2960 = vmatmul.mubr.bf16.gmra.mrb[0].mxu0 %v2677
  %v2961 = vpop.f32.mrb[0].mxu0
  %v2962 = vadd.f32 0.0, %v2961
  %v2963 = vpop.f32.mrb[0].mxu0
  %v2964 = vpop.f32.mrb[0].mxu0
  %v2965 = vadd.f32 0.0, %v2964
  %v2966 = vpop.f32.mrb[0].mxu0
  %2967 = vdwg.mxu0
  %v2968 = vmax.f32 %v2714, %v2746
  %v2969 = vmax.f32 %v2717, %v2749
  %v2970 = vmax.f32 %v2722, %v2754
  %v2971 = vmax.f32 %v2725, %v2757
  %v2972 = vmax.f32 %v2730, %v2762
  %v2973 = vmax.f32 %v2733, %v2765
  %v2974 = vmax.f32 %v2738, %v2770
  %v2975 = vmax.f32 %v2741, %v2773
  %v2976 = vmax.f32 %v2968, %v2778
  %v2977 = vmax.f32 %v2969, %v2781
  %v2978 = vmax.f32 %v2970, %v2786
  %v2979 = vmax.f32 %v2971, %v2789
  %v2980 = vmax.f32 %v2972, %v2794
  %v2981 = vmax.f32 %v2973, %v2797
  %v2982 = vmax.f32 %v2974, %v2802
  %v2983 = vmax.f32 %v2975, %v2805
  %v2984 = vmax.f32 %v2976, %v2810
  %v2985 = vmax.f32 %v2977, %v2813
  %v2986 = vmax.f32 %v2978, %v2818
  %v2987 = vmax.f32 %v2979, %v2821
  %v2988 = vmax.f32 %v2980, %v2826
  %v2989 = vmax.f32 %v2981, %v2829
  %v2990 = vmax.f32 %v2982, %v2834
  %v2991 = vmax.f32 %v2983, %v2837
  %v2992 = vmax.f32 %v2984, %v2842
  %v2993 = vmax.f32 %v2985, %v2845
  %v2994 = vmax.f32 %v2986, %v2850
  %v2995 = vmax.f32 %v2987, %v2853
  %v2996 = vmax.f32 %v2988, %v2858
  %v2997 = vmax.f32 %v2989, %v2861
  %v2998 = vmax.f32 %v2990, %v2866
  %v2999 = vmax.f32 %v2991, %v2869
  %v3000 = vmax.f32 %v2992, %v2874
  %v3001 = vmax.f32 %v2993, %v2877
  %v3002 = vmax.f32 %v2994, %v2882
  %v3003 = vmax.f32 %v2995, %v2885
  %v3004 = vmax.f32 %v2996, %v2890
  %v3005 = vmax.f32 %v2997, %v2893
  %v3006 = vmax.f32 %v2998, %v2898
  %v3007 = vmax.f32 %v2999, %v2901
  %v3008 = vmax.f32 %v3000, %v2906
  %v3009 = vmax.f32 %v3001, %v2909
  %v3010 = vmax.f32 %v3002, %v2914
  %v3011 = vmax.f32 %v3003, %v2917
  %v3012 = vmax.f32 %v3004, %v2922
  %v3013 = vmax.f32 %v3005, %v2925
  %v3014 = vmax.f32 %v3006, %v2930
  %v3015 = vmax.f32 %v3007, %v2933
  %v3016 = vmax.f32 %v3008, %v2938
  %v3017 = vmax.f32 %v3009, %v2941
  %v3018 = vmax.f32 %v3010, %v2946
  %v3019 = vmax.f32 %v3011, %v2949
  %v3020 = vmax.f32 %v3012, %v2954
  %v3021 = vmax.f32 %v3013, %v2957
  %v3022 = vmax.f32 %v3014, %v2962
  %v3023 = vmax.f32 %v3015, %v2965
  %v3024 = vld [vmem:[%s8] sm:$0x1]
  %v3026 = vlaneseq
  %v3027 = vshrl.u32 %v3026, 7
  %v3028 = vsub.s32 0, %v3027
  %v3029 = vrot.slane %v3024, %v3028
  %v3031 = vmul.f32 %v3016, %v3029
  %v3032 = vmul.f32 %v3017, %v3029
  %v3033 = vmul.f32 %v3018, %v3029
  %v3034 = vmul.f32 %v3019, %v3029
  %v3035 = vmul.f32 %v3020, %v3029
  %v3036 = vmul.f32 %v3021, %v3029
  %v3037 = vmul.f32 %v3022, %v3029
  %v3038 = vmul.f32 %v3023, %v3029
  %v3039 = vld [vmem:[%s9] sm:$0x1]
  %v3041 = vlaneseq
  %v3042 = vshrl.u32 %v3041, 7
  %v3043 = vsub.s32 0, %v3042
  %v3044 = vrot.slane %v3039, %v3043
  %v3046 = vadd.f32 %v3031, %v3044
  %v3047 = vadd.f32 %v3032, %v3044
  %v3048 = vadd.f32 %v3033, %v3044
  %v3049 = vadd.f32 %v3034, %v3044
  %v3050 = vadd.f32 %v3035, %v3044
  %v3051 = vadd.f32 %v3036, %v3044
  %v3052 = vadd.f32 %v3037, %v3044
  %v3053 = vadd.f32 %v3038, %v3044
  %v3054 = vpack.c.bf16 %v3047, %v3046
  %v3055 = vpack.c.bf16 %v3049, %v3048
  %v3056 = vpack.c.bf16 %v3051, %v3050
  %v3057 = vpack.c.bf16 %v3053, %v3052
  %v3062 = vunpack.c.l.b16 %v3054
  %v3063 = vunpack.c.h.b16 %v3054
  %v3064 = vunpack.c.l.b16 %v3055
  %v3065 = vunpack.c.h.b16 %v3055
  %v3066 = vunpack.c.l.b16 %v3056
  %v3067 = vunpack.c.h.b16 %v3056
  %v3068 = vunpack.c.l.b16 %v3057
  %v3069 = vunpack.c.h.b16 %v3057
  %v3070 = vpack.c.b16 %v3062, %v3062
  %v3071 = vpack.c.b16 %v3063, %v3063
  %v3072 = vpack.c.b16 %v3064, %v3064
  %v3073 = vpack.c.b16 %v3065, %v3065
  %v3074 = vpack.c.b16 %v3066, %v3066
  %v3075 = vpack.c.b16 %v3067, %v3067
  %v3076 = vpack.c.b16 %v3068, %v3068
  %v3077 = vpack.c.b16 %v3069, %v3069
  %vm3086 = vcmask 257024
  %3087 = vst.msk [vmem:[%s10] sm:$0xf] %vm3086, %v3070
  %3088 = vst.msk [vmem:[%s10 + $0x4] sm:$0xf] %vm3086, %v3071
  %3089 = vst.msk [vmem:[%s10 + $0x8] sm:$0xf] %vm3086, %v3072
  %3090 = vst.msk [vmem:[%s10 + $0xc] sm:$0xf] %vm3086, %v3073
  %3091 = vst.msk [vmem:[%s10 + $0x10] sm:$0xf] %vm3086, %v3074
  %3092 = vst.msk [vmem:[%s10 + $0x14] sm:$0xf] %vm3086, %v3075
  %3093 = vst.msk [vmem:[%s10 + $0x18] sm:$0xf] %vm3086, %v3076
  %3094 = vst.msk [vmem:[%s10 + $0x1c] sm:$0xf] %vm3086, %v3077
  // Predicated region
  $region42: #{_lambda_.20} parent=0 // pred_check
    _
  $region43: #{_lambda_.20} parent=0 // pred_check_branch
    %3096 = sbr.rel (0) target = $region45
  $region44: #{_lambda_.20} parent=0 // pred_region
    _
  $region45: #{_lambda_.20} parent=0 // pred_fallthru
    _
  // Predicated region
  $region46: #{_lambda_.20} parent=0 // pred_check
    _
  $region47: #{_lambda_.20} parent=0 // pred_check_branch
    %3098 = sbr.rel (0) target = $region49
  $region48: #{_lambda_.20} parent=0 // pred_region
    _
  $region49: #{_lambda_.20} parent=0 // pred_fallthru
    _

// kernel: _lambda_.23
$region0: #{_lambda_.23}
  #allocation0 [shape = 'u32[]', space=smem, size = 0x4, offset = 0x4, fixed_abs, tag = 'smem constant byte address 0x4 - core index']
  #allocation1 [shape = 'u32[144,128]{1,0:T(1,128)}', space=vmem, size = 0x12000, scoped, tag = 'internal scratch']
  %s0 = inlined_call_operand.vmem [shape: bf16[64,256], index: 0, kind: input, shape index: {}]
  %s1 = inlined_call_operand.vmem [shape: bf16[64,32], index: 1, kind: input, shape index: {}]
  %s2 = inlined_call_operand.vmem [shape: f32[1,32], index: 2, kind: input, shape index: {}]
  %s3 = inlined_call_operand.vmem [shape: f32[1,32], index: 3, kind: input, shape index: {}]
  %s4 = inlined_call_operand.vmem [shape: bf16[64,32], index: 4, kind: input, shape index: {}]
  %s5 = inlined_call_operand.vmem [shape: bf16[64,32], index: 5, kind: output, shape index: {}]
  %s6 = sld [smem:[#allocation0]]
  $region30: #{_lambda_.23} parent=0
    _
  %s8 = ssub.s32 1, %s6
  %s9 = scalar_select 0, %s8, %s6
  // Predicated region
  $region2: #{_lambda_.23} parent=0 // pred_check
    _
  $region3: #{_lambda_.23} parent=0 // pred_check_branch
    %11 = sbr.rel (0) target = $region5
  $region4: #{_lambda_.23} parent=0 // pred_region
    _
  $region5: #{_lambda_.23} parent=0 // pred_fallthru
    _
  // Predicated region
  $region6: #{_lambda_.23} parent=0 // pred_check
    _
  $region7: #{_lambda_.23} parent=0 // pred_check_branch
    %13 = sbr.rel (0) target = $region9
  $region8: #{_lambda_.23} parent=0 // pred_region
    _
  $region9: #{_lambda_.23} parent=0 // pred_fallthru
    _
  // Predicated region
  $region10: #{_lambda_.23} parent=0 // pred_check
    _
  $region11: #{_lambda_.23} parent=0 // pred_check_branch
    %15 = sbr.rel (0) target = $region13
  $region12: #{_lambda_.23} parent=0 // pred_region
    _
  $region13: #{_lambda_.23} parent=0 // pred_fallthru
    _
  // Predicated region
  $region14: #{_lambda_.23} parent=0 // pred_check
    _
  $region15: #{_lambda_.23} parent=0 // pred_check_branch
    %17 = sbr.rel (0) target = $region17
  $region16: #{_lambda_.23} parent=0 // pred_region
    _
  $region17: #{_lambda_.23} parent=0 // pred_fallthru
    _
  // Predicated region
  $region18: #{_lambda_.23} parent=0 // pred_check
    _
  $region19: #{_lambda_.23} parent=0 // pred_check_branch
    %19 = sbr.rel (0) target = $region21
  $region20: #{_lambda_.23} parent=0 // pred_region
    _
  $region21: #{_lambda_.23} parent=0 // pred_fallthru
    _
  %v20 = vld [vmem:[%s0] sm:$0xff]
  %v21 = vld [vmem:[%s0 + $0x8] sm:$0xff]
  %v22 = vld [vmem:[%s0 + $0x10] sm:$0xff]
  %v23 = vld [vmem:[%s0 + $0x18] sm:$0xff]
  %v24 = vld [vmem:[%s0 + $0x20] sm:$0xff]
  %v25 = vld [vmem:[%s0 + $0x28] sm:$0xff]
  %v26 = vld [vmem:[%s0 + $0x30] sm:$0xff]
  %v27 = vld [vmem:[%s0 + $0x38] sm:$0xff]
  %v28 = vunpack.c.l.bf16 %v20
  %v29 = vunpack.c.h.bf16 %v20
  %v30 = vunpack.c.l.bf16 %v21
  %v31 = vunpack.c.h.bf16 %v21
  %v32 = vunpack.c.l.bf16 %v22
  %v33 = vunpack.c.h.bf16 %v22
  %v34 = vunpack.c.l.bf16 %v23
  %v35 = vunpack.c.h.bf16 %v23
  %v36 = vunpack.c.l.bf16 %v24
  %v37 = vunpack.c.h.bf16 %v24
  %v38 = vunpack.c.l.bf16 %v25
  %v39 = vunpack.c.h.bf16 %v25
  %v40 = vunpack.c.l.bf16 %v26
  %v41 = vunpack.c.h.bf16 %v26
  %v42 = vunpack.c.l.bf16 %v27
  %v43 = vunpack.c.h.bf16 %v27
  %44 = vrot.lane.b32.xlu0 %v28, 32
  %v45 = vpop.permute.xlu0 %44
  %46 = vrot.lane.b32.xlu0 %v30, 32
  %v47 = vpop.permute.xlu0 %46
  %48 = vrot.lane.b32.xlu0 %v32, 32
  %v49 = vpop.permute.xlu0 %48
  %50 = vrot.lane.b32.xlu0 %v34, 32
  %v51 = vpop.permute.xlu0 %50
  %52 = vrot.lane.b32.xlu0 %v36, 32
  %v53 = vpop.permute.xlu0 %52
  %54 = vrot.lane.b32.xlu0 %v38, 32
  %v55 = vpop.permute.xlu0 %54
  %56 = vrot.lane.b32.xlu0 %v40, 32
  %v57 = vpop.permute.xlu0 %56
  %58 = vrot.lane.b32.xlu0 %v42, 32
  %v59 = vpop.permute.xlu0 %58
  %60 = vrot.lane.b32.xlu0 %v29, 32
  %v61 = vpop.permute.xlu0 %60
  %62 = vrot.lane.b32.xlu0 %v31, 32
  %v63 = vpop.permute.xlu0 %62
  %64 = vrot.lane.b32.xlu0 %v33, 32
  %v65 = vpop.permute.xlu0 %64
  %66 = vrot.lane.b32.xlu0 %v35, 32
  %v67 = vpop.permute.xlu0 %66
  %68 = vrot.lane.b32.xlu0 %v37, 32
  %v69 = vpop.permute.xlu0 %68
  %70 = vrot.lane.b32.xlu0 %v39, 32
  %v71 = vpop.permute.xlu0 %70
  %72 = vrot.lane.b32.xlu0 %v41, 32
  %v73 = vpop.permute.xlu0 %72
  %74 = vrot.lane.b32.xlu0 %v43, 32
  %v75 = vpop.permute.xlu0 %74
  %v76 = vlaneseq
  %v77 = vand.u32 %v76, 127
  %vm78 = vcmp.lt.s32.totalorder %v77, 32
  %v79 = vsel %vm78, %v45, %v61
  %v80 = vsel %vm78, %v47, %v63
  %v81 = vsel %vm78, %v49, %v65
  %v82 = vsel %vm78, %v51, %v67
  %v83 = vsel %vm78, %v53, %v69
  %v84 = vsel %vm78, %v55, %v71
  %v85 = vsel %vm78, %v57, %v73
  %v86 = vsel %vm78, %v59, %v75
  %v87 = vsel %vm78, %v61, %v45
  %v88 = vsel %vm78, %v63, %v47
  %v89 = vsel %vm78, %v65, %v49
  %v90 = vsel %vm78, %v67, %v51
  %v91 = vsel %vm78, %v69, %v53
  %v92 = vsel %vm78, %v71, %v55
  %v93 = vsel %vm78, %v73, %v57
  %v94 = vsel %vm78, %v75, %v59
  %v95 = vmax.f32 %v28, %v87
  %v96 = vmax.f32 %v29, %v79
  %v97 = vmax.f32 %v30, %v88
  %v98 = vmax.f32 %v31, %v80
  %v99 = vmax.f32 %v32, %v89
  %v100 = vmax.f32 %v33, %v81
  %v101 = vmax.f32 %v34, %v90
  %v102 = vmax.f32 %v35, %v82
  %v103 = vmax.f32 %v36, %v91
  %v104 = vmax.f32 %v37, %v83
  %v105 = vmax.f32 %v38, %v92
  %v106 = vmax.f32 %v39, %v84
  %v107 = vmax.f32 %v40, %v93
  %v108 = vmax.f32 %v41, %v85
  %v109 = vmax.f32 %v42, %v94
  %v110 = vmax.f32 %v43, %v86
  %111 = vrot.lane.b32.xlu0 %v95, 64
  %v112 = vpop.permute.xlu0 %111
  %113 = vrot.lane.b32.xlu0 %v97, 64
  %v114 = vpop.permute.xlu0 %113
  %115 = vrot.lane.b32.xlu0 %v99, 64
  %v116 = vpop.permute.xlu0 %115
  %117 = vrot.lane.b32.xlu0 %v101, 64
  %v118 = vpop.permute.xlu0 %117
  %119 = vrot.lane.b32.xlu0 %v103, 64
  %v120 = vpop.permute.xlu0 %119
  %121 = vrot.lane.b32.xlu0 %v105, 64
  %v122 = vpop.permute.xlu0 %121
  %123 = vrot.lane.b32.xlu0 %v107, 64
  %v124 = vpop.permute.xlu0 %123
  %125 = vrot.lane.b32.xlu0 %v109, 64
  %v126 = vpop.permute.xlu0 %125
  %127 = vrot.lane.b32.xlu0 %v96, 64
  %v128 = vpop.permute.xlu0 %127
  %129 = vrot.lane.b32.xlu0 %v98, 64
  %v130 = vpop.permute.xlu0 %129
  %131 = vrot.lane.b32.xlu0 %v100, 64
  %v132 = vpop.permute.xlu0 %131
  %133 = vrot.lane.b32.xlu0 %v102, 64
  %v134 = vpop.permute.xlu0 %133
  %135 = vrot.lane.b32.xlu0 %v104, 64
  %v136 = vpop.permute.xlu0 %135
  %137 = vrot.lane.b32.xlu0 %v106, 64
  %v138 = vpop.permute.xlu0 %137
  %139 = vrot.lane.b32.xlu0 %v108, 64
  %v140 = vpop.permute.xlu0 %139
  %141 = vrot.lane.b32.xlu0 %v110, 64
  %v142 = vpop.permute.xlu0 %141
  %vm143 = vcmp.lt.s32.totalorder %v77, 64
  %v144 = vsel %vm143, %v112, %v128
  %v145 = vsel %vm143, %v114, %v130
  %v146 = vsel %vm143, %v116, %v132
  %v147 = vsel %vm143, %v118, %v134
  %v148 = vsel %vm143, %v120, %v136
  %v149 = vsel %vm143, %v122, %v138
  %v150 = vsel %vm143, %v124, %v140
  %v151 = vsel %vm143, %v126, %v142
  %v152 = vsel %vm143, %v128, %v112
  %v153 = vsel %vm143, %v130, %v114
  %v154 = vsel %vm143, %v132, %v116
  %v155 = vsel %vm143, %v134, %v118
  %v156 = vsel %vm143, %v136, %v120
  %v157 = vsel %vm143, %v138, %v122
  %v158 = vsel %vm143, %v140, %v124
  %v159 = vsel %vm143, %v142, %v126
  %v160 = vmax.f32 %v95, %v152
  %v161 = vmax.f32 %v96, %v144
  %v162 = vmax.f32 %v97, %v153
  %v163 = vmax.f32 %v98, %v145
  %v164 = vmax.f32 %v99, %v154
  %v165 = vmax.f32 %v100, %v146
  %v166 = vmax.f32 %v101, %v155
  %v167 = vmax.f32 %v102, %v147
  %v168 = vmax.f32 %v103, %v156
  %v169 = vmax.f32 %v104, %v148
  %v170 = vmax.f32 %v105, %v157
  %v171 = vmax.f32 %v106, %v149
  %v172 = vmax.f32 %v107, %v158
  %v173 = vmax.f32 %v108, %v150
  %v174 = vmax.f32 %v109, %v159
  %v175 = vmax.f32 %v110, %v151
  %v176 = vmax.f32 %v160, %v161
  %v177 = vmax.f32 %v162, %v163
  %v178 = vmax.f32 %v164, %v165
  %v179 = vmax.f32 %v166, %v167
  %v180 = vmax.f32 %v168, %v169
  %v181 = vmax.f32 %v170, %v171
  %v182 = vmax.f32 %v172, %v173
  %v183 = vmax.f32 %v174, %v175
  %v184 = vld [vmem:[%s1] sm:$0xf]
  %v185 = vld [vmem:[%s1 + $0x4] sm:$0xf]
  %v186 = vld [vmem:[%s1 + $0x8] sm:$0xf]
  %v187 = vld [vmem:[%s1 + $0xc] sm:$0xf]
  %v188 = vld [vmem:[%s1 + $0x10] sm:$0xf]
  %v189 = vld [vmem:[%s1 + $0x14] sm:$0xf]
  %v190 = vld [vmem:[%s1 + $0x18] sm:$0xf]
  %v191 = vld [vmem:[%s1 + $0x1c] sm:$0xf]
  %v192 = vunpack.c.l.bf16 %v184
  %v193 = vunpack.c.l.bf16 %v185
  %v194 = vunpack.c.l.bf16 %v186
  %v195 = vunpack.c.l.bf16 %v187
  %v196 = vunpack.c.l.bf16 %v188
  %v197 = vunpack.c.l.bf16 %v189
  %v198 = vunpack.c.l.bf16 %v190
  %v199 = vunpack.c.l.bf16 %v191
  %v200 = vsub.f32 %v176, %v192
  %v201 = vsub.f32 %v177, %v193
  %v202 = vsub.f32 %v178, %v194
  %v203 = vsub.f32 %v179, %v195
  %v204 = vsub.f32 %v180, %v196
  %v205 = vsub.f32 %v181, %v197
  %v206 = vsub.f32 %v182, %v198
  %v207 = vsub.f32 %v183, %v199
  %v208 = vld [vmem:[%s2] sm:$0x1]
  %v210 = vlaneseq
  %v211 = vshrl.u32 %v210, 7
  %v212 = vsub.s32 0, %v211
  %v213 = vrot.slane %v208, %v212
  %v215 = vmul.f32 %v200, %v213
  %v216 = vmul.f32 %v201, %v213
  %v217 = vmul.f32 %v202, %v213
  %v218 = vmul.f32 %v203, %v213
  %v219 = vmul.f32 %v204, %v213
  %v220 = vmul.f32 %v205, %v213
  %v221 = vmul.f32 %v206, %v213
  %v222 = vmul.f32 %v207, %v213
  %v223 = vld [vmem:[%s3] sm:$0x1]
  %v225 = vlaneseq
  %v226 = vshrl.u32 %v225, 7
  %v227 = vsub.s32 0, %v226
  %v228 = vrot.slane %v223, %v227
  %v230 = vadd.f32 %v215, %v228
  %v231 = vadd.f32 %v216, %v228
  %v232 = vadd.f32 %v217, %v228
  %v233 = vadd.f32 %v218, %v228
  %v234 = vadd.f32 %v219, %v228
  %v235 = vadd.f32 %v220, %v228
  %v236 = vadd.f32 %v221, %v228
  %v237 = vadd.f32 %v222, %v228
  %v238 = vld [vmem:[%s4] sm:$0xf]
  %v239 = vld [vmem:[%s4 + $0x4] sm:$0xf]
  %v240 = vld [vmem:[%s4 + $0x8] sm:$0xf]
  %v241 = vld [vmem:[%s4 + $0xc] sm:$0xf]
  %v242 = vld [vmem:[%s4 + $0x10] sm:$0xf]
  %v243 = vld [vmem:[%s4 + $0x14] sm:$0xf]
  %v244 = vld [vmem:[%s4 + $0x18] sm:$0xf]
  %v245 = vld [vmem:[%s4 + $0x1c] sm:$0xf]
  %v246 = vunpack.c.l.bf16 %v238
  %v247 = vunpack.c.l.bf16 %v239
  %v248 = vunpack.c.l.bf16 %v240
  %v249 = vunpack.c.l.bf16 %v241
  %v250 = vunpack.c.l.bf16 %v242
  %v251 = vunpack.c.l.bf16 %v243
  %v252 = vunpack.c.l.bf16 %v244
  %v253 = vunpack.c.l.bf16 %v245
  %v254 = vadd.f32 %v230, %v246
  %v255 = vadd.f32 %v231, %v247
  %v256 = vadd.f32 %v232, %v248
  %v257 = vadd.f32 %v233, %v249
  %v258 = vadd.f32 %v234, %v250
  %v259 = vadd.f32 %v235, %v251
  %v260 = vadd.f32 %v236, %v252
  %v261 = vadd.f32 %v237, %v253
  %v262 = vpack.c.bf16 %v255, %v254
  %v263 = vpack.c.bf16 %v257, %v256
  %v264 = vpack.c.bf16 %v259, %v258
  %v265 = vpack.c.bf16 %v261, %v260
  %v270 = vunpack.c.l.b16 %v262
  %v271 = vunpack.c.h.b16 %v262
  %v272 = vunpack.c.l.b16 %v263
  %v273 = vunpack.c.h.b16 %v263
  %v274 = vunpack.c.l.b16 %v264
  %v275 = vunpack.c.h.b16 %v264
  %v276 = vunpack.c.l.b16 %v265
  %v277 = vunpack.c.h.b16 %v265
  %v278 = vpack.c.b16 %v270, %v270
  %v279 = vpack.c.b16 %v271, %v271
  %v280 = vpack.c.b16 %v272, %v272
  %v281 = vpack.c.b16 %v273, %v273
  %v282 = vpack.c.b16 %v274, %v274
  %v283 = vpack.c.b16 %v275, %v275
  %v284 = vpack.c.b16 %v276, %v276
  %v285 = vpack.c.b16 %v277, %v277
  %vm294 = vcmask 257024
  %295 = vst.msk [vmem:[%s5] sm:$0xf] %vm294, %v278
  %296 = vst.msk [vmem:[%s5 + $0x4] sm:$0xf] %vm294, %v279
  %297 = vst.msk [vmem:[%s5 + $0x8] sm:$0xf] %vm294, %v280
  %298 = vst.msk [vmem:[%s5 + $0xc] sm:$0xf] %vm294, %v281
  %299 = vst.msk [vmem:[%s5 + $0x10] sm:$0xf] %vm294, %v282
  %300 = vst.msk [vmem:[%s5 + $0x14] sm:$0xf] %vm294, %v283
  %301 = vst.msk [vmem:[%s5 + $0x18] sm:$0xf] %vm294, %v284
  %302 = vst.msk [vmem:[%s5 + $0x1c] sm:$0xf] %vm294, %v285
  // Predicated region
  $region22: #{_lambda_.23} parent=0 // pred_check
    _
  $region23: #{_lambda_.23} parent=0 // pred_check_branch
    %304 = sbr.rel (0) target = $region25
  $region24: #{_lambda_.23} parent=0 // pred_region
    _
  $region25: #{_lambda_.23} parent=0 // pred_fallthru
    _
  // Predicated region
  $region26: #{_lambda_.23} parent=0 // pred_check
    _
  $region27: #{_lambda_.23} parent=0 // pred_check_branch
    %306 = sbr.rel (0) target = $region29
  $region28: #{_lambda_.23} parent=0 // pred_region
    _
  $region29: #{_lambda_.23} parent=0 // pred_fallthru
    _

// kernel: _lambda_.28
$region0: #{_lambda_.28}
  #allocation0 [shape = 'u32[]', space=smem, size = 0x4, offset = 0x4, fixed_abs, tag = 'smem constant byte address 0x4 - core index']
  #allocation1 [shape = 'u32[144,128]{1,0:T(1,128)}', space=vmem, size = 0x12000, scoped, tag = 'internal scratch']
  %s0 = inlined_call_operand.vmem [shape: bf16[64,32], index: 0, kind: input, shape index: {}]
  %s1 = inlined_call_operand.vmem [shape: bf16[32,64], index: 1, kind: input, shape index: {}]
  %s2 = inlined_call_operand.vmem [shape: f32[1,64], index: 2, kind: input, shape index: {}]
  %s3 = inlined_call_operand.vmem [shape: f32[1,64], index: 3, kind: input, shape index: {}]
  %s4 = inlined_call_operand.vmem [shape: bf16[64,64], index: 4, kind: output, shape index: {}]
  %s5 = sld [smem:[#allocation0]]
  $region26: #{_lambda_.28} parent=0
    _
  %s7 = ssub.s32 1, %s5
  %s8 = scalar_select 0, %s7, %s5
  // Predicated region
  $region2: #{_lambda_.28} parent=0 // pred_check
    _
  $region3: #{_lambda_.28} parent=0 // pred_check_branch
    %10 = sbr.rel (0) target = $region5
  $region4: #{_lambda_.28} parent=0 // pred_region
    _
  $region5: #{_lambda_.28} parent=0 // pred_fallthru
    _
  // Predicated region
  $region6: #{_lambda_.28} parent=0 // pred_check
    _
  $region7: #{_lambda_.28} parent=0 // pred_check_branch
    %12 = sbr.rel (0) target = $region9
  $region8: #{_lambda_.28} parent=0 // pred_region
    _
  $region9: #{_lambda_.28} parent=0 // pred_fallthru
    _
  // Predicated region
  $region10: #{_lambda_.28} parent=0 // pred_check
    _
  $region11: #{_lambda_.28} parent=0 // pred_check_branch
    %14 = sbr.rel (0) target = $region13
  $region12: #{_lambda_.28} parent=0 // pred_region
    _
  $region13: #{_lambda_.28} parent=0 // pred_fallthru
    _
  // Predicated region
  $region14: #{_lambda_.28} parent=0 // pred_check
    _
  $region15: #{_lambda_.28} parent=0 // pred_check_branch
    %16 = sbr.rel (0) target = $region17
  $region16: #{_lambda_.28} parent=0 // pred_region
    _
  $region17: #{_lambda_.28} parent=0 // pred_fallthru
    _
  %v18 = vld [vmem:[%s0] sm:$0xf]
  %v19 = vld [vmem:[%s0 + $0x4] sm:$0xf]
  %v20 = vld [vmem:[%s0 + $0x8] sm:$0xf]
  %v21 = vld [vmem:[%s0 + $0xc] sm:$0xf]
  %v22 = vld [vmem:[%s0 + $0x10] sm:$0xf]
  %v23 = vld [vmem:[%s0 + $0x14] sm:$0xf]
  %v24 = vld [vmem:[%s0 + $0x18] sm:$0xf]
  %v25 = vld [vmem:[%s0 + $0x1c] sm:$0xf]
  %v26 = vld [vmem:[%s1] sm:$0xf]
  %v27 = vld [vmem:[%s1 + $0x4] sm:$0xf]
  %v28 = vld [vmem:[%s1 + $0x8] sm:$0xf]
  %v29 = vld [vmem:[%s1 + $0xc] sm:$0xf]
  %v38 = vunpack.c.l.b16 %v18
  %v39 = vunpack.c.l.b16 %v19
  %v40 = vunpack.c.l.b16 %v20
  %v41 = vunpack.c.l.b16 %v21
  %v42 = vunpack.c.l.b16 %v22
  %v43 = vunpack.c.l.b16 %v23
  %v44 = vunpack.c.l.b16 %v24
  %v45 = vunpack.c.l.b16 %v25
  %v46 = vpack.c.b16 %v39, %v38
  %v47 = vpack.c.b16 %v41, %v40
  %v48 = vpack.c.b16 %v43, %v42
  %v49 = vpack.c.b16 %v45, %v44
  %v54 = vunpack.c.l.b16 %v26
  %v55 = vunpack.c.l.b16 %v27
  %v56 = vunpack.c.l.b16 %v28
  %v57 = vunpack.c.l.b16 %v29
  %v58 = vpack.c.b16 %v55, %v54
  %v59 = vpack.c.b16 %v57, %v56
  %vm62 = vcmask 261120
  %v64 = vsel %vm62, %v46, 0
  %v67 = vsel %vm62, %v47, 0
  %v70 = vsel %vm62, %v48, 0
  %v73 = vsel %vm62, %v49, 0
  %75 = vmatprep.subr.bf16.mxu0 0
  %76 = vmatpush1.bf16.msra.mxu0 %v58
  %77 = vmatprep.subr.bf16.mxu0 0
  %78 = vmatpush1.bf16.msra.mxu0 %v59
  %79 = vmatprep.subr.bf16.mxu0 0
  %80 = vmatpush1.bf16.msra.mxu0 0
  %81 = vmatprep.subr.bf16.mxu0 0
  %82 = vmatpush1.bf16.msra.mxu0 0
  %83 = vmatprep.subr.bf16.mxu0 0
  %84 = vmatpush1.bf16.msra.mxu0 0
  %85 = vmatprep.subr.bf16.mxu0 0
  %86 = vmatpush1.bf16.msra.mxu0 0
  %87 = vmatprep.subr.bf16.mxu0 0
  %88 = vmatpush1.bf16.msra.mxu0 0
  %89 = vmatprep.subr.bf16.mxu0 0
  %90 = vmatpush1.bf16.msra.mxu0 0
  %91 = vmatprep.subr.bf16.mxu0 0
  %92 = vmatpush1.bf16.msra.mxu0 0
  %93 = vmatprep.subr.bf16.mxu0 0
  %94 = vmatpush1.bf16.msra.mxu0 0
  %95 = vmatprep.subr.bf16.mxu0 0
  %96 = vmatpush1.bf16.msra.mxu0 0
  %97 = vmatprep.subr.bf16.mxu0 0
  %98 = vmatpush1.bf16.msra.mxu0 0
  %99 = vmatprep.subr.bf16.mxu0 0
  %100 = vmatpush1.bf16.msra.mxu0 0
  %101 = vmatprep.subr.bf16.mxu0 0
  %102 = vmatpush1.bf16.msra.mxu0 0
  %103 = vmatprep.subr.bf16.mxu0 0
  %104 = vmatpush1.bf16.msra.mxu0 0
  %105 = vmatprep.subr.bf16.mxu0 0
  %106 = vmatpush1.bf16.msra.mxu0 0
  %107 = vmatprep.mubr.bf16.mxu0 0
  %108 = vmatmul.mubr.bf16.gmra.mrb[0].mxu0 %v64
  %v109 = vpop.f32.mrb[0].mxu0
  %v110 = vadd.f32 0.0, %v109
  %v111 = vpop.f32.mrb[0].mxu0
  %v112 = vpop.f32.mrb[0].mxu0
  %v113 = vadd.f32 0.0, %v112
  %v114 = vpop.f32.mrb[0].mxu0
  %115 = vmatprep.mubr.bf16.mxu0 0
  %116 = vmatmul.mubr.bf16.gmra.mrb[0].mxu0 %v67
  %v117 = vpop.f32.mrb[0].mxu0
  %v118 = vadd.f32 0.0, %v117
  %v119 = vpop.f32.mrb[0].mxu0
  %v120 = vpop.f32.mrb[0].mxu0
  %v121 = vadd.f32 0.0, %v120
  %v122 = vpop.f32.mrb[0].mxu0
  %123 = vmatprep.mubr.bf16.mxu0 0
  %124 = vmatmul.mubr.bf16.gmra.mrb[0].mxu0 %v70
  %v125 = vpop.f32.mrb[0].mxu0
  %v126 = vadd.f32 0.0, %v125
  %v127 = vpop.f32.mrb[0].mxu0
  %v128 = vpop.f32.mrb[0].mxu0
  %v129 = vadd.f32 0.0, %v128
  %v130 = vpop.f32.mrb[0].mxu0
  %131 = vmatprep.mubr.bf16.mxu0 0
  %132 = vmatmul.mubr.bf16.gmra.mrb[0].mxu0 %v73
  %v133 = vpop.f32.mrb[0].mxu0
  %v134 = vadd.f32 0.0, %v133
  %v135 = vpop.f32.mrb[0].mxu0
  %v136 = vpop.f32.mrb[0].mxu0
  %v137 = vadd.f32 0.0, %v136
  %v138 = vpop.f32.mrb[0].mxu0
  %139 = vdwg.mxu0
  %v140 = vld [vmem:[%s2] sm:$0x1]
  %v142 = vlaneseq
  %v143 = vshrl.u32 %v142, 7
  %v144 = vsub.s32 0, %v143
  %v145 = vrot.slane %v140, %v144
  %v147 = vmul.f32 %v110, %v145
  %v148 = vmul.f32 %v113, %v145
  %v149 = vmul.f32 %v118, %v145
  %v150 = vmul.f32 %v121, %v145
  %v151 = vmul.f32 %v126, %v145
  %v152 = vmul.f32 %v129, %v145
  %v153 = vmul.f32 %v134, %v145
  %v154 = vmul.f32 %v137, %v145
  %v155 = vld [vmem:[%s3] sm:$0x1]
  %v157 = vlaneseq
  %v158 = vshrl.u32 %v157, 7
  %v159 = vsub.s32 0, %v158
  %v160 = vrot.slane %v155, %v159
  %v162 = vadd.f32 %v147, %v160
  %v163 = vadd.f32 %v148, %v160
  %v164 = vadd.f32 %v149, %v160
  %v165 = vadd.f32 %v150, %v160
  %v166 = vadd.f32 %v151, %v160
  %v167 = vadd.f32 %v152, %v160
  %v168 = vadd.f32 %v153, %v160
  %v169 = vadd.f32 %v154, %v160
  %v170 = vpack.c.bf16 %v163, %v162
  %v171 = vpack.c.bf16 %v165, %v164
  %v172 = vpack.c.bf16 %v167, %v166
  %v173 = vpack.c.bf16 %v169, %v168
  %v178 = vunpack.c.l.b16 %v170
  %v179 = vunpack.c.h.b16 %v170
  %v180 = vunpack.c.l.b16 %v171
  %v181 = vunpack.c.h.b16 %v171
  %v182 = vunpack.c.l.b16 %v172
  %v183 = vunpack.c.h.b16 %v172
  %v184 = vunpack.c.l.b16 %v173
  %v185 = vunpack.c.h.b16 %v173
  %v186 = vpack.c.b16 %v178, %v178
  %v187 = vpack.c.b16 %v179, %v179
  %v188 = vpack.c.b16 %v180, %v180
  %v189 = vpack.c.b16 %v181, %v181
  %v190 = vpack.c.b16 %v182, %v182
  %v191 = vpack.c.b16 %v183, %v183
  %v192 = vpack.c.b16 %v184, %v184
  %v193 = vpack.c.b16 %v185, %v185
  %vm202 = vcmask 519168
  %203 = vst.msk [vmem:[%s4] sm:$0xf] %vm202, %v186
  %204 = vst.msk [vmem:[%s4 + $0x4] sm:$0xf] %vm202, %v187
  %205 = vst.msk [vmem:[%s4 + $0x8] sm:$0xf] %vm202, %v188
  %206 = vst.msk [vmem:[%s4 + $0xc] sm:$0xf] %vm202, %v189
  %207 = vst.msk [vmem:[%s4 + $0x10] sm:$0xf] %vm202, %v190
  %208 = vst.msk [vmem:[%s4 + $0x14] sm:$0xf] %vm202, %v191
  %209 = vst.msk [vmem:[%s4 + $0x18] sm:$0xf] %vm202, %v192
  %210 = vst.msk [vmem:[%s4 + $0x1c] sm:$0xf] %vm202, %v193
  // Predicated region
  $region18: #{_lambda_.28} parent=0 // pred_check
    _
  $region19: #{_lambda_.28} parent=0 // pred_check_branch
    %212 = sbr.rel (0) target = $region21
  $region20: #{_lambda_.28} parent=0 // pred_region
    _
  $region21: #{_lambda_.28} parent=0 // pred_fallthru
    _
  // Predicated region
  $region22: #{_lambda_.28} parent=0 // pred_check
    _
  $region23: #{_lambda_.28} parent=0 // pred_check_branch
    %214 = sbr.rel (0) target = $region25
  $region24: #{_lambda_.28} parent=0 // pred_region
    _
  $region25: #{_lambda_.28} parent=0 // pred_fallthru
    _

// kernel: _lambda_.29
$region0: #{_lambda_.29}
  #allocation0 [shape = 'u32[]', space=smem, size = 0x4, offset = 0x4, fixed_abs, tag = 'smem constant byte address 0x4 - core index']
  #allocation1 [shape = 'u32[144,128]{1,0:T(1,128)}', space=vmem, size = 0x12000, scoped, tag = 'internal scratch']
  %s0 = inlined_call_operand.vmem [shape: bf16[64,512], index: 0, kind: input, shape index: {}]
  %s1 = inlined_call_operand.vmem [shape: bf16[64,64], index: 1, kind: input, shape index: {}]
  %s2 = inlined_call_operand.vmem [shape: f32[1,64], index: 2, kind: input, shape index: {}]
  %s3 = inlined_call_operand.vmem [shape: f32[1,64], index: 3, kind: input, shape index: {}]
  %s4 = inlined_call_operand.vmem [shape: bf16[64,64], index: 4, kind: input, shape index: {}]
  %s5 = inlined_call_operand.vmem [shape: bf16[64,64], index: 5, kind: output, shape index: {}]
  %s6 = sld [smem:[#allocation0]]
  $region30: #{_lambda_.29} parent=0
    _
  %s8 = ssub.s32 1, %s6
  %s9 = scalar_select 0, %s8, %s6
  // Predicated region
  $region2: #{_lambda_.29} parent=0 // pred_check
    _
  $region3: #{_lambda_.29} parent=0 // pred_check_branch
    %11 = sbr.rel (0) target = $region5
  $region4: #{_lambda_.29} parent=0 // pred_region
    _
  $region5: #{_lambda_.29} parent=0 // pred_fallthru
    _
  // Predicated region
  $region6: #{_lambda_.29} parent=0 // pred_check
    _
  $region7: #{_lambda_.29} parent=0 // pred_check_branch
    %13 = sbr.rel (0) target = $region9
  $region8: #{_lambda_.29} parent=0 // pred_region
    _
  $region9: #{_lambda_.29} parent=0 // pred_fallthru
    _
  // Predicated region
  $region10: #{_lambda_.29} parent=0 // pred_check
    _
  $region11: #{_lambda_.29} parent=0 // pred_check_branch
    %15 = sbr.rel (0) target = $region13
  $region12: #{_lambda_.29} parent=0 // pred_region
    _
  $region13: #{_lambda_.29} parent=0 // pred_fallthru
    _
  // Predicated region
  $region14: #{_lambda_.29} parent=0 // pred_check
    _
  $region15: #{_lambda_.29} parent=0 // pred_check_branch
    %17 = sbr.rel (0) target = $region17
  $region16: #{_lambda_.29} parent=0 // pred_region
    _
  $region17: #{_lambda_.29} parent=0 // pred_fallthru
    _
  // Predicated region
  $region18: #{_lambda_.29} parent=0 // pred_check
    _
  $region19: #{_lambda_.29} parent=0 // pred_check_branch
    %19 = sbr.rel (0) target = $region21
  $region20: #{_lambda_.29} parent=0 // pred_region
    _
  $region21: #{_lambda_.29} parent=0 // pred_fallthru
    _
  %v20 = vld [vmem:[%s0] sm:$0xff]
  %v21 = vld [vmem:[%s0 + $0x8] sm:$0xff]
  %v22 = vld [vmem:[%s0 + $0x10] sm:$0xff]
  %v23 = vld [vmem:[%s0 + $0x18] sm:$0xff]
  %v24 = vld [vmem:[%s0 + $0x20] sm:$0xff]
  %v25 = vld [vmem:[%s0 + $0x28] sm:$0xff]
  %v26 = vld [vmem:[%s0 + $0x30] sm:$0xff]
  %v27 = vld [vmem:[%s0 + $0x38] sm:$0xff]
  %v28 = vld [vmem:[%s0 + $0x40] sm:$0xff]
  %v29 = vld [vmem:[%s0 + $0x48] sm:$0xff]
  %v30 = vld [vmem:[%s0 + $0x50] sm:$0xff]
  %v31 = vld [vmem:[%s0 + $0x58] sm:$0xff]
  %v32 = vld [vmem:[%s0 + $0x60] sm:$0xff]
  %v33 = vld [vmem:[%s0 + $0x68] sm:$0xff]
  %v34 = vld [vmem:[%s0 + $0x70] sm:$0xff]
  %v35 = vld [vmem:[%s0 + $0x78] sm:$0xff]
  %v36 = vunpack.c.l.bf16 %v20
  %v37 = vunpack.c.h.bf16 %v20
  %v38 = vunpack.c.l.bf16 %v21
  %v39 = vunpack.c.h.bf16 %v21
  %v40 = vunpack.c.l.bf16 %v22
  %v41 = vunpack.c.h.bf16 %v22
  %v42 = vunpack.c.l.bf16 %v23
  %v43 = vunpack.c.h.bf16 %v23
  %v44 = vunpack.c.l.bf16 %v24
  %v45 = vunpack.c.h.bf16 %v24
  %v46 = vunpack.c.l.bf16 %v25
  %v47 = vunpack.c.h.bf16 %v25
  %v48 = vunpack.c.l.bf16 %v26
  %v49 = vunpack.c.h.bf16 %v26
  %v50 = vunpack.c.l.bf16 %v27
  %v51 = vunpack.c.h.bf16 %v27
  %v52 = vunpack.c.l.bf16 %v28
  %v53 = vunpack.c.h.bf16 %v28
  %v54 = vunpack.c.l.bf16 %v29
  %v55 = vunpack.c.h.bf16 %v29
  %v56 = vunpack.c.l.bf16 %v30
  %v57 = vunpack.c.h.bf16 %v30
  %v58 = vunpack.c.l.bf16 %v31
  %v59 = vunpack.c.h.bf16 %v31
  %v60 = vunpack.c.l.bf16 %v32
  %v61 = vunpack.c.h.bf16 %v32
  %v62 = vunpack.c.l.bf16 %v33
  %v63 = vunpack.c.h.bf16 %v33
  %v64 = vunpack.c.l.bf16 %v34
  %v65 = vunpack.c.h.bf16 %v34
  %v66 = vunpack.c.l.bf16 %v35
  %v67 = vunpack.c.h.bf16 %v35
  %68 = vrot.lane.b32.xlu0 %v36, 64
  %v69 = vpop.permute.xlu0 %68
  %70 = vrot.lane.b32.xlu0 %v40, 64
  %v71 = vpop.permute.xlu0 %70
  %72 = vrot.lane.b32.xlu0 %v44, 64
  %v73 = vpop.permute.xlu0 %72
  %74 = vrot.lane.b32.xlu0 %v48, 64
  %v75 = vpop.permute.xlu0 %74
  %76 = vrot.lane.b32.xlu0 %v52, 64
  %v77 = vpop.permute.xlu0 %76
  %78 = vrot.lane.b32.xlu0 %v56, 64
  %v79 = vpop.permute.xlu0 %78
  %80 = vrot.lane.b32.xlu0 %v60, 64
  %v81 = vpop.permute.xlu0 %80
  %82 = vrot.lane.b32.xlu0 %v64, 64
  %v83 = vpop.permute.xlu0 %82
  %84 = vrot.lane.b32.xlu0 %v37, 64
  %v85 = vpop.permute.xlu0 %84
  %86 = vrot.lane.b32.xlu0 %v41, 64
  %v87 = vpop.permute.xlu0 %86
  %88 = vrot.lane.b32.xlu0 %v45, 64
  %v89 = vpop.permute.xlu0 %88
  %90 = vrot.lane.b32.xlu0 %v49, 64
  %v91 = vpop.permute.xlu0 %90
  %92 = vrot.lane.b32.xlu0 %v53, 64
  %v93 = vpop.permute.xlu0 %92
  %94 = vrot.lane.b32.xlu0 %v57, 64
  %v95 = vpop.permute.xlu0 %94
  %96 = vrot.lane.b32.xlu0 %v61, 64
  %v97 = vpop.permute.xlu0 %96
  %98 = vrot.lane.b32.xlu0 %v65, 64
  %v99 = vpop.permute.xlu0 %98
  %100 = vrot.lane.b32.xlu0 %v38, 64
  %v101 = vpop.permute.xlu0 %100
  %102 = vrot.lane.b32.xlu0 %v42, 64
  %v103 = vpop.permute.xlu0 %102
  %104 = vrot.lane.b32.xlu0 %v46, 64
  %v105 = vpop.permute.xlu0 %104
  %106 = vrot.lane.b32.xlu0 %v50, 64
  %v107 = vpop.permute.xlu0 %106
  %108 = vrot.lane.b32.xlu0 %v54, 64
  %v109 = vpop.permute.xlu0 %108
  %110 = vrot.lane.b32.xlu0 %v58, 64
  %v111 = vpop.permute.xlu0 %110
  %112 = vrot.lane.b32.xlu0 %v62, 64
  %v113 = vpop.permute.xlu0 %112
  %114 = vrot.lane.b32.xlu0 %v66, 64
  %v115 = vpop.permute.xlu0 %114
  %116 = vrot.lane.b32.xlu0 %v39, 64
  %v117 = vpop.permute.xlu0 %116
  %118 = vrot.lane.b32.xlu0 %v43, 64
  %v119 = vpop.permute.xlu0 %118
  %120 = vrot.lane.b32.xlu0 %v47, 64
  %v121 = vpop.permute.xlu0 %120
  %122 = vrot.lane.b32.xlu0 %v51, 64
  %v123 = vpop.permute.xlu0 %122
  %124 = vrot.lane.b32.xlu0 %v55, 64
  %v125 = vpop.permute.xlu0 %124
  %126 = vrot.lane.b32.xlu0 %v59, 64
  %v127 = vpop.permute.xlu0 %126
  %128 = vrot.lane.b32.xlu0 %v63, 64
  %v129 = vpop.permute.xlu0 %128
  %130 = vrot.lane.b32.xlu0 %v67, 64
  %v131 = vpop.permute.xlu0 %130
  %v132 = vlaneseq
  %v133 = vand.u32 %v132, 127
  %vm134 = vcmp.lt.s32.totalorder %v133, 64
  %v135 = vsel %vm134, %v101, %v117
  %v136 = vsel %vm134, %v103, %v119
  %v137 = vsel %vm134, %v105, %v121
  %v138 = vsel %vm134, %v107, %v123
  %v139 = vsel %vm134, %v109, %v125
  %v140 = vsel %vm134, %v111, %v127
  %v141 = vsel %vm134, %v113, %v129
  %v142 = vsel %vm134, %v115, %v131
  %v143 = vsel %vm134, %v85, %v101
  %v144 = vsel %vm134, %v87, %v103
  %v145 = vsel %vm134, %v89, %v105
  %v146 = vsel %vm134, %v91, %v107
  %v147 = vsel %vm134, %v93, %v109
  %v148 = vsel %vm134, %v95, %v111
  %v149 = vsel %vm134, %v97, %v113
  %v150 = vsel %vm134, %v99, %v115
  %v151 = vsel %vm134, %v69, %v85
  %v152 = vsel %vm134, %v71, %v87
  %v153 = vsel %vm134, %v73, %v89
  %v154 = vsel %vm134, %v75, %v91
  %v155 = vsel %vm134, %v77, %v93
  %v156 = vsel %vm134, %v79, %v95
  %v157 = vsel %vm134, %v81, %v97
  %v158 = vsel %vm134, %v83, %v99
  %v159 = vsel %vm134, %v117, %v69
  %v160 = vsel %vm134, %v119, %v71
  %v161 = vsel %vm134, %v121, %v73
  %v162 = vsel %vm134, %v123, %v75
  %v163 = vsel %vm134, %v125, %v77
  %v164 = vsel %vm134, %v127, %v79
  %v165 = vsel %vm134, %v129, %v81
  %v166 = vsel %vm134, %v131, %v83
  %v167 = vmax.f32 %v36, %v159
  %v168 = vmax.f32 %v37, %v151
  %v169 = vmax.f32 %v38, %v143
  %v170 = vmax.f32 %v39, %v135
  %v171 = vmax.f32 %v40, %v160
  %v172 = vmax.f32 %v41, %v152
  %v173 = vmax.f32 %v42, %v144
  %v174 = vmax.f32 %v43, %v136
  %v175 = vmax.f32 %v44, %v161
  %v176 = vmax.f32 %v45, %v153
  %v177 = vmax.f32 %v46, %v145
  %v178 = vmax.f32 %v47, %v137
  %v179 = vmax.f32 %v48, %v162
  %v180 = vmax.f32 %v49, %v154
  %v181 = vmax.f32 %v50, %v146
  %v182 = vmax.f32 %v51, %v138
  %v183 = vmax.f32 %v52, %v163
  %v184 = vmax.f32 %v53, %v155
  %v185 = vmax.f32 %v54, %v147
  %v186 = vmax.f32 %v55, %v139
  %v187 = vmax.f32 %v56, %v164
  %v188 = vmax.f32 %v57, %v156
  %v189 = vmax.f32 %v58, %v148
  %v190 = vmax.f32 %v59, %v140
  %v191 = vmax.f32 %v60, %v165
  %v192 = vmax.f32 %v61, %v157
  %v193 = vmax.f32 %v62, %v149
  %v194 = vmax.f32 %v63, %v141
  %v195 = vmax.f32 %v64, %v166
  %v196 = vmax.f32 %v65, %v158
  %v197 = vmax.f32 %v66, %v150
  %v198 = vmax.f32 %v67, %v142
  %v199 = vmax.f32 %v167, %v170
  %v200 = vmax.f32 %v169, %v168
  %v201 = vmax.f32 %v171, %v174
  %v202 = vmax.f32 %v173, %v172
  %v203 = vmax.f32 %v175, %v178
  %v204 = vmax.f32 %v177, %v176
  %v205 = vmax.f32 %v179, %v182
  %v206 = vmax.f32 %v181, %v180
  %v207 = vmax.f32 %v183, %v186
  %v208 = vmax.f32 %v185, %v184
  %v209 = vmax.f32 %v187, %v190
  %v210 = vmax.f32 %v189, %v188
  %v211 = vmax.f32 %v191, %v194
  %v212 = vmax.f32 %v193, %v192
  %v213 = vmax.f32 %v195, %v198
  %v214 = vmax.f32 %v197, %v196
  %v215 = vmax.f32 %v199, %v200
  %v216 = vmax.f32 %v201, %v202
  %v217 = vmax.f32 %v203, %v204
  %v218 = vmax.f32 %v205, %v206
  %v219 = vmax.f32 %v207, %v208
  %v220 = vmax.f32 %v209, %v210
  %v221 = vmax.f32 %v211, %v212
  %v222 = vmax.f32 %v213, %v214
  %v223 = vld [vmem:[%s1] sm:$0xf]
  %v224 = vld [vmem:[%s1 + $0x4] sm:$0xf]
  %v225 = vld [vmem:[%s1 + $0x8] sm:$0xf]
  %v226 = vld [vmem:[%s1 + $0xc] sm:$0xf]
  %v227 = vld [vmem:[%s1 + $0x10] sm:$0xf]
  %v228 = vld [vmem:[%s1 + $0x14] sm:$0xf]
  %v229 = vld [vmem:[%s1 + $0x18] sm:$0xf]
  %v230 = vld [vmem:[%s1 + $0x1c] sm:$0xf]
  %v231 = vunpack.c.l.bf16 %v223
  %v232 = vunpack.c.l.bf16 %v224
  %v233 = vunpack.c.l.bf16 %v225
  %v234 = vunpack.c.l.bf16 %v226
  %v235 = vunpack.c.l.bf16 %v227
  %v236 = vunpack.c.l.bf16 %v228
  %v237 = vunpack.c.l.bf16 %v229
  %v238 = vunpack.c.l.bf16 %v230
  %v239 = vsub.f32 %v215, %v231
  %v240 = vsub.f32 %v216, %v232
  %v241 = vsub.f32 %v217, %v233
  %v242 = vsub.f32 %v218, %v234
  %v243 = vsub.f32 %v219, %v235
  %v244 = vsub.f32 %v220, %v236
  %v245 = vsub.f32 %v221, %v237
  %v246 = vsub.f32 %v222, %v238
  %v247 = vld [vmem:[%s2] sm:$0x1]
  %v249 = vlaneseq
  %v250 = vshrl.u32 %v249, 7
  %v251 = vsub.s32 0, %v250
  %v252 = vrot.slane %v247, %v251
  %v254 = vmul.f32 %v239, %v252
  %v255 = vmul.f32 %v240, %v252
  %v256 = vmul.f32 %v241, %v252
  %v257 = vmul.f32 %v242, %v252
  %v258 = vmul.f32 %v243, %v252
  %v259 = vmul.f32 %v244, %v252
  %v260 = vmul.f32 %v245, %v252
  %v261 = vmul.f32 %v246, %v252
  %v262 = vld [vmem:[%s3] sm:$0x1]
  %v264 = vlaneseq
  %v265 = vshrl.u32 %v264, 7
  %v266 = vsub.s32 0, %v265
  %v267 = vrot.slane %v262, %v266
  %v269 = vadd.f32 %v254, %v267
  %v270 = vadd.f32 %v255, %v267
  %v271 = vadd.f32 %v256, %v267
  %v272 = vadd.f32 %v257, %v267
  %v273 = vadd.f32 %v258, %v267
  %v274 = vadd.f32 %v259, %v267
  %v275 = vadd.f32 %v260, %v267
  %v276 = vadd.f32 %v261, %v267
  %v277 = vld [vmem:[%s4] sm:$0xf]
  %v278 = vld [vmem:[%s4 + $0x4] sm:$0xf]
  %v279 = vld [vmem:[%s4 + $0x8] sm:$0xf]
  %v280 = vld [vmem:[%s4 + $0xc] sm:$0xf]
  %v281 = vld [vmem:[%s4 + $0x10] sm:$0xf]
  %v282 = vld [vmem:[%s4 + $0x14] sm:$0xf]
  %v283 = vld [vmem:[%s4 + $0x18] sm:$0xf]
  %v284 = vld [vmem:[%s4 + $0x1c] sm:$0xf]
  %v285 = vunpack.c.l.bf16 %v277
  %v286 = vunpack.c.l.bf16 %v278
  %v287 = vunpack.c.l.bf16 %v279
  %v288 = vunpack.c.l.bf16 %v280
  %v289 = vunpack.c.l.bf16 %v281
  %v290 = vunpack.c.l.bf16 %v282
  %v291 = vunpack.c.l.bf16 %v283
  %v292 = vunpack.c.l.bf16 %v284
  %v293 = vadd.f32 %v269, %v285
  %v294 = vadd.f32 %v270, %v286
  %v295 = vadd.f32 %v271, %v287
  %v296 = vadd.f32 %v272, %v288
  %v297 = vadd.f32 %v273, %v289
  %v298 = vadd.f32 %v274, %v290
  %v299 = vadd.f32 %v275, %v291
  %v300 = vadd.f32 %v276, %v292
  %v301 = vpack.c.bf16 %v294, %v293
  %v302 = vpack.c.bf16 %v296, %v295
  %v303 = vpack.c.bf16 %v298, %v297
  %v304 = vpack.c.bf16 %v300, %v299
  %v309 = vunpack.c.l.b16 %v301
  %v310 = vunpack.c.h.b16 %v301
  %v311 = vunpack.c.l.b16 %v302
  %v312 = vunpack.c.h.b16 %v302
  %v313 = vunpack.c.l.b16 %v303
  %v314 = vunpack.c.h.b16 %v303
  %v315 = vunpack.c.l.b16 %v304
  %v316 = vunpack.c.h.b16 %v304
  %v317 = vpack.c.b16 %v309, %v309
  %v318 = vpack.c.b16 %v310, %v310
  %v319 = vpack.c.b16 %v311, %v311
  %v320 = vpack.c.b16 %v312, %v312
  %v321 = vpack.c.b16 %v313, %v313
  %v322 = vpack.c.b16 %v314, %v314
  %v323 = vpack.c.b16 %v315, %v315
  %v324 = vpack.c.b16 %v316, %v316
  %vm333 = vcmask 519168
  %334 = vst.msk [vmem:[%s5] sm:$0xf] %vm333, %v317
  %335 = vst.msk [vmem:[%s5 + $0x4] sm:$0xf] %vm333, %v318
  %336 = vst.msk [vmem:[%s5 + $0x8] sm:$0xf] %vm333, %v319
  %337 = vst.msk [vmem:[%s5 + $0xc] sm:$0xf] %vm333, %v320
  %338 = vst.msk [vmem:[%s5 + $0x10] sm:$0xf] %vm333, %v321
  %339 = vst.msk [vmem:[%s5 + $0x14] sm:$0xf] %vm333, %v322
  %340 = vst.msk [vmem:[%s5 + $0x18] sm:$0xf] %vm333, %v323
  %341 = vst.msk [vmem:[%s5 + $0x1c] sm:$0xf] %vm333, %v324
  // Predicated region
  $region22: #{_lambda_.29} parent=0 // pred_check
    _
  $region23: #{_lambda_.29} parent=0 // pred_check_branch
    %343 = sbr.rel (0) target = $region25
  $region24: #{_lambda_.29} parent=0 // pred_region
    _
  $region25: #{_lambda_.29} parent=0 // pred_fallthru
    _
  // Predicated region
  $region26: #{_lambda_.29} parent=0 // pred_check
    _
  $region27: #{_lambda_.29} parent=0 // pred_check_branch
    %345 = sbr.rel (0) target = $region29
  $region28: #{_lambda_.29} parent=0 // pred_region
    _
  $region29: #{_lambda_.29} parent=0 // pred_fallthru
    _

// kernel: _lambda_.32
$region0: #{_lambda_.32}
  #allocation0 [shape = 'u32[]', space=smem, size = 0x4, offset = 0x4, fixed_abs, tag = 'smem constant byte address 0x4 - core index']
  #allocation1 [shape = 'u32[144,128]{1,0:T(1,128)}', space=vmem, size = 0x12000, scoped, tag = 'internal scratch']
  %s0 = inlined_call_operand.vmem [shape: bf16[32,64], index: 0, kind: input, shape index: {}]
  %s1 = inlined_call_operand.vmem [shape: bf16[64,64], index: 1, kind: input, shape index: {}]
  %s2 = inlined_call_operand.vmem [shape: f32[1,64], index: 2, kind: input, shape index: {}]
  %s3 = inlined_call_operand.vmem [shape: f32[1,64], index: 3, kind: input, shape index: {}]
  %s4 = inlined_call_operand.vmem [shape: bf16[32,64], index: 4, kind: output, shape index: {}]
  %s5 = sld [smem:[#allocation0]]
  $region26: #{_lambda_.32} parent=0
    _
  %s7 = ssub.s32 1, %s5
  %s8 = scalar_select 0, %s7, %s5
  // Predicated region
  $region2: #{_lambda_.32} parent=0 // pred_check
    _
  $region3: #{_lambda_.32} parent=0 // pred_check_branch
    %10 = sbr.rel (0) target = $region5
  $region4: #{_lambda_.32} parent=0 // pred_region
    _
  $region5: #{_lambda_.32} parent=0 // pred_fallthru
    _
  // Predicated region
  $region6: #{_lambda_.32} parent=0 // pred_check
    _
  $region7: #{_lambda_.32} parent=0 // pred_check_branch
    %12 = sbr.rel (0) target = $region9
  $region8: #{_lambda_.32} parent=0 // pred_region
    _
  $region9: #{_lambda_.32} parent=0 // pred_fallthru
    _
  // Predicated region
  $region10: #{_lambda_.32} parent=0 // pred_check
    _
  $region11: #{_lambda_.32} parent=0 // pred_check_branch
    %14 = sbr.rel (0) target = $region13
  $region12: #{_lambda_.32} parent=0 // pred_region
    _
  $region13: #{_lambda_.32} parent=0 // pred_fallthru
    _
  // Predicated region
  $region14: #{_lambda_.32} parent=0 // pred_check
    _
  $region15: #{_lambda_.32} parent=0 // pred_check_branch
    %16 = sbr.rel (0) target = $region17
  $region16: #{_lambda_.32} parent=0 // pred_region
    _
  $region17: #{_lambda_.32} parent=0 // pred_fallthru
    _
  %v18 = vld [vmem:[%s0] sm:$0xf]
  %v19 = vld [vmem:[%s0 + $0x4] sm:$0xf]
  %v20 = vld [vmem:[%s0 + $0x8] sm:$0xf]
  %v21 = vld [vmem:[%s0 + $0xc] sm:$0xf]
  %v22 = vld [vmem:[%s1] sm:$0xf]
  %v23 = vld [vmem:[%s1 + $0x4] sm:$0xf]
  %v24 = vld [vmem:[%s1 + $0x8] sm:$0xf]
  %v25 = vld [vmem:[%s1 + $0xc] sm:$0xf]
  %v26 = vld [vmem:[%s1 + $0x10] sm:$0xf]
  %v27 = vld [vmem:[%s1 + $0x14] sm:$0xf]
  %v28 = vld [vmem:[%s1 + $0x18] sm:$0xf]
  %v29 = vld [vmem:[%s1 + $0x1c] sm:$0xf]
  %v34 = vunpack.c.l.b16 %v18
  %v35 = vunpack.c.l.b16 %v19
  %v36 = vunpack.c.l.b16 %v20
  %v37 = vunpack.c.l.b16 %v21
  %v38 = vpack.c.b16 %v35, %v34
  %v39 = vpack.c.b16 %v37, %v36
  %v48 = vunpack.c.l.b16 %v22
  %v49 = vunpack.c.l.b16 %v23
  %v50 = vunpack.c.l.b16 %v24
  %v51 = vunpack.c.l.b16 %v25
  %v52 = vunpack.c.l.b16 %v26
  %v53 = vunpack.c.l.b16 %v27
  %v54 = vunpack.c.l.b16 %v28
  %v55 = vunpack.c.l.b16 %v29
  %v56 = vpack.c.b16 %v49, %v48
  %v57 = vpack.c.b16 %v51, %v50
  %v58 = vpack.c.b16 %v53, %v52
  %v59 = vpack.c.b16 %v55, %v54
  %vm64 = vcmask 523264
  %v66 = vsel %vm64, %v38, 0
  %v69 = vsel %vm64, %v39, 0
  %71 = vmatprep.subr.bf16.mxu0 0
  %72 = vmatpush1.bf16.msra.mxu0 %v56
  %73 = vmatprep.subr.bf16.mxu0 0
  %74 = vmatpush1.bf16.msra.mxu0 %v57
  %75 = vmatprep.subr.bf16.mxu0 0
  %76 = vmatpush1.bf16.msra.mxu0 %v58
  %77 = vmatprep.subr.bf16.mxu0 0
  %78 = vmatpush1.bf16.msra.mxu0 %v59
  %79 = vmatprep.subr.bf16.mxu0 0
  %80 = vmatpush1.bf16.msra.mxu0 0
  %81 = vmatprep.subr.bf16.mxu0 0
  %82 = vmatpush1.bf16.msra.mxu0 0
  %83 = vmatprep.subr.bf16.mxu0 0
  %84 = vmatpush1.bf16.msra.mxu0 0
  %85 = vmatprep.subr.bf16.mxu0 0
  %86 = vmatpush1.bf16.msra.mxu0 0
  %87 = vmatprep.subr.bf16.mxu0 0
  %88 = vmatpush1.bf16.msra.mxu0 0
  %89 = vmatprep.subr.bf16.mxu0 0
  %90 = vmatpush1.bf16.msra.mxu0 0
  %91 = vmatprep.subr.bf16.mxu0 0
  %92 = vmatpush1.bf16.msra.mxu0 0
  %93 = vmatprep.subr.bf16.mxu0 0
  %94 = vmatpush1.bf16.msra.mxu0 0
  %95 = vmatprep.subr.bf16.mxu0 0
  %96 = vmatpush1.bf16.msra.mxu0 0
  %97 = vmatprep.subr.bf16.mxu0 0
  %98 = vmatpush1.bf16.msra.mxu0 0
  %99 = vmatprep.subr.bf16.mxu0 0
  %100 = vmatpush1.bf16.msra.mxu0 0
  %101 = vmatprep.subr.bf16.mxu0 0
  %102 = vmatpush1.bf16.msra.mxu0 0
  %103 = vmatprep.mubr.bf16.mxu0 0
  %104 = vmatmul.mubr.bf16.gmra.mrb[0].mxu0 %v66
  %v105 = vpop.f32.mrb[0].mxu0
  %v106 = vadd.f32 0.0, %v105
  %v107 = vpop.f32.mrb[0].mxu0
  %v108 = vpop.f32.mrb[0].mxu0
  %v109 = vadd.f32 0.0, %v108
  %v110 = vpop.f32.mrb[0].mxu0
  %111 = vmatprep.mubr.bf16.mxu0 0
  %112 = vmatmul.mubr.bf16.gmra.mrb[0].mxu0 %v69
  %v113 = vpop.f32.mrb[0].mxu0
  %v114 = vadd.f32 0.0, %v113
  %v115 = vpop.f32.mrb[0].mxu0
  %v116 = vpop.f32.mrb[0].mxu0
  %v117 = vadd.f32 0.0, %v116
  %v118 = vpop.f32.mrb[0].mxu0
  %119 = vdwg.mxu0
  %v120 = vld [vmem:[%s2] sm:$0x1]
  %v122 = vlaneseq
  %v123 = vshrl.u32 %v122, 7
  %v124 = vsub.s32 0, %v123
  %v125 = vrot.slane %v120, %v124
  %v127 = vmul.f32 %v106, %v125
  %v128 = vmul.f32 %v109, %v125
  %v129 = vmul.f32 %v114, %v125
  %v130 = vmul.f32 %v117, %v125
  %v131 = vld [vmem:[%s3] sm:$0x1]
  %v133 = vlaneseq
  %v134 = vshrl.u32 %v133, 7
  %v135 = vsub.s32 0, %v134
  %v136 = vrot.slane %v131, %v135
  %v138 = vadd.f32 %v127, %v136
  %v139 = vadd.f32 %v128, %v136
  %v140 = vadd.f32 %v129, %v136
  %v141 = vadd.f32 %v130, %v136
  %v142 = vpack.c.bf16 %v139, %v138
  %v143 = vpack.c.bf16 %v141, %v140
  %v146 = vunpack.c.l.b16 %v142
  %v147 = vunpack.c.h.b16 %v142
  %v148 = vunpack.c.l.b16 %v143
  %v149 = vunpack.c.h.b16 %v143
  %v150 = vpack.c.b16 %v146, %v146
  %v151 = vpack.c.b16 %v147, %v147
  %v152 = vpack.c.b16 %v148, %v148
  %v153 = vpack.c.b16 %v149, %v149
  %vm158 = vcmask 519168
  %159 = vst.msk [vmem:[%s4] sm:$0xf] %vm158, %v150
  %160 = vst.msk [vmem:[%s4 + $0x4] sm:$0xf] %vm158, %v151
  %161 = vst.msk [vmem:[%s4 + $0x8] sm:$0xf] %vm158, %v152
  %162 = vst.msk [vmem:[%s4 + $0xc] sm:$0xf] %vm158, %v153
  // Predicated region
  $region18: #{_lambda_.32} parent=0 // pred_check
    _
  $region19: #{_lambda_.32} parent=0 // pred_check_branch
    %164 = sbr.rel (0) target = $region21
  $region20: #{_lambda_.32} parent=0 // pred_region
    _
  $region21: #{_lambda_.32} parent=0 // pred_fallthru
    _
  // Predicated region
  $region22: #{_lambda_.32} parent=0 // pred_check
    _
  $region23: #{_lambda_.32} parent=0 // pred_check_branch
    %166 = sbr.rel (0) target = $region25
  $region24: #{_lambda_.32} parent=0 // pred_region
    _
  $region25: #{_lambda_.32} parent=0 // pred_fallthru
    _

// kernel: _lambda_.31
$region0: #{_lambda_.31}
  #allocation0 [shape = 'u32[]', space=smem, size = 0x4, offset = 0x4, fixed_abs, tag = 'smem constant byte address 0x4 - core index']
  #allocation1 [shape = 'u32[144,128]{1,0:T(1,128)}', space=vmem, size = 0x12000, scoped, tag = 'internal scratch']
  %s0 = inlined_call_operand.vmem [shape: bf16[32,64], index: 0, kind: input, shape index: {}, may-alias: {0,6}]
  %s1 = inlined_call_operand.vmem [shape: bf16[64,128], index: 1, kind: input, shape index: {}]
  %s2 = inlined_call_operand.vmem [shape: f32[1,128], index: 2, kind: input, shape index: {}]
  %s3 = inlined_call_operand.vmem [shape: bf16[128,64], index: 3, kind: input, shape index: {}]
  %s4 = inlined_call_operand.vmem [shape: f32[1,64], index: 4, kind: input, shape index: {}]
  %s5 = inlined_call_operand.vmem [shape: f32[1,64], index: 5, kind: input, shape index: {}]
  %s6 = inlined_call_operand.vmem [shape: bf16[32,64], index: 6, kind: input, shape index: {}, may-alias: {0,6}]
  %s7 = inlined_call_operand.vmem [shape: bf16[32,64], index: 7, kind: output, shape index: {}]
  %s8 = sld [smem:[#allocation0]]
  $region38: #{_lambda_.31} parent=0
    _
  %s10 = ssub.s32 1, %s8
  %s11 = scalar_select 0, %s10, %s8
  // Predicated region
  $region2: #{_lambda_.31} parent=0 // pred_check
    _
  $region3: #{_lambda_.31} parent=0 // pred_check_branch
    %13 = sbr.rel (0) target = $region5
  $region4: #{_lambda_.31} parent=0 // pred_region
    _
  $region5: #{_lambda_.31} parent=0 // pred_fallthru
    _
  // Predicated region
  $region6: #{_lambda_.31} parent=0 // pred_check
    _
  $region7: #{_lambda_.31} parent=0 // pred_check_branch
    %15 = sbr.rel (0) target = $region9
  $region8: #{_lambda_.31} parent=0 // pred_region
    _
  $region9: #{_lambda_.31} parent=0 // pred_fallthru
    _
  // Predicated region
  $region10: #{_lambda_.31} parent=0 // pred_check
    _
  $region11: #{_lambda_.31} parent=0 // pred_check_branch
    %17 = sbr.rel (0) target = $region13
  $region12: #{_lambda_.31} parent=0 // pred_region
    _
  $region13: #{_lambda_.31} parent=0 // pred_fallthru
    _
  // Predicated region
  $region14: #{_lambda_.31} parent=0 // pred_check
    _
  $region15: #{_lambda_.31} parent=0 // pred_check_branch
    %19 = sbr.rel (0) target = $region17
  $region16: #{_lambda_.31} parent=0 // pred_region
    _
  $region17: #{_lambda_.31} parent=0 // pred_fallthru
    _
  // Predicated region
  $region18: #{_lambda_.31} parent=0 // pred_check
    _
  $region19: #{_lambda_.31} parent=0 // pred_check_branch
    %21 = sbr.rel (0) target = $region21
  $region20: #{_lambda_.31} parent=0 // pred_region
    _
  $region21: #{_lambda_.31} parent=0 // pred_fallthru
    _
  // Predicated region
  $region22: #{_lambda_.31} parent=0 // pred_check
    _
  $region23: #{_lambda_.31} parent=0 // pred_check_branch
    %23 = sbr.rel (0) target = $region25
  $region24: #{_lambda_.31} parent=0 // pred_region
    _
  $region25: #{_lambda_.31} parent=0 // pred_fallthru
    _
  // Predicated region
  $region26: #{_lambda_.31} parent=0 // pred_check
    _
  $region27: #{_lambda_.31} parent=0 // pred_check_branch
    %25 = sbr.rel (0) target = $region29
  $region28: #{_lambda_.31} parent=0 // pred_region
    _
  $region29: #{_lambda_.31} parent=0 // pred_fallthru
    _
  %v27 = vld [vmem:[%s0] sm:$0xf]
  %v28 = vld [vmem:[%s0 + $0x4] sm:$0xf]
  %v29 = vld [vmem:[%s0 + $0x8] sm:$0xf]
  %v30 = vld [vmem:[%s0 + $0xc] sm:$0xf]
  %v31 = vld [vmem:[%s1] sm:$0xf]
  %v32 = vld [vmem:[%s1 + $0x4] sm:$0xf]
  %v33 = vld [vmem:[%s1 + $0x8] sm:$0xf]
  %v34 = vld [vmem:[%s1 + $0xc] sm:$0xf]
  %v35 = vld [vmem:[%s1 + $0x10] sm:$0xf]
  %v36 = vld [vmem:[%s1 + $0x14] sm:$0xf]
  %v37 = vld [vmem:[%s1 + $0x18] sm:$0xf]
  %v38 = vld [vmem:[%s1 + $0x1c] sm:$0xf]
  %v39 = vld [vmem:[%s2] sm:$0x1]
  %v41 = vlaneseq
  %v42 = vshrl.u32 %v41, 7
  %v43 = vsub.s32 0, %v42
  %v44 = vrot.slane %v39, %v43
  %v50 = vunpack.c.l.b16 %v27
  %v51 = vunpack.c.l.b16 %v28
  %v52 = vunpack.c.l.b16 %v29
  %v53 = vunpack.c.l.b16 %v30
  %v54 = vpack.c.b16 %v51, %v50
  %v55 = vpack.c.b16 %v53, %v52
  %v64 = vunpack.c.l.b16 %v31
  %v65 = vunpack.c.l.b16 %v32
  %v66 = vunpack.c.l.b16 %v33
  %v67 = vunpack.c.l.b16 %v34
  %v68 = vunpack.c.l.b16 %v35
  %v69 = vunpack.c.l.b16 %v36
  %v70 = vunpack.c.l.b16 %v37
  %v71 = vunpack.c.l.b16 %v38
  %v72 = vpack.c.b16 %v65, %v64
  %v73 = vpack.c.b16 %v67, %v66
  %v74 = vpack.c.b16 %v69, %v68
  %v75 = vpack.c.b16 %v71, %v70
  %vm80 = vcmask 523264
  %v82 = vsel %vm80, %v54, 0
  %v85 = vsel %vm80, %v55, 0
  %87 = vmatprep.subr.bf16.mxu0 0
  %88 = vmatpush1.bf16.msra.mxu0 %v72
  %89 = vmatprep.subr.bf16.mxu0 0
  %90 = vmatpush1.bf16.msra.mxu0 %v73
  %91 = vmatprep.subr.bf16.mxu0 0
  %92 = vmatpush1.bf16.msra.mxu0 %v74
  %93 = vmatprep.subr.bf16.mxu0 0
  %94 = vmatpush1.bf16.msra.mxu0 %v75
  %95 = vmatprep.subr.bf16.mxu0 0
  %96 = vmatpush1.bf16.msra.mxu0 0
  %97 = vmatprep.subr.bf16.mxu0 0
  %98 = vmatpush1.bf16.msra.mxu0 0
  %99 = vmatprep.subr.bf16.mxu0 0
  %100 = vmatpush1.bf16.msra.mxu0 0
  %101 = vmatprep.subr.bf16.mxu0 0
  %102 = vmatpush1.bf16.msra.mxu0 0
  %103 = vmatprep.subr.bf16.mxu0 0
  %104 = vmatpush1.bf16.msra.mxu0 0
  %105 = vmatprep.subr.bf16.mxu0 0
  %106 = vmatpush1.bf16.msra.mxu0 0
  %107 = vmatprep.subr.bf16.mxu0 0
  %108 = vmatpush1.bf16.msra.mxu0 0
  %109 = vmatprep.subr.bf16.mxu0 0
  %110 = vmatpush1.bf16.msra.mxu0 0
  %111 = vmatprep.subr.bf16.mxu0 0
  %112 = vmatpush1.bf16.msra.mxu0 0
  %113 = vmatprep.subr.bf16.mxu0 0
  %114 = vmatpush1.bf16.msra.mxu0 0
  %115 = vmatprep.subr.bf16.mxu0 0
  %116 = vmatpush1.bf16.msra.mxu0 0
  %117 = vmatprep.subr.bf16.mxu0 0
  %118 = vmatpush1.bf16.msra.mxu0 0
  %119 = vmatprep.mubr.bf16.mxu0 0
  %120 = vmatmul.mubr.bf16.gmra.mrb[0].mxu0 %v82
  %v121 = vpop.f32.mrb[0].mxu0
  %v122 = vadd.f32 %v44, %v121
  %v123 = vpop.f32.mrb[0].mxu0
  %v124 = vpop.f32.mrb[0].mxu0
  %v125 = vadd.f32 %v44, %v124
  %v126 = vpop.f32.mrb[0].mxu0
  %127 = vmatprep.mubr.bf16.mxu0 0
  %128 = vmatmul.mubr.bf16.gmra.mrb[0].mxu0 %v85
  %v129 = vpop.f32.mrb[0].mxu0
  %v130 = vadd.f32 %v44, %v129
  %v131 = vpop.f32.mrb[0].mxu0
  %v132 = vpop.f32.mrb[0].mxu0
  %v133 = vadd.f32 %v44, %v132
  %v134 = vpop.f32.mrb[0].mxu0
  %135 = vdwg.mxu0
  %v136 = vmul.f32 %v122, 0.5
  %v137 = vmul.f32 %v125, 0.5
  %v138 = vmul.f32 %v130, 0.5
  %v139 = vmul.f32 %v133, 0.5
  %v140 = vmul.f32 %v122, 0.044715
  %v141 = vmul.f32 %v125, 0.044715
  %v142 = vmul.f32 %v130, 0.044715
  %v143 = vmul.f32 %v133, 0.044715
  %v144 = vmul.f32 %v140, %v122
  %v145 = vmul.f32 %v141, %v125
  %v146 = vmul.f32 %v142, %v130
  %v147 = vmul.f32 %v143, %v133
  %v148 = vmul.f32 %v144, %v122
  %v149 = vmul.f32 %v145, %v125
  %v150 = vmul.f32 %v146, %v130
  %v151 = vmul.f32 %v147, %v133
  %v152 = vadd.f32 %v122, %v148
  %v153 = vadd.f32 %v125, %v149
  %v154 = vadd.f32 %v130, %v150
  %v155 = vadd.f32 %v133, %v151
  %v156 = vmul.f32 %v152, 0.7978846
  %v157 = vmul.f32 %v153, 0.7978846
  %v158 = vmul.f32 %v154, 0.7978846
  %v159 = vmul.f32 %v155, 0.7978846
  %v160 = vtanh.pop %v156
  %v161 = vtanh.pop %v157
  %v162 = vtanh.pop %v158
  %v163 = vtanh.pop %v159
  %v164 = vadd.f32 %v160, 1.0
  %v165 = vadd.f32 %v161, 1.0
  %v166 = vadd.f32 %v162, 1.0
  %v167 = vadd.f32 %v163, 1.0
  %v168 = vmul.f32 %v136, %v164
  %v169 = vmul.f32 %v137, %v165
  %v170 = vmul.f32 %v138, %v166
  %v171 = vmul.f32 %v139, %v167
  %v172 = vld [vmem:[%s3] sm:$0xf]
  %v173 = vld [vmem:[%s3 + $0x4] sm:$0xf]
  %v174 = vld [vmem:[%s3 + $0x8] sm:$0xf]
  %v175 = vld [vmem:[%s3 + $0xc] sm:$0xf]
  %v176 = vld [vmem:[%s3 + $0x10] sm:$0xf]
  %v177 = vld [vmem:[%s3 + $0x14] sm:$0xf]
  %v178 = vld [vmem:[%s3 + $0x18] sm:$0xf]
  %v179 = vld [vmem:[%s3 + $0x1c] sm:$0xf]
  %v180 = vld [vmem:[%s3 + $0x20] sm:$0xf]
  %v181 = vld [vmem:[%s3 + $0x24] sm:$0xf]
  %v182 = vld [vmem:[%s3 + $0x28] sm:$0xf]
  %v183 = vld [vmem:[%s3 + $0x2c] sm:$0xf]
  %v184 = vld [vmem:[%s3 + $0x30] sm:$0xf]
  %v185 = vld [vmem:[%s3 + $0x34] sm:$0xf]
  %v186 = vld [vmem:[%s3 + $0x38] sm:$0xf]
  %v187 = vld [vmem:[%s3 + $0x3c] sm:$0xf]
  %v188 = vpack.c.bf16 %v169, %v168
  %v189 = vpack.c.bf16 %v171, %v170
  %v206 = vunpack.c.l.b16 %v172
  %v207 = vunpack.c.l.b16 %v173
  %v208 = vunpack.c.l.b16 %v174
  %v209 = vunpack.c.l.b16 %v175
  %v210 = vunpack.c.l.b16 %v176
  %v211 = vunpack.c.l.b16 %v177
  %v212 = vunpack.c.l.b16 %v178
  %v213 = vunpack.c.l.b16 %v179
  %v214 = vunpack.c.l.b16 %v180
  %v215 = vunpack.c.l.b16 %v181
  %v216 = vunpack.c.l.b16 %v182
  %v217 = vunpack.c.l.b16 %v183
  %v218 = vunpack.c.l.b16 %v184
  %v219 = vunpack.c.l.b16 %v185
  %v220 = vunpack.c.l.b16 %v186
  %v221 = vunpack.c.l.b16 %v187
  %v222 = vpack.c.b16 %v207, %v206
  %v223 = vpack.c.b16 %v209, %v208
  %v224 = vpack.c.b16 %v211, %v210
  %v225 = vpack.c.b16 %v213, %v212
  %v226 = vpack.c.b16 %v215, %v214
  %v227 = vpack.c.b16 %v217, %v216
  %v228 = vpack.c.b16 %v219, %v218
  %v229 = vpack.c.b16 %v221, %v220
  %238 = vmatprep.subr.bf16.mxu0 0
  %239 = vmatpush1.bf16.msra.mxu0 %v222
  %240 = vmatprep.subr.bf16.mxu0 0
  %241 = vmatpush1.bf16.msra.mxu0 %v223
  %242 = vmatprep.subr.bf16.mxu0 0
  %243 = vmatpush1.bf16.msra.mxu0 %v224
  %244 = vmatprep.subr.bf16.mxu0 0
  %245 = vmatpush1.bf16.msra.mxu0 %v225
  %246 = vmatprep.subr.bf16.mxu0 0
  %247 = vmatpush1.bf16.msra.mxu0 %v226
  %248 = vmatprep.subr.bf16.mxu0 0
  %249 = vmatpush1.bf16.msra.mxu0 %v227
  %250 = vmatprep.subr.bf16.mxu0 0
  %251 = vmatpush1.bf16.msra.mxu0 %v228
  %252 = vmatprep.subr.bf16.mxu0 0
  %253 = vmatpush1.bf16.msra.mxu0 %v229
  %254 = vmatprep.subr.bf16.mxu0 0
  %255 = vmatpush1.bf16.msra.mxu0 0
  %256 = vmatprep.subr.bf16.mxu0 0
  %257 = vmatpush1.bf16.msra.mxu0 0
  %258 = vmatprep.subr.bf16.mxu0 0
  %259 = vmatpush1.bf16.msra.mxu0 0
  %260 = vmatprep.subr.bf16.mxu0 0
  %261 = vmatpush1.bf16.msra.mxu0 0
  %262 = vmatprep.subr.bf16.mxu0 0
  %263 = vmatpush1.bf16.msra.mxu0 0
  %264 = vmatprep.subr.bf16.mxu0 0
  %265 = vmatpush1.bf16.msra.mxu0 0
  %266 = vmatprep.subr.bf16.mxu0 0
  %267 = vmatpush1.bf16.msra.mxu0 0
  %268 = vmatprep.subr.bf16.mxu0 0
  %269 = vmatpush1.bf16.msra.mxu0 0
  %270 = vmatprep.mubr.bf16.mxu0 0
  %271 = vmatmul.mubr.bf16.gmra.mrb[0].mxu0 %v188
  %v272 = vpop.f32.mrb[0].mxu0
  %v273 = vadd.f32 0.0, %v272
  %v274 = vpop.f32.mrb[0].mxu0
  %v275 = vpop.f32.mrb[0].mxu0
  %v276 = vadd.f32 0.0, %v275
  %v277 = vpop.f32.mrb[0].mxu0
  %278 = vmatprep.mubr.bf16.mxu0 0
  %279 = vmatmul.mubr.bf16.gmra.mrb[0].mxu0 %v189
  %v280 = vpop.f32.mrb[0].mxu0
  %v281 = vadd.f32 0.0, %v280
  %v282 = vpop.f32.mrb[0].mxu0
  %v283 = vpop.f32.mrb[0].mxu0
  %v284 = vadd.f32 0.0, %v283
  %v285 = vpop.f32.mrb[0].mxu0
  %286 = vdwg.mxu0
  %v287 = vld [vmem:[%s4] sm:$0x1]
  %v289 = vlaneseq
  %v290 = vshrl.u32 %v289, 7
  %v291 = vsub.s32 0, %v290
  %v292 = vrot.slane %v287, %v291
  %v294 = vmul.f32 %v273, %v292
  %v295 = vmul.f32 %v276, %v292
  %v296 = vmul.f32 %v281, %v292
  %v297 = vmul.f32 %v284, %v292
  %v298 = vld [vmem:[%s5] sm:$0x1]
  %v300 = vlaneseq
  %v301 = vshrl.u32 %v300, 7
  %v302 = vsub.s32 0, %v301
  %v303 = vrot.slane %v298, %v302
  %v305 = vadd.f32 %v294, %v303
  %v306 = vadd.f32 %v295, %v303
  %v307 = vadd.f32 %v296, %v303
  %v308 = vadd.f32 %v297, %v303
  %v309 = vld [vmem:[%s6] sm:$0xf]
  %v310 = vld [vmem:[%s6 + $0x4] sm:$0xf]
  %v311 = vld [vmem:[%s6 + $0x8] sm:$0xf]
  %v312 = vld [vmem:[%s6 + $0xc] sm:$0xf]
  %v313 = vunpack.c.l.bf16 %v309
  %v314 = vunpack.c.l.bf16 %v310
  %v315 = vunpack.c.l.bf16 %v311
  %v316 = vunpack.c.l.bf16 %v312
  %v317 = vadd.f32 %v305, %v313
  %v318 = vadd.f32 %v306, %v314
  %v319 = vadd.f32 %v307, %v315
  %v320 = vadd.f32 %v308, %v316
  %v321 = vpack.c.bf16 %v318, %v317
  %v322 = vpack.c.bf16 %v320, %v319
  %v325 = vunpack.c.l.b16 %v321
  %v326 = vunpack.c.h.b16 %v321
  %v327 = vunpack.c.l.b16 %v322
  %v328 = vunpack.c.h.b16 %v322
  %v329 = vpack.c.b16 %v325, %v325
  %v330 = vpack.c.b16 %v326, %v326
  %v331 = vpack.c.b16 %v327, %v327
  %v332 = vpack.c.b16 %v328, %v328
  %vm337 = vcmask 519168
  %338 = vst.msk [vmem:[%s7] sm:$0xf] %vm337, %v329
  %339 = vst.msk [vmem:[%s7 + $0x4] sm:$0xf] %vm337, %v330
  %340 = vst.msk [vmem:[%s7 + $0x8] sm:$0xf] %vm337, %v331
  %341 = vst.msk [vmem:[%s7 + $0xc] sm:$0xf] %vm337, %v332
  // Predicated region
  $region30: #{_lambda_.31} parent=0 // pred_check
    _
  $region31: #{_lambda_.31} parent=0 // pred_check_branch
    %343 = sbr.rel (0) target = $region33
  $region32: #{_lambda_.31} parent=0 // pred_region
    _
  $region33: #{_lambda_.31} parent=0 // pred_fallthru
    _
  // Predicated region
  $region34: #{_lambda_.31} parent=0 // pred_check
    _
  $region35: #{_lambda_.31} parent=0 // pred_check_branch
    %345 = sbr.rel (0) target = $region37
  $region36: #{_lambda_.31} parent=0 // pred_region
    _
  $region37: #{_lambda_.31} parent=0 // pred_fallthru
    _

// kernel: _lambda_.30
$region0: #{_lambda_.30}
  #allocation0 [shape = 'u32[]', space=smem, size = 0x4, offset = 0x4, fixed_abs, tag = 'smem constant byte address 0x4 - core index']
  #allocation1 [shape = 'u32[144,128]{1,0:T(1,128)}', space=vmem, size = 0x12000, scoped, tag = 'internal scratch']
  %s0 = inlined_call_operand.vmem [shape: f32[8,32,3], index: 0, kind: input, shape index: {}]
  %s1 = inlined_call_operand.vmem [shape: f32[3,4], index: 1, kind: input, shape index: {}]
  %s2 = inlined_call_operand.vmem [shape: f32[1,4], index: 2, kind: input, shape index: {}]
  %s3 = inlined_call_operand.vmem [shape: f32[1,4], index: 3, kind: input, shape index: {}]
  %s4 = inlined_call_operand.vmem [shape: bf16[4,8], index: 4, kind: input, shape index: {}]
  %s5 = inlined_call_operand.vmem [shape: f32[1,8], index: 5, kind: input, shape index: {}]
  %s6 = inlined_call_operand.vmem [shape: f32[1,8], index: 6, kind: input, shape index: {}]
  %s7 = inlined_call_operand.vmem [shape: bf16[8,16], index: 7, kind: input, shape index: {}]
  %s8 = inlined_call_operand.vmem [shape: bf16[16,64], index: 8, kind: input, shape index: {}]
  %s9 = inlined_call_operand.vmem [shape: f32[1,64], index: 9, kind: input, shape index: {}]
  %s10 = inlined_call_operand.vmem [shape: f32[1,64], index: 10, kind: input, shape index: {}]
  %s11 = inlined_call_operand.vmem [shape: bf16[32,64], index: 11, kind: input, shape index: {}]
  %s12 = inlined_call_operand.vmem [shape: bf16[32,64], index: 12, kind: output, shape index: {}]
  %s13 = sld [smem:[#allocation0]]
  $region58: #{_lambda_.30} parent=0
    _
  %s15 = ssub.s32 1, %s13
  %s16 = scalar_select 0, %s15, %s13
  // Predicated region
  $region2: #{_lambda_.30} parent=0 // pred_check
    _
  $region3: #{_lambda_.30} parent=0 // pred_check_branch
    %18 = sbr.rel (0) target = $region5
  $region4: #{_lambda_.30} parent=0 // pred_region
    _
  $region5: #{_lambda_.30} parent=0 // pred_fallthru
    _
  // Predicated region
  $region6: #{_lambda_.30} parent=0 // pred_check
    _
  $region7: #{_lambda_.30} parent=0 // pred_check_branch
    %20 = sbr.rel (0) target = $region9
  $region8: #{_lambda_.30} parent=0 // pred_region
    _
  $region9: #{_lambda_.30} parent=0 // pred_fallthru
    _
  // Predicated region
  $region10: #{_lambda_.30} parent=0 // pred_check
    _
  $region11: #{_lambda_.30} parent=0 // pred_check_branch
    %22 = sbr.rel (0) target = $region13
  $region12: #{_lambda_.30} parent=0 // pred_region
    _
  $region13: #{_lambda_.30} parent=0 // pred_fallthru
    _
  // Predicated region
  $region14: #{_lambda_.30} parent=0 // pred_check
    _
  $region15: #{_lambda_.30} parent=0 // pred_check_branch
    %24 = sbr.rel (0) target = $region17
  $region16: #{_lambda_.30} parent=0 // pred_region
    _
  $region17: #{_lambda_.30} parent=0 // pred_fallthru
    _
  // Predicated region
  $region18: #{_lambda_.30} parent=0 // pred_check
    _
  $region19: #{_lambda_.30} parent=0 // pred_check_branch
    %26 = sbr.rel (0) target = $region21
  $region20: #{_lambda_.30} parent=0 // pred_region
    _
  $region21: #{_lambda_.30} parent=0 // pred_fallthru
    _
  // Predicated region
  $region22: #{_lambda_.30} parent=0 // pred_check
    _
  $region23: #{_lambda_.30} parent=0 // pred_check_branch
    %28 = sbr.rel (0) target = $region25
  $region24: #{_lambda_.30} parent=0 // pred_region
    _
  $region25: #{_lambda_.30} parent=0 // pred_fallthru
    _
  // Predicated region
  $region26: #{_lambda_.30} parent=0 // pred_check
    _
  $region27: #{_lambda_.30} parent=0 // pred_check_branch
    %30 = sbr.rel (0) target = $region29
  $region28: #{_lambda_.30} parent=0 // pred_region
    _
  $region29: #{_lambda_.30} parent=0 // pred_fallthru
    _
  // Predicated region
  $region30: #{_lambda_.30} parent=0 // pred_check
    _
  $region31: #{_lambda_.30} parent=0 // pred_check_branch
    %32 = sbr.rel (0) target = $region33
  $region32: #{_lambda_.30} parent=0 // pred_region
    _
  $region33: #{_lambda_.30} parent=0 // pred_fallthru
    _
  // Predicated region
  $region34: #{_lambda_.30} parent=0 // pred_check
    _
  $region35: #{_lambda_.30} parent=0 // pred_check_branch
    %34 = sbr.rel (0) target = $region37
  $region36: #{_lambda_.30} parent=0 // pred_region
    _
  $region37: #{_lambda_.30} parent=0 // pred_fallthru
    _
  // Predicated region
  $region38: #{_lambda_.30} parent=0 // pred_check
    _
  $region39: #{_lambda_.30} parent=0 // pred_check_branch
    %36 = sbr.rel (0) target = $region41
  $region40: #{_lambda_.30} parent=0 // pred_region
    _
  $region41: #{_lambda_.30} parent=0 // pred_fallthru
    _
  // Predicated region
  $region42: #{_lambda_.30} parent=0 // pred_check
    _
  $region43: #{_lambda_.30} parent=0 // pred_check_branch
    %38 = sbr.rel (0) target = $region45
  $region44: #{_lambda_.30} parent=0 // pred_region
    _
  $region45: #{_lambda_.30} parent=0 // pred_fallthru
    _
  // Predicated region
  $region46: #{_lambda_.30} parent=0 // pred_check
    _
  $region47: #{_lambda_.30} parent=0 // pred_check_branch
    %40 = sbr.rel (0) target = $region49
  $region48: #{_lambda_.30} parent=0 // pred_region
    _
  $region49: #{_lambda_.30} parent=0 // pred_fallthru
    _
  %v42 = vld [vmem:[%s0] sm:$0xff]
  %v43 = vld [vmem:[%s0 + $0x8] sm:$0xff]
  %v44 = vld [vmem:[%s0 + $0x10] sm:$0xff]
  %v45 = vld [vmem:[%s0 + $0x18] sm:$0xff]
  %v46 = vld [vmem:[%s0 + $0x20] sm:$0xff]
  %v47 = vld [vmem:[%s0 + $0x28] sm:$0xff]
  %v48 = vld [vmem:[%s0 + $0x30] sm:$0xff]
  %v49 = vld [vmem:[%s0 + $0x38] sm:$0xff]
  %v50 = vld [vmem:[%s0 + $0x40] sm:$0xff]
  %v51 = vld [vmem:[%s0 + $0x48] sm:$0xff]
  %v52 = vld [vmem:[%s0 + $0x50] sm:$0xff]
  %v53 = vld [vmem:[%s0 + $0x58] sm:$0xff]
  %v54 = vld [vmem:[%s0 + $0x60] sm:$0xff]
  %v55 = vld [vmem:[%s0 + $0x68] sm:$0xff]
  %v56 = vld [vmem:[%s0 + $0x70] sm:$0xff]
  %v57 = vld [vmem:[%s0 + $0x78] sm:$0xff]
  %v58 = vld [vmem:[%s0 + $0x80] sm:$0xff]
  %v59 = vld [vmem:[%s0 + $0x88] sm:$0xff]
  %v60 = vld [vmem:[%s0 + $0x90] sm:$0xff]
  %v61 = vld [vmem:[%s0 + $0x98] sm:$0xff]
  %v62 = vld [vmem:[%s0 + $0xa0] sm:$0xff]
  %v63 = vld [vmem:[%s0 + $0xa8] sm:$0xff]
  %v64 = vld [vmem:[%s0 + $0xb0] sm:$0xff]
  %v65 = vld [vmem:[%s0 + $0xb8] sm:$0xff]
  %v66 = vld [vmem:[%s0 + $0xc0] sm:$0xff]
  %v67 = vld [vmem:[%s0 + $0xc8] sm:$0xff]
  %v68 = vld [vmem:[%s0 + $0xd0] sm:$0xff]
  %v69 = vld [vmem:[%s0 + $0xd8] sm:$0xff]
  %v70 = vld [vmem:[%s0 + $0xe0] sm:$0xff]
  %v71 = vld [vmem:[%s0 + $0xe8] sm:$0xff]
  %v72 = vld [vmem:[%s0 + $0xf0] sm:$0xff]
  %v73 = vld [vmem:[%s0 + $0xf8] sm:$0xff]
  %v74 = vld [vmem:[%s1] sm:$0x7]
  %vm75 = vcmask 23552
  %v77 = vsel %vm75, %v42, 0
  %v80 = vsel %vm75, %v43, 0
  %v83 = vsel %vm75, %v44, 0
  %v86 = vsel %vm75, %v45, 0
  %v89 = vsel %vm75, %v46, 0
  %v92 = vsel %vm75, %v47, 0
  %v95 = vsel %vm75, %v48, 0
  %v98 = vsel %vm75, %v49, 0
  %v101 = vsel %vm75, %v50, 0
  %v104 = vsel %vm75, %v51, 0
  %v107 = vsel %vm75, %v52, 0
  %v110 = vsel %vm75, %v53, 0
  %v113 = vsel %vm75, %v54, 0
  %v116 = vsel %vm75, %v55, 0
  %v119 = vsel %vm75, %v56, 0
  %v122 = vsel %vm75, %v57, 0
  %v125 = vsel %vm75, %v58, 0
  %v128 = vsel %vm75, %v59, 0
  %v131 = vsel %vm75, %v60, 0
  %v134 = vsel %vm75, %v61, 0
  %v137 = vsel %vm75, %v62, 0
  %v140 = vsel %vm75, %v63, 0
  %v143 = vsel %vm75, %v64, 0
  %v146 = vsel %vm75, %v65, 0
  %v149 = vsel %vm75, %v66, 0
  %v152 = vsel %vm75, %v67, 0
  %v155 = vsel %vm75, %v68, 0
  %v158 = vsel %vm75, %v69, 0
  %v161 = vsel %vm75, %v70, 0
  %v164 = vsel %vm75, %v71, 0
  %v167 = vsel %vm75, %v72, 0
  %v170 = vsel %vm75, %v73, 0
  %vm172 = vcmask 1042432
  %v174 = vsel %vm172, %v74, 0
  %176 = vmatprep.subr.mxu0 0.0
  %177 = vmatpush1.msra.mxu0 %v174
  %178 = vmatprep.subr.mxu0 0.0
  %179 = vmatpush1.msra.mxu0 0.0
  %180 = vmatprep.subr.mxu0 0.0
  %181 = vmatpush1.msra.mxu0 0.0
  %182 = vmatprep.subr.mxu0 0.0
  %183 = vmatpush1.msra.mxu0 0.0
  %184 = vmatprep.subr.mxu0 0.0
  %185 = vmatpush1.msra.mxu0 0.0
  %186 = vmatprep.subr.mxu0 0.0
  %187 = vmatpush1.msra.mxu0 0.0
  %188 = vmatprep.subr.mxu0 0.0
  %189 = vmatpush1.msra.mxu0 0.0
  %190 = vmatprep.subr.mxu0 0.0
  %191 = vmatpush1.msra.mxu0 0.0
  %192 = vmatprep.subr.mxu0 0.0
  %193 = vmatpush1.msra.mxu0 0.0
  %194 = vmatprep.subr.mxu0 0.0
  %195 = vmatpush1.msra.mxu0 0.0
  %196 = vmatprep.subr.mxu0 0.0
  %197 = vmatpush1.msra.mxu0 0.0
  %198 = vmatprep.subr.mxu0 0.0
  %199 = vmatpush1.msra.mxu0 0.0
  %200 = vmatprep.subr.mxu0 0.0
  %201 = vmatpush1.msra.mxu0 0.0
  %202 = vmatprep.subr.mxu0 0.0
  %203 = vmatpush1.msra.mxu0 0.0
  %204 = vmatprep.subr.mxu0 0.0
  %205 = vmatpush1.msra.mxu0 0.0
  %206 = vmatprep.subr.mxu0 0.0
  %207 = vmatpush1.msra.mxu0 0.0
  %208 = vmatprep.subr.mxu0 0.0
  %209 = vmatpush1.msra.mxu0 0.0
  %210 = vmatprep.subr.mxu0 0.0
  %211 = vmatpush1.msra.mxu0 0.0
  %212 = vmatprep.subr.mxu0 0.0
  %213 = vmatpush1.msra.mxu0 0.0
  %214 = vmatprep.subr.mxu0 0.0
  %215 = vmatpush1.msra.mxu0 0.0
  %216 = vmatprep.subr.mxu0 0.0
  %217 = vmatpush1.msra.mxu0 0.0
  %218 = vmatprep.subr.mxu0 0.0
  %219 = vmatpush1.msra.mxu0 0.0
  %220 = vmatprep.subr.mxu0 0.0
  %221 = vmatpush1.msra.mxu0 0.0
  %222 = vmatprep.subr.mxu0 0.0
  %223 = vmatpush1.msra.mxu0 0.0
  %224 = vmatprep.subr.mxu0 0.0
  %225 = vmatpush1.msra.mxu0 0.0
  %226 = vmatprep.subr.mxu0 0.0
  %227 = vmatpush1.msra.mxu0 0.0
  %228 = vmatprep.subr.mxu0 0.0
  %229 = vmatpush1.msra.mxu0 0.0
  %230 = vmatprep.subr.mxu0 0.0
  %231 = vmatpush1.msra.mxu0 0.0
  %232 = vmatprep.subr.mxu0 0.0
  %233 = vmatpush1.msra.mxu0 0.0
  %234 = vmatprep.subr.mxu0 0.0
  %235 = vmatpush1.msra.mxu0 0.0
  %236 = vmatprep.subr.mxu0 0.0
  %237 = vmatpush1.msra.mxu0 0.0
  %238 = vmatprep.subr.mxu0 0.0
  %239 = vmatpush1.msra.mxu0 0.0
  %240 = vmatprep.mubr.f32.mxu0 0.0
  %241 = vmatmul.mubr.f32.gmra.mrb[0].mxu0 %v77
  %v242 = vpop.f32.mrb[0].mxu0
  %v243 = vadd.f32 0.0, %v242
  %v244 = vpop.f32.mrb[0].mxu0
  %245 = vmatprep.mubr.f32.mxu0 0.0
  %246 = vmatmul.mubr.f32.gmra.mrb[0].mxu0 %v80
  %v247 = vpop.f32.mrb[0].mxu0
  %v248 = vadd.f32 0.0, %v247
  %v249 = vpop.f32.mrb[0].mxu0
  %250 = vmatprep.mubr.f32.mxu0 0.0
  %251 = vmatmul.mubr.f32.gmra.mrb[0].mxu0 %v83
  %v252 = vpop.f32.mrb[0].mxu0
  %v253 = vadd.f32 0.0, %v252
  %v254 = vpop.f32.mrb[0].mxu0
  %255 = vmatprep.mubr.f32.mxu0 0.0
  %256 = vmatmul.mubr.f32.gmra.mrb[0].mxu0 %v86
  %v257 = vpop.f32.mrb[0].mxu0
  %v258 = vadd.f32 0.0, %v257
  %v259 = vpop.f32.mrb[0].mxu0
  %260 = vmatprep.mubr.f32.mxu0 0.0
  %261 = vmatmul.mubr.f32.gmra.mrb[0].mxu0 %v89
  %v262 = vpop.f32.mrb[0].mxu0
  %v263 = vadd.f32 0.0, %v262
  %v264 = vpop.f32.mrb[0].mxu0
  %265 = vmatprep.mubr.f32.mxu0 0.0
  %266 = vmatmul.mubr.f32.gmra.mrb[0].mxu0 %v92
  %v267 = vpop.f32.mrb[0].mxu0
  %v268 = vadd.f32 0.0, %v267
  %v269 = vpop.f32.mrb[0].mxu0
  %270 = vmatprep.mubr.f32.mxu0 0.0
  %271 = vmatmul.mubr.f32.gmra.mrb[0].mxu0 %v95
  %v272 = vpop.f32.mrb[0].mxu0
  %v273 = vadd.f32 0.0, %v272
  %v274 = vpop.f32.mrb[0].mxu0
  %275 = vmatprep.mubr.f32.mxu0 0.0
  %276 = vmatmul.mubr.f32.gmra.mrb[0].mxu0 %v98
  %v277 = vpop.f32.mrb[0].mxu0
  %v278 = vadd.f32 0.0, %v277
  %v279 = vpop.f32.mrb[0].mxu0
  %280 = vmatprep.mubr.f32.mxu0 0.0
  %281 = vmatmul.mubr.f32.gmra.mrb[0].mxu0 %v101
  %v282 = vpop.f32.mrb[0].mxu0
  %v283 = vadd.f32 0.0, %v282
  %v284 = vpop.f32.mrb[0].mxu0
  %285 = vmatprep.mubr.f32.mxu0 0.0
  %286 = vmatmul.mubr.f32.gmra.mrb[0].mxu0 %v104
  %v287 = vpop.f32.mrb[0].mxu0
  %v288 = vadd.f32 0.0, %v287
  %v289 = vpop.f32.mrb[0].mxu0
  %290 = vmatprep.mubr.f32.mxu0 0.0
  %291 = vmatmul.mubr.f32.gmra.mrb[0].mxu0 %v107
  %v292 = vpop.f32.mrb[0].mxu0
  %v293 = vadd.f32 0.0, %v292
  %v294 = vpop.f32.mrb[0].mxu0
  %295 = vmatprep.mubr.f32.mxu0 0.0
  %296 = vmatmul.mubr.f32.gmra.mrb[0].mxu0 %v110
  %v297 = vpop.f32.mrb[0].mxu0
  %v298 = vadd.f32 0.0, %v297
  %v299 = vpop.f32.mrb[0].mxu0
  %300 = vmatprep.mubr.f32.mxu0 0.0
  %301 = vmatmul.mubr.f32.gmra.mrb[0].mxu0 %v113
  %v302 = vpop.f32.mrb[0].mxu0
  %v303 = vadd.f32 0.0, %v302
  %v304 = vpop.f32.mrb[0].mxu0
  %305 = vmatprep.mubr.f32.mxu0 0.0
  %306 = vmatmul.mubr.f32.gmra.mrb[0].mxu0 %v116
  %v307 = vpop.f32.mrb[0].mxu0
  %v308 = vadd.f32 0.0, %v307
  %v309 = vpop.f32.mrb[0].mxu0
  %310 = vmatprep.mubr.f32.mxu0 0.0
  %311 = vmatmul.mubr.f32.gmra.mrb[0].mxu0 %v119
  %v312 = vpop.f32.mrb[0].mxu0
  %v313 = vadd.f32 0.0, %v312
  %v314 = vpop.f32.mrb[0].mxu0
  %315 = vmatprep.mubr.f32.mxu0 0.0
  %316 = vmatmul.mubr.f32.gmra.mrb[0].mxu0 %v122
  %v317 = vpop.f32.mrb[0].mxu0
  %v318 = vadd.f32 0.0, %v317
  %v319 = vpop.f32.mrb[0].mxu0
  %320 = vmatprep.mubr.f32.mxu0 0.0
  %321 = vmatmul.mubr.f32.gmra.mrb[0].mxu0 %v125
  %v322 = vpop.f32.mrb[0].mxu0
  %v323 = vadd.f32 0.0, %v322
  %v324 = vpop.f32.mrb[0].mxu0
  %325 = vmatprep.mubr.f32.mxu0 0.0
  %326 = vmatmul.mubr.f32.gmra.mrb[0].mxu0 %v128
  %v327 = vpop.f32.mrb[0].mxu0
  %v328 = vadd.f32 0.0, %v327
  %v329 = vpop.f32.mrb[0].mxu0
  %330 = vmatprep.mubr.f32.mxu0 0.0
  %331 = vmatmul.mubr.f32.gmra.mrb[0].mxu0 %v131
  %v332 = vpop.f32.mrb[0].mxu0
  %v333 = vadd.f32 0.0, %v332
  %v334 = vpop.f32.mrb[0].mxu0
  %335 = vmatprep.mubr.f32.mxu0 0.0
  %336 = vmatmul.mubr.f32.gmra.mrb[0].mxu0 %v134
  %v337 = vpop.f32.mrb[0].mxu0
  %v338 = vadd.f32 0.0, %v337
  %v339 = vpop.f32.mrb[0].mxu0
  %340 = vmatprep.mubr.f32.mxu0 0.0
  %341 = vmatmul.mubr.f32.gmra.mrb[0].mxu0 %v137
  %v342 = vpop.f32.mrb[0].mxu0
  %v343 = vadd.f32 0.0, %v342
  %v344 = vpop.f32.mrb[0].mxu0
  %345 = vmatprep.mubr.f32.mxu0 0.0
  %346 = vmatmul.mubr.f32.gmra.mrb[0].mxu0 %v140
  %v347 = vpop.f32.mrb[0].mxu0
  %v348 = vadd.f32 0.0, %v347
  %v349 = vpop.f32.mrb[0].mxu0
  %350 = vmatprep.mubr.f32.mxu0 0.0
  %351 = vmatmul.mubr.f32.gmra.mrb[0].mxu0 %v143
  %v352 = vpop.f32.mrb[0].mxu0
  %v353 = vadd.f32 0.0, %v352
  %v354 = vpop.f32.mrb[0].mxu0
  %355 = vmatprep.mubr.f32.mxu0 0.0
  %356 = vmatmul.mubr.f32.gmra.mrb[0].mxu0 %v146
  %v357 = vpop.f32.mrb[0].mxu0
  %v358 = vadd.f32 0.0, %v357
  %v359 = vpop.f32.mrb[0].mxu0
  %360 = vmatprep.mubr.f32.mxu0 0.0
  %361 = vmatmul.mubr.f32.gmra.mrb[0].mxu0 %v149
  %v362 = vpop.f32.mrb[0].mxu0
  %v363 = vadd.f32 0.0, %v362
  %v364 = vpop.f32.mrb[0].mxu0
  %365 = vmatprep.mubr.f32.mxu0 0.0
  %366 = vmatmul.mubr.f32.gmra.mrb[0].mxu0 %v152
  %v367 = vpop.f32.mrb[0].mxu0
  %v368 = vadd.f32 0.0, %v367
  %v369 = vpop.f32.mrb[0].mxu0
  %370 = vmatprep.mubr.f32.mxu0 0.0
  %371 = vmatmul.mubr.f32.gmra.mrb[0].mxu0 %v155
  %v372 = vpop.f32.mrb[0].mxu0
  %v373 = vadd.f32 0.0, %v372
  %v374 = vpop.f32.mrb[0].mxu0
  %375 = vmatprep.mubr.f32.mxu0 0.0
  %376 = vmatmul.mubr.f32.gmra.mrb[0].mxu0 %v158
  %v377 = vpop.f32.mrb[0].mxu0
  %v378 = vadd.f32 0.0, %v377
  %v379 = vpop.f32.mrb[0].mxu0
  %380 = vmatprep.mubr.f32.mxu0 0.0
  %381 = vmatmul.mubr.f32.gmra.mrb[0].mxu0 %v161
  %v382 = vpop.f32.mrb[0].mxu0
  %v383 = vadd.f32 0.0, %v382
  %v384 = vpop.f32.mrb[0].mxu0
  %385 = vmatprep.mubr.f32.mxu0 0.0
  %386 = vmatmul.mubr.f32.gmra.mrb[0].mxu0 %v164
  %v387 = vpop.f32.mrb[0].mxu0
  %v388 = vadd.f32 0.0, %v387
  %v389 = vpop.f32.mrb[0].mxu0
  %390 = vmatprep.mubr.f32.mxu0 0.0
  %391 = vmatmul.mubr.f32.gmra.mrb[0].mxu0 %v167
  %v392 = vpop.f32.mrb[0].mxu0
  %v393 = vadd.f32 0.0, %v392
  %v394 = vpop.f32.mrb[0].mxu0
  %395 = vmatprep.mubr.f32.mxu0 0.0
  %396 = vmatmul.mubr.f32.gmra.mrb[0].mxu0 %v170
  %v397 = vpop.f32.mrb[0].mxu0
  %v398 = vadd.f32 0.0, %v397
  %v399 = vpop.f32.mrb[0].mxu0
  %400 = vdwg.mxu0
  %v401 = vld [vmem:[%s2] sm:$0x1]
  %v403 = vlaneseq
  %v404 = vshrl.u32 %v403, 7
  %v405 = vsub.s32 0, %v404
  %v406 = vrot.slane %v401, %v405
  %v408 = vmul.f32 %v243, %v406
  %v409 = vmul.f32 %v248, %v406
  %v410 = vmul.f32 %v253, %v406
  %v411 = vmul.f32 %v258, %v406
  %v412 = vmul.f32 %v263, %v406
  %v413 = vmul.f32 %v268, %v406
  %v414 = vmul.f32 %v273, %v406
  %v415 = vmul.f32 %v278, %v406
  %v416 = vmul.f32 %v283, %v406
  %v417 = vmul.f32 %v288, %v406
  %v418 = vmul.f32 %v293, %v406
  %v419 = vmul.f32 %v298, %v406
  %v420 = vmul.f32 %v303, %v406
  %v421 = vmul.f32 %v308, %v406
  %v422 = vmul.f32 %v313, %v406
  %v423 = vmul.f32 %v318, %v406
  %v424 = vmul.f32 %v323, %v406
  %v425 = vmul.f32 %v328, %v406
  %v426 = vmul.f32 %v333, %v406
  %v427 = vmul.f32 %v338, %v406
  %v428 = vmul.f32 %v343, %v406
  %v429 = vmul.f32 %v348, %v406
  %v430 = vmul.f32 %v353, %v406
  %v431 = vmul.f32 %v358, %v406
  %v432 = vmul.f32 %v363, %v406
  %v433 = vmul.f32 %v368, %v406
  %v434 = vmul.f32 %v373, %v406
  %v435 = vmul.f32 %v378, %v406
  %v436 = vmul.f32 %v383, %v406
  %v437 = vmul.f32 %v388, %v406
  %v438 = vmul.f32 %v393, %v406
  %v439 = vmul.f32 %v398, %v406
  %v440 = vld [vmem:[%s3] sm:$0x1]
  %v442 = vlaneseq
  %v443 = vshrl.u32 %v442, 7
  %v444 = vsub.s32 0, %v443
  %v445 = vrot.slane %v440, %v444
  %v447 = vadd.f32 %v408, %v445
  %v448 = vadd.f32 %v409, %v445
  %v449 = vadd.f32 %v410, %v445
  %v450 = vadd.f32 %v411, %v445
  %v451 = vadd.f32 %v412, %v445
  %v452 = vadd.f32 %v413, %v445
  %v453 = vadd.f32 %v414, %v445
  %v454 = vadd.f32 %v415, %v445
  %v455 = vadd.f32 %v416, %v445
  %v456 = vadd.f32 %v417, %v445
  %v457 = vadd.f32 %v418, %v445
  %v458 = vadd.f32 %v419, %v445
  %v459 = vadd.f32 %v420, %v445
  %v460 = vadd.f32 %v421, %v445
  %v461 = vadd.f32 %v422, %v445
  %v462 = vadd.f32 %v423, %v445
  %v463 = vadd.f32 %v424, %v445
  %v464 = vadd.f32 %v425, %v445
  %v465 = vadd.f32 %v426, %v445
  %v466 = vadd.f32 %v427, %v445
  %v467 = vadd.f32 %v428, %v445
  %v468 = vadd.f32 %v429, %v445
  %v469 = vadd.f32 %v430, %v445
  %v470 = vadd.f32 %v431, %v445
  %v471 = vadd.f32 %v432, %v445
  %v472 = vadd.f32 %v433, %v445
  %v473 = vadd.f32 %v434, %v445
  %v474 = vadd.f32 %v435, %v445
  %v475 = vadd.f32 %v436, %v445
  %v476 = vadd.f32 %v437, %v445
  %v477 = vadd.f32 %v438, %v445
  %v478 = vadd.f32 %v439, %v445
  %v479 = vmul.f32 %v447, 0.5
  %v480 = vmul.f32 %v448, 0.5
  %v481 = vmul.f32 %v449, 0.5
  %v482 = vmul.f32 %v450, 0.5
  %v483 = vmul.f32 %v451, 0.5
  %v484 = vmul.f32 %v452, 0.5
  %v485 = vmul.f32 %v453, 0.5
  %v486 = vmul.f32 %v454, 0.5
  %v487 = vmul.f32 %v455, 0.5
  %v488 = vmul.f32 %v456, 0.5
  %v489 = vmul.f32 %v457, 0.5
  %v490 = vmul.f32 %v458, 0.5
  %v491 = vmul.f32 %v459, 0.5
  %v492 = vmul.f32 %v460, 0.5
  %v493 = vmul.f32 %v461, 0.5
  %v494 = vmul.f32 %v462, 0.5
  %v495 = vmul.f32 %v463, 0.5
  %v496 = vmul.f32 %v464, 0.5
  %v497 = vmul.f32 %v465, 0.5
  %v498 = vmul.f32 %v466, 0.5
  %v499 = vmul.f32 %v467, 0.5
  %v500 = vmul.f32 %v468, 0.5
  %v501 = vmul.f32 %v469, 0.5
  %v502 = vmul.f32 %v470, 0.5
  %v503 = vmul.f32 %v471, 0.5
  %v504 = vmul.f32 %v472, 0.5
  %v505 = vmul.f32 %v473, 0.5
  %v506 = vmul.f32 %v474, 0.5
  %v507 = vmul.f32 %v475, 0.5
  %v508 = vmul.f32 %v476, 0.5
  %v509 = vmul.f32 %v477, 0.5
  %v510 = vmul.f32 %v478, 0.5
  %v511 = vmul.f32 %v447, 0.044715
  %v512 = vmul.f32 %v448, 0.044715
  %v513 = vmul.f32 %v449, 0.044715
  %v514 = vmul.f32 %v450, 0.044715
  %v515 = vmul.f32 %v451, 0.044715
  %v516 = vmul.f32 %v452, 0.044715
  %v517 = vmul.f32 %v453, 0.044715
  %v518 = vmul.f32 %v454, 0.044715
  %v519 = vmul.f32 %v455, 0.044715
  %v520 = vmul.f32 %v456, 0.044715
  %v521 = vmul.f32 %v457, 0.044715
  %v522 = vmul.f32 %v458, 0.044715
  %v523 = vmul.f32 %v459, 0.044715
  %v524 = vmul.f32 %v460, 0.044715
  %v525 = vmul.f32 %v461, 0.044715
  %v526 = vmul.f32 %v462, 0.044715
  %v527 = vmul.f32 %v463, 0.044715
  %v528 = vmul.f32 %v464, 0.044715
  %v529 = vmul.f32 %v465, 0.044715
  %v530 = vmul.f32 %v466, 0.044715
  %v531 = vmul.f32 %v467, 0.044715
  %v532 = vmul.f32 %v468, 0.044715
  %v533 = vmul.f32 %v469, 0.044715
  %v534 = vmul.f32 %v470, 0.044715
  %v535 = vmul.f32 %v471, 0.044715
  %v536 = vmul.f32 %v472, 0.044715
  %v537 = vmul.f32 %v473, 0.044715
  %v538 = vmul.f32 %v474, 0.044715
  %v539 = vmul.f32 %v475, 0.044715
  %v540 = vmul.f32 %v476, 0.044715
  %v541 = vmul.f32 %v477, 0.044715
  %v542 = vmul.f32 %v478, 0.044715
  %v543 = vmul.f32 %v511, %v447
  %v544 = vmul.f32 %v512, %v448
  %v545 = vmul.f32 %v513, %v449
  %v546 = vmul.f32 %v514, %v450
  %v547 = vmul.f32 %v515, %v451
  %v548 = vmul.f32 %v516, %v452
  %v549 = vmul.f32 %v517, %v453
  %v550 = vmul.f32 %v518, %v454
  %v551 = vmul.f32 %v519, %v455
  %v552 = vmul.f32 %v520, %v456
  %v553 = vmul.f32 %v521, %v457
  %v554 = vmul.f32 %v522, %v458
  %v555 = vmul.f32 %v523, %v459
  %v556 = vmul.f32 %v524, %v460
  %v557 = vmul.f32 %v525, %v461
  %v558 = vmul.f32 %v526, %v462
  %v559 = vmul.f32 %v527, %v463
  %v560 = vmul.f32 %v528, %v464
  %v561 = vmul.f32 %v529, %v465
  %v562 = vmul.f32 %v530, %v466
  %v563 = vmul.f32 %v531, %v467
  %v564 = vmul.f32 %v532, %v468
  %v565 = vmul.f32 %v533, %v469
  %v566 = vmul.f32 %v534, %v470
  %v567 = vmul.f32 %v535, %v471
  %v568 = vmul.f32 %v536, %v472
  %v569 = vmul.f32 %v537, %v473
  %v570 = vmul.f32 %v538, %v474
  %v571 = vmul.f32 %v539, %v475
  %v572 = vmul.f32 %v540, %v476
  %v573 = vmul.f32 %v541, %v477
  %v574 = vmul.f32 %v542, %v478
  %v575 = vmul.f32 %v543, %v447
  %v576 = vmul.f32 %v544, %v448
  %v577 = vmul.f32 %v545, %v449
  %v578 = vmul.f32 %v546, %v450
  %v579 = vmul.f32 %v547, %v451
  %v580 = vmul.f32 %v548, %v452
  %v581 = vmul.f32 %v549, %v453
  %v582 = vmul.f32 %v550, %v454
  %v583 = vmul.f32 %v551, %v455
  %v584 = vmul.f32 %v552, %v456
  %v585 = vmul.f32 %v553, %v457
  %v586 = vmul.f32 %v554, %v458
  %v587 = vmul.f32 %v555, %v459
  %v588 = vmul.f32 %v556, %v460
  %v589 = vmul.f32 %v557, %v461
  %v590 = vmul.f32 %v558, %v462
  %v591 = vmul.f32 %v559, %v463
  %v592 = vmul.f32 %v560, %v464
  %v593 = vmul.f32 %v561, %v465
  %v594 = vmul.f32 %v562, %v466
  %v595 = vmul.f32 %v563, %v467
  %v596 = vmul.f32 %v564, %v468
  %v597 = vmul.f32 %v565, %v469
  %v598 = vmul.f32 %v566, %v470
  %v599 = vmul.f32 %v567, %v471
  %v600 = vmul.f32 %v568, %v472
  %v601 = vmul.f32 %v569, %v473
  %v602 = vmul.f32 %v570, %v474
  %v603 = vmul.f32 %v571, %v475
  %v604 = vmul.f32 %v572, %v476
  %v605 = vmul.f32 %v573, %v477
  %v606 = vmul.f32 %v574, %v478
  %v607 = vadd.f32 %v447, %v575
  %v608 = vadd.f32 %v448, %v576
  %v609 = vadd.f32 %v449, %v577
  %v610 = vadd.f32 %v450, %v578
  %v611 = vadd.f32 %v451, %v579
  %v612 = vadd.f32 %v452, %v580
  %v613 = vadd.f32 %v453, %v581
  %v614 = vadd.f32 %v454, %v582
  %v615 = vadd.f32 %v455, %v583
  %v616 = vadd.f32 %v456, %v584
  %v617 = vadd.f32 %v457, %v585
  %v618 = vadd.f32 %v458, %v586
  %v619 = vadd.f32 %v459, %v587
  %v620 = vadd.f32 %v460, %v588
  %v621 = vadd.f32 %v461, %v589
  %v622 = vadd.f32 %v462, %v590
  %v623 = vadd.f32 %v463, %v591
  %v624 = vadd.f32 %v464, %v592
  %v625 = vadd.f32 %v465, %v593
  %v626 = vadd.f32 %v466, %v594
  %v627 = vadd.f32 %v467, %v595
  %v628 = vadd.f32 %v468, %v596
  %v629 = vadd.f32 %v469, %v597
  %v630 = vadd.f32 %v470, %v598
  %v631 = vadd.f32 %v471, %v599
  %v632 = vadd.f32 %v472, %v600
  %v633 = vadd.f32 %v473, %v601
  %v634 = vadd.f32 %v474, %v602
  %v635 = vadd.f32 %v475, %v603
  %v636 = vadd.f32 %v476, %v604
  %v637 = vadd.f32 %v477, %v605
  %v638 = vadd.f32 %v478, %v606
  %v639 = vmul.f32 %v607, 0.7978846
  %v640 = vmul.f32 %v608, 0.7978846
  %v641 = vmul.f32 %v609, 0.7978846
  %v642 = vmul.f32 %v610, 0.7978846
  %v643 = vmul.f32 %v611, 0.7978846
  %v644 = vmul.f32 %v612, 0.7978846
  %v645 = vmul.f32 %v613, 0.7978846
  %v646 = vmul.f32 %v614, 0.7978846
  %v647 = vmul.f32 %v615, 0.7978846
  %v648 = vmul.f32 %v616, 0.7978846
  %v649 = vmul.f32 %v617, 0.7978846
  %v650 = vmul.f32 %v618, 0.7978846
  %v651 = vmul.f32 %v619, 0.7978846
  %v652 = vmul.f32 %v620, 0.7978846
  %v653 = vmul.f32 %v621, 0.7978846
  %v654 = vmul.f32 %v622, 0.7978846
  %v655 = vmul.f32 %v623, 0.7978846
  %v656 = vmul.f32 %v624, 0.7978846
  %v657 = vmul.f32 %v625, 0.7978846
  %v658 = vmul.f32 %v626, 0.7978846
  %v659 = vmul.f32 %v627, 0.7978846
  %v660 = vmul.f32 %v628, 0.7978846
  %v661 = vmul.f32 %v629, 0.7978846
  %v662 = vmul.f32 %v630, 0.7978846
  %v663 = vmul.f32 %v631, 0.7978846
  %v664 = vmul.f32 %v632, 0.7978846
  %v665 = vmul.f32 %v633, 0.7978846
  %v666 = vmul.f32 %v634, 0.7978846
  %v667 = vmul.f32 %v635, 0.7978846
  %v668 = vmul.f32 %v636, 0.7978846
  %v669 = vmul.f32 %v637, 0.7978846
  %v670 = vmul.f32 %v638, 0.7978846
  %v671 = vtanh.pop %v639
  %v672 = vtanh.pop %v640
  %v673 = vtanh.pop %v641
  %v674 = vtanh.pop %v642
  %v675 = vtanh.pop %v643
  %v676 = vtanh.pop %v644
  %v677 = vtanh.pop %v645
  %v678 = vtanh.pop %v646
  %v679 = vtanh.pop %v647
  %v680 = vtanh.pop %v648
  %v681 = vtanh.pop %v649
  %v682 = vtanh.pop %v650
  %v683 = vtanh.pop %v651
  %v684 = vtanh.pop %v652
  %v685 = vtanh.pop %v653
  %v686 = vtanh.pop %v654
  %v687 = vtanh.pop %v655
  %v688 = vtanh.pop %v656
  %v689 = vtanh.pop %v657
  %v690 = vtanh.pop %v658
  %v691 = vtanh.pop %v659
  %v692 = vtanh.pop %v660
  %v693 = vtanh.pop %v661
  %v694 = vtanh.pop %v662
  %v695 = vtanh.pop %v663
  %v696 = vtanh.pop %v664
  %v697 = vtanh.pop %v665
  %v698 = vtanh.pop %v666
  %v699 = vtanh.pop %v667
  %v700 = vtanh.pop %v668
  %v701 = vtanh.pop %v669
  %v702 = vtanh.pop %v670
  %v703 = vadd.f32 %v671, 1.0
  %v704 = vadd.f32 %v672, 1.0
  %v705 = vadd.f32 %v673, 1.0
  %v706 = vadd.f32 %v674, 1.0
  %v707 = vadd.f32 %v675, 1.0
  %v708 = vadd.f32 %v676, 1.0
  %v709 = vadd.f32 %v677, 1.0
  %v710 = vadd.f32 %v678, 1.0
  %v711 = vadd.f32 %v679, 1.0
  %v712 = vadd.f32 %v680, 1.0
  %v713 = vadd.f32 %v681, 1.0
  %v714 = vadd.f32 %v682, 1.0
  %v715 = vadd.f32 %v683, 1.0
  %v716 = vadd.f32 %v684, 1.0
  %v717 = vadd.f32 %v685, 1.0
  %v718 = vadd.f32 %v686, 1.0
  %v719 = vadd.f32 %v687, 1.0
  %v720 = vadd.f32 %v688, 1.0
  %v721 = vadd.f32 %v689, 1.0
  %v722 = vadd.f32 %v690, 1.0
  %v723 = vadd.f32 %v691, 1.0
  %v724 = vadd.f32 %v692, 1.0
  %v725 = vadd.f32 %v693, 1.0
  %v726 = vadd.f32 %v694, 1.0
  %v727 = vadd.f32 %v695, 1.0
  %v728 = vadd.f32 %v696, 1.0
  %v729 = vadd.f32 %v697, 1.0
  %v730 = vadd.f32 %v698, 1.0
  %v731 = vadd.f32 %v699, 1.0
  %v732 = vadd.f32 %v700, 1.0
  %v733 = vadd.f32 %v701, 1.0
  %v734 = vadd.f32 %v702, 1.0
  %v735 = vmul.f32 %v479, %v703
  %v736 = vmul.f32 %v480, %v704
  %v737 = vmul.f32 %v481, %v705
  %v738 = vmul.f32 %v482, %v706
  %v739 = vmul.f32 %v483, %v707
  %v740 = vmul.f32 %v484, %v708
  %v741 = vmul.f32 %v485, %v709
  %v742 = vmul.f32 %v486, %v710
  %v743 = vmul.f32 %v487, %v711
  %v744 = vmul.f32 %v488, %v712
  %v745 = vmul.f32 %v489, %v713
  %v746 = vmul.f32 %v490, %v714
  %v747 = vmul.f32 %v491, %v715
  %v748 = vmul.f32 %v492, %v716
  %v749 = vmul.f32 %v493, %v717
  %v750 = vmul.f32 %v494, %v718
  %v751 = vmul.f32 %v495, %v719
  %v752 = vmul.f32 %v496, %v720
  %v753 = vmul.f32 %v497, %v721
  %v754 = vmul.f32 %v498, %v722
  %v755 = vmul.f32 %v499, %v723
  %v756 = vmul.f32 %v500, %v724
  %v757 = vmul.f32 %v501, %v725
  %v758 = vmul.f32 %v502, %v726
  %v759 = vmul.f32 %v503, %v727
  %v760 = vmul.f32 %v504, %v728
  %v761 = vmul.f32 %v505, %v729
  %v762 = vmul.f32 %v506, %v730
  %v763 = vmul.f32 %v507, %v731
  %v764 = vmul.f32 %v508, %v732
  %v765 = vmul.f32 %v509, %v733
  %v766 = vmul.f32 %v510, %v734
  %v767 = vld [vmem:[%s4] sm:$0x3]
  %v768 = vpack.c.bf16 %v736, %v735
  %v769 = vpack.c.bf16 %v738, %v737
  %v770 = vpack.c.bf16 %v740, %v739
  %v771 = vpack.c.bf16 %v742, %v741
  %v772 = vpack.c.bf16 %v744, %v743
  %v773 = vpack.c.bf16 %v746, %v745
  %v774 = vpack.c.bf16 %v748, %v747
  %v775 = vpack.c.bf16 %v750, %v749
  %v776 = vpack.c.bf16 %v752, %v751
  %v777 = vpack.c.bf16 %v754, %v753
  %v778 = vpack.c.bf16 %v756, %v755
  %v779 = vpack.c.bf16 %v758, %v757
  %v780 = vpack.c.bf16 %v760, %v759
  %v781 = vpack.c.bf16 %v762, %v761
  %v782 = vpack.c.bf16 %v764, %v763
  %v783 = vpack.c.bf16 %v766, %v765
  %vm784 = vcmask 31744
  %v786 = vsel %vm784, %v768, 0
  %v789 = vsel %vm784, %v769, 0
  %v792 = vsel %vm784, %v770, 0
  %v795 = vsel %vm784, %v771, 0
  %v798 = vsel %vm784, %v772, 0
  %v801 = vsel %vm784, %v773, 0
  %v804 = vsel %vm784, %v774, 0
  %v807 = vsel %vm784, %v775, 0
  %v810 = vsel %vm784, %v776, 0
  %v813 = vsel %vm784, %v777, 0
  %v816 = vsel %vm784, %v778, 0
  %v819 = vsel %vm784, %v779, 0
  %v822 = vsel %vm784, %v780, 0
  %v825 = vsel %vm784, %v781, 0
  %v828 = vsel %vm784, %v782, 0
  %v831 = vsel %vm784, %v783, 0
  %vm833 = vcmask 1041408
  %v835 = vsel %vm833, %v767, 0
  %837 = vmatprep.subr.bf16.mxu0 0
  %838 = vmatpush1.bf16.msra.mxu0 %v835
  %839 = vmatprep.subr.bf16.mxu0 0
  %840 = vmatpush1.bf16.msra.mxu0 0
  %841 = vmatprep.subr.bf16.mxu0 0
  %842 = vmatpush1.bf16.msra.mxu0 0
  %843 = vmatprep.subr.bf16.mxu0 0
  %844 = vmatpush1.bf16.msra.mxu0 0
  %845 = vmatprep.subr.bf16.mxu0 0
  %846 = vmatpush1.bf16.msra.mxu0 0
  %847 = vmatprep.subr.bf16.mxu0 0
  %848 = vmatpush1.bf16.msra.mxu0 0
  %849 = vmatprep.subr.bf16.mxu0 0
  %850 = vmatpush1.bf16.msra.mxu0 0
  %851 = vmatprep.subr.bf16.mxu0 0
  %852 = vmatpush1.bf16.msra.mxu0 0
  %853 = vmatprep.subr.bf16.mxu0 0
  %854 = vmatpush1.bf16.msra.mxu0 0
  %855 = vmatprep.subr.bf16.mxu0 0
  %856 = vmatpush1.bf16.msra.mxu0 0
  %857 = vmatprep.subr.bf16.mxu0 0
  %858 = vmatpush1.bf16.msra.mxu0 0
  %859 = vmatprep.subr.bf16.mxu0 0
  %860 = vmatpush1.bf16.msra.mxu0 0
  %861 = vmatprep.subr.bf16.mxu0 0
  %862 = vmatpush1.bf16.msra.mxu0 0
  %863 = vmatprep.subr.bf16.mxu0 0
  %864 = vmatpush1.bf16.msra.mxu0 0
  %865 = vmatprep.subr.bf16.mxu0 0
  %866 = vmatpush1.bf16.msra.mxu0 0
  %867 = vmatprep.subr.bf16.mxu0 0
  %868 = vmatpush1.bf16.msra.mxu0 0
  %869 = vmatprep.mubr.bf16.mxu0 0
  %870 = vmatmul.mubr.bf16.gmra.mrb[0].mxu0 %v786
  %v871 = vpop.f32.mrb[0].mxu0
  %v872 = vadd.f32 0.0, %v871
  %v873 = vpop.f32.mrb[0].mxu0
  %v874 = vpop.f32.mrb[0].mxu0
  %v875 = vadd.f32 0.0, %v874
  %v876 = vpop.f32.mrb[0].mxu0
  %877 = vmatprep.mubr.bf16.mxu0 0
  %878 = vmatmul.mubr.bf16.gmra.mrb[0].mxu0 %v789
  %v879 = vpop.f32.mrb[0].mxu0
  %v880 = vadd.f32 0.0, %v879
  %v881 = vpop.f32.mrb[0].mxu0
  %v882 = vpop.f32.mrb[0].mxu0
  %v883 = vadd.f32 0.0, %v882
  %v884 = vpop.f32.mrb[0].mxu0
  %885 = vmatprep.mubr.bf16.mxu0 0
  %886 = vmatmul.mubr.bf16.gmra.mrb[0].mxu0 %v792
  %v887 = vpop.f32.mrb[0].mxu0
  %v888 = vadd.f32 0.0, %v887
  %v889 = vpop.f32.mrb[0].mxu0
  %v890 = vpop.f32.mrb[0].mxu0
  %v891 = vadd.f32 0.0, %v890
  %v892 = vpop.f32.mrb[0].mxu0
  %893 = vmatprep.mubr.bf16.mxu0 0
  %894 = vmatmul.mubr.bf16.gmra.mrb[0].mxu0 %v795
  %v895 = vpop.f32.mrb[0].mxu0
  %v896 = vadd.f32 0.0, %v895
  %v897 = vpop.f32.mrb[0].mxu0
  %v898 = vpop.f32.mrb[0].mxu0
  %v899 = vadd.f32 0.0, %v898
  %v900 = vpop.f32.mrb[0].mxu0
  %901 = vmatprep.mubr.bf16.mxu0 0
  %902 = vmatmul.mubr.bf16.gmra.mrb[0].mxu0 %v798
  %v903 = vpop.f32.mrb[0].mxu0
  %v904 = vadd.f32 0.0, %v903
  %v905 = vpop.f32.mrb[0].mxu0
  %v906 = vpop.f32.mrb[0].mxu0
  %v907 = vadd.f32 0.0, %v906
  %v908 = vpop.f32.mrb[0].mxu0
  %909 = vmatprep.mubr.bf16.mxu0 0
  %910 = vmatmul.mubr.bf16.gmra.mrb[0].mxu0 %v801
  %v911 = vpop.f32.mrb[0].mxu0
  %v912 = vadd.f32 0.0, %v911
  %v913 = vpop.f32.mrb[0].mxu0
  %v914 = vpop.f32.mrb[0].mxu0
  %v915 = vadd.f32 0.0, %v914
  %v916 = vpop.f32.mrb[0].mxu0
  %917 = vmatprep.mubr.bf16.mxu0 0
  %918 = vmatmul.mubr.bf16.gmra.mrb[0].mxu0 %v804
  %v919 = vpop.f32.mrb[0].mxu0
  %v920 = vadd.f32 0.0, %v919
  %v921 = vpop.f32.mrb[0].mxu0
  %v922 = vpop.f32.mrb[0].mxu0
  %v923 = vadd.f32 0.0, %v922
  %v924 = vpop.f32.mrb[0].mxu0
  %925 = vmatprep.mubr.bf16.mxu0 0
  %926 = vmatmul.mubr.bf16.gmra.mrb[0].mxu0 %v807
  %v927 = vpop.f32.mrb[0].mxu0
  %v928 = vadd.f32 0.0, %v927
  %v929 = vpop.f32.mrb[0].mxu0
  %v930 = vpop.f32.mrb[0].mxu0
  %v931 = vadd.f32 0.0, %v930
  %v932 = vpop.f32.mrb[0].mxu0
  %933 = vmatprep.mubr.bf16.mxu0 0
  %934 = vmatmul.mubr.bf16.gmra.mrb[0].mxu0 %v810
  %v935 = vpop.f32.mrb[0].mxu0
  %v936 = vadd.f32 0.0, %v935
  %v937 = vpop.f32.mrb[0].mxu0
  %v938 = vpop.f32.mrb[0].mxu0
  %v939 = vadd.f32 0.0, %v938
  %v940 = vpop.f32.mrb[0].mxu0
  %941 = vmatprep.mubr.bf16.mxu0 0
  %942 = vmatmul.mubr.bf16.gmra.mrb[0].mxu0 %v813
  %v943 = vpop.f32.mrb[0].mxu0
  %v944 = vadd.f32 0.0, %v943
  %v945 = vpop.f32.mrb[0].mxu0
  %v946 = vpop.f32.mrb[0].mxu0
  %v947 = vadd.f32 0.0, %v946
  %v948 = vpop.f32.mrb[0].mxu0
  %949 = vmatprep.mubr.bf16.mxu0 0
  %950 = vmatmul.mubr.bf16.gmra.mrb[0].mxu0 %v816
  %v951 = vpop.f32.mrb[0].mxu0
  %v952 = vadd.f32 0.0, %v951
  %v953 = vpop.f32.mrb[0].mxu0
  %v954 = vpop.f32.mrb[0].mxu0
  %v955 = vadd.f32 0.0, %v954
  %v956 = vpop.f32.mrb[0].mxu0
  %957 = vmatprep.mubr.bf16.mxu0 0
  %958 = vmatmul.mubr.bf16.gmra.mrb[0].mxu0 %v819
  %v959 = vpop.f32.mrb[0].mxu0
  %v960 = vadd.f32 0.0, %v959
  %v961 = vpop.f32.mrb[0].mxu0
  %v962 = vpop.f32.mrb[0].mxu0
  %v963 = vadd.f32 0.0, %v962
  %v964 = vpop.f32.mrb[0].mxu0
  %965 = vmatprep.mubr.bf16.mxu0 0
  %966 = vmatmul.mubr.bf16.gmra.mrb[0].mxu0 %v822
  %v967 = vpop.f32.mrb[0].mxu0
  %v968 = vadd.f32 0.0, %v967
  %v969 = vpop.f32.mrb[0].mxu0
  %v970 = vpop.f32.mrb[0].mxu0
  %v971 = vadd.f32 0.0, %v970
  %v972 = vpop.f32.mrb[0].mxu0
  %973 = vmatprep.mubr.bf16.mxu0 0
  %974 = vmatmul.mubr.bf16.gmra.mrb[0].mxu0 %v825
  %v975 = vpop.f32.mrb[0].mxu0
  %v976 = vadd.f32 0.0, %v975
  %v977 = vpop.f32.mrb[0].mxu0
  %v978 = vpop.f32.mrb[0].mxu0
  %v979 = vadd.f32 0.0, %v978
  %v980 = vpop.f32.mrb[0].mxu0
  %981 = vmatprep.mubr.bf16.mxu0 0
  %982 = vmatmul.mubr.bf16.gmra.mrb[0].mxu0 %v828
  %v983 = vpop.f32.mrb[0].mxu0
  %v984 = vadd.f32 0.0, %v983
  %v985 = vpop.f32.mrb[0].mxu0
  %v986 = vpop.f32.mrb[0].mxu0
  %v987 = vadd.f32 0.0, %v986
  %v988 = vpop.f32.mrb[0].mxu0
  %989 = vmatprep.mubr.bf16.mxu0 0
  %990 = vmatmul.mubr.bf16.gmra.mrb[0].mxu0 %v831
  %v991 = vpop.f32.mrb[0].mxu0
  %v992 = vadd.f32 0.0, %v991
  %v993 = vpop.f32.mrb[0].mxu0
  %v994 = vpop.f32.mrb[0].mxu0
  %v995 = vadd.f32 0.0, %v994
  %v996 = vpop.f32.mrb[0].mxu0
  %997 = vdwg.mxu0
  %v998 = vld [vmem:[%s5] sm:$0x1]
  %v1000 = vlaneseq
  %v1001 = vshrl.u32 %v1000, 7
  %v1002 = vsub.s32 0, %v1001
  %v1003 = vrot.slane %v998, %v1002
  %v1005 = vmul.f32 %v872, %v1003
  %v1006 = vmul.f32 %v875, %v1003
  %v1007 = vmul.f32 %v880, %v1003
  %v1008 = vmul.f32 %v883, %v1003
  %v1009 = vmul.f32 %v888, %v1003
  %v1010 = vmul.f32 %v891, %v1003
  %v1011 = vmul.f32 %v896, %v1003
  %v1012 = vmul.f32 %v899, %v1003
  %v1013 = vmul.f32 %v904, %v1003
  %v1014 = vmul.f32 %v907, %v1003
  %v1015 = vmul.f32 %v912, %v1003
  %v1016 = vmul.f32 %v915, %v1003
  %v1017 = vmul.f32 %v920, %v1003
  %v1018 = vmul.f32 %v923, %v1003
  %v1019 = vmul.f32 %v928, %v1003
  %v1020 = vmul.f32 %v931, %v1003
  %v1021 = vmul.f32 %v936, %v1003
  %v1022 = vmul.f32 %v939, %v1003
  %v1023 = vmul.f32 %v944, %v1003
  %v1024 = vmul.f32 %v947, %v1003
  %v1025 = vmul.f32 %v952, %v1003
  %v1026 = vmul.f32 %v955, %v1003
  %v1027 = vmul.f32 %v960, %v1003
  %v1028 = vmul.f32 %v963, %v1003
  %v1029 = vmul.f32 %v968, %v1003
  %v1030 = vmul.f32 %v971, %v1003
  %v1031 = vmul.f32 %v976, %v1003
  %v1032 = vmul.f32 %v979, %v1003
  %v1033 = vmul.f32 %v984, %v1003
  %v1034 = vmul.f32 %v987, %v1003
  %v1035 = vmul.f32 %v992, %v1003
  %v1036 = vmul.f32 %v995, %v1003
  %v1037 = vld [vmem:[%s6] sm:$0x1]
  %v1039 = vlaneseq
  %v1040 = vshrl.u32 %v1039, 7
  %v1041 = vsub.s32 0, %v1040
  %v1042 = vrot.slane %v1037, %v1041
  %v1044 = vadd.f32 %v1005, %v1042
  %v1045 = vadd.f32 %v1006, %v1042
  %v1046 = vadd.f32 %v1007, %v1042
  %v1047 = vadd.f32 %v1008, %v1042
  %v1048 = vadd.f32 %v1009, %v1042
  %v1049 = vadd.f32 %v1010, %v1042
  %v1050 = vadd.f32 %v1011, %v1042
  %v1051 = vadd.f32 %v1012, %v1042
  %v1052 = vadd.f32 %v1013, %v1042
  %v1053 = vadd.f32 %v1014, %v1042
  %v1054 = vadd.f32 %v1015, %v1042
  %v1055 = vadd.f32 %v1016, %v1042
  %v1056 = vadd.f32 %v1017, %v1042
  %v1057 = vadd.f32 %v1018, %v1042
  %v1058 = vadd.f32 %v1019, %v1042
  %v1059 = vadd.f32 %v1020, %v1042
  %v1060 = vadd.f32 %v1021, %v1042
  %v1061 = vadd.f32 %v1022, %v1042
  %v1062 = vadd.f32 %v1023, %v1042
  %v1063 = vadd.f32 %v1024, %v1042
  %v1064 = vadd.f32 %v1025, %v1042
  %v1065 = vadd.f32 %v1026, %v1042
  %v1066 = vadd.f32 %v1027, %v1042
  %v1067 = vadd.f32 %v1028, %v1042
  %v1068 = vadd.f32 %v1029, %v1042
  %v1069 = vadd.f32 %v1030, %v1042
  %v1070 = vadd.f32 %v1031, %v1042
  %v1071 = vadd.f32 %v1032, %v1042
  %v1072 = vadd.f32 %v1033, %v1042
  %v1073 = vadd.f32 %v1034, %v1042
  %v1074 = vadd.f32 %v1035, %v1042
  %v1075 = vadd.f32 %v1036, %v1042
  %v1076 = vmul.f32 %v1044, 0.5
  %v1077 = vmul.f32 %v1045, 0.5
  %v1078 = vmul.f32 %v1046, 0.5
  %v1079 = vmul.f32 %v1047, 0.5
  %v1080 = vmul.f32 %v1048, 0.5
  %v1081 = vmul.f32 %v1049, 0.5
  %v1082 = vmul.f32 %v1050, 0.5
  %v1083 = vmul.f32 %v1051, 0.5
  %v1084 = vmul.f32 %v1052, 0.5
  %v1085 = vmul.f32 %v1053, 0.5
  %v1086 = vmul.f32 %v1054, 0.5
  %v1087 = vmul.f32 %v1055, 0.5
  %v1088 = vmul.f32 %v1056, 0.5
  %v1089 = vmul.f32 %v1057, 0.5
  %v1090 = vmul.f32 %v1058, 0.5
  %v1091 = vmul.f32 %v1059, 0.5
  %v1092 = vmul.f32 %v1060, 0.5
  %v1093 = vmul.f32 %v1061, 0.5
  %v1094 = vmul.f32 %v1062, 0.5
  %v1095 = vmul.f32 %v1063, 0.5
  %v1096 = vmul.f32 %v1064, 0.5
  %v1097 = vmul.f32 %v1065, 0.5
  %v1098 = vmul.f32 %v1066, 0.5
  %v1099 = vmul.f32 %v1067, 0.5
  %v1100 = vmul.f32 %v1068, 0.5
  %v1101 = vmul.f32 %v1069, 0.5
  %v1102 = vmul.f32 %v1070, 0.5
  %v1103 = vmul.f32 %v1071, 0.5
  %v1104 = vmul.f32 %v1072, 0.5
  %v1105 = vmul.f32 %v1073, 0.5
  %v1106 = vmul.f32 %v1074, 0.5
  %v1107 = vmul.f32 %v1075, 0.5
  %v1108 = vmul.f32 %v1044, 0.044715
  %v1109 = vmul.f32 %v1045, 0.044715
  %v1110 = vmul.f32 %v1046, 0.044715
  %v1111 = vmul.f32 %v1047, 0.044715
  %v1112 = vmul.f32 %v1048, 0.044715
  %v1113 = vmul.f32 %v1049, 0.044715
  %v1114 = vmul.f32 %v1050, 0.044715
  %v1115 = vmul.f32 %v1051, 0.044715
  %v1116 = vmul.f32 %v1052, 0.044715
  %v1117 = vmul.f32 %v1053, 0.044715
  %v1118 = vmul.f32 %v1054, 0.044715
  %v1119 = vmul.f32 %v1055, 0.044715
  %v1120 = vmul.f32 %v1056, 0.044715
  %v1121 = vmul.f32 %v1057, 0.044715
  %v1122 = vmul.f32 %v1058, 0.044715
  %v1123 = vmul.f32 %v1059, 0.044715
  %v1124 = vmul.f32 %v1060, 0.044715
  %v1125 = vmul.f32 %v1061, 0.044715
  %v1126 = vmul.f32 %v1062, 0.044715
  %v1127 = vmul.f32 %v1063, 0.044715
  %v1128 = vmul.f32 %v1064, 0.044715
  %v1129 = vmul.f32 %v1065, 0.044715
  %v1130 = vmul.f32 %v1066, 0.044715
  %v1131 = vmul.f32 %v1067, 0.044715
  %v1132 = vmul.f32 %v1068, 0.044715
  %v1133 = vmul.f32 %v1069, 0.044715
  %v1134 = vmul.f32 %v1070, 0.044715
  %v1135 = vmul.f32 %v1071, 0.044715
  %v1136 = vmul.f32 %v1072, 0.044715
  %v1137 = vmul.f32 %v1073, 0.044715
  %v1138 = vmul.f32 %v1074, 0.044715
  %v1139 = vmul.f32 %v1075, 0.044715
  %v1140 = vmul.f32 %v1108, %v1044
  %v1141 = vmul.f32 %v1109, %v1045
  %v1142 = vmul.f32 %v1110, %v1046
  %v1143 = vmul.f32 %v1111, %v1047
  %v1144 = vmul.f32 %v1112, %v1048
  %v1145 = vmul.f32 %v1113, %v1049
  %v1146 = vmul.f32 %v1114, %v1050
  %v1147 = vmul.f32 %v1115, %v1051
  %v1148 = vmul.f32 %v1116, %v1052
  %v1149 = vmul.f32 %v1117, %v1053
  %v1150 = vmul.f32 %v1118, %v1054
  %v1151 = vmul.f32 %v1119, %v1055
  %v1152 = vmul.f32 %v1120, %v1056
  %v1153 = vmul.f32 %v1121, %v1057
  %v1154 = vmul.f32 %v1122, %v1058
  %v1155 = vmul.f32 %v1123, %v1059
  %v1156 = vmul.f32 %v1124, %v1060
  %v1157 = vmul.f32 %v1125, %v1061
  %v1158 = vmul.f32 %v1126, %v1062
  %v1159 = vmul.f32 %v1127, %v1063
  %v1160 = vmul.f32 %v1128, %v1064
  %v1161 = vmul.f32 %v1129, %v1065
  %v1162 = vmul.f32 %v1130, %v1066
  %v1163 = vmul.f32 %v1131, %v1067
  %v1164 = vmul.f32 %v1132, %v1068
  %v1165 = vmul.f32 %v1133, %v1069
  %v1166 = vmul.f32 %v1134, %v1070
  %v1167 = vmul.f32 %v1135, %v1071
  %v1168 = vmul.f32 %v1136, %v1072
  %v1169 = vmul.f32 %v1137, %v1073
  %v1170 = vmul.f32 %v1138, %v1074
  %v1171 = vmul.f32 %v1139, %v1075
  %v1172 = vmul.f32 %v1140, %v1044
  %v1173 = vmul.f32 %v1141, %v1045
  %v1174 = vmul.f32 %v1142, %v1046
  %v1175 = vmul.f32 %v1143, %v1047
  %v1176 = vmul.f32 %v1144, %v1048
  %v1177 = vmul.f32 %v1145, %v1049
  %v1178 = vmul.f32 %v1146, %v1050
  %v1179 = vmul.f32 %v1147, %v1051
  %v1180 = vmul.f32 %v1148, %v1052
  %v1181 = vmul.f32 %v1149, %v1053
  %v1182 = vmul.f32 %v1150, %v1054
  %v1183 = vmul.f32 %v1151, %v1055
  %v1184 = vmul.f32 %v1152, %v1056
  %v1185 = vmul.f32 %v1153, %v1057
  %v1186 = vmul.f32 %v1154, %v1058
  %v1187 = vmul.f32 %v1155, %v1059
  %v1188 = vmul.f32 %v1156, %v1060
  %v1189 = vmul.f32 %v1157, %v1061
  %v1190 = vmul.f32 %v1158, %v1062
  %v1191 = vmul.f32 %v1159, %v1063
  %v1192 = vmul.f32 %v1160, %v1064
  %v1193 = vmul.f32 %v1161, %v1065
  %v1194 = vmul.f32 %v1162, %v1066
  %v1195 = vmul.f32 %v1163, %v1067
  %v1196 = vmul.f32 %v1164, %v1068
  %v1197 = vmul.f32 %v1165, %v1069
  %v1198 = vmul.f32 %v1166, %v1070
  %v1199 = vmul.f32 %v1167, %v1071
  %v1200 = vmul.f32 %v1168, %v1072
  %v1201 = vmul.f32 %v1169, %v1073
  %v1202 = vmul.f32 %v1170, %v1074
  %v1203 = vmul.f32 %v1171, %v1075
  %v1204 = vadd.f32 %v1044, %v1172
  %v1205 = vadd.f32 %v1045, %v1173
  %v1206 = vadd.f32 %v1046, %v1174
  %v1207 = vadd.f32 %v1047, %v1175
  %v1208 = vadd.f32 %v1048, %v1176
  %v1209 = vadd.f32 %v1049, %v1177
  %v1210 = vadd.f32 %v1050, %v1178
  %v1211 = vadd.f32 %v1051, %v1179
  %v1212 = vadd.f32 %v1052, %v1180
  %v1213 = vadd.f32 %v1053, %v1181
  %v1214 = vadd.f32 %v1054, %v1182
  %v1215 = vadd.f32 %v1055, %v1183
  %v1216 = vadd.f32 %v1056, %v1184
  %v1217 = vadd.f32 %v1057, %v1185
  %v1218 = vadd.f32 %v1058, %v1186
  %v1219 = vadd.f32 %v1059, %v1187
  %v1220 = vadd.f32 %v1060, %v1188
  %v1221 = vadd.f32 %v1061, %v1189
  %v1222 = vadd.f32 %v1062, %v1190
  %v1223 = vadd.f32 %v1063, %v1191
  %v1224 = vadd.f32 %v1064, %v1192
  %v1225 = vadd.f32 %v1065, %v1193
  %v1226 = vadd.f32 %v1066, %v1194
  %v1227 = vadd.f32 %v1067, %v1195
  %v1228 = vadd.f32 %v1068, %v1196
  %v1229 = vadd.f32 %v1069, %v1197
  %v1230 = vadd.f32 %v1070, %v1198
  %v1231 = vadd.f32 %v1071, %v1199
  %v1232 = vadd.f32 %v1072, %v1200
  %v1233 = vadd.f32 %v1073, %v1201
  %v1234 = vadd.f32 %v1074, %v1202
  %v1235 = vadd.f32 %v1075, %v1203
  %v1236 = vmul.f32 %v1204, 0.7978846
  %v1237 = vmul.f32 %v1205, 0.7978846
  %v1238 = vmul.f32 %v1206, 0.7978846
  %v1239 = vmul.f32 %v1207, 0.7978846
  %v1240 = vmul.f32 %v1208, 0.7978846
  %v1241 = vmul.f32 %v1209, 0.7978846
  %v1242 = vmul.f32 %v1210, 0.7978846
  %v1243 = vmul.f32 %v1211, 0.7978846
  %v1244 = vmul.f32 %v1212, 0.7978846
  %v1245 = vmul.f32 %v1213, 0.7978846
  %v1246 = vmul.f32 %v1214, 0.7978846
  %v1247 = vmul.f32 %v1215, 0.7978846
  %v1248 = vmul.f32 %v1216, 0.7978846
  %v1249 = vmul.f32 %v1217, 0.7978846
  %v1250 = vmul.f32 %v1218, 0.7978846
  %v1251 = vmul.f32 %v1219, 0.7978846
  %v1252 = vmul.f32 %v1220, 0.7978846
  %v1253 = vmul.f32 %v1221, 0.7978846
  %v1254 = vmul.f32 %v1222, 0.7978846
  %v1255 = vmul.f32 %v1223, 0.7978846
  %v1256 = vmul.f32 %v1224, 0.7978846
  %v1257 = vmul.f32 %v1225, 0.7978846
  %v1258 = vmul.f32 %v1226, 0.7978846
  %v1259 = vmul.f32 %v1227, 0.7978846
  %v1260 = vmul.f32 %v1228, 0.7978846
  %v1261 = vmul.f32 %v1229, 0.7978846
  %v1262 = vmul.f32 %v1230, 0.7978846
  %v1263 = vmul.f32 %v1231, 0.7978846
  %v1264 = vmul.f32 %v1232, 0.7978846
  %v1265 = vmul.f32 %v1233, 0.7978846
  %v1266 = vmul.f32 %v1234, 0.7978846
  %v1267 = vmul.f32 %v1235, 0.7978846
  %v1268 = vtanh.pop %v1236
  %v1269 = vtanh.pop %v1237
  %v1270 = vtanh.pop %v1238
  %v1271 = vtanh.pop %v1239
  %v1272 = vtanh.pop %v1240
  %v1273 = vtanh.pop %v1241
  %v1274 = vtanh.pop %v1242
  %v1275 = vtanh.pop %v1243
  %v1276 = vtanh.pop %v1244
  %v1277 = vtanh.pop %v1245
  %v1278 = vtanh.pop %v1246
  %v1279 = vtanh.pop %v1247
  %v1280 = vtanh.pop %v1248
  %v1281 = vtanh.pop %v1249
  %v1282 = vtanh.pop %v1250
  %v1283 = vtanh.pop %v1251
  %v1284 = vtanh.pop %v1252
  %v1285 = vtanh.pop %v1253
  %v1286 = vtanh.pop %v1254
  %v1287 = vtanh.pop %v1255
  %v1288 = vtanh.pop %v1256
  %v1289 = vtanh.pop %v1257
  %v1290 = vtanh.pop %v1258
  %v1291 = vtanh.pop %v1259
  %v1292 = vtanh.pop %v1260
  %v1293 = vtanh.pop %v1261
  %v1294 = vtanh.pop %v1262
  %v1295 = vtanh.pop %v1263
  %v1296 = vtanh.pop %v1264
  %v1297 = vtanh.pop %v1265
  %v1298 = vtanh.pop %v1266
  %v1299 = vtanh.pop %v1267
  %v1300 = vadd.f32 %v1268, 1.0
  %v1301 = vadd.f32 %v1269, 1.0
  %v1302 = vadd.f32 %v1270, 1.0
  %v1303 = vadd.f32 %v1271, 1.0
  %v1304 = vadd.f32 %v1272, 1.0
  %v1305 = vadd.f32 %v1273, 1.0
  %v1306 = vadd.f32 %v1274, 1.0
  %v1307 = vadd.f32 %v1275, 1.0
  %v1308 = vadd.f32 %v1276, 1.0
  %v1309 = vadd.f32 %v1277, 1.0
  %v1310 = vadd.f32 %v1278, 1.0
  %v1311 = vadd.f32 %v1279, 1.0
  %v1312 = vadd.f32 %v1280, 1.0
  %v1313 = vadd.f32 %v1281, 1.0
  %v1314 = vadd.f32 %v1282, 1.0
  %v1315 = vadd.f32 %v1283, 1.0
  %v1316 = vadd.f32 %v1284, 1.0
  %v1317 = vadd.f32 %v1285, 1.0
  %v1318 = vadd.f32 %v1286, 1.0
  %v1319 = vadd.f32 %v1287, 1.0
  %v1320 = vadd.f32 %v1288, 1.0
  %v1321 = vadd.f32 %v1289, 1.0
  %v1322 = vadd.f32 %v1290, 1.0
  %v1323 = vadd.f32 %v1291, 1.0
  %v1324 = vadd.f32 %v1292, 1.0
  %v1325 = vadd.f32 %v1293, 1.0
  %v1326 = vadd.f32 %v1294, 1.0
  %v1327 = vadd.f32 %v1295, 1.0
  %v1328 = vadd.f32 %v1296, 1.0
  %v1329 = vadd.f32 %v1297, 1.0
  %v1330 = vadd.f32 %v1298, 1.0
  %v1331 = vadd.f32 %v1299, 1.0
  %v1332 = vmul.f32 %v1076, %v1300
  %v1333 = vmul.f32 %v1077, %v1301
  %v1334 = vmul.f32 %v1078, %v1302
  %v1335 = vmul.f32 %v1079, %v1303
  %v1336 = vmul.f32 %v1080, %v1304
  %v1337 = vmul.f32 %v1081, %v1305
  %v1338 = vmul.f32 %v1082, %v1306
  %v1339 = vmul.f32 %v1083, %v1307
  %v1340 = vmul.f32 %v1084, %v1308
  %v1341 = vmul.f32 %v1085, %v1309
  %v1342 = vmul.f32 %v1086, %v1310
  %v1343 = vmul.f32 %v1087, %v1311
  %v1344 = vmul.f32 %v1088, %v1312
  %v1345 = vmul.f32 %v1089, %v1313
  %v1346 = vmul.f32 %v1090, %v1314
  %v1347 = vmul.f32 %v1091, %v1315
  %v1348 = vmul.f32 %v1092, %v1316
  %v1349 = vmul.f32 %v1093, %v1317
  %v1350 = vmul.f32 %v1094, %v1318
  %v1351 = vmul.f32 %v1095, %v1319
  %v1352 = vmul.f32 %v1096, %v1320
  %v1353 = vmul.f32 %v1097, %v1321
  %v1354 = vmul.f32 %v1098, %v1322
  %v1355 = vmul.f32 %v1099, %v1323
  %v1356 = vmul.f32 %v1100, %v1324
  %v1357 = vmul.f32 %v1101, %v1325
  %v1358 = vmul.f32 %v1102, %v1326
  %v1359 = vmul.f32 %v1103, %v1327
  %v1360 = vmul.f32 %v1104, %v1328
  %v1361 = vmul.f32 %v1105, %v1329
  %v1362 = vmul.f32 %v1106, %v1330
  %v1363 = vmul.f32 %v1107, %v1331
  %v1364 = vld [vmem:[%s7] sm:$0xf]
  %v1365 = vpack.c.bf16 %v1333, %v1332
  %v1366 = vpack.c.bf16 %v1335, %v1334
  %v1367 = vpack.c.bf16 %v1337, %v1336
  %v1368 = vpack.c.bf16 %v1339, %v1338
  %v1369 = vpack.c.bf16 %v1341, %v1340
  %v1370 = vpack.c.bf16 %v1343, %v1342
  %v1371 = vpack.c.bf16 %v1345, %v1344
  %v1372 = vpack.c.bf16 %v1347, %v1346
  %v1373 = vpack.c.bf16 %v1349, %v1348
  %v1374 = vpack.c.bf16 %v1351, %v1350
  %v1375 = vpack.c.bf16 %v1353, %v1352
  %v1376 = vpack.c.bf16 %v1355, %v1354
  %v1377 = vpack.c.bf16 %v1357, %v1356
  %v1378 = vpack.c.bf16 %v1359, %v1358
  %v1379 = vpack.c.bf16 %v1361, %v1360
  %v1380 = vpack.c.bf16 %v1363, %v1362
  %vm1381 = vcmask 64512
  %v1383 = vsel %vm1381, %v1365, 0
  %v1386 = vsel %vm1381, %v1366, 0
  %v1389 = vsel %vm1381, %v1367, 0
  %v1392 = vsel %vm1381, %v1368, 0
  %v1395 = vsel %vm1381, %v1369, 0
  %v1398 = vsel %vm1381, %v1370, 0
  %v1401 = vsel %vm1381, %v1371, 0
  %v1404 = vsel %vm1381, %v1372, 0
  %v1407 = vsel %vm1381, %v1373, 0
  %v1410 = vsel %vm1381, %v1374, 0
  %v1413 = vsel %vm1381, %v1375, 0
  %v1416 = vsel %vm1381, %v1376, 0
  %v1419 = vsel %vm1381, %v1377, 0
  %v1422 = vsel %vm1381, %v1378, 0
  %v1425 = vsel %vm1381, %v1379, 0
  %v1428 = vsel %vm1381, %v1380, 0
  %vm1430 = vcmask 1043456
  %v1432 = vsel %vm1430, %v1364, 0
  %1434 = vmatprep.subr.bf16.mxu0 0
  %1435 = vmatpush1.bf16.msra.mxu0 %v1432
  %1436 = vmatprep.subr.bf16.mxu0 0
  %1437 = vmatpush1.bf16.msra.mxu0 0
  %1438 = vmatprep.subr.bf16.mxu0 0
  %1439 = vmatpush1.bf16.msra.mxu0 0
  %1440 = vmatprep.subr.bf16.mxu0 0
  %1441 = vmatpush1.bf16.msra.mxu0 0
  %1442 = vmatprep.subr.bf16.mxu0 0
  %1443 = vmatpush1.bf16.msra.mxu0 0
  %1444 = vmatprep.subr.bf16.mxu0 0
  %1445 = vmatpush1.bf16.msra.mxu0 0
  %1446 = vmatprep.subr.bf16.mxu0 0
  %1447 = vmatpush1.bf16.msra.mxu0 0
  %1448 = vmatprep.subr.bf16.mxu0 0
  %1449 = vmatpush1.bf16.msra.mxu0 0
  %1450 = vmatprep.subr.bf16.mxu0 0
  %1451 = vmatpush1.bf16.msra.mxu0 0
  %1452 = vmatprep.subr.bf16.mxu0 0
  %1453 = vmatpush1.bf16.msra.mxu0 0
  %1454 = vmatprep.subr.bf16.mxu0 0
  %1455 = vmatpush1.bf16.msra.mxu0 0
  %1456 = vmatprep.subr.bf16.mxu0 0
  %1457 = vmatpush1.bf16.msra.mxu0 0
  %1458 = vmatprep.subr.bf16.mxu0 0
  %1459 = vmatpush1.bf16.msra.mxu0 0
  %1460 = vmatprep.subr.bf16.mxu0 0
  %1461 = vmatpush1.bf16.msra.mxu0 0
  %1462 = vmatprep.subr.bf16.mxu0 0
  %1463 = vmatpush1.bf16.msra.mxu0 0
  %1464 = vmatprep.subr.bf16.mxu0 0
  %1465 = vmatpush1.bf16.msra.mxu0 0
  %1466 = vmatprep.mubr.bf16.mxu0 0
  %1467 = vmatmul.mubr.bf16.gmra.mrb[0].mxu0 %v1383
  %v1468 = vpop.f32.mrb[0].mxu0
  %v1469 = vadd.f32 0.0, %v1468
  %v1470 = vpop.f32.mrb[0].mxu0
  %v1471 = vpop.f32.mrb[0].mxu0
  %v1472 = vadd.f32 0.0, %v1471
  %v1473 = vpop.f32.mrb[0].mxu0
  %1474 = vmatprep.mubr.bf16.mxu0 0
  %1475 = vmatmul.mubr.bf16.gmra.mrb[0].mxu0 %v1386
  %v1476 = vpop.f32.mrb[0].mxu0
  %v1477 = vadd.f32 0.0, %v1476
  %v1478 = vpop.f32.mrb[0].mxu0
  %v1479 = vpop.f32.mrb[0].mxu0
  %v1480 = vadd.f32 0.0, %v1479
  %v1481 = vpop.f32.mrb[0].mxu0
  %1482 = vmatprep.mubr.bf16.mxu0 0
  %1483 = vmatmul.mubr.bf16.gmra.mrb[0].mxu0 %v1389
  %v1484 = vpop.f32.mrb[0].mxu0
  %v1485 = vadd.f32 0.0, %v1484
  %v1486 = vpop.f32.mrb[0].mxu0
  %v1487 = vpop.f32.mrb[0].mxu0
  %v1488 = vadd.f32 0.0, %v1487
  %v1489 = vpop.f32.mrb[0].mxu0
  %1490 = vmatprep.mubr.bf16.mxu0 0
  %1491 = vmatmul.mubr.bf16.gmra.mrb[0].mxu0 %v1392
  %v1492 = vpop.f32.mrb[0].mxu0
  %v1493 = vadd.f32 0.0, %v1492
  %v1494 = vpop.f32.mrb[0].mxu0
  %v1495 = vpop.f32.mrb[0].mxu0
  %v1496 = vadd.f32 0.0, %v1495
  %v1497 = vpop.f32.mrb[0].mxu0
  %1498 = vmatprep.mubr.bf16.mxu0 0
  %1499 = vmatmul.mubr.bf16.gmra.mrb[0].mxu0 %v1395
  %v1500 = vpop.f32.mrb[0].mxu0
  %v1501 = vadd.f32 0.0, %v1500
  %v1502 = vpop.f32.mrb[0].mxu0
  %v1503 = vpop.f32.mrb[0].mxu0
  %v1504 = vadd.f32 0.0, %v1503
  %v1505 = vpop.f32.mrb[0].mxu0
  %1506 = vmatprep.mubr.bf16.mxu0 0
  %1507 = vmatmul.mubr.bf16.gmra.mrb[0].mxu0 %v1398
  %v1508 = vpop.f32.mrb[0].mxu0
  %v1509 = vadd.f32 0.0, %v1508
  %v1510 = vpop.f32.mrb[0].mxu0
  %v1511 = vpop.f32.mrb[0].mxu0
  %v1512 = vadd.f32 0.0, %v1511
  %v1513 = vpop.f32.mrb[0].mxu0
  %1514 = vmatprep.mubr.bf16.mxu0 0
  %1515 = vmatmul.mubr.bf16.gmra.mrb[0].mxu0 %v1401
  %v1516 = vpop.f32.mrb[0].mxu0
  %v1517 = vadd.f32 0.0, %v1516
  %v1518 = vpop.f32.mrb[0].mxu0
  %v1519 = vpop.f32.mrb[0].mxu0
  %v1520 = vadd.f32 0.0, %v1519
  %v1521 = vpop.f32.mrb[0].mxu0
  %1522 = vmatprep.mubr.bf16.mxu0 0
  %1523 = vmatmul.mubr.bf16.gmra.mrb[0].mxu0 %v1404
  %v1524 = vpop.f32.mrb[0].mxu0
  %v1525 = vadd.f32 0.0, %v1524
  %v1526 = vpop.f32.mrb[0].mxu0
  %v1527 = vpop.f32.mrb[0].mxu0
  %v1528 = vadd.f32 0.0, %v1527
  %v1529 = vpop.f32.mrb[0].mxu0
  %1530 = vmatprep.mubr.bf16.mxu0 0
  %1531 = vmatmul.mubr.bf16.gmra.mrb[0].mxu0 %v1407
  %v1532 = vpop.f32.mrb[0].mxu0
  %v1533 = vadd.f32 0.0, %v1532
  %v1534 = vpop.f32.mrb[0].mxu0
  %v1535 = vpop.f32.mrb[0].mxu0
  %v1536 = vadd.f32 0.0, %v1535
  %v1537 = vpop.f32.mrb[0].mxu0
  %1538 = vmatprep.mubr.bf16.mxu0 0
  %1539 = vmatmul.mubr.bf16.gmra.mrb[0].mxu0 %v1410
  %v1540 = vpop.f32.mrb[0].mxu0
  %v1541 = vadd.f32 0.0, %v1540
  %v1542 = vpop.f32.mrb[0].mxu0
  %v1543 = vpop.f32.mrb[0].mxu0
  %v1544 = vadd.f32 0.0, %v1543
  %v1545 = vpop.f32.mrb[0].mxu0
  %1546 = vmatprep.mubr.bf16.mxu0 0
  %1547 = vmatmul.mubr.bf16.gmra.mrb[0].mxu0 %v1413
  %v1548 = vpop.f32.mrb[0].mxu0
  %v1549 = vadd.f32 0.0, %v1548
  %v1550 = vpop.f32.mrb[0].mxu0
  %v1551 = vpop.f32.mrb[0].mxu0
  %v1552 = vadd.f32 0.0, %v1551
  %v1553 = vpop.f32.mrb[0].mxu0
  %1554 = vmatprep.mubr.bf16.mxu0 0
  %1555 = vmatmul.mubr.bf16.gmra.mrb[0].mxu0 %v1416
  %v1556 = vpop.f32.mrb[0].mxu0
  %v1557 = vadd.f32 0.0, %v1556
  %v1558 = vpop.f32.mrb[0].mxu0
  %v1559 = vpop.f32.mrb[0].mxu0
  %v1560 = vadd.f32 0.0, %v1559
  %v1561 = vpop.f32.mrb[0].mxu0
  %1562 = vmatprep.mubr.bf16.mxu0 0
  %1563 = vmatmul.mubr.bf16.gmra.mrb[0].mxu0 %v1419
  %v1564 = vpop.f32.mrb[0].mxu0
  %v1565 = vadd.f32 0.0, %v1564
  %v1566 = vpop.f32.mrb[0].mxu0
  %v1567 = vpop.f32.mrb[0].mxu0
  %v1568 = vadd.f32 0.0, %v1567
  %v1569 = vpop.f32.mrb[0].mxu0
  %1570 = vmatprep.mubr.bf16.mxu0 0
  %1571 = vmatmul.mubr.bf16.gmra.mrb[0].mxu0 %v1422
  %v1572 = vpop.f32.mrb[0].mxu0
  %v1573 = vadd.f32 0.0, %v1572
  %v1574 = vpop.f32.mrb[0].mxu0
  %v1575 = vpop.f32.mrb[0].mxu0
  %v1576 = vadd.f32 0.0, %v1575
  %v1577 = vpop.f32.mrb[0].mxu0
  %1578 = vmatprep.mubr.bf16.mxu0 0
  %1579 = vmatmul.mubr.bf16.gmra.mrb[0].mxu0 %v1425
  %v1580 = vpop.f32.mrb[0].mxu0
  %v1581 = vadd.f32 0.0, %v1580
  %v1582 = vpop.f32.mrb[0].mxu0
  %v1583 = vpop.f32.mrb[0].mxu0
  %v1584 = vadd.f32 0.0, %v1583
  %v1585 = vpop.f32.mrb[0].mxu0
  %1586 = vmatprep.mubr.bf16.mxu0 0
  %1587 = vmatmul.mubr.bf16.gmra.mrb[0].mxu0 %v1428
  %v1588 = vpop.f32.mrb[0].mxu0
  %v1589 = vadd.f32 0.0, %v1588
  %v1590 = vpop.f32.mrb[0].mxu0
  %v1591 = vpop.f32.mrb[0].mxu0
  %v1592 = vadd.f32 0.0, %v1591
  %v1593 = vpop.f32.mrb[0].mxu0
  %1594 = vdwg.mxu0
  %v1595 = vmax.f32 %v1469, %v1485
  %v1596 = vmax.f32 %v1472, %v1488
  %v1597 = vmax.f32 %v1477, %v1493
  %v1598 = vmax.f32 %v1480, %v1496
  %v1599 = vmax.f32 %v1595, %v1501
  %v1600 = vmax.f32 %v1596, %v1504
  %v1601 = vmax.f32 %v1597, %v1509
  %v1602 = vmax.f32 %v1598, %v1512
  %v1603 = vmax.f32 %v1599, %v1517
  %v1604 = vmax.f32 %v1600, %v1520
  %v1605 = vmax.f32 %v1601, %v1525
  %v1606 = vmax.f32 %v1602, %v1528
  %v1607 = vmax.f32 %v1603, %v1533
  %v1608 = vmax.f32 %v1604, %v1536
  %v1609 = vmax.f32 %v1605, %v1541
  %v1610 = vmax.f32 %v1606, %v1544
  %v1611 = vmax.f32 %v1607, %v1549
  %v1612 = vmax.f32 %v1608, %v1552
  %v1613 = vmax.f32 %v1609, %v1557
  %v1614 = vmax.f32 %v1610, %v1560
  %v1615 = vmax.f32 %v1611, %v1565
  %v1616 = vmax.f32 %v1612, %v1568
  %v1617 = vmax.f32 %v1613, %v1573
  %v1618 = vmax.f32 %v1614, %v1576
  %v1619 = vmax.f32 %v1615, %v1581
  %v1620 = vmax.f32 %v1616, %v1584
  %v1621 = vmax.f32 %v1617, %v1589
  %v1622 = vmax.f32 %v1618, %v1592
  %v1623 = vld [vmem:[%s8] sm:$0xf]
  %v1624 = vld [vmem:[%s8 + $0x4] sm:$0xf]
  %v1625 = vpack.c.bf16 %v1620, %v1619
  %v1626 = vpack.c.bf16 %v1622, %v1621
  %v1629 = vunpack.c.l.b16 %v1623
  %v1630 = vunpack.c.l.b16 %v1624
  %v1631 = vpack.c.b16 %v1630, %v1629
  %vm1633 = vcmask 130048
  %v1635 = vsel %vm1633, %v1625, 0
  %v1638 = vsel %vm1633, %v1626, 0
  %1640 = vmatprep.subr.bf16.mxu0 0
  %1641 = vmatpush1.bf16.msra.mxu0 %v1631
  %1642 = vmatprep.subr.bf16.mxu0 0
  %1643 = vmatpush1.bf16.msra.mxu0 0
  %1644 = vmatprep.subr.bf16.mxu0 0
  %1645 = vmatpush1.bf16.msra.mxu0 0
  %1646 = vmatprep.subr.bf16.mxu0 0
  %1647 = vmatpush1.bf16.msra.mxu0 0
  %1648 = vmatprep.subr.bf16.mxu0 0
  %1649 = vmatpush1.bf16.msra.mxu0 0
  %1650 = vmatprep.subr.bf16.mxu0 0
  %1651 = vmatpush1.bf16.msra.mxu0 0
  %1652 = vmatprep.subr.bf16.mxu0 0
  %1653 = vmatpush1.bf16.msra.mxu0 0
  %1654 = vmatprep.subr.bf16.mxu0 0
  %1655 = vmatpush1.bf16.msra.mxu0 0
  %1656 = vmatprep.subr.bf16.mxu0 0
  %1657 = vmatpush1.bf16.msra.mxu0 0
  %1658 = vmatprep.subr.bf16.mxu0 0
  %1659 = vmatpush1.bf16.msra.mxu0 0
  %1660 = vmatprep.subr.bf16.mxu0 0
  %1661 = vmatpush1.bf16.msra.mxu0 0
  %1662 = vmatprep.subr.bf16.mxu0 0
  %1663 = vmatpush1.bf16.msra.mxu0 0
  %1664 = vmatprep.subr.bf16.mxu0 0
  %1665 = vmatpush1.bf16.msra.mxu0 0
  %1666 = vmatprep.subr.bf16.mxu0 0
  %1667 = vmatpush1.bf16.msra.mxu0 0
  %1668 = vmatprep.subr.bf16.mxu0 0
  %1669 = vmatpush1.bf16.msra.mxu0 0
  %1670 = vmatprep.subr.bf16.mxu0 0
  %1671 = vmatpush1.bf16.msra.mxu0 0
  %1672 = vmatprep.mubr.bf16.mxu0 0
  %1673 = vmatmul.mubr.bf16.gmra.mrb[0].mxu0 %v1635
  %v1674 = vpop.f32.mrb[0].mxu0
  %v1675 = vadd.f32 0.0, %v1674
  %v1676 = vpop.f32.mrb[0].mxu0
  %v1677 = vpop.f32.mrb[0].mxu0
  %v1678 = vadd.f32 0.0, %v1677
  %v1679 = vpop.f32.mrb[0].mxu0
  %1680 = vmatprep.mubr.bf16.mxu0 0
  %1681 = vmatmul.mubr.bf16.gmra.mrb[0].mxu0 %v1638
  %v1682 = vpop.f32.mrb[0].mxu0
  %v1683 = vadd.f32 0.0, %v1682
  %v1684 = vpop.f32.mrb[0].mxu0
  %v1685 = vpop.f32.mrb[0].mxu0
  %v1686 = vadd.f32 0.0, %v1685
  %v1687 = vpop.f32.mrb[0].mxu0
  %1688 = vdwg.mxu0
  %v1689 = vld [vmem:[%s9] sm:$0x1]
  %v1691 = vlaneseq
  %v1692 = vshrl.u32 %v1691, 7
  %v1693 = vsub.s32 0, %v1692
  %v1694 = vrot.slane %v1689, %v1693
  %v1696 = vmul.f32 %v1675, %v1694
  %v1697 = vmul.f32 %v1678, %v1694
  %v1698 = vmul.f32 %v1683, %v1694
  %v1699 = vmul.f32 %v1686, %v1694
  %v1700 = vld [vmem:[%s10] sm:$0x1]
  %v1702 = vlaneseq
  %v1703 = vshrl.u32 %v1702, 7
  %v1704 = vsub.s32 0, %v1703
  %v1705 = vrot.slane %v1700, %v1704
  %v1707 = vadd.f32 %v1696, %v1705
  %v1708 = vadd.f32 %v1697, %v1705
  %v1709 = vadd.f32 %v1698, %v1705
  %v1710 = vadd.f32 %v1699, %v1705
  %v1711 = vld [vmem:[%s11] sm:$0xf]
  %v1712 = vld [vmem:[%s11 + $0x4] sm:$0xf]
  %v1713 = vld [vmem:[%s11 + $0x8] sm:$0xf]
  %v1714 = vld [vmem:[%s11 + $0xc] sm:$0xf]
  %v1715 = vunpack.c.l.bf16 %v1711
  %v1716 = vunpack.c.l.bf16 %v1712
  %v1717 = vunpack.c.l.bf16 %v1713
  %v1718 = vunpack.c.l.bf16 %v1714
  %v1719 = vadd.f32 %v1707, %v1715
  %v1720 = vadd.f32 %v1708, %v1716
  %v1721 = vadd.f32 %v1709, %v1717
  %v1722 = vadd.f32 %v1710, %v1718
  %v1723 = vpack.c.bf16 %v1720, %v1719
  %v1724 = vpack.c.bf16 %v1722, %v1721
  %v1727 = vunpack.c.l.b16 %v1723
  %v1728 = vunpack.c.h.b16 %v1723
  %v1729 = vunpack.c.l.b16 %v1724
  %v1730 = vunpack.c.h.b16 %v1724
  %v1731 = vpack.c.b16 %v1727, %v1727
  %v1732 = vpack.c.b16 %v1728, %v1728
  %v1733 = vpack.c.b16 %v1729, %v1729
  %v1734 = vpack.c.b16 %v1730, %v1730
  %vm1739 = vcmask 519168
  %1740 = vst.msk [vmem:[%s12] sm:$0xf] %vm1739, %v1731
  %1741 = vst.msk [vmem:[%s12 + $0x4] sm:$0xf] %vm1739, %v1732
  %1742 = vst.msk [vmem:[%s12 + $0x8] sm:$0xf] %vm1739, %v1733
  %1743 = vst.msk [vmem:[%s12 + $0xc] sm:$0xf] %vm1739, %v1734
  // Predicated region
  $region50: #{_lambda_.30} parent=0 // pred_check
    _
  $region51: #{_lambda_.30} parent=0 // pred_check_branch
    %1745 = sbr.rel (0) target = $region53
  $region52: #{_lambda_.30} parent=0 // pred_region
    _
  $region53: #{_lambda_.30} parent=0 // pred_fallthru
    _
  // Predicated region
  $region54: #{_lambda_.30} parent=0 // pred_check
    _
  $region55: #{_lambda_.30} parent=0 // pred_check_branch
    %1747 = sbr.rel (0) target = $region57
  $region56: #{_lambda_.30} parent=0 // pred_region
    _
  $region57: #{_lambda_.30} parent=0 // pred_fallthru
    _

// kernel: _lambda_.33
$region0: #{_lambda_.33}
  #allocation0 [shape = 'u32[]', space=smem, size = 0x4, offset = 0x4, fixed_abs, tag = 'smem constant byte address 0x4 - core index']
  #allocation1 [shape = 'u32[144,128]{1,0:T(1,128)}', space=vmem, size = 0x12000, scoped, tag = 'internal scratch']
  %s0 = inlined_call_operand.vmem [shape: bf16[32,512], index: 0, kind: input, shape index: {}]
  %s1 = inlined_call_operand.vmem [shape: bf16[32,64], index: 1, kind: input, shape index: {}]
  %s2 = inlined_call_operand.vmem [shape: f32[1,64], index: 2, kind: input, shape index: {}]
  %s3 = inlined_call_operand.vmem [shape: f32[1,64], index: 3, kind: input, shape index: {}]
  %s4 = inlined_call_operand.vmem [shape: bf16[32,64], index: 4, kind: input, shape index: {}]
  %s5 = inlined_call_operand.vmem [shape: bf16[32,64], index: 5, kind: output, shape index: {}]
  %s6 = sld [smem:[#allocation0]]
  $region30: #{_lambda_.33} parent=0
    _
  %s8 = ssub.s32 1, %s6
  %s9 = scalar_select 0, %s8, %s6
  // Predicated region
  $region2: #{_lambda_.33} parent=0 // pred_check
    _
  $region3: #{_lambda_.33} parent=0 // pred_check_branch
    %11 = sbr.rel (0) target = $region5
  $region4: #{_lambda_.33} parent=0 // pred_region
    _
  $region5: #{_lambda_.33} parent=0 // pred_fallthru
    _
  // Predicated region
  $region6: #{_lambda_.33} parent=0 // pred_check
    _
  $region7: #{_lambda_.33} parent=0 // pred_check_branch
    %13 = sbr.rel (0) target = $region9
  $region8: #{_lambda_.33} parent=0 // pred_region
    _
  $region9: #{_lambda_.33} parent=0 // pred_fallthru
    _
  // Predicated region
  $region10: #{_lambda_.33} parent=0 // pred_check
    _
  $region11: #{_lambda_.33} parent=0 // pred_check_branch
    %15 = sbr.rel (0) target = $region13
  $region12: #{_lambda_.33} parent=0 // pred_region
    _
  $region13: #{_lambda_.33} parent=0 // pred_fallthru
    _
  // Predicated region
  $region14: #{_lambda_.33} parent=0 // pred_check
    _
  $region15: #{_lambda_.33} parent=0 // pred_check_branch
    %17 = sbr.rel (0) target = $region17
  $region16: #{_lambda_.33} parent=0 // pred_region
    _
  $region17: #{_lambda_.33} parent=0 // pred_fallthru
    _
  // Predicated region
  $region18: #{_lambda_.33} parent=0 // pred_check
    _
  $region19: #{_lambda_.33} parent=0 // pred_check_branch
    %19 = sbr.rel (0) target = $region21
  $region20: #{_lambda_.33} parent=0 // pred_region
    _
  $region21: #{_lambda_.33} parent=0 // pred_fallthru
    _
  %v20 = vld [vmem:[%s0] sm:$0xff]
  %v21 = vld [vmem:[%s0 + $0x8] sm:$0xff]
  %v22 = vld [vmem:[%s0 + $0x10] sm:$0xff]
  %v23 = vld [vmem:[%s0 + $0x18] sm:$0xff]
  %v24 = vld [vmem:[%s0 + $0x20] sm:$0xff]
  %v25 = vld [vmem:[%s0 + $0x28] sm:$0xff]
  %v26 = vld [vmem:[%s0 + $0x30] sm:$0xff]
  %v27 = vld [vmem:[%s0 + $0x38] sm:$0xff]
  %v28 = vunpack.c.l.bf16 %v20
  %v29 = vunpack.c.h.bf16 %v20
  %v30 = vunpack.c.l.bf16 %v21
  %v31 = vunpack.c.h.bf16 %v21
  %v32 = vunpack.c.l.bf16 %v22
  %v33 = vunpack.c.h.bf16 %v22
  %v34 = vunpack.c.l.bf16 %v23
  %v35 = vunpack.c.h.bf16 %v23
  %v36 = vunpack.c.l.bf16 %v24
  %v37 = vunpack.c.h.bf16 %v24
  %v38 = vunpack.c.l.bf16 %v25
  %v39 = vunpack.c.h.bf16 %v25
  %v40 = vunpack.c.l.bf16 %v26
  %v41 = vunpack.c.h.bf16 %v26
  %v42 = vunpack.c.l.bf16 %v27
  %v43 = vunpack.c.h.bf16 %v27
  %44 = vrot.lane.b32.xlu0 %v28, 64
  %v45 = vpop.permute.xlu0 %44
  %46 = vrot.lane.b32.xlu0 %v32, 64
  %v47 = vpop.permute.xlu0 %46
  %48 = vrot.lane.b32.xlu0 %v36, 64
  %v49 = vpop.permute.xlu0 %48
  %50 = vrot.lane.b32.xlu0 %v40, 64
  %v51 = vpop.permute.xlu0 %50
  %52 = vrot.lane.b32.xlu0 %v29, 64
  %v53 = vpop.permute.xlu0 %52
  %54 = vrot.lane.b32.xlu0 %v33, 64
  %v55 = vpop.permute.xlu0 %54
  %56 = vrot.lane.b32.xlu0 %v37, 64
  %v57 = vpop.permute.xlu0 %56
  %58 = vrot.lane.b32.xlu0 %v41, 64
  %v59 = vpop.permute.xlu0 %58
  %60 = vrot.lane.b32.xlu0 %v30, 64
  %v61 = vpop.permute.xlu0 %60
  %62 = vrot.lane.b32.xlu0 %v34, 64
  %v63 = vpop.permute.xlu0 %62
  %64 = vrot.lane.b32.xlu0 %v38, 64
  %v65 = vpop.permute.xlu0 %64
  %66 = vrot.lane.b32.xlu0 %v42, 64
  %v67 = vpop.permute.xlu0 %66
  %68 = vrot.lane.b32.xlu0 %v31, 64
  %v69 = vpop.permute.xlu0 %68
  %70 = vrot.lane.b32.xlu0 %v35, 64
  %v71 = vpop.permute.xlu0 %70
  %72 = vrot.lane.b32.xlu0 %v39, 64
  %v73 = vpop.permute.xlu0 %72
  %74 = vrot.lane.b32.xlu0 %v43, 64
  %v75 = vpop.permute.xlu0 %74
  %v76 = vlaneseq
  %v77 = vand.u32 %v76, 127
  %vm78 = vcmp.lt.s32.totalorder %v77, 64
  %v79 = vsel %vm78, %v61, %v69
  %v80 = vsel %vm78, %v63, %v71
  %v81 = vsel %vm78, %v65, %v73
  %v82 = vsel %vm78, %v67, %v75
  %v83 = vsel %vm78, %v53, %v61
  %v84 = vsel %vm78, %v55, %v63
  %v85 = vsel %vm78, %v57, %v65
  %v86 = vsel %vm78, %v59, %v67
  %v87 = vsel %vm78, %v45, %v53
  %v88 = vsel %vm78, %v47, %v55
  %v89 = vsel %vm78, %v49, %v57
  %v90 = vsel %vm78, %v51, %v59
  %v91 = vsel %vm78, %v69, %v45
  %v92 = vsel %vm78, %v71, %v47
  %v93 = vsel %vm78, %v73, %v49
  %v94 = vsel %vm78, %v75, %v51
  %v95 = vmax.f32 %v28, %v91
  %v96 = vmax.f32 %v29, %v87
  %v97 = vmax.f32 %v30, %v83
  %v98 = vmax.f32 %v31, %v79
  %v99 = vmax.f32 %v32, %v92
  %v100 = vmax.f32 %v33, %v88
  %v101 = vmax.f32 %v34, %v84
  %v102 = vmax.f32 %v35, %v80
  %v103 = vmax.f32 %v36, %v93
  %v104 = vmax.f32 %v37, %v89
  %v105 = vmax.f32 %v38, %v85
  %v106 = vmax.f32 %v39, %v81
  %v107 = vmax.f32 %v40, %v94
  %v108 = vmax.f32 %v41, %v90
  %v109 = vmax.f32 %v42, %v86
  %v110 = vmax.f32 %v43, %v82
  %v111 = vmax.f32 %v95, %v98
  %v112 = vmax.f32 %v97, %v96
  %v113 = vmax.f32 %v99, %v102
  %v114 = vmax.f32 %v101, %v100
  %v115 = vmax.f32 %v103, %v106
  %v116 = vmax.f32 %v105, %v104
  %v117 = vmax.f32 %v107, %v110
  %v118 = vmax.f32 %v109, %v108
  %v119 = vmax.f32 %v111, %v112
  %v120 = vmax.f32 %v113, %v114
  %v121 = vmax.f32 %v115, %v116
  %v122 = vmax.f32 %v117, %v118
  %v123 = vld [vmem:[%s1] sm:$0xf]
  %v124 = vld [vmem:[%s1 + $0x4] sm:$0xf]
  %v125 = vld [vmem:[%s1 + $0x8] sm:$0xf]
  %v126 = vld [vmem:[%s1 + $0xc] sm:$0xf]
  %v127 = vunpack.c.l.bf16 %v123
  %v128 = vunpack.c.l.bf16 %v124
  %v129 = vunpack.c.l.bf16 %v125
  %v130 = vunpack.c.l.bf16 %v126
  %v131 = vsub.f32 %v119, %v127
  %v132 = vsub.f32 %v120, %v128
  %v133 = vsub.f32 %v121, %v129
  %v134 = vsub.f32 %v122, %v130
  %v135 = vld [vmem:[%s2] sm:$0x1]
  %v137 = vlaneseq
  %v138 = vshrl.u32 %v137, 7
  %v139 = vsub.s32 0, %v138
  %v140 = vrot.slane %v135, %v139
  %v142 = vmul.f32 %v131, %v140
  %v143 = vmul.f32 %v132, %v140
  %v144 = vmul.f32 %v133, %v140
  %v145 = vmul.f32 %v134, %v140
  %v146 = vld [vmem:[%s3] sm:$0x1]
  %v148 = vlaneseq
  %v149 = vshrl.u32 %v148, 7
  %v150 = vsub.s32 0, %v149
  %v151 = vrot.slane %v146, %v150
  %v153 = vadd.f32 %v142, %v151
  %v154 = vadd.f32 %v143, %v151
  %v155 = vadd.f32 %v144, %v151
  %v156 = vadd.f32 %v145, %v151
  %v157 = vld [vmem:[%s4] sm:$0xf]
  %v158 = vld [vmem:[%s4 + $0x4] sm:$0xf]
  %v159 = vld [vmem:[%s4 + $0x8] sm:$0xf]
  %v160 = vld [vmem:[%s4 + $0xc] sm:$0xf]
  %v161 = vunpack.c.l.bf16 %v157
  %v162 = vunpack.c.l.bf16 %v158
  %v163 = vunpack.c.l.bf16 %v159
  %v164 = vunpack.c.l.bf16 %v160
  %v165 = vadd.f32 %v153, %v161
  %v166 = vadd.f32 %v154, %v162
  %v167 = vadd.f32 %v155, %v163
  %v168 = vadd.f32 %v156, %v164
  %v169 = vpack.c.bf16 %v166, %v165
  %v170 = vpack.c.bf16 %v168, %v167
  %v173 = vunpack.c.l.b16 %v169
  %v174 = vunpack.c.h.b16 %v169
  %v175 = vunpack.c.l.b16 %v170
  %v176 = vunpack.c.h.b16 %v170
  %v177 = vpack.c.b16 %v173, %v173
  %v178 = vpack.c.b16 %v174, %v174
  %v179 = vpack.c.b16 %v175, %v175
  %v180 = vpack.c.b16 %v176, %v176
  %vm185 = vcmask 519168
  %186 = vst.msk [vmem:[%s5] sm:$0xf] %vm185, %v177
  %187 = vst.msk [vmem:[%s5 + $0x4] sm:$0xf] %vm185, %v178
  %188 = vst.msk [vmem:[%s5 + $0x8] sm:$0xf] %vm185, %v179
  %189 = vst.msk [vmem:[%s5 + $0xc] sm:$0xf] %vm185, %v180
  // Predicated region
  $region22: #{_lambda_.33} parent=0 // pred_check
    _
  $region23: #{_lambda_.33} parent=0 // pred_check_branch
    %191 = sbr.rel (0) target = $region25
  $region24: #{_lambda_.33} parent=0 // pred_region
    _
  $region25: #{_lambda_.33} parent=0 // pred_fallthru
    _
  // Predicated region
  $region26: #{_lambda_.33} parent=0 // pred_check
    _
  $region27: #{_lambda_.33} parent=0 // pred_check_branch
    %193 = sbr.rel (0) target = $region29
  $region28: #{_lambda_.33} parent=0 // pred_region
    _
  $region29: #{_lambda_.33} parent=0 // pred_fallthru
    _

// kernel: _lambda_.37
$region0: #{_lambda_.37}
  #allocation0 [shape = 'u32[]', space=smem, size = 0x4, offset = 0x4, fixed_abs, tag = 'smem constant byte address 0x4 - core index']
  #allocation1 [shape = 'u32[144,128]{1,0:T(1,128)}', space=vmem, size = 0x12000, scoped, tag = 'internal scratch']
  %s0 = inlined_call_operand.vmem [shape: bf16[32,64], index: 0, kind: input, shape index: {}]
  %s1 = inlined_call_operand.vmem [shape: bf16[64,32], index: 1, kind: input, shape index: {}]
  %s2 = inlined_call_operand.vmem [shape: f32[1,64], index: 2, kind: input, shape index: {}]
  %s3 = inlined_call_operand.vmem [shape: f32[1,64], index: 3, kind: input, shape index: {}]
  %s4 = inlined_call_operand.vmem [shape: f32[1,32], index: 4, kind: input, shape index: {}]
  %s5 = inlined_call_operand.vmem [shape: f32[1,32], index: 5, kind: input, shape index: {}]
  %s6 = inlined_call_operand.vmem [shape: bf16[32,32], index: 6, kind: output, shape index: {}]
  %s7 = sld [smem:[#allocation0]]
  $region34: #{_lambda_.37} parent=0
    _
  %s9 = ssub.s32 1, %s7
  %s10 = scalar_select 0, %s9, %s7
  // Predicated region
  $region2: #{_lambda_.37} parent=0 // pred_check
    _
  $region3: #{_lambda_.37} parent=0 // pred_check_branch
    %12 = sbr.rel (0) target = $region5
  $region4: #{_lambda_.37} parent=0 // pred_region
    _
  $region5: #{_lambda_.37} parent=0 // pred_fallthru
    _
  // Predicated region
  $region6: #{_lambda_.37} parent=0 // pred_check
    _
  $region7: #{_lambda_.37} parent=0 // pred_check_branch
    %14 = sbr.rel (0) target = $region9
  $region8: #{_lambda_.37} parent=0 // pred_region
    _
  $region9: #{_lambda_.37} parent=0 // pred_fallthru
    _
  // Predicated region
  $region10: #{_lambda_.37} parent=0 // pred_check
    _
  $region11: #{_lambda_.37} parent=0 // pred_check_branch
    %16 = sbr.rel (0) target = $region13
  $region12: #{_lambda_.37} parent=0 // pred_region
    _
  $region13: #{_lambda_.37} parent=0 // pred_fallthru
    _
  // Predicated region
  $region14: #{_lambda_.37} parent=0 // pred_check
    _
  $region15: #{_lambda_.37} parent=0 // pred_check_branch
    %18 = sbr.rel (0) target = $region17
  $region16: #{_lambda_.37} parent=0 // pred_region
    _
  $region17: #{_lambda_.37} parent=0 // pred_fallthru
    _
  // Predicated region
  $region18: #{_lambda_.37} parent=0 // pred_check
    _
  $region19: #{_lambda_.37} parent=0 // pred_check_branch
    %20 = sbr.rel (0) target = $region21
  $region20: #{_lambda_.37} parent=0 // pred_region
    _
  $region21: #{_lambda_.37} parent=0 // pred_fallthru
    _
  // Predicated region
  $region22: #{_lambda_.37} parent=0 // pred_check
    _
  $region23: #{_lambda_.37} parent=0 // pred_check_branch
    %22 = sbr.rel (0) target = $region25
  $region24: #{_lambda_.37} parent=0 // pred_region
    _
  $region25: #{_lambda_.37} parent=0 // pred_fallthru
    _
  %v24 = vld [vmem:[%s0] sm:$0xf]
  %v25 = vld [vmem:[%s0 + $0x4] sm:$0xf]
  %v26 = vld [vmem:[%s0 + $0x8] sm:$0xf]
  %v27 = vld [vmem:[%s0 + $0xc] sm:$0xf]
  %v28 = vunpack.c.l.bf16 %v24
  %v29 = vunpack.c.l.bf16 %v25
  %v30 = vunpack.c.l.bf16 %v26
  %v31 = vunpack.c.l.bf16 %v27
  %v32 = vld [vmem:[%s2] sm:$0x1]
  %v34 = vlaneseq
  %v35 = vshrl.u32 %v34, 7
  %v36 = vsub.s32 0, %v35
  %v37 = vrot.slane %v32, %v36
  %v39 = vmul.f32 %v28, %v37
  %v40 = vmul.f32 %v29, %v37
  %v41 = vmul.f32 %v30, %v37
  %v42 = vmul.f32 %v31, %v37
  %v43 = vld [vmem:[%s3] sm:$0x1]
  %v45 = vlaneseq
  %v46 = vshrl.u32 %v45, 7
  %v47 = vsub.s32 0, %v46
  %v48 = vrot.slane %v43, %v47
  %v50 = vadd.f32 %v39, %v48
  %v51 = vadd.f32 %v40, %v48
  %v52 = vadd.f32 %v41, %v48
  %v53 = vadd.f32 %v42, %v48
  %v54 = vld [vmem:[%s1] sm:$0xf]
  %v55 = vld [vmem:[%s1 + $0x4] sm:$0xf]
  %v56 = vld [vmem:[%s1 + $0x8] sm:$0xf]
  %v57 = vld [vmem:[%s1 + $0xc] sm:$0xf]
  %v58 = vld [vmem:[%s1 + $0x10] sm:$0xf]
  %v59 = vld [vmem:[%s1 + $0x14] sm:$0xf]
  %v60 = vld [vmem:[%s1 + $0x18] sm:$0xf]
  %v61 = vld [vmem:[%s1 + $0x1c] sm:$0xf]
  %v62 = vpack.c.bf16 %v51, %v50
  %v63 = vpack.c.bf16 %v53, %v52
  %v72 = vunpack.c.l.b16 %v54
  %v73 = vunpack.c.l.b16 %v55
  %v74 = vunpack.c.l.b16 %v56
  %v75 = vunpack.c.l.b16 %v57
  %v76 = vunpack.c.l.b16 %v58
  %v77 = vunpack.c.l.b16 %v59
  %v78 = vunpack.c.l.b16 %v60
  %v79 = vunpack.c.l.b16 %v61
  %v80 = vpack.c.b16 %v73, %v72
  %v81 = vpack.c.b16 %v75, %v74
  %v82 = vpack.c.b16 %v77, %v76
  %v83 = vpack.c.b16 %v79, %v78
  %vm88 = vcmask 523264
  %v90 = vsel %vm88, %v62, 0
  %v93 = vsel %vm88, %v63, 0
  %95 = vmatprep.subr.bf16.mxu0 0
  %96 = vmatpush1.bf16.msra.mxu0 %v80
  %97 = vmatprep.subr.bf16.mxu0 0
  %98 = vmatpush1.bf16.msra.mxu0 %v81
  %99 = vmatprep.subr.bf16.mxu0 0
  %100 = vmatpush1.bf16.msra.mxu0 %v82
  %101 = vmatprep.subr.bf16.mxu0 0
  %102 = vmatpush1.bf16.msra.mxu0 %v83
  %103 = vmatprep.subr.bf16.mxu0 0
  %104 = vmatpush1.bf16.msra.mxu0 0
  %105 = vmatprep.subr.bf16.mxu0 0
  %106 = vmatpush1.bf16.msra.mxu0 0
  %107 = vmatprep.subr.bf16.mxu0 0
  %108 = vmatpush1.bf16.msra.mxu0 0
  %109 = vmatprep.subr.bf16.mxu0 0
  %110 = vmatpush1.bf16.msra.mxu0 0
  %111 = vmatprep.subr.bf16.mxu0 0
  %112 = vmatpush1.bf16.msra.mxu0 0
  %113 = vmatprep.subr.bf16.mxu0 0
  %114 = vmatpush1.bf16.msra.mxu0 0
  %115 = vmatprep.subr.bf16.mxu0 0
  %116 = vmatpush1.bf16.msra.mxu0 0
  %117 = vmatprep.subr.bf16.mxu0 0
  %118 = vmatpush1.bf16.msra.mxu0 0
  %119 = vmatprep.subr.bf16.mxu0 0
  %120 = vmatpush1.bf16.msra.mxu0 0
  %121 = vmatprep.subr.bf16.mxu0 0
  %122 = vmatpush1.bf16.msra.mxu0 0
  %123 = vmatprep.subr.bf16.mxu0 0
  %124 = vmatpush1.bf16.msra.mxu0 0
  %125 = vmatprep.subr.bf16.mxu0 0
  %126 = vmatpush1.bf16.msra.mxu0 0
  %127 = vmatprep.mubr.bf16.mxu0 0
  %128 = vmatmul.mubr.bf16.gmra.mrb[0].mxu0 %v90
  %v129 = vpop.f32.mrb[0].mxu0
  %v130 = vadd.f32 0.0, %v129
  %v131 = vpop.f32.mrb[0].mxu0
  %v132 = vpop.f32.mrb[0].mxu0
  %v133 = vadd.f32 0.0, %v132
  %v134 = vpop.f32.mrb[0].mxu0
  %135 = vmatprep.mubr.bf16.mxu0 0
  %136 = vmatmul.mubr.bf16.gmra.mrb[0].mxu0 %v93
  %v137 = vpop.f32.mrb[0].mxu0
  %v138 = vadd.f32 0.0, %v137
  %v139 = vpop.f32.mrb[0].mxu0
  %v140 = vpop.f32.mrb[0].mxu0
  %v141 = vadd.f32 0.0, %v140
  %v142 = vpop.f32.mrb[0].mxu0
  %143 = vdwg.mxu0
  %v144 = vld [vmem:[%s4] sm:$0x1]
  %v146 = vlaneseq
  %v147 = vshrl.u32 %v146, 7
  %v148 = vsub.s32 0, %v147
  %v149 = vrot.slane %v144, %v148
  %v151 = vmul.f32 %v130, %v149
  %v152 = vmul.f32 %v133, %v149
  %v153 = vmul.f32 %v138, %v149
  %v154 = vmul.f32 %v141, %v149
  %v155 = vld [vmem:[%s5] sm:$0x1]
  %v157 = vlaneseq
  %v158 = vshrl.u32 %v157, 7
  %v159 = vsub.s32 0, %v158
  %v160 = vrot.slane %v155, %v159
  %v162 = vadd.f32 %v151, %v160
  %v163 = vadd.f32 %v152, %v160
  %v164 = vadd.f32 %v153, %v160
  %v165 = vadd.f32 %v154, %v160
  %v166 = vpack.c.bf16 %v163, %v162
  %v167 = vpack.c.bf16 %v165, %v164
  %v170 = vunpack.c.l.b16 %v166
  %v171 = vunpack.c.h.b16 %v166
  %v172 = vunpack.c.l.b16 %v167
  %v173 = vunpack.c.h.b16 %v167
  %v174 = vpack.c.b16 %v170, %v170
  %v175 = vpack.c.b16 %v171, %v171
  %v176 = vpack.c.b16 %v172, %v172
  %v177 = vpack.c.b16 %v173, %v173
  %vm182 = vcmask 257024
  %183 = vst.msk [vmem:[%s6] sm:$0xf] %vm182, %v174
  %184 = vst.msk [vmem:[%s6 + $0x4] sm:$0xf] %vm182, %v175
  %185 = vst.msk [vmem:[%s6 + $0x8] sm:$0xf] %vm182, %v176
  %186 = vst.msk [vmem:[%s6 + $0xc] sm:$0xf] %vm182, %v177
  // Predicated region
  $region26: #{_lambda_.37} parent=0 // pred_check
    _
  $region27: #{_lambda_.37} parent=0 // pred_check_branch
    %188 = sbr.rel (0) target = $region29
  $region28: #{_lambda_.37} parent=0 // pred_region
    _
  $region29: #{_lambda_.37} parent=0 // pred_fallthru
    _
  // Predicated region
  $region30: #{_lambda_.37} parent=0 // pred_check
    _
  $region31: #{_lambda_.37} parent=0 // pred_check_branch
    %190 = sbr.rel (0) target = $region33
  $region32: #{_lambda_.37} parent=0 // pred_region
    _
  $region33: #{_lambda_.37} parent=0 // pred_fallthru
    _

// kernel: _lambda_.38
$region0: #{_lambda_.38}
  #allocation0 [shape = 'u32[]', space=smem, size = 0x4, offset = 0x4, fixed_abs, tag = 'smem constant byte address 0x4 - core index']
  #allocation1 [shape = 'u32[144,128]{1,0:T(1,128)}', space=vmem, size = 0x12000, scoped, tag = 'internal scratch']
  %s0 = inlined_call_operand.vmem [shape: bf16[64,32], index: 0, kind: input, shape index: {}]
  %s1 = inlined_call_operand.vmem [shape: bf16[32,32], index: 1, kind: input, shape index: {}]
  %s2 = inlined_call_operand.vmem [shape: f32[1,32], index: 2, kind: input, shape index: {}]
  %s3 = inlined_call_operand.vmem [shape: f32[1,32], index: 3, kind: input, shape index: {}]
  %s4 = inlined_call_operand.vmem [shape: f32[1,32], index: 4, kind: input, shape index: {}]
  %s5 = inlined_call_operand.vmem [shape: f32[1,32], index: 5, kind: input, shape index: {}]
  %s6 = inlined_call_operand.vmem [shape: bf16[64,32], index: 6, kind: input, shape index: {}]
  %s7 = inlined_call_operand.vmem [shape: bf16[64,32], index: 7, kind: output, shape index: {}]
  %s8 = sld [smem:[#allocation0]]
  $region38: #{_lambda_.38} parent=0
    _
  %s10 = ssub.s32 1, %s8
  %s11 = scalar_select 0, %s10, %s8
  // Predicated region
  $region2: #{_lambda_.38} parent=0 // pred_check
    _
  $region3: #{_lambda_.38} parent=0 // pred_check_branch
    %13 = sbr.rel (0) target = $region5
  $region4: #{_lambda_.38} parent=0 // pred_region
    _
  $region5: #{_lambda_.38} parent=0 // pred_fallthru
    _
  // Predicated region
  $region6: #{_lambda_.38} parent=0 // pred_check
    _
  $region7: #{_lambda_.38} parent=0 // pred_check_branch
    %15 = sbr.rel (0) target = $region9
  $region8: #{_lambda_.38} parent=0 // pred_region
    _
  $region9: #{_lambda_.38} parent=0 // pred_fallthru
    _
  // Predicated region
  $region10: #{_lambda_.38} parent=0 // pred_check
    _
  $region11: #{_lambda_.38} parent=0 // pred_check_branch
    %17 = sbr.rel (0) target = $region13
  $region12: #{_lambda_.38} parent=0 // pred_region
    _
  $region13: #{_lambda_.38} parent=0 // pred_fallthru
    _
  // Predicated region
  $region14: #{_lambda_.38} parent=0 // pred_check
    _
  $region15: #{_lambda_.38} parent=0 // pred_check_branch
    %19 = sbr.rel (0) target = $region17
  $region16: #{_lambda_.38} parent=0 // pred_region
    _
  $region17: #{_lambda_.38} parent=0 // pred_fallthru
    _
  // Predicated region
  $region18: #{_lambda_.38} parent=0 // pred_check
    _
  $region19: #{_lambda_.38} parent=0 // pred_check_branch
    %21 = sbr.rel (0) target = $region21
  $region20: #{_lambda_.38} parent=0 // pred_region
    _
  $region21: #{_lambda_.38} parent=0 // pred_fallthru
    _
  // Predicated region
  $region22: #{_lambda_.38} parent=0 // pred_check
    _
  $region23: #{_lambda_.38} parent=0 // pred_check_branch
    %23 = sbr.rel (0) target = $region25
  $region24: #{_lambda_.38} parent=0 // pred_region
    _
  $region25: #{_lambda_.38} parent=0 // pred_fallthru
    _
  // Predicated region
  $region26: #{_lambda_.38} parent=0 // pred_check
    _
  $region27: #{_lambda_.38} parent=0 // pred_check_branch
    %25 = sbr.rel (0) target = $region29
  $region28: #{_lambda_.38} parent=0 // pred_region
    _
  $region29: #{_lambda_.38} parent=0 // pred_fallthru
    _
  %v27 = vld [vmem:[%s0] sm:$0xf]
  %v28 = vld [vmem:[%s0 + $0x4] sm:$0xf]
  %v29 = vld [vmem:[%s0 + $0x8] sm:$0xf]
  %v30 = vld [vmem:[%s0 + $0xc] sm:$0xf]
  %v31 = vld [vmem:[%s0 + $0x10] sm:$0xf]
  %v32 = vld [vmem:[%s0 + $0x14] sm:$0xf]
  %v33 = vld [vmem:[%s0 + $0x18] sm:$0xf]
  %v34 = vld [vmem:[%s0 + $0x1c] sm:$0xf]
  %v35 = vunpack.c.l.bf16 %v27
  %v36 = vunpack.c.l.bf16 %v28
  %v37 = vunpack.c.l.bf16 %v29
  %v38 = vunpack.c.l.bf16 %v30
  %v39 = vunpack.c.l.bf16 %v31
  %v40 = vunpack.c.l.bf16 %v32
  %v41 = vunpack.c.l.bf16 %v33
  %v42 = vunpack.c.l.bf16 %v34
  %v43 = vld [vmem:[%s2] sm:$0x1]
  %v45 = vlaneseq
  %v46 = vshrl.u32 %v45, 7
  %v47 = vsub.s32 0, %v46
  %v48 = vrot.slane %v43, %v47
  %v50 = vmul.f32 %v35, %v48
  %v51 = vmul.f32 %v36, %v48
  %v52 = vmul.f32 %v37, %v48
  %v53 = vmul.f32 %v38, %v48
  %v54 = vmul.f32 %v39, %v48
  %v55 = vmul.f32 %v40, %v48
  %v56 = vmul.f32 %v41, %v48
  %v57 = vmul.f32 %v42, %v48
  %v58 = vld [vmem:[%s3] sm:$0x1]
  %v60 = vlaneseq
  %v61 = vshrl.u32 %v60, 7
  %v62 = vsub.s32 0, %v61
  %v63 = vrot.slane %v58, %v62
  %v65 = vadd.f32 %v50, %v63
  %v66 = vadd.f32 %v51, %v63
  %v67 = vadd.f32 %v52, %v63
  %v68 = vadd.f32 %v53, %v63
  %v69 = vadd.f32 %v54, %v63
  %v70 = vadd.f32 %v55, %v63
  %v71 = vadd.f32 %v56, %v63
  %v72 = vadd.f32 %v57, %v63
  %v73 = vld [vmem:[%s1] sm:$0xf]
  %v74 = vld [vmem:[%s1 + $0x4] sm:$0xf]
  %v75 = vld [vmem:[%s1 + $0x8] sm:$0xf]
  %v76 = vld [vmem:[%s1 + $0xc] sm:$0xf]
  %v77 = vpack.c.bf16 %v66, %v65
  %v78 = vpack.c.bf16 %v68, %v67
  %v79 = vpack.c.bf16 %v70, %v69
  %v80 = vpack.c.bf16 %v72, %v71
  %v85 = vunpack.c.l.b16 %v73
  %v86 = vunpack.c.l.b16 %v74
  %v87 = vunpack.c.l.b16 %v75
  %v88 = vunpack.c.l.b16 %v76
  %v89 = vpack.c.b16 %v86, %v85
  %v90 = vpack.c.b16 %v88, %v87
  %vm93 = vcmask 261120
  %v95 = vsel %vm93, %v77, 0
  %v98 = vsel %vm93, %v78, 0
  %v101 = vsel %vm93, %v79, 0
  %v104 = vsel %vm93, %v80, 0
  %106 = vmatprep.subr.bf16.mxu0 0
  %107 = vmatpush1.bf16.msra.mxu0 %v89
  %108 = vmatprep.subr.bf16.mxu0 0
  %109 = vmatpush1.bf16.msra.mxu0 %v90
  %110 = vmatprep.subr.bf16.mxu0 0
  %111 = vmatpush1.bf16.msra.mxu0 0
  %112 = vmatprep.subr.bf16.mxu0 0
  %113 = vmatpush1.bf16.msra.mxu0 0
  %114 = vmatprep.subr.bf16.mxu0 0
  %115 = vmatpush1.bf16.msra.mxu0 0
  %116 = vmatprep.subr.bf16.mxu0 0
  %117 = vmatpush1.bf16.msra.mxu0 0
  %118 = vmatprep.subr.bf16.mxu0 0
  %119 = vmatpush1.bf16.msra.mxu0 0
  %120 = vmatprep.subr.bf16.mxu0 0
  %121 = vmatpush1.bf16.msra.mxu0 0
  %122 = vmatprep.subr.bf16.mxu0 0
  %123 = vmatpush1.bf16.msra.mxu0 0
  %124 = vmatprep.subr.bf16.mxu0 0
  %125 = vmatpush1.bf16.msra.mxu0 0
  %126 = vmatprep.subr.bf16.mxu0 0
  %127 = vmatpush1.bf16.msra.mxu0 0
  %128 = vmatprep.subr.bf16.mxu0 0
  %129 = vmatpush1.bf16.msra.mxu0 0
  %130 = vmatprep.subr.bf16.mxu0 0
  %131 = vmatpush1.bf16.msra.mxu0 0
  %132 = vmatprep.subr.bf16.mxu0 0
  %133 = vmatpush1.bf16.msra.mxu0 0
  %134 = vmatprep.subr.bf16.mxu0 0
  %135 = vmatpush1.bf16.msra.mxu0 0
  %136 = vmatprep.subr.bf16.mxu0 0
  %137 = vmatpush1.bf16.msra.mxu0 0
  %138 = vmatprep.mubr.bf16.mxu0 0
  %139 = vmatmul.mubr.bf16.gmra.mrb[0].mxu0 %v95
  %v140 = vpop.f32.mrb[0].mxu0
  %v141 = vadd.f32 0.0, %v140
  %v142 = vpop.f32.mrb[0].mxu0
  %v143 = vpop.f32.mrb[0].mxu0
  %v144 = vadd.f32 0.0, %v143
  %v145 = vpop.f32.mrb[0].mxu0
  %146 = vmatprep.mubr.bf16.mxu0 0
  %147 = vmatmul.mubr.bf16.gmra.mrb[0].mxu0 %v98
  %v148 = vpop.f32.mrb[0].mxu0
  %v149 = vadd.f32 0.0, %v148
  %v150 = vpop.f32.mrb[0].mxu0
  %v151 = vpop.f32.mrb[0].mxu0
  %v152 = vadd.f32 0.0, %v151
  %v153 = vpop.f32.mrb[0].mxu0
  %154 = vmatprep.mubr.bf16.mxu0 0
  %155 = vmatmul.mubr.bf16.gmra.mrb[0].mxu0 %v101
  %v156 = vpop.f32.mrb[0].mxu0
  %v157 = vadd.f32 0.0, %v156
  %v158 = vpop.f32.mrb[0].mxu0
  %v159 = vpop.f32.mrb[0].mxu0
  %v160 = vadd.f32 0.0, %v159
  %v161 = vpop.f32.mrb[0].mxu0
  %162 = vmatprep.mubr.bf16.mxu0 0
  %163 = vmatmul.mubr.bf16.gmra.mrb[0].mxu0 %v104
  %v164 = vpop.f32.mrb[0].mxu0
  %v165 = vadd.f32 0.0, %v164
  %v166 = vpop.f32.mrb[0].mxu0
  %v167 = vpop.f32.mrb[0].mxu0
  %v168 = vadd.f32 0.0, %v167
  %v169 = vpop.f32.mrb[0].mxu0
  %170 = vdwg.mxu0
  %v171 = vld [vmem:[%s4] sm:$0x1]
  %v173 = vlaneseq
  %v174 = vshrl.u32 %v173, 7
  %v175 = vsub.s32 0, %v174
  %v176 = vrot.slane %v171, %v175
  %v178 = vmul.f32 %v141, %v176
  %v179 = vmul.f32 %v144, %v176
  %v180 = vmul.f32 %v149, %v176
  %v181 = vmul.f32 %v152, %v176
  %v182 = vmul.f32 %v157, %v176
  %v183 = vmul.f32 %v160, %v176
  %v184 = vmul.f32 %v165, %v176
  %v185 = vmul.f32 %v168, %v176
  %v186 = vld [vmem:[%s5] sm:$0x1]
  %v188 = vlaneseq
  %v189 = vshrl.u32 %v188, 7
  %v190 = vsub.s32 0, %v189
  %v191 = vrot.slane %v186, %v190
  %v193 = vadd.f32 %v178, %v191
  %v194 = vadd.f32 %v179, %v191
  %v195 = vadd.f32 %v180, %v191
  %v196 = vadd.f32 %v181, %v191
  %v197 = vadd.f32 %v182, %v191
  %v198 = vadd.f32 %v183, %v191
  %v199 = vadd.f32 %v184, %v191
  %v200 = vadd.f32 %v185, %v191
  %v201 = vld [vmem:[%s6] sm:$0xf]
  %v202 = vld [vmem:[%s6 + $0x4] sm:$0xf]
  %v203 = vld [vmem:[%s6 + $0x8] sm:$0xf]
  %v204 = vld [vmem:[%s6 + $0xc] sm:$0xf]
  %v205 = vld [vmem:[%s6 + $0x10] sm:$0xf]
  %v206 = vld [vmem:[%s6 + $0x14] sm:$0xf]
  %v207 = vld [vmem:[%s6 + $0x18] sm:$0xf]
  %v208 = vld [vmem:[%s6 + $0x1c] sm:$0xf]
  %v209 = vunpack.c.l.bf16 %v201
  %v210 = vunpack.c.l.bf16 %v202
  %v211 = vunpack.c.l.bf16 %v203
  %v212 = vunpack.c.l.bf16 %v204
  %v213 = vunpack.c.l.bf16 %v205
  %v214 = vunpack.c.l.bf16 %v206
  %v215 = vunpack.c.l.bf16 %v207
  %v216 = vunpack.c.l.bf16 %v208
  %v217 = vadd.f32 %v193, %v209
  %v218 = vadd.f32 %v194, %v210
  %v219 = vadd.f32 %v195, %v211
  %v220 = vadd.f32 %v196, %v212
  %v221 = vadd.f32 %v197, %v213
  %v222 = vadd.f32 %v198, %v214
  %v223 = vadd.f32 %v199, %v215
  %v224 = vadd.f32 %v200, %v216
  %v225 = vpack.c.bf16 %v218, %v217
  %v226 = vpack.c.bf16 %v220, %v219
  %v227 = vpack.c.bf16 %v222, %v221
  %v228 = vpack.c.bf16 %v224, %v223
  %v233 = vunpack.c.l.b16 %v225
  %v234 = vunpack.c.h.b16 %v225
  %v235 = vunpack.c.l.b16 %v226
  %v236 = vunpack.c.h.b16 %v226
  %v237 = vunpack.c.l.b16 %v227
  %v238 = vunpack.c.h.b16 %v227
  %v239 = vunpack.c.l.b16 %v228
  %v240 = vunpack.c.h.b16 %v228
  %v241 = vpack.c.b16 %v233, %v233
  %v242 = vpack.c.b16 %v234, %v234
  %v243 = vpack.c.b16 %v235, %v235
  %v244 = vpack.c.b16 %v236, %v236
  %v245 = vpack.c.b16 %v237, %v237
  %v246 = vpack.c.b16 %v238, %v238
  %v247 = vpack.c.b16 %v239, %v239
  %v248 = vpack.c.b16 %v240, %v240
  %vm257 = vcmask 257024
  %258 = vst.msk [vmem:[%s7] sm:$0xf] %vm257, %v241
  %259 = vst.msk [vmem:[%s7 + $0x4] sm:$0xf] %vm257, %v242
  %260 = vst.msk [vmem:[%s7 + $0x8] sm:$0xf] %vm257, %v243
  %261 = vst.msk [vmem:[%s7 + $0xc] sm:$0xf] %vm257, %v244
  %262 = vst.msk [vmem:[%s7 + $0x10] sm:$0xf] %vm257, %v245
  %263 = vst.msk [vmem:[%s7 + $0x14] sm:$0xf] %vm257, %v246
  %264 = vst.msk [vmem:[%s7 + $0x18] sm:$0xf] %vm257, %v247
  %265 = vst.msk [vmem:[%s7 + $0x1c] sm:$0xf] %vm257, %v248
  // Predicated region
  $region30: #{_lambda_.38} parent=0 // pred_check
    _
  $region31: #{_lambda_.38} parent=0 // pred_check_branch
    %267 = sbr.rel (0) target = $region33
  $region32: #{_lambda_.38} parent=0 // pred_region
    _
  $region33: #{_lambda_.38} parent=0 // pred_fallthru
    _
  // Predicated region
  $region34: #{_lambda_.38} parent=0 // pred_check
    _
  $region35: #{_lambda_.38} parent=0 // pred_check_branch
    %269 = sbr.rel (0) target = $region37
  $region36: #{_lambda_.38} parent=0 // pred_region
    _
  $region37: #{_lambda_.38} parent=0 // pred_fallthru
    _

// kernel: _lambda_.39
$region0: #{_lambda_.39}
  #allocation0 [shape = 'u32[]', space=smem, size = 0x4, offset = 0x4, fixed_abs, tag = 'smem constant byte address 0x4 - core index']
  #allocation1 [shape = 'u32[144,128]{1,0:T(1,128)}', space=vmem, size = 0x12000, scoped, tag = 'internal scratch']
  %s0 = inlined_call_operand.vmem [shape: bf16[64,32], index: 0, kind: input, shape index: {}]
  %s1 = inlined_call_operand.vmem [shape: bf16[32,13], index: 1, kind: input, shape index: {}]
  %s2 = inlined_call_operand.vmem [shape: f32[1,32], index: 2, kind: input, shape index: {}]
  %s3 = inlined_call_operand.vmem [shape: f32[1,32], index: 3, kind: input, shape index: {}]
  %s4 = inlined_call_operand.vmem [shape: f32[1,13], index: 4, kind: input, shape index: {}]
  %s5 = inlined_call_operand.vmem [shape: f32[1,13], index: 5, kind: input, shape index: {}]
  %s6 = inlined_call_operand.vmem [shape: f32[64,13], index: 6, kind: output, shape index: {}]
  %s7 = sld [smem:[#allocation0]]
  $region34: #{_lambda_.39} parent=0
    _
  %s9 = ssub.s32 1, %s7
  %s10 = scalar_select 0, %s9, %s7
  // Predicated region
  $region2: #{_lambda_.39} parent=0 // pred_check
    _
  $region3: #{_lambda_.39} parent=0 // pred_check_branch
    %12 = sbr.rel (0) target = $region5
  $region4: #{_lambda_.39} parent=0 // pred_region
    _
  $region5: #{_lambda_.39} parent=0 // pred_fallthru
    _
  // Predicated region
  $region6: #{_lambda_.39} parent=0 // pred_check
    _
  $region7: #{_lambda_.39} parent=0 // pred_check_branch
    %14 = sbr.rel (0) target = $region9
  $region8: #{_lambda_.39} parent=0 // pred_region
    _
  $region9: #{_lambda_.39} parent=0 // pred_fallthru
    _
  // Predicated region
  $region10: #{_lambda_.39} parent=0 // pred_check
    _
  $region11: #{_lambda_.39} parent=0 // pred_check_branch
    %16 = sbr.rel (0) target = $region13
  $region12: #{_lambda_.39} parent=0 // pred_region
    _
  $region13: #{_lambda_.39} parent=0 // pred_fallthru
    _
  // Predicated region
  $region14: #{_lambda_.39} parent=0 // pred_check
    _
  $region15: #{_lambda_.39} parent=0 // pred_check_branch
    %18 = sbr.rel (0) target = $region17
  $region16: #{_lambda_.39} parent=0 // pred_region
    _
  $region17: #{_lambda_.39} parent=0 // pred_fallthru
    _
  // Predicated region
  $region18: #{_lambda_.39} parent=0 // pred_check
    _
  $region19: #{_lambda_.39} parent=0 // pred_check_branch
    %20 = sbr.rel (0) target = $region21
  $region20: #{_lambda_.39} parent=0 // pred_region
    _
  $region21: #{_lambda_.39} parent=0 // pred_fallthru
    _
  // Predicated region
  $region22: #{_lambda_.39} parent=0 // pred_check
    _
  $region23: #{_lambda_.39} parent=0 // pred_check_branch
    %22 = sbr.rel (0) target = $region25
  $region24: #{_lambda_.39} parent=0 // pred_region
    _
  $region25: #{_lambda_.39} parent=0 // pred_fallthru
    _
  %v24 = vld [vmem:[%s0] sm:$0xf]
  %v25 = vld [vmem:[%s0 + $0x4] sm:$0xf]
  %v26 = vld [vmem:[%s0 + $0x8] sm:$0xf]
  %v27 = vld [vmem:[%s0 + $0xc] sm:$0xf]
  %v28 = vld [vmem:[%s0 + $0x10] sm:$0xf]
  %v29 = vld [vmem:[%s0 + $0x14] sm:$0xf]
  %v30 = vld [vmem:[%s0 + $0x18] sm:$0xf]
  %v31 = vld [vmem:[%s0 + $0x1c] sm:$0xf]
  %v32 = vunpack.c.l.bf16 %v24
  %v33 = vunpack.c.l.bf16 %v25
  %v34 = vunpack.c.l.bf16 %v26
  %v35 = vunpack.c.l.bf16 %v27
  %v36 = vunpack.c.l.bf16 %v28
  %v37 = vunpack.c.l.bf16 %v29
  %v38 = vunpack.c.l.bf16 %v30
  %v39 = vunpack.c.l.bf16 %v31
  %v40 = vld [vmem:[%s2] sm:$0x1]
  %v42 = vlaneseq
  %v43 = vshrl.u32 %v42, 7
  %v44 = vsub.s32 0, %v43
  %v45 = vrot.slane %v40, %v44
  %v47 = vmul.f32 %v32, %v45
  %v48 = vmul.f32 %v33, %v45
  %v49 = vmul.f32 %v34, %v45
  %v50 = vmul.f32 %v35, %v45
  %v51 = vmul.f32 %v36, %v45
  %v52 = vmul.f32 %v37, %v45
  %v53 = vmul.f32 %v38, %v45
  %v54 = vmul.f32 %v39, %v45
  %v55 = vld [vmem:[%s3] sm:$0x1]
  %v57 = vlaneseq
  %v58 = vshrl.u32 %v57, 7
  %v59 = vsub.s32 0, %v58
  %v60 = vrot.slane %v55, %v59
  %v62 = vadd.f32 %v47, %v60
  %v63 = vadd.f32 %v48, %v60
  %v64 = vadd.f32 %v49, %v60
  %v65 = vadd.f32 %v50, %v60
  %v66 = vadd.f32 %v51, %v60
  %v67 = vadd.f32 %v52, %v60
  %v68 = vadd.f32 %v53, %v60
  %v69 = vadd.f32 %v54, %v60
  %v70 = vmul.f32 %v62, 0.5
  %v71 = vmul.f32 %v63, 0.5
  %v72 = vmul.f32 %v64, 0.5
  %v73 = vmul.f32 %v65, 0.5
  %v74 = vmul.f32 %v66, 0.5
  %v75 = vmul.f32 %v67, 0.5
  %v76 = vmul.f32 %v68, 0.5
  %v77 = vmul.f32 %v69, 0.5
  %v78 = vmul.f32 %v62, 0.044715
  %v79 = vmul.f32 %v63, 0.044715
  %v80 = vmul.f32 %v64, 0.044715
  %v81 = vmul.f32 %v65, 0.044715
  %v82 = vmul.f32 %v66, 0.044715
  %v83 = vmul.f32 %v67, 0.044715
  %v84 = vmul.f32 %v68, 0.044715
  %v85 = vmul.f32 %v69, 0.044715
  %v86 = vmul.f32 %v78, %v62
  %v87 = vmul.f32 %v79, %v63
  %v88 = vmul.f32 %v80, %v64
  %v89 = vmul.f32 %v81, %v65
  %v90 = vmul.f32 %v82, %v66
  %v91 = vmul.f32 %v83, %v67
  %v92 = vmul.f32 %v84, %v68
  %v93 = vmul.f32 %v85, %v69
  %v94 = vmul.f32 %v86, %v62
  %v95 = vmul.f32 %v87, %v63
  %v96 = vmul.f32 %v88, %v64
  %v97 = vmul.f32 %v89, %v65
  %v98 = vmul.f32 %v90, %v66
  %v99 = vmul.f32 %v91, %v67
  %v100 = vmul.f32 %v92, %v68
  %v101 = vmul.f32 %v93, %v69
  %v102 = vadd.f32 %v62, %v94
  %v103 = vadd.f32 %v63, %v95
  %v104 = vadd.f32 %v64, %v96
  %v105 = vadd.f32 %v65, %v97
  %v106 = vadd.f32 %v66, %v98
  %v107 = vadd.f32 %v67, %v99
  %v108 = vadd.f32 %v68, %v100
  %v109 = vadd.f32 %v69, %v101
  %v110 = vmul.f32 %v102, 0.7978846
  %v111 = vmul.f32 %v103, 0.7978846
  %v112 = vmul.f32 %v104, 0.7978846
  %v113 = vmul.f32 %v105, 0.7978846
  %v114 = vmul.f32 %v106, 0.7978846
  %v115 = vmul.f32 %v107, 0.7978846
  %v116 = vmul.f32 %v108, 0.7978846
  %v117 = vmul.f32 %v109, 0.7978846
  %v118 = vtanh.pop %v110
  %v119 = vtanh.pop %v111
  %v120 = vtanh.pop %v112
  %v121 = vtanh.pop %v113
  %v122 = vtanh.pop %v114
  %v123 = vtanh.pop %v115
  %v124 = vtanh.pop %v116
  %v125 = vtanh.pop %v117
  %v126 = vadd.f32 %v118, 1.0
  %v127 = vadd.f32 %v119, 1.0
  %v128 = vadd.f32 %v120, 1.0
  %v129 = vadd.f32 %v121, 1.0
  %v130 = vadd.f32 %v122, 1.0
  %v131 = vadd.f32 %v123, 1.0
  %v132 = vadd.f32 %v124, 1.0
  %v133 = vadd.f32 %v125, 1.0
  %v134 = vmul.f32 %v70, %v126
  %v135 = vmul.f32 %v71, %v127
  %v136 = vmul.f32 %v72, %v128
  %v137 = vmul.f32 %v73, %v129
  %v138 = vmul.f32 %v74, %v130
  %v139 = vmul.f32 %v75, %v131
  %v140 = vmul.f32 %v76, %v132
  %v141 = vmul.f32 %v77, %v133
  %v142 = vld [vmem:[%s1] sm:$0xf]
  %v143 = vld [vmem:[%s1 + $0x4] sm:$0xf]
  %v144 = vld [vmem:[%s1 + $0x8] sm:$0xf]
  %v145 = vld [vmem:[%s1 + $0xc] sm:$0xf]
  %v146 = vpack.c.bf16 %v135, %v134
  %v147 = vpack.c.bf16 %v137, %v136
  %v148 = vpack.c.bf16 %v139, %v138
  %v149 = vpack.c.bf16 %v141, %v140
  %v154 = vunpack.c.l.b16 %v142
  %v155 = vunpack.c.l.b16 %v143
  %v156 = vunpack.c.l.b16 %v144
  %v157 = vunpack.c.l.b16 %v145
  %v158 = vpack.c.b16 %v155, %v154
  %v159 = vpack.c.b16 %v157, %v156
  %vm162 = vcmask 261120
  %v164 = vsel %vm162, %v146, 0
  %v167 = vsel %vm162, %v147, 0
  %v170 = vsel %vm162, %v148, 0
  %v173 = vsel %vm162, %v149, 0
  %175 = vmatprep.subr.bf16.mxu0 0
  %176 = vmatpush1.bf16.msra.mxu0 %v158
  %177 = vmatprep.subr.bf16.mxu0 0
  %178 = vmatpush1.bf16.msra.mxu0 %v159
  %179 = vmatprep.subr.bf16.mxu0 0
  %180 = vmatpush1.bf16.msra.mxu0 0
  %181 = vmatprep.subr.bf16.mxu0 0
  %182 = vmatpush1.bf16.msra.mxu0 0
  %183 = vmatprep.subr.bf16.mxu0 0
  %184 = vmatpush1.bf16.msra.mxu0 0
  %185 = vmatprep.subr.bf16.mxu0 0
  %186 = vmatpush1.bf16.msra.mxu0 0
  %187 = vmatprep.subr.bf16.mxu0 0
  %188 = vmatpush1.bf16.msra.mxu0 0
  %189 = vmatprep.subr.bf16.mxu0 0
  %190 = vmatpush1.bf16.msra.mxu0 0
  %191 = vmatprep.subr.bf16.mxu0 0
  %192 = vmatpush1.bf16.msra.mxu0 0
  %193 = vmatprep.subr.bf16.mxu0 0
  %194 = vmatpush1.bf16.msra.mxu0 0
  %195 = vmatprep.subr.bf16.mxu0 0
  %196 = vmatpush1.bf16.msra.mxu0 0
  %197 = vmatprep.subr.bf16.mxu0 0
  %198 = vmatpush1.bf16.msra.mxu0 0
  %199 = vmatprep.subr.bf16.mxu0 0
  %200 = vmatpush1.bf16.msra.mxu0 0
  %201 = vmatprep.subr.bf16.mxu0 0
  %202 = vmatpush1.bf16.msra.mxu0 0
  %203 = vmatprep.subr.bf16.mxu0 0
  %204 = vmatpush1.bf16.msra.mxu0 0
  %205 = vmatprep.subr.bf16.mxu0 0
  %206 = vmatpush1.bf16.msra.mxu0 0
  %207 = vmatprep.mubr.bf16.mxu0 0
  %208 = vmatmul.mubr.bf16.gmra.mrb[0].mxu0 %v164
  %v209 = vpop.f32.mrb[0].mxu0
  %v210 = vadd.f32 0.0, %v209
  %v211 = vpop.f32.mrb[0].mxu0
  %v212 = vpop.f32.mrb[0].mxu0
  %v213 = vadd.f32 0.0, %v212
  %v214 = vpop.f32.mrb[0].mxu0
  %215 = vmatprep.mubr.bf16.mxu0 0
  %216 = vmatmul.mubr.bf16.gmra.mrb[0].mxu0 %v167
  %v217 = vpop.f32.mrb[0].mxu0
  %v218 = vadd.f32 0.0, %v217
  %v219 = vpop.f32.mrb[0].mxu0
  %v220 = vpop.f32.mrb[0].mxu0
  %v221 = vadd.f32 0.0, %v220
  %v222 = vpop.f32.mrb[0].mxu0
  %223 = vmatprep.mubr.bf16.mxu0 0
  %224 = vmatmul.mubr.bf16.gmra.mrb[0].mxu0 %v170
  %v225 = vpop.f32.mrb[0].mxu0
  %v226 = vadd.f32 0.0, %v225
  %v227 = vpop.f32.mrb[0].mxu0
  %v228 = vpop.f32.mrb[0].mxu0
  %v229 = vadd.f32 0.0, %v228
  %v230 = vpop.f32.mrb[0].mxu0
  %231 = vmatprep.mubr.bf16.mxu0 0
  %232 = vmatmul.mubr.bf16.gmra.mrb[0].mxu0 %v173
  %v233 = vpop.f32.mrb[0].mxu0
  %v234 = vadd.f32 0.0, %v233
  %v235 = vpop.f32.mrb[0].mxu0
  %v236 = vpop.f32.mrb[0].mxu0
  %v237 = vadd.f32 0.0, %v236
  %v238 = vpop.f32.mrb[0].mxu0
  %239 = vdwg.mxu0
  %v240 = vld [vmem:[%s4] sm:$0x1]
  %v242 = vlaneseq
  %v243 = vshrl.u32 %v242, 7
  %v244 = vsub.s32 0, %v243
  %v245 = vrot.slane %v240, %v244
  %v247 = vmul.f32 %v210, %v245
  %v248 = vmul.f32 %v213, %v245
  %v249 = vmul.f32 %v218, %v245
  %v250 = vmul.f32 %v221, %v245
  %v251 = vmul.f32 %v226, %v245
  %v252 = vmul.f32 %v229, %v245
  %v253 = vmul.f32 %v234, %v245
  %v254 = vmul.f32 %v237, %v245
  %v255 = vld [vmem:[%s5] sm:$0x1]
  %v257 = vlaneseq
  %v258 = vshrl.u32 %v257, 7
  %v259 = vsub.s32 0, %v258
  %v260 = vrot.slane %v255, %v259
  %v262 = vadd.f32 %v247, %v260
  %v263 = vadd.f32 %v248, %v260
  %v264 = vadd.f32 %v249, %v260
  %v265 = vadd.f32 %v250, %v260
  %v266 = vadd.f32 %v251, %v260
  %v267 = vadd.f32 %v252, %v260
  %v268 = vadd.f32 %v253, %v260
  %v269 = vadd.f32 %v254, %v260
  %vm270 = vcmask 105472
  %271 = vst.msk [vmem:[%s6] sm:$0xff] %vm270, %v262
  %272 = vst.msk [vmem:[%s6 + $0x8] sm:$0xff] %vm270, %v263
  %273 = vst.msk [vmem:[%s6 + $0x10] sm:$0xff] %vm270, %v264
  %274 = vst.msk [vmem:[%s6 + $0x18] sm:$0xff] %vm270, %v265
  %275 = vst.msk [vmem:[%s6 + $0x20] sm:$0xff] %vm270, %v266
  %276 = vst.msk [vmem:[%s6 + $0x28] sm:$0xff] %vm270, %v267
  %277 = vst.msk [vmem:[%s6 + $0x30] sm:$0xff] %vm270, %v268
  %278 = vst.msk [vmem:[%s6 + $0x38] sm:$0xff] %vm270, %v269
  // Predicated region
  $region26: #{_lambda_.39} parent=0 // pred_check
    _
  $region27: #{_lambda_.39} parent=0 // pred_check_branch
    %280 = sbr.rel (0) target = $region29
  $region28: #{_lambda_.39} parent=0 // pred_region
    _
  $region29: #{_lambda_.39} parent=0 // pred_fallthru
    _
  // Predicated region
  $region30: #{_lambda_.39} parent=0 // pred_check
    _
  $region31: #{_lambda_.39} parent=0 // pred_check_branch
    %282 = sbr.rel (0) target = $region33
  $region32: #{_lambda_.39} parent=0 // pred_region
    _
  $region33: #{_lambda_.39} parent=0 // pred_fallthru
    _

</llo_original>
